<compile_context>
chip_gen: v6e
topology: v6e:2x2x1
jax: 0.10.0
libtpu: 0.0.40
codegen_flags: <defaults>
</compile_context>

<pallas_src>
import math
import functools

import jax
import jax.numpy as jnp
from jax.experimental import pallas as pl
from jax.experimental.pallas import tpu as pltpu


MXU_DTYPE = jnp.bfloat16   # matmul operand dtype (accumulation in f32)
_LN_EPS = 1e-5


def _cparams(n_par=1):
    return pltpu.CompilerParams(
        dimension_semantics=("parallel",) * n_par,
        vmem_limit_bytes=32 * 1024 * 1024)


def _act_fn(y, act):
    if act == "sigmoid":
        return jax.nn.sigmoid(y)
    if act == "relu":
        return jnp.maximum(y, 0.0)
    if act == "gelu":
        return jax.nn.gelu(y)
    return y


def _layernorm(x, g, b):
    mu = jnp.mean(x, axis=-1, keepdims=True)
    var = jnp.mean((x - mu) ** 2, axis=-1, keepdims=True)
    return (x - mu) * jax.lax.rsqrt(var + _LN_EPS) * g + b


# ----------------------------- Pallas kernels ------------------------------

def _linear_kernel(x_ref, w_ref, b_ref, o_ref, *, act):
    y = jnp.dot(x_ref[...].astype(MXU_DTYPE), w_ref[...],
                preferred_element_type=jnp.float32) + b_ref[...]
    o_ref[...] = _act_fn(y, act).astype(o_ref.dtype)


def _linear_nobias_kernel(x_ref, w_ref, o_ref, *, act):
    y = jnp.dot(x_ref[...].astype(MXU_DTYPE), w_ref[...],
                preferred_element_type=jnp.float32)
    o_ref[...] = _act_fn(y, act).astype(o_ref.dtype)


def _enc_layer_kernel(res_ref, amp_ref, phase_ref, freq_ref, level_ref,
                      in_w_ref, in_b_ref, out_wh_ref, kern_ref, gconst_ref,
                      ln1g_ref, ln1b_ref, ff_w1_ref, ff_w2_ref,
                      ln2g_ref, ln2b_ref,
                      gp_w_ref, gp_b_ref, sp_w_ref, sp_b_ref,
                      kt_main_ref, kt_aux_ref, lvl_init_ref,
                      res_out_ref, lvl_out_ref, glast_ref, stail_ref,
                      *, nhead, act):
    # One full ETSformer EncoderLayer for one batch element, entirely in VMEM.
    T = res_ref.shape[1]
    D = res_ref.shape[2]
    P = stail_ref.shape[1]
    HD = in_w_ref.shape[1]
    dh = HD // nhead
    t_total = T + P

    # ---- season block: Fourier extrapolation over the top-K frequencies ----
    # amp/phase/freq are the K *positive* frequencies; factor 2 = conj pair.
    tv = jax.lax.broadcasted_iota(jnp.int32, (t_total, D), 0).astype(jnp.float32)
    fr = freq_ref[0]
    ph = phase_ref[0]
    am = amp_ref[0]
    ang = (2.0 * math.pi) * fr[:, None, :] * tv[None, :, :] + ph[:, None, :]
    season_full = 2.0 * jnp.sum(am[:, None, :] * jnp.cos(ang), axis=0)  # (T+P, D)
    season = season_full[:T]
    stail_ref[0] = season_full[T:].astype(stail_ref.dtype)

    # ---- growth block: in_proj + (diff + exp. smoothing + out_proj) -------
    x = res_ref[0] - season                                          # (T, D)
    v = jnp.dot(x.astype(MXU_DTYPE), in_w_ref[...],
                preferred_element_type=jnp.float32) + in_b_ref[...]  # (T, HD)
    # The first-difference, z0 row and v0 init term are folded into a
    # modified Toeplitz matrix (kern_ref, f32) and a precomputed constant
    # (gconst_ref) -> one matmul chain per head, no shifts/concats needed.
    # Rows [0:T]  of g_cat -> growth[:, 1:]  (g_tail)
    # Rows [T:2T] of g_cat -> growth[:, :-1] (g_prev, used by the LevelLayer)
    g_cat = gconst_ref[...]                                          # (2T, D)
    for h in range(nhead):
        p_h = jnp.dot(v[:, h * dh:(h + 1) * dh].astype(MXU_DTYPE),
                      out_wh_ref[h],
                      preferred_element_type=jnp.float32)            # (T, D)
        g_cat = g_cat + jnp.dot(kern_ref[h], p_h,
                                preferred_element_type=jnp.float32)  # f32 ES matmul
    g_tail = g_cat[:T]
    g_prev = g_cat[T:]
    glast_ref[0] = g_tail[T - 1:T, :].astype(glast_ref.dtype)

    # ---- residual path: LN1(x - growth) -> FFN -> LN2 ---------------------
    r1 = _layernorm(x - g_tail, ln1g_ref[...], ln1b_ref[...])
    hmid = _act_fn(jnp.dot(r1.astype(MXU_DTYPE), ff_w1_ref[...],
                           preferred_element_type=jnp.float32), act)
    ffo = jnp.dot(hmid.astype(MXU_DTYPE), ff_w2_ref[...],
                  preferred_element_type=jnp.float32)
    res_out_ref[0] = _layernorm(r1 + ffo, ln2g_ref[...],
                                ln2b_ref[...]).astype(res_out_ref.dtype)

    # ---- level layer: growth/season projections + aux ES ------------------
    g_proj = jnp.dot(g_prev.astype(MXU_DTYPE), gp_w_ref[...],
                     preferred_element_type=jnp.float32) + gp_b_ref[...]  # (T, C)
    s_proj = jnp.dot(season.astype(MXU_DTYPE), sp_w_ref[...],
                     preferred_element_type=jnp.float32) + sp_b_ref[...]  # (T, C)
    u = level_ref[0] - s_proj                                             # (T, C)
    lvl = (lvl_init_ref[...]
           + jnp.sum(kt_main_ref[...] * u[None, :, :], axis=1)
           + jnp.sum(kt_aux_ref[...] * g_proj[None, :, :], axis=1))       # (T, C)
    lvl_out_ref[0] = lvl.astype(lvl_out_ref.dtype)


# ----------------------------- Pallas wrappers ------------------------------

def _choose_bm(M):
    """Row-block size and (possibly padded) row count."""
    if M <= 512:
        return M, M
    for bm in (512, 256, 128):
        if M % bm == 0:
            return bm, M
    bm = 512
    return bm, ((M + bm - 1) // bm) * bm


def pallas_linear(x, w, b=None, act=None):
    """x: [..., K]; w: [K, N] (cast to bf16 here); b: [N] or None."""
    lead = x.shape[:-1]
    K = x.shape[-1]
    N = w.shape[1]
    x2 = x.reshape(-1, K)
    M = x2.shape[0]
    bm, Mp = _choose_bm(M)
    if Mp != M:
        x2 = jnp.pad(x2, ((0, Mp - M), (0, 0)))
    wb = w.astype(MXU_DTYPE)
    if b is not None:
        out = pl.pallas_call(
            functools.partial(_linear_kernel, act=act),
            out_shape=jax.ShapeDtypeStruct((Mp, N), jnp.float32),
            grid=(Mp // bm,),
            in_specs=[pl.BlockSpec((bm, K), lambda i: (i, 0)),
                      pl.BlockSpec((K, N), lambda i: (0, 0)),
                      pl.BlockSpec((1, N), lambda i: (0, 0))],
            out_specs=pl.BlockSpec((bm, N), lambda i: (i, 0)),
            compiler_params=_cparams(),
        )(x2, wb, b.reshape(1, N))
    else:
        out = pl.pallas_call(
            functools.partial(_linear_nobias_kernel, act=act),
            out_shape=jax.ShapeDtypeStruct((Mp, N), jnp.float32),
            grid=(Mp // bm,),
            in_specs=[pl.BlockSpec((bm, K), lambda i: (i, 0)),
                      pl.BlockSpec((K, N), lambda i: (0, 0))],
            out_specs=pl.BlockSpec((bm, N), lambda i: (i, 0)),
            compiler_params=_cparams(),
        )(x2, wb)
    if Mp != M:
        out = out[:M]
    return out.reshape(*lead, N)


def pallas_conv_embed(x, w3):
    """ETSEmbedding: Conv1d(c_in->d_model, k=3, circular padding, no bias),
    realized as a single (B*L, 3C) x (3C, D) matmul."""
    B, L, C = x.shape
    D = w3.shape[-1]
    xp = jnp.concatenate([x[:, -1:, :], x, x[:, :1, :]], axis=1)      # circular pad
    win = jnp.concatenate([xp[:, k:k + L, :] for k in range(3)], axis=-1)
    return pallas_linear(win, w3.reshape(3 * C, D))                   # (B, L, D)


def _growth_constants(lp, T, nhead):
    """Batch-independent ES constants for the growth path.

    The first-difference (with z0) and the v0 init term are folded into a
    modified Toeplitz matrix applied directly to the in_proj output, and a
    per-time-step constant.  Also builds the row-shifted version used by the
    LevelLayer (growth[:, :-1]) and g_head = out_proj(v0)."""
    HD = lp["in_w"].shape[1]
    dh = HD // nhead
    D = lp["out_w"].shape[1]
    alpha = jax.nn.sigmoid(lp["es_sw"].reshape(-1))                    # (H,)
    t = jnp.arange(T, dtype=jnp.float32)
    diff = t[:, None] - t[None, :]                                     # t - s
    a = alpha[:, None, None]
    pos = jnp.maximum(diff - 1.0, 0.0)[None]
    kern2 = jnp.where(diff[None] == 0, 1.0 - a,
                      jnp.where(diff[None] > 0,
                                -(1.0 - a) ** 2 * a ** pos, 0.0))      # (H,T,T)
    kern3 = jnp.concatenate(
        [jnp.zeros((nhead, 1, T), jnp.float32), kern2[:, :-1, :]], axis=1)
    kern_cat = jnp.concatenate([kern2, kern3], axis=1)                 # (H,2T,T)

    out_wh = lp["out_w"].reshape(nhead, dh, D)
    v0p = jnp.einsum("hd,hdn->hn", lp["es_v0"], out_wh)                # (H, D)
    z0p = jnp.einsum("hd,hdn->hn", lp["z0"], out_wh)                   # (H, D)
    init_w = alpha[:, None] ** (t[None, :] + 1.0)                      # a^{t+1}
    z0_w = (1.0 - alpha)[:, None] * alpha[:, None] ** t[None, :]       # (1-a)a^t
    gconst = (lp["out_b"][None, :]
              + jnp.einsum("ht,hn->tn", init_w, v0p)
              - jnp.einsum("ht,hn->tn", z0_w, z0p))                    # (T, D)
    g_head = lp["es_v0"].reshape(1, HD) @ lp["out_w"] + lp["out_b"][None, :]
    gconst_prev = jnp.concatenate([g_head, gconst[:-1]], axis=0)       # (T, D)
    gconst_cat = jnp.concatenate([gconst, gconst_prev], axis=0)        # (2T, D)
    return kern_cat, gconst_cat, out_wh.astype(MXU_DTYPE)


def _level_constants(lp, T, c_out):
    """ES (with aux) Toeplitz matrices and init term for the LevelLayer,
    laid out (t, s, c) so the kernel uses a broadcast-multiply-reduce."""
    alpha = jax.nn.sigmoid(lp["lvl_sw"].reshape(-1))                   # (C,)
    t = jnp.arange(T, dtype=jnp.float32)
    d3 = (t[:, None] - t[None, :])[:, :, None]                         # (T,T,1)
    a = alpha[None, None, :]
    pw = a ** jnp.maximum(d3, 0.0)
    kt_main = jnp.where(d3 >= 0, (1.0 - a) * pw, 0.0)                  # (1-a)a^{t-s}
    kt_aux = jnp.where(d3 >= 0, a * pw, 0.0)                           # a^{t-s+1}
    lvl_init = (alpha[None, :] ** (t[:, None] + 1.0)) * lp["lvl_v0"].reshape(1, c_out)
    return kt_main, kt_aux, lvl_init


def pallas_encoder_layer(res, level, amp, phase, freq, lp, cfg):
    """One fused ETSformer encoder layer (incl. LevelLayer), grid over batch.

    Returns (res_new [B,T,D], level_new [B,T,C],
             growth_last [B,1,D], season_tail [B,P,D])."""
    B, T, D = res.shape
    C = level.shape[-1]
    P = cfg["pred_len"]
    H = cfg["n_heads"]
    F = amp.shape[1]
    dff = lp["ff_w1"].shape[1]
    HD = lp["in_w"].shape[1]
    dh = HD // H

    kern_cat, gconst_cat, out_wh = _growth_constants(lp, T, H)
    kt_main, kt_aux, lvl_init = _level_constants(lp, T, C)

    in_specs = [
        pl.BlockSpec((1, T, D), lambda b: (b, 0, 0)),        # res
        pl.BlockSpec((1, F, D), lambda b: (b, 0, 0)),        # amp
        pl.BlockSpec((1, F, D), lambda b: (b, 0, 0)),        # phase
        pl.BlockSpec((1, F, D), lambda b: (b, 0, 0)),        # freq
        pl.BlockSpec((1, T, C), lambda b: (b, 0, 0)),        # level
        pl.BlockSpec((D, HD), lambda b: (0, 0)),             # in_w (bf16)
        pl.BlockSpec((1, HD), lambda b: (0, 0)),             # in_b
        pl.BlockSpec((H, dh, D), lambda b: (0, 0, 0)),       # out_w per head (bf16)
        pl.BlockSpec((H, 2 * T, T), lambda b: (0, 0, 0)),    # ES Toeplitz (f32)
        pl.BlockSpec((2 * T, D), lambda b: (0, 0)),          # growth constants
        pl.BlockSpec((1, D), lambda b: (0, 0)),              # ln1_g
        pl.BlockSpec((1, D), lambda b: (0, 0)),              # ln1_b
        pl.BlockSpec((D, dff), lambda b: (0, 0)),            # ff_w1 (bf16)
        pl.BlockSpec((dff, D), lambda b: (0, 0)),            # ff_w2 (bf16)
        pl.BlockSpec((1, D), lambda b: (0, 0)),              # ln2_g
        pl.BlockSpec((1, D), lambda b: (0, 0)),              # ln2_b
        pl.BlockSpec((D, C), lambda b: (0, 0)),              # gp_w (bf16)
        pl.BlockSpec((1, C), lambda b: (0, 0)),              # gp_b
        pl.BlockSpec((D, C), lambda b: (0, 0)),              # sp_w (bf16)
        pl.BlockSpec((1, C), lambda b: (0, 0)),              # sp_b
        pl.BlockSpec((T, T, C), lambda b: (0, 0, 0)),        # level ES main (f32)
        pl.BlockSpec((T, T, C), lambda b: (0, 0, 0)),        # level ES aux  (f32)
        pl.BlockSpec((T, C), lambda b: (0, 0)),              # level ES init
    ]
    out_specs = (
        pl.BlockSpec((1, T, D), lambda b: (b, 0, 0)),
        pl.BlockSpec((1, T, C), lambda b: (b, 0, 0)),
        pl.BlockSpec((1, 1, D), lambda b: (b, 0, 0)),
        pl.BlockSpec((1, P, D), lambda b: (b, 0, 0)),
    )
    out_shape = (
        jax.ShapeDtypeStruct((B, T, D), jnp.float32),
        jax.ShapeDtypeStruct((B, T, C), jnp.float32),
        jax.ShapeDtypeStruct((B, 1, D), jnp.float32),
        jax.ShapeDtypeStruct((B, P, D), jnp.float32),
    )
    return pl.pallas_call(
        functools.partial(_enc_layer_kernel, nhead=H, act=cfg["activation"]),
        out_shape=out_shape,
        grid=(B,),
        in_specs=in_specs,
        out_specs=out_specs,
        compiler_params=_cparams(),
    )(res, amp, phase, freq, level,
      lp["in_w"].astype(MXU_DTYPE), lp["in_b"].reshape(1, HD),
      out_wh, kern_cat, gconst_cat,
      lp["ln1_g"].reshape(1, D), lp["ln1_b"].reshape(1, D),
      lp["ff_w1"].astype(MXU_DTYPE), lp["ff_w2"].astype(MXU_DTYPE),
      lp["ln2_g"].reshape(1, D), lp["ln2_b"].reshape(1, D),
      lp["gp_w"].astype(MXU_DTYPE), lp["gp_b"].reshape(1, C),
      lp["sp_w"].astype(MXU_DTYPE), lp["sp_b"].reshape(1, C),
      kt_main, kt_aux, lvl_init)


# ----------------------------- plain-JAX glue --------------------------------

def fourier_topk(x, k_top):
    """rfft + data-dependent top-K frequency selection (kept in XLA).
    Returns amp / phase / freq of the K positive frequencies: (B, K, D)."""
    B, T, D = x.shape
    xf = jnp.fft.rfft(x, axis=1)
    if T % 2 == 0:
        xf = xf[:, 1:-1]
        f = jnp.fft.rfftfreq(T)[1:-1]
    else:
        xf = xf[:, 1:]
        f = jnp.fft.rfftfreq(T)[1:]
    f = f.astype(jnp.float32)
    mag = jnp.abs(xf)                                   # (B, F, D)
    magT = jnp.transpose(mag, (0, 2, 1))                # (B, D, F)
    _, idx = jax.lax.top_k(magT, k_top)                 # (B, D, K)
    xfT = jnp.transpose(xf, (0, 2, 1))                  # (B, D, F)
    xf_top = jnp.take_along_axis(xfT, idx, axis=2)      # (B, D, K)
    xf_top = jnp.transpose(xf_top, (0, 2, 1))           # (B, K, D)
    f_top = jnp.transpose(f[idx], (0, 2, 1))            # (B, K, D)
    amp = (jnp.abs(xf_top) / T).astype(jnp.float32)
    phase = jnp.angle(xf_top).astype(jnp.float32)
    return amp, phase, f_top


def damping_layer(growth_last, raw_df, nhead, pred_len):
    B, _, D = growth_last.shape
    dfac = jax.nn.sigmoid(raw_df)                                     # (1, H)
    powers = jnp.arange(1, pred_len + 1, dtype=jnp.float32)[:, None]  # (P, 1)
    dampf = jnp.cumsum(dfac ** powers, axis=0)                        # (P, H)
    x = jnp.broadcast_to(growth_last, (B, pred_len, D))
    x = x.reshape(B, pred_len, nhead, D // nhead) * dampf[None, :, :, None]
    return x.reshape(B, pred_len, D)


def etsformer_forward(history_data, future_data, params, cfg):
    """history_data: [B, L1, N, C]; returns preds [B, L2, N, 1] (eval mode)."""
    # TODO(synk): train-mode Transform (random scale/shift/jitter) and dropout
    # are stochastic train-only ops and are intentionally identity here.
    del future_data  # only its length is implied by pred_len
    x_enc = history_data[:, :, :, 0].astype(jnp.float32)              # (B, T, N)
    B = x_enc.shape[0]
    P, D = cfg["pred_len"], cfg["d_model"]

    res = pallas_conv_embed(x_enc, params["embed_w"])                 # (B, T, D)
    level = x_enc

    growth_repr = jnp.zeros((B, P, D), jnp.float32)
    season_repr = jnp.zeros((B, P, D), jnp.float32)
    for lp, dp in zip(params["enc_layers"], params["dec_layers"]):
        amp, phase, freq = fourier_topk(res, cfg["K"])
        res, level, g_last, s_tail = pallas_encoder_layer(
            res, level, amp, phase, freq, lp, cfg)
        growth_repr = growth_repr + damping_layer(g_last, dp["damp"],
                                                  cfg["n_heads"], P)
        season_repr = season_repr + s_tail

    # pred(growth) + pred(season) == (growth + season) @ W + 2b (shared weights)
    proj = pallas_linear(growth_repr + season_repr,
                         params["pred_w"], 2.0 * params["pred_b"])    # (B, P, c)
    preds = level[:, -1:] + proj                                      # (B, P, c_out)
    return preds[..., None]                                           # (B, P, c_out, 1)


# ----------------------------- parameters -----------------------------------

def init_params(key, cfg):
    def nrm(k, shape, scale=0.1):
        return scale * jax.random.normal(k, shape, dtype=jnp.float32)

    keys = iter(jax.random.split(key, 256))
    D, H = cfg["d_model"], cfg["n_heads"]
    dff, cin, cout = cfg["d_ff"], cfg["enc_in"], cfg["c_out"]
    dh = D // H
    params = {"embed_w": nrm(next(keys), (3, cin, D), 0.3)}   # Conv1d weight [k, C, D]
    enc = []
    for _ in range(cfg["e_layers"]):
        enc.append({
            # GrowthLayer
            "in_w": nrm(next(keys), (D, H * dh)),
            "in_b": nrm(next(keys), (H * dh,)),
            "z0": nrm(next(keys), (H, dh), 1.0),
            "es_sw": nrm(next(keys), (H, 1), 1.0),
            "es_v0": nrm(next(keys), (H, dh), 1.0),
            "out_w": nrm(next(keys), (H * dh, D)),
            "out_b": nrm(next(keys), (D,)),
            # LevelLayer
            "lvl_sw": nrm(next(keys), (cout, 1), 1.0),
            "lvl_v0": nrm(next(keys), (cout, 1), 1.0),
            "gp_w": nrm(next(keys), (D, cout)),
            "gp_b": nrm(next(keys), (cout,)),
            "sp_w": nrm(next(keys), (D, cout)),
            "sp_b": nrm(next(keys), (cout,)),
            # Feedforward (bias=False) + LayerNorms
            "ff_w1": nrm(next(keys), (D, dff)),
            "ff_w2": nrm(next(keys), (dff, D)),
            "ln1_g": jnp.ones((D,), jnp.float32),
            "ln1_b": jnp.zeros((D,), jnp.float32),
            "ln2_g": jnp.ones((D,), jnp.float32),
            "ln2_b": jnp.zeros((D,), jnp.float32),
        })
    params["enc_layers"] = enc
    params["dec_layers"] = [{"damp": nrm(next(keys), (1, H), 1.0)}
                            for _ in range(cfg["d_layers"])]
    params["pred_w"] = nrm(next(keys), (D, cout))
    params["pred_b"] = nrm(next(keys), (cout,))
    return params


# ----------------------------- main ------------------------------------------

if __name__ == "__main__":
    cfg = dict(seq_len=16, pred_len=8, e_layers=2, d_layers=2, enc_in=4,
               d_model=32, dropout=0.1, n_heads=4, c_out=4, K=3, d_ff=64,
               sigma=0.2, activation="sigmoid", output_attention=False)
    assert cfg["e_layers"] == cfg["d_layers"]

    key = jax.random.PRNGKey(0)
    k_hist, k_fut, k_par = jax.random.split(key, 3)
    B, C = 2, 2
    history_data = jax.random.normal(
        k_hist, (B, cfg["seq_len"], cfg["enc_in"], C), dtype=jnp.float32)
    future_data = jax.random.normal(
        k_fut, (B, cfg["pred_len"], cfg["enc_in"], C), dtype=jnp.float32)

    params = init_params(k_par, cfg)
    fwd = jax.jit(lambda h, f, p: etsformer_forward(h, f, p, cfg))
    out = jax.block_until_ready(fwd(history_data, future_data, params))

    assert out.shape == (B, cfg["pred_len"], cfg["c_out"], 1), out.shape
    assert bool(jnp.all(jnp.isfinite(out)))
    print("KERNEL_OK")
</pallas_src>

<mosaic_0001>
module attributes {stable_mosaic.version = 11 : i64} {
  func.func @_linear_nobias_kernel(%arg0: i32, %arg1: memref<32x12xf32, #tpu.memory_space<vmem>>, %arg2: memref<12x32xbf16, #tpu.memory_space<vmem>>, %arg3: memref<32x32xf32, #tpu.memory_space<vmem>>) attributes {dimension_semantics = [#tpu.dimension_semantics<parallel>], iteration_bounds = array<i64: 1>, scalar_prefetch = 0 : i64, scratch_operands = 0 : i64, tpu.core_type = #tpu.core_type<tc>, window_params = [{transform_indices = @transform_0, window_bounds = array<i64: 32, 12>}, {pipeline_mode = #tpu.pipeline_mode<synchronous>, transform_indices = @transform_1, window_bounds = array<i64: 12, 32>}, {transform_indices = @transform_2, window_bounds = array<i64: 32, 32>}]} {
    %c0 = arith.constant 0 : index
    %c0_0 = arith.constant 0 : index
    %0 = vector.load %arg1[%c0, %c0_0] : memref<32x12xf32, #tpu.memory_space<vmem>>, vector<32x12xf32>
    %1 = arith.truncf %0 : vector<32x12xf32> to vector<32x12xbf16>
    %c0_1 = arith.constant 0 : index
    %c0_2 = arith.constant 0 : index
    %2 = vector.load %arg2[%c0_1, %c0_2] : memref<12x32xbf16, #tpu.memory_space<vmem>>, vector<12x32xbf16>
    %cst = arith.constant dense<0.000000e+00> : vector<32x32xf32>
    %3 = tpu.matmul %1, %2, %cst {dimension_numbers = #tpu.dot_dimension_numbers<[1], [0], [0], [1], [0, 0, 1, 1], [], []>} : vector<32x12xbf16>, vector<12x32xbf16>, vector<32x32xf32> -> vector<32x32xf32>
    %c0_3 = arith.constant 0 : index
    %c0_4 = arith.constant 0 : index
    %4 = vector.load %arg3[%c0_3, %c0_4] : memref<32x32xf32, #tpu.memory_space<vmem>>, vector<32x32xf32>
    tpu.vector_store %arg3[%c0_3, %c0_4], %3 {strides = array<i32>} : memref<32x32xf32, #tpu.memory_space<vmem>>, vector<32x32xf32>,
    return
  }
  func.func @transform_0(%arg0: i32) -> (i32, i32) {
    %c0_i32 = arith.constant 0 : i32
    %c0_i32_0 = arith.constant 0 : i32
    return %arg0, %c0_i32 : i32, i32
  }
  func.func @transform_1(%arg0: i32) -> (i32, i32) {
    %c0_i32 = arith.constant 0 : i32
    %c0_i32_0 = arith.constant 0 : i32
    %c0_i32_1 = arith.constant 0 : i32
    return %c0_i32, %c0_i32_0 : i32, i32
  }
  func.func @transform_2(%arg0: i32) -> (i32, i32) {
    %c0_i32 = arith.constant 0 : i32
    %c0_i32_0 = arith.constant 0 : i32
    return %arg0, %c0_i32 : i32, i32
  }
}

module attributes {stable_mosaic.version = 11 : i64} {
  func.func @_enc_layer_kernel(%arg0: i32, %arg1: memref<1x16x32xf32, #tpu.memory_space<vmem>>, %arg2: memref<1x3x32xf32, #tpu.memory_space<vmem>>, %arg3: memref<1x3x32xf32, #tpu.memory_space<vmem>>, %arg4: memref<1x3x32xf32, #tpu.memory_space<vmem>>, %arg5: memref<1x16x4xf32, #tpu.memory_space<vmem>>, %arg6: memref<32x32xbf16, #tpu.memory_space<vmem>>, %arg7: memref<1x32xf32, #tpu.memory_space<vmem>>, %arg8: memref<4x8x32xbf16, #tpu.memory_space<vmem>>, %arg9: memref<4x32x16xf32, #tpu.memory_space<vmem>>, %arg10: memref<32x32xf32, #tpu.memory_space<vmem>>, %arg11: memref<1x32xf32, #tpu.memory_space<vmem>>, %arg12: memref<1x32xf32, #tpu.memory_space<vmem>>, %arg13: memref<32x64xbf16, #tpu.memory_space<vmem>>, %arg14: memref<64x32xbf16, #tpu.memory_space<vmem>>, %arg15: memref<1x32xf32, #tpu.memory_space<vmem>>, %arg16: memref<1x32xf32, #tpu.memory_space<vmem>>, %arg17: memref<32x4xbf16, #tpu.memory_space<vmem>>, %arg18: memref<1x4xf32, #tpu.memory_space<vmem>>, %arg19: memref<32x4xbf16, #tpu.memory_space<vmem>>, %arg20: memref<1x4xf32, #tpu.memory_space<vmem>>, %arg21: memref<16x16x4xf32, #tpu.memory_space<vmem>>, %arg22: memref<16x16x4xf32, #tpu.memory_space<vmem>>, %arg23: memref<16x4xf32, #tpu.memory_space<vmem>>, %arg24: memref<1x16x32xf32, #tpu.memory_space<vmem>>, %arg25: memref<1x16x4xf32, #tpu.memory_space<vmem>>, %arg26: memref<1x1x32xf32, #tpu.memory_space<vmem>>, %arg27: memref<1x8x32xf32, #tpu.memory_space<vmem>>) attributes {dimension_semantics = [#tpu.dimension_semantics<parallel>], iteration_bounds = array<i64: 2>, scalar_prefetch = 0 : i64, scratch_operands = 0 : i64, tpu.core_type = #tpu.core_type<tc>, window_params = [{transform_indices = @transform_0, window_bounds = array<i64: 1, 16, 32>}, {transform_indices = @transform_1, window_bounds = array<i64: 1, 3, 32>}, {transform_indices = @transform_2, window_bounds = array<i64: 1, 3, 32>}, {transform_indices = @transform_3, window_bounds = array<i64: 1, 3, 32>}, {transform_indices = @transform_4, window_bounds = array<i64: 1, 16, 4>}, {pipeline_mode = #tpu.pipeline_mode<synchronous>, transform_indices = @transform_5, window_bounds = array<i64: 32, 32>}, {pipeline_mode = #tpu.pipeline_mode<synchronous>, transform_indices = @transform_6, window_bounds = array<i64: 1, 32>}, {pipeline_mode = #tpu.pipeline_mode<synchronous>, transform_indices = @transform_7, window_bounds = array<i64: 4, 8, 32>}, {pipeline_mode = #tpu.pipeline_mode<synchronous>, transform_indices = @transform_8, window_bounds = array<i64: 4, 32, 16>}, {pipeline_mode = #tpu.pipeline_mode<synchronous>, transform_indices = @transform_9, window_bounds = array<i64: 32, 32>}, {pipeline_mode = #tpu.pipeline_mode<synchronous>, transform_indices = @transform_10, window_bounds = array<i64: 1, 32>}, {pipeline_mode = #tpu.pipeline_mode<synchronous>, transform_indices = @transform_11, window_bounds = array<i64: 1, 32>}, {pipeline_mode = #tpu.pipeline_mode<synchronous>, transform_indices = @transform_12, window_bounds = array<i64: 32, 64>}, {pipeline_mode = #tpu.pipeline_mode<synchronous>, transform_indices = @transform_13, window_bounds = array<i64: 64, 32>}, {pipeline_mode = #tpu.pipeline_mode<synchronous>, transform_indices = @transform_14, window_bounds = array<i64: 1, 32>}, {pipeline_mode = #tpu.pipeline_mode<synchronous>, transform_indices = @transform_15, window_bounds = array<i64: 1, 32>}, {pipeline_mode = #tpu.pipeline_mode<synchronous>, transform_indices = @transform_16, window_bounds = array<i64: 32, 4>}, {pipeline_mode = #tpu.pipeline_mode<synchronous>, transform_indices = @transform_17, window_bounds = array<i64: 1, 4>}, {pipeline_mode = #tpu.pipeline_mode<synchronous>, transform_indices = @transform_18, window_bounds = array<i64: 32, 4>}, {pipeline_mode = #tpu.pipeline_mode<synchronous>, transform_indices = @transform_19, window_bounds = array<i64: 1, 4>}, {pipeline_mode = #tpu.pipeline_mode<synchronous>, transform_indices = @transform_20, window_bounds = array<i64: 16, 16, 4>}, {pipeline_mode = #tpu.pipeline_mode<synchronous>, transform_indices = @transform_21, window_bounds = array<i64: 16, 16, 4>}, {pipeline_mode = #tpu.pipeline_mode<synchronous>, transform_indices = @transform_22, window_bounds = array<i64: 16, 4>}, {transform_indices = @transform_23, window_bounds = array<i64: 1, 16, 32>}, {transform_indices = @transform_24, window_bounds = array<i64: 1, 16, 4>}, {transform_indices = @transform_25, window_bounds = array<i64: 1, 1, 32>}, {transform_indices = @transform_26, window_bounds = array<i64: 1, 8, 32>}]} {
    %0 = tpu.iota {dimensions = array<i32: 0>} : vector<24x32xi32>
    %1 = arith.sitofp %0 : vector<24x32xi32> to vector<24x32xf32>
    %c0 = arith.constant 0 : index
    %c0_0 = arith.constant 0 : index
    %c0_1 = arith.constant 0 : index
    %2 = vector.load %arg4[%c0, %c0_0, %c0_1] : memref<1x3x32xf32, #tpu.memory_space<vmem>>, vector<1x3x32xf32>
    %3 = vector.shape_cast %2 : vector<1x3x32xf32> to vector<3x32xf32>
    %c0_2 = arith.constant 0 : index
    %c0_3 = arith.constant 0 : index
    %c0_4 = arith.constant 0 : index
    %4 = vector.load %arg3[%c0_2, %c0_3, %c0_4] : memref<1x3x32xf32, #tpu.memory_space<vmem>>, vector<1x3x32xf32>
    %5 = vector.shape_cast %4 : vector<1x3x32xf32> to vector<3x32xf32>
    %c0_5 = arith.constant 0 : index
    %c0_6 = arith.constant 0 : index
    %c0_7 = arith.constant 0 : index
    %6 = vector.load %arg2[%c0_5, %c0_6, %c0_7] : memref<1x3x32xf32, #tpu.memory_space<vmem>>, vector<1x3x32xf32>
    %7 = vector.shape_cast %6 : vector<1x3x32xf32> to vector<3x32xf32>
    %8 = vector.shape_cast %3 : vector<3x32xf32> to vector<3x1x32xf32>
    %cst = arith.constant 6.28318548 : f32
    %9 = vector.broadcast %cst : f32 to vector<3x1x32xf32>
    %10 = arith.mulf %9, %8 : vector<3x1x32xf32>
    %11 = vector.shape_cast %1 : vector<24x32xf32> to vector<1x24x32xf32>
    %12 = vector.broadcast %10 : vector<3x1x32xf32> to vector<3x24x32xf32>
    %13 = vector.broadcast %11 : vector<1x24x32xf32> to vector<3x24x32xf32>
    %14 = arith.mulf %12, %13 : vector<3x24x32xf32>
    %15 = vector.shape_cast %5 : vector<3x32xf32> to vector<3x1x32xf32>
    %16 = vector.broadcast %15 : vector<3x1x32xf32> to vector<3x24x32xf32>
    %17 = arith.addf %14, %16 : vector<3x24x32xf32>
    %18 = vector.shape_cast %7 : vector<3x32xf32> to vector<3x1x32xf32>
    %19 = math.cos %17 : vector<3x24x32xf32>
    %20 = vector.broadcast %18 : vector<3x1x32xf32> to vector<3x24x32xf32>
    %21 = arith.mulf %20, %19 : vector<3x24x32xf32>
    %cst_8 = arith.constant dense<0.000000e+00> : vector<24x32xf32>
    %22 = vector.multi_reduction <add>, %21, %cst_8 [0] : vector<3x24x32xf32> to vector<24x32xf32>
    %cst_9 = arith.constant 2.000000e+00 : f32
    %23 = vector.broadcast %cst_9 : f32 to vector<24x32xf32>
    %24 = arith.mulf %23, %22 : vector<24x32xf32>
    %25 = vector.extract_strided_slice %24 {offsets = [0, 0], sizes = [16, 32], strides = [1, 1]} : vector<24x32xf32> to vector<16x32xf32>
    %26 = vector.extract_strided_slice %24 {offsets = [16, 0], sizes = [8, 32], strides = [1, 1]} : vector<24x32xf32> to vector<8x32xf32>
    %c0_10 = arith.constant 0 : index
    %c0_11 = arith.constant 0 : index
    %c0_12 = arith.constant 0 : index
    %27 = vector.load %arg27[%c0_10, %c0_11, %c0_12] : memref<1x8x32xf32, #tpu.memory_space<vmem>>, vector<1x8x32xf32>
    %28 = vector.shape_cast %27 : vector<1x8x32xf32> to vector<8x32xf32>
    %29 = vector.shape_cast %26 : vector<8x32xf32> to vector<1x8x32xf32>
    tpu.vector_store %arg27[%c0_10, %c0_11, %c0_12], %29 {strides = array<i32>} : memref<1x8x32xf32, #tpu.memory_space<vmem>>, vector<1x8x32xf32>,
    %c0_13 = arith.constant 0 : index
    %c0_14 = arith.constant 0 : index
    %c0_15 = arith.constant 0 : index
    %30 = vector.load %arg1[%c0_13, %c0_14, %c0_15] : memref<1x16x32xf32, #tpu.memory_space<vmem>>, vector<1x16x32xf32>
    %31 = vector.shape_cast %30 : vector<1x16x32xf32> to vector<16x32xf32>
    %32 = arith.subf %31, %25 : vector<16x32xf32>
    %33 = arith.truncf %32 : vector<16x32xf32> to vector<16x32xbf16>
    %c0_16 = arith.constant 0 : index
    %c0_17 = arith.constant 0 : index
    %34 = vector.load %arg6[%c0_16, %c0_17] : memref<32x32xbf16, #tpu.memory_space<vmem>>, vector<32x32xbf16>
    %cst_18 = arith.constant dense<0.000000e+00> : vector<16x32xf32>
    %35 = tpu.matmul %33, %34, %cst_18 {dimension_numbers = #tpu.dot_dimension_numbers<[1], [0], [0], [1], [0, 0, 1, 1], [], []>} : vector<16x32xbf16>, vector<32x32xbf16>, vector<16x32xf32> -> vector<16x32xf32>
    %c0_19 = arith.constant 0 : index
    %c0_20 = arith.constant 0 : index
    %36 = vector.load %arg7[%c0_19, %c0_20] : memref<1x32xf32, #tpu.memory_space<vmem>>, vector<1x32xf32>
    %37 = vector.broadcast %36 : vector<1x32xf32> to vector<16x32xf32>
    %38 = arith.addf %35, %37 : vector<16x32xf32>
    %c0_21 = arith.constant 0 : index
    %c0_22 = arith.constant 0 : index
    %39 = vector.load %arg10[%c0_21, %c0_22] : memref<32x32xf32, #tpu.memory_space<vmem>>, vector<32x32xf32>
    %40 = vector.extract_strided_slice %38 {offsets = [0, 0], sizes = [16, 8], strides = [1, 1]} : vector<16x32xf32> to vector<16x8xf32>
    %41 = arith.truncf %40 : vector<16x8xf32> to vector<16x8xbf16>
    %c0_23 = arith.constant 0 : index
    %c0_24 = arith.constant 0 : index
    %c0_25 = arith.constant 0 : index
    %42 = vector.load %arg8[%c0_23, %c0_24, %c0_25] : memref<4x8x32xbf16, #tpu.memory_space<vmem>>, vector<1x8x32xbf16>
    %43 = vector.shape_cast %42 : vector<1x8x32xbf16> to vector<8x32xbf16>
    %cst_26 = arith.constant dense<0.000000e+00> : vector<16x32xf32>
    %44 = tpu.matmul %41, %43, %cst_26 {dimension_numbers = #tpu.dot_dimension_numbers<[1], [0], [0], [1], [0, 0, 1, 1], [], []>} : vector<16x8xbf16>, vector<8x32xbf16>, vector<16x32xf32> -> vector<16x32xf32>
    %c0_27 = arith.constant 0 : index
    %c0_28 = arith.constant 0 : index
    %c0_29 = arith.constant 0 : index
    %45 = vector.load %arg9[%c0_27, %c0_28, %c0_29] : memref<4x32x16xf32, #tpu.memory_space<vmem>>, vector<1x32x16xf32>
    %46 = vector.shape_cast %45 : vector<1x32x16xf32> to vector<32x16xf32>
    %cst_30 = arith.constant dense<0.000000e+00> : vector<32x32xf32>
    %47 = tpu.matmul %46, %44, %cst_30 {dimension_numbers = #tpu.dot_dimension_numbers<[1], [0], [0], [1], [0, 0, 1, 1], [], []>} : vector<32x16xf32>, vector<16x32xf32>, vector<32x32xf32> -> vector<32x32xf32>
    %48 = arith.addf %39, %47 : vector<32x32xf32>
    %49 = vector.extract_strided_slice %38 {offsets = [0, 8], sizes = [16, 8], strides = [1, 1]} : vector<16x32xf32> to vector<16x8xf32>
    %50 = arith.truncf %49 : vector<16x8xf32> to vector<16x8xbf16>
    %c1 = arith.constant 1 : index
    %c0_31 = arith.constant 0 : index
    %c0_32 = arith.constant 0 : index
    %51 = vector.load %arg8[%c1, %c0_31, %c0_32] : memref<4x8x32xbf16, #tpu.memory_space<vmem>>, vector<1x8x32xbf16>
    %52 = vector.shape_cast %51 : vector<1x8x32xbf16> to vector<8x32xbf16>
    %cst_33 = arith.constant dense<0.000000e+00> : vector<16x32xf32>
    %53 = tpu.matmul %50, %52, %cst_33 {dimension_numbers = #tpu.dot_dimension_numbers<[1], [0], [0], [1], [0, 0, 1, 1], [], []>} : vector<16x8xbf16>, vector<8x32xbf16>, vector<16x32xf32> -> vector<16x32xf32>
    %c1_34 = arith.constant 1 : index
    %c0_35 = arith.constant 0 : index
    %c0_36 = arith.constant 0 : index
    %54 = vector.load %arg9[%c1_34, %c0_35, %c0_36] : memref<4x32x16xf32, #tpu.memory_space<vmem>>, vector<1x32x16xf32>
    %55 = vector.shape_cast %54 : vector<1x32x16xf32> to vector<32x16xf32>
    %cst_37 = arith.constant dense<0.000000e+00> : vector<32x32xf32>
    %56 = tpu.matmul %55, %53, %cst_37 {dimension_numbers = #tpu.dot_dimension_numbers<[1], [0], [0], [1], [0, 0, 1, 1], [], []>} : vector<32x16xf32>, vector<16x32xf32>, vector<32x32xf32> -> vector<32x32xf32>
    %57 = arith.addf %48, %56 : vector<32x32xf32>
    %58 = vector.extract_strided_slice %38 {offsets = [0, 16], sizes = [16, 8], strides = [1, 1]} : vector<16x32xf32> to vector<16x8xf32>
    %59 = arith.truncf %58 : vector<16x8xf32> to vector<16x8xbf16>
    %c2 = arith.constant 2 : index
    %c0_38 = arith.constant 0 : index
    %c0_39 = arith.constant 0 : index
    %60 = vector.load %arg8[%c2, %c0_38, %c0_39] : memref<4x8x32xbf16, #tpu.memory_space<vmem>>, vector<1x8x32xbf16>
    %61 = vector.shape_cast %60 : vector<1x8x32xbf16> to vector<8x32xbf16>
    %cst_40 = arith.constant dense<0.000000e+00> : vector<16x32xf32>
    %62 = tpu.matmul %59, %61, %cst_40 {dimension_numbers = #tpu.dot_dimension_numbers<[1], [0], [0], [1], [0, 0, 1, 1], [], []>} : vector<16x8xbf16>, vector<8x32xbf16>, vector<16x32xf32> -> vector<16x32xf32>
    %c2_41 = arith.constant 2 : index
    %c0_42 = arith.constant 0 : index
    %c0_43 = arith.constant 0 : index
    %63 = vector.load %arg9[%c2_41, %c0_42, %c0_43] : memref<4x32x16xf32, #tpu.memory_space<vmem>>, vector<1x32x16xf32>
    %64 = vector.shape_cast %63 : vector<1x32x16xf32> to vector<32x16xf32>
    %cst_44 = arith.constant dense<0.000000e+00> : vector<32x32xf32>
    %65 = tpu.matmul %64, %62, %cst_44 {dimension_numbers = #tpu.dot_dimension_numbers<[1], [0], [0], [1], [0, 0, 1, 1], [], []>} : vector<32x16xf32>, vector<16x32xf32>, vector<32x32xf32> -> vector<32x32xf32>
    %66 = arith.addf %57, %65 : vector<32x32xf32>
    %67 = vector.extract_strided_slice %38 {offsets = [0, 24], sizes = [16, 8], strides = [1, 1]} : vector<16x32xf32> to vector<16x8xf32>
    %68 = arith.truncf %67 : vector<16x8xf32> to vector<16x8xbf16>
    %c3 = arith.constant 3 : index
    %c0_45 = arith.constant 0 : index
    %c0_46 = arith.constant 0 : index
    %69 = vector.load %arg8[%c3, %c0_45, %c0_46] : memref<4x8x32xbf16, #tpu.memory_space<vmem>>, vector<1x8x32xbf16>
    %70 = vector.shape_cast %69 : vector<1x8x32xbf16> to vector<8x32xbf16>
    %cst_47 = arith.constant dense<0.000000e+00> : vector<16x32xf32>
    %71 = tpu.matmul %68, %70, %cst_47 {dimension_numbers = #tpu.dot_dimension_numbers<[1], [0], [0], [1], [0, 0, 1, 1], [], []>} : vector<16x8xbf16>, vector<8x32xbf16>, vector<16x32xf32> -> vector<16x32xf32>
    %c3_48 = arith.constant 3 : index
    %c0_49 = arith.constant 0 : index
    %c0_50 = arith.constant 0 : index
    %72 = vector.load %arg9[%c3_48, %c0_49, %c0_50] : memref<4x32x16xf32, #tpu.memory_space<vmem>>, vector<1x32x16xf32>
    %73 = vector.shape_cast %72 : vector<1x32x16xf32> to vector<32x16xf32>
    %cst_51 = arith.constant dense<0.000000e+00> : vector<32x32xf32>
    %74 = tpu.matmul %73, %71, %cst_51 {dimension_numbers = #tpu.dot_dimension_numbers<[1], [0], [0], [1], [0, 0, 1, 1], [], []>} : vector<32x16xf32>, vector<16x32xf32>, vector<32x32xf32> -> vector<32x32xf32>
    %75 = arith.addf %66, %74 : vector<32x32xf32>
    %76 = vector.extract_strided_slice %75 {offsets = [0, 0], sizes = [16, 32], strides = [1, 1]} : vector<32x32xf32> to vector<16x32xf32>
    %77 = vector.extract_strided_slice %75 {offsets = [16, 0], sizes = [16, 32], strides = [1, 1]} : vector<32x32xf32> to vector<16x32xf32>
    %78 = vector.extract_strided_slice %76 {offsets = [15, 0], sizes = [1, 32], strides = [1, 1]} : vector<16x32xf32> to vector<1x32xf32>
    %c0_52 = arith.constant 0 : index
    %c0_53 = arith.constant 0 : index
    %c0_54 = arith.constant 0 : index
    %79 = vector.load %arg26[%c0_52, %c0_53, %c0_54] : memref<1x1x32xf32, #tpu.memory_space<vmem>>, vector<1x1x32xf32>
    %80 = vector.shape_cast %79 : vector<1x1x32xf32> to vector<1x32xf32>
    %81 = vector.shape_cast %78 : vector<1x32xf32> to vector<1x1x32xf32>
    tpu.vector_store %arg26[%c0_52, %c0_53, %c0_54], %81 {strides = array<i32>} : memref<1x1x32xf32, #tpu.memory_space<vmem>>, vector<1x1x32xf32>,
    %82 = arith.subf %32, %76 : vector<16x32xf32>
    %c0_55 = arith.constant 0 : index
    %c0_56 = arith.constant 0 : index
    %83 = vector.load %arg11[%c0_55, %c0_56] : memref<1x32xf32, #tpu.memory_space<vmem>>, vector<1x32xf32>
    %c0_57 = arith.constant 0 : index
    %c0_58 = arith.constant 0 : index
    %84 = vector.load %arg12[%c0_57, %c0_58] : memref<1x32xf32, #tpu.memory_space<vmem>>, vector<1x32xf32>
    %cst_59 = arith.constant dense<0.000000e+00> : vector<16xf32>
    %85 = vector.multi_reduction <add>, %82, %cst_59 [1] : vector<16x32xf32> to vector<16xf32>
    %86 = vector.shape_cast %85 : vector<16xf32> to vector<16x1xf32>
    %cst_60 = arith.constant 3.200000e+01 : f32
    %87 = vector.broadcast %cst_60 : f32 to vector<16x1xf32>
    %88 = arith.divf %86, %87 : vector<16x1xf32>
    %89 = vector.broadcast %88 : vector<16x1xf32> to vector<16x32xf32>
    %90 = arith.subf %82, %89 : vector<16x32xf32>
    %91 = arith.mulf %90, %90 : vector<16x32xf32>
    %cst_61 = arith.constant dense<0.000000e+00> : vector<16xf32>
    %92 = vector.multi_reduction <add>, %91, %cst_61 [1] : vector<16x32xf32> to vector<16xf32>
    %93 = vector.shape_cast %92 : vector<16xf32> to vector<16x1xf32>
    %cst_62 = arith.constant 3.200000e+01 : f32
    %94 = vector.broadcast %cst_62 : f32 to vector<16x1xf32>
    %95 = arith.divf %93, %94 : vector<16x1xf32>
    %96 = vector.broadcast %88 : vector<16x1xf32> to vector<16x32xf32>
    %97 = arith.subf %82, %96 : vector<16x32xf32>
    %cst_63 = arith.constant 9.99999974E-6 : f32
    %98 = vector.broadcast %cst_63 : f32 to vector<16x1xf32>
    %99 = arith.addf %95, %98 : vector<16x1xf32>
    %100 = math.rsqrt %99 : vector<16x1xf32>
    %101 = vector.broadcast %100 : vector<16x1xf32> to vector<16x32xf32>
    %102 = arith.mulf %97, %101 : vector<16x32xf32>
    %103 = vector.broadcast %83 : vector<1x32xf32> to vector<16x32xf32>
    %104 = arith.mulf %102, %103 : vector<16x32xf32>
    %105 = vector.broadcast %84 : vector<1x32xf32> to vector<16x32xf32>
    %106 = arith.addf %104, %105 : vector<16x32xf32>
    %107 = arith.truncf %106 : vector<16x32xf32> to vector<16x32xbf16>
    %c0_64 = arith.constant 0 : index
    %c0_65 = arith.constant 0 : index
    %108 = vector.load %arg13[%c0_64, %c0_65] : memref<32x64xbf16, #tpu.memory_space<vmem>>, vector<32x64xbf16>
    %cst_66 = arith.constant dense<0.000000e+00> : vector<16x64xf32>
    %109 = tpu.matmul %107, %108, %cst_66 {dimension_numbers = #tpu.dot_dimension_numbers<[1], [0], [0], [1], [0, 0, 1, 1], [], []>} : vector<16x32xbf16>, vector<32x64xbf16>, vector<16x64xf32> -> vector<16x64xf32>
    %110 = arith.negf %109 : vector<16x64xf32>
    %111 = math.exp %110 : vector<16x64xf32>
    %cst_67 = arith.constant 1.000000e+00 : f32
    %112 = vector.broadcast %cst_67 : f32 to vector<16x64xf32>
    %113 = arith.addf %112, %111 : vector<16x64xf32>
    %114 = arith.divf %112, %113 : vector<16x64xf32>
    %115 = arith.truncf %114 : vector<16x64xf32> to vector<16x64xbf16>
    %c0_68 = arith.constant 0 : index
    %c0_69 = arith.constant 0 : index
    %116 = vector.load %arg14[%c0_68, %c0_69] : memref<64x32xbf16, #tpu.memory_space<vmem>>, vector<64x32xbf16>
    %cst_70 = arith.constant dense<0.000000e+00> : vector<16x32xf32>
    %117 = tpu.matmul %115, %116, %cst_70 {dimension_numbers = #tpu.dot_dimension_numbers<[1], [0], [0], [1], [0, 0, 1, 1], [], []>} : vector<16x64xbf16>, vector<64x32xbf16>, vector<16x32xf32> -> vector<16x32xf32>
    %118 = arith.addf %106, %117 : vector<16x32xf32>
    %c0_71 = arith.constant 0 : index
    %c0_72 = arith.constant 0 : index
    %119 = vector.load %arg15[%c0_71, %c0_72] : memref<1x32xf32, #tpu.memory_space<vmem>>, vector<1x32xf32>
    %c0_73 = arith.constant 0 : index
    %c0_74 = arith.constant 0 : index
    %120 = vector.load %arg16[%c0_73, %c0_74] : memref<1x32xf32, #tpu.memory_space<vmem>>, vector<1x32xf32>
    %cst_75 = arith.constant dense<0.000000e+00> : vector<16xf32>
    %121 = vector.multi_reduction <add>, %118, %cst_75 [1] : vector<16x32xf32> to vector<16xf32>
    %122 = vector.shape_cast %121 : vector<16xf32> to vector<16x1xf32>
    %cst_76 = arith.constant 3.200000e+01 : f32
    %123 = vector.broadcast %cst_76 : f32 to vector<16x1xf32>
    %124 = arith.divf %122, %123 : vector<16x1xf32>
    %125 = vector.broadcast %124 : vector<16x1xf32> to vector<16x32xf32>
    %126 = arith.subf %118, %125 : vector<16x32xf32>
    %127 = arith.mulf %126, %126 : vector<16x32xf32>
    %cst_77 = arith.constant dense<0.000000e+00> : vector<16xf32>
    %128 = vector.multi_reduction <add>, %127, %cst_77 [1] : vector<16x32xf32> to vector<16xf32>
    %129 = vector.shape_cast %128 : vector<16xf32> to vector<16x1xf32>
    %cst_78 = arith.constant 3.200000e+01 : f32
    %130 = vector.broadcast %cst_78 : f32 to vector<16x1xf32>
    %131 = arith.divf %129, %130 : vector<16x1xf32>
    %132 = vector.broadcast %124 : vector<16x1xf32> to vector<16x32xf32>
    %133 = arith.subf %118, %132 : vector<16x32xf32>
    %cst_79 = arith.constant 9.99999974E-6 : f32
    %134 = vector.broadcast %cst_79 : f32 to vector<16x1xf32>
    %135 = arith.addf %131, %134 : vector<16x1xf32>
    %136 = math.rsqrt %135 : vector<16x1xf32>
    %137 = vector.broadcast %136 : vector<16x1xf32> to vector<16x32xf32>
    %138 = arith.mulf %133, %137 : vector<16x32xf32>
    %139 = vector.broadcast %119 : vector<1x32xf32> to vector<16x32xf32>
    %140 = arith.mulf %138, %139 : vector<16x32xf32>
    %141 = vector.broadcast %120 : vector<1x32xf32> to vector<16x32xf32>
    %142 = arith.addf %140, %141 : vector<16x32xf32>
    %c0_80 = arith.constant 0 : index
    %c0_81 = arith.constant 0 : index
    %c0_82 = arith.constant 0 : index
    %143 = vector.load %arg24[%c0_80, %c0_81, %c0_82] : memref<1x16x32xf32, #tpu.memory_space<vmem>>, vector<1x16x32xf32>
    %144 = vector.shape_cast %143 : vector<1x16x32xf32> to vector<16x32xf32>
    %145 = vector.shape_cast %142 : vector<16x32xf32> to vector<1x16x32xf32>
    tpu.vector_store %arg24[%c0_80, %c0_81, %c0_82], %145 {strides = array<i32>} : memref<1x16x32xf32, #tpu.memory_space<vmem>>, vector<1x16x32xf32>,
    %146 = arith.truncf %77 : vector<16x32xf32> to vector<16x32xbf16>
    %c0_83 = arith.constant 0 : index
    %c0_84 = arith.constant 0 : index
    %147 = vector.load %arg17[%c0_83, %c0_84] : memref<32x4xbf16, #tpu.memory_space<vmem>>, vector<32x4xbf16>
    %cst_85 = arith.constant dense<0.000000e+00> : vector<16x4xf32>
    %148 = tpu.matmul %146, %147, %cst_85 {dimension_numbers = #tpu.dot_dimension_numbers<[1], [0], [0], [1], [0, 0, 1, 1], [], []>} : vector<16x32xbf16>, vector<32x4xbf16>, vector<16x4xf32> -> vector<16x4xf32>
    %c0_86 = arith.constant 0 : index
    %c0_87 = arith.constant 0 : index
    %149 = vector.load %arg18[%c0_86, %c0_87] : memref<1x4xf32, #tpu.memory_space<vmem>>, vector<1x4xf32>
    %150 = vector.broadcast %149 : vector<1x4xf32> to vector<16x4xf32>
    %151 = arith.addf %148, %150 : vector<16x4xf32>
    %152 = arith.truncf %25 : vector<16x32xf32> to vector<16x32xbf16>
    %c0_88 = arith.constant 0 : index
    %c0_89 = arith.constant 0 : index
    %153 = vector.load %arg19[%c0_88, %c0_89] : memref<32x4xbf16, #tpu.memory_space<vmem>>, vector<32x4xbf16>
    %cst_90 = arith.constant dense<0.000000e+00> : vector<16x4xf32>
    %154 = tpu.matmul %152, %153, %cst_90 {dimension_numbers = #tpu.dot_dimension_numbers<[1], [0], [0], [1], [0, 0, 1, 1], [], []>} : vector<16x32xbf16>, vector<32x4xbf16>, vector<16x4xf32> -> vector<16x4xf32>
    %c0_91 = arith.constant 0 : index
    %c0_92 = arith.constant 0 : index
    %155 = vector.load %arg20[%c0_91, %c0_92] : memref<1x4xf32, #tpu.memory_space<vmem>>, vector<1x4xf32>
    %156 = vector.broadcast %155 : vector<1x4xf32> to vector<16x4xf32>
    %157 = arith.addf %154, %156 : vector<16x4xf32>
    %c0_93 = arith.constant 0 : index
    %c0_94 = arith.constant 0 : index
    %c0_95 = arith.constant 0 : index
    %158 = vector.load %arg5[%c0_93, %c0_94, %c0_95] : memref<1x16x4xf32, #tpu.memory_space<vmem>>, vector<1x16x4xf32>
    %159 = vector.shape_cast %158 : vector<1x16x4xf32> to vector<16x4xf32>
    %160 = arith.subf %159, %157 : vector<16x4xf32>
    %c0_96 = arith.constant 0 : index
    %c0_97 = arith.constant 0 : index
    %161 = vector.load %arg23[%c0_96, %c0_97] : memref<16x4xf32, #tpu.memory_space<vmem>>, vector<16x4xf32>
    %c0_98 = arith.constant 0 : index
    %c0_99 = arith.constant 0 : index
    %c0_100 = arith.constant 0 : index
    %162 = vector.load %arg21[%c0_98, %c0_99, %c0_100] : memref<16x16x4xf32, #tpu.memory_space<vmem>>, vector<16x16x4xf32>
    %163 = vector.shape_cast %160 : vector<16x4xf32> to vector<1x16x4xf32>
    %164 = vector.broadcast %163 : vector<1x16x4xf32> to vector<16x16x4xf32>
    %165 = arith.mulf %162, %164 : vector<16x16x4xf32>
    %cst_101 = arith.constant dense<0.000000e+00> : vector<16x4xf32>
    %166 = vector.multi_reduction <add>, %165, %cst_101 [1] : vector<16x16x4xf32> to vector<16x4xf32>
    %167 = arith.addf %161, %166 : vector<16x4xf32>
    %c0_102 = arith.constant 0 : index
    %c0_103 = arith.constant 0 : index
    %c0_104 = arith.constant 0 : index
    %168 = vector.load %arg22[%c0_102, %c0_103, %c0_104] : memref<16x16x4xf32, #tpu.memory_space<vmem>>, vector<16x16x4xf32>
    %169 = vector.shape_cast %151 : vector<16x4xf32> to vector<1x16x4xf32>
    %170 = vector.broadcast %169 : vector<1x16x4xf32> to vector<16x16x4xf32>
    %171 = arith.mulf %168, %170 : vector<16x16x4xf32>
    %cst_105 = arith.constant dense<0.000000e+00> : vector<16x4xf32>
    %172 = vector.multi_reduction <add>, %171, %cst_105 [1] : vector<16x16x4xf32> to vector<16x4xf32>
    %173 = arith.addf %167, %172 : vector<16x4xf32>
    %c0_106 = arith.constant 0 : index
    %c0_107 = arith.constant 0 : index
    %c0_108 = arith.constant 0 : index
    %174 = vector.load %arg25[%c0_106, %c0_107, %c0_108] : memref<1x16x4xf32, #tpu.memory_space<vmem>>, vector<1x16x4xf32>
    %175 = vector.shape_cast %174 : vector<1x16x4xf32> to vector<16x4xf32>
    %176 = vector.shape_cast %173 : vector<16x4xf32> to vector<1x16x4xf32>
    tpu.vector_store %arg25[%c0_106, %c0_107, %c0_108], %176 {strides = array<i32>} : memref<1x16x4xf32, #tpu.memory_space<vmem>>, vector<1x16x4xf32>,
    return
  }
  func.func @transform_0(%arg0: i32) -> (i32, i32, i32) {
    %c0_i32 = arith.constant 0 : i32
    %c0_i32_0 = arith.constant 0 : i32
    %c0_i32_1 = arith.constant 0 : i32
    return %arg0, %c0_i32, %c0_i32_0 : i32, i32, i32
  }
  func.func @transform_1(%arg0: i32) -> (i32, i32, i32) {
    %c0_i32 = arith.constant 0 : i32
    %c0_i32_0 = arith.constant 0 : i32
    %c0_i32_1 = arith.constant 0 : i32
    return %arg0, %c0_i32, %c0_i32_0 : i32, i32, i32
  }
  func.func @transform_2(%arg0: i32) -> (i32, i32, i32) {
    %c0_i32 = arith.constant 0 : i32
    %c0_i32_0 = arith.constant 0 : i32
    %c0_i32_1 = arith.constant 0 : i32
    return %arg0, %c0_i32, %c0_i32_0 : i32, i32, i32
  }
  func.func @transform_3(%arg0: i32) -> (i32, i32, i32) {
    %c0_i32 = arith.constant 0 : i32
    %c0_i32_0 = arith.constant 0 : i32
    %c0_i32_1 = arith.constant 0 : i32
    return %arg0, %c0_i32, %c0_i32_0 : i32, i32, i32
  }
  func.func @transform_4(%arg0: i32) -> (i32, i32, i32) {
    %c0_i32 = arith.constant 0 : i32
    %c0_i32_0 = arith.constant 0 : i32
    %c0_i32_1 = arith.constant 0 : i32
    return %arg0, %c0_i32, %c0_i32_0 : i32, i32, i32
  }
  func.func @transform_5(%arg0: i32) -> (i32, i32) {
    %c0_i32 = arith.constant 0 : i32
    %c0_i32_0 = arith.constant 0 : i32
    %c0_i32_1 = arith.constant 0 : i32
    return %c0_i32, %c0_i32_0 : i32, i32
  }
  func.func @transform_6(%arg0: i32) -> (i32, i32) {
    %c0_i32 = arith.constant 0 : i32
    %c0_i32_0 = arith.constant 0 : i32
    %c0_i32_1 = arith.constant 0 : i32
    return %c0_i32, %c0_i32_0 : i32, i32
  }
  func.func @transform_7(%arg0: i32) -> (i32, i32, i32) {
    %c0_i32 = arith.constant 0 : i32
    %c0_i32_0 = arith.constant 0 : i32
    %c0_i32_1 = arith.constant 0 : i32
    %c0_i32_2 = arith.constant 0 : i32
    return %c0_i32, %c0_i32_0, %c0_i32_1 : i32, i32, i32
  }
  func.func @transform_8(%arg0: i32) -> (i32, i32, i32) {
    %c0_i32 = arith.constant 0 : i32
    %c0_i32_0 = arith.constant 0 : i32
    %c0_i32_1 = arith.constant 0 : i32
    %c0_i32_2 = arith.constant 0 : i32
    return %c0_i32, %c0_i32_0, %c0_i32_1 : i32, i32, i32
  }
  func.func @transform_9(%arg0: i32) -> (i32, i32) {
    %c0_i32 = arith.constant 0 : i32
    %c0_i32_0 = arith.constant 0 : i32
    %c0_i32_1 = arith.constant 0 : i32
    return %c0_i32, %c0_i32_0 : i32, i32
  }
  func.func @transform_10(%arg0: i32) -> (i32, i32) {
    %c0_i32 = arith.constant 0 : i32
    %c0_i32_0 = arith.constant 0 : i32
    %c0_i32_1 = arith.constant 0 : i32
    return %c0_i32, %c0_i32_0 : i32, i32
  }
  func.func @transform_11(%arg0: i32) -> (i32, i32) {
    %c0_i32 = arith.constant 0 : i32
    %c0_i32_0 = arith.constant 0 : i32
    %c0_i32_1 = arith.constant 0 : i32
    return %c0_i32, %c0_i32_0 : i32, i32
  }
  func.func @transform_12(%arg0: i32) -> (i32, i32) {
    %c0_i32 = arith.constant 0 : i32
    %c0_i32_0 = arith.constant 0 : i32
    %c0_i32_1 = arith.constant 0 : i32
    return %c0_i32, %c0_i32_0 : i32, i32
  }
  func.func @transform_13(%arg0: i32) -> (i32, i32) {
    %c0_i32 = arith.constant 0 : i32
    %c0_i32_0 = arith.constant 0 : i32
    %c0_i32_1 = arith.constant 0 : i32
    return %c0_i32, %c0_i32_0 : i32, i32
  }
  func.func @transform_14(%arg0: i32) -> (i32, i32) {
    %c0_i32 = arith.constant 0 : i32
    %c0_i32_0 = arith.constant 0 : i32
    %c0_i32_1 = arith.constant 0 : i32
    return %c0_i32, %c0_i32_0 : i32, i32
  }
  func.func @transform_15(%arg0: i32) -> (i32, i32) {
    %c0_i32 = arith.constant 0 : i32
    %c0_i32_0 = arith.constant 0 : i32
    %c0_i32_1 = arith.constant 0 : i32
    return %c0_i32, %c0_i32_0 : i32, i32
  }
  func.func @transform_16(%arg0: i32) -> (i32, i32) {
    %c0_i32 = arith.constant 0 : i32
    %c0_i32_0 = arith.constant 0 : i32
    %c0_i32_1 = arith.constant 0 : i32
    return %c0_i32, %c0_i32_0 : i32, i32
  }
  func.func @transform_17(%arg0: i32) -> (i32, i32) {
    %c0_i32 = arith.constant 0 : i32
    %c0_i32_0 = arith.constant 0 : i32
    %c0_i32_1 = arith.constant 0 : i32
    return %c0_i32, %c0_i32_0 : i32, i32
  }
  func.func @transform_18(%arg0: i32) -> (i32, i32) {
    %c0_i32 = arith.constant 0 : i32
    %c0_i32_0 = arith.constant 0 : i32
    %c0_i32_1 = arith.constant 0 : i32
    return %c0_i32, %c0_i32_0 : i32, i32
  }
  func.func @transform_19(%arg0: i32) -> (i32, i32) {
    %c0_i32 = arith.constant 0 : i32
    %c0_i32_0 = arith.constant 0 : i32
    %c0_i32_1 = arith.constant 0 : i32
    return %c0_i32, %c0_i32_0 : i32, i32
  }
  func.func @transform_20(%arg0: i32) -> (i32, i32, i32) {
    %c0_i32 = arith.constant 0 : i32
    %c0_i32_0 = arith.constant 0 : i32
    %c0_i32_1 = arith.constant 0 : i32
    %c0_i32_2 = arith.constant 0 : i32
    return %c0_i32, %c0_i32_0, %c0_i32_1 : i32, i32, i32
  }
  func.func @transform_21(%arg0: i32) -> (i32, i32, i32) {
    %c0_i32 = arith.constant 0 : i32
    %c0_i32_0 = arith.constant 0 : i32
    %c0_i32_1 = arith.constant 0 : i32
    %c0_i32_2 = arith.constant 0 : i32
    return %c0_i32, %c0_i32_0, %c0_i32_1 : i32, i32, i32
  }
  func.func @transform_22(%arg0: i32) -> (i32, i32) {
    %c0_i32 = arith.constant 0 : i32
    %c0_i32_0 = arith.constant 0 : i32
    %c0_i32_1 = arith.constant 0 : i32
    return %c0_i32, %c0_i32_0 : i32, i32
  }
  func.func @transform_23(%arg0: i32) -> (i32, i32, i32) {
    %c0_i32 = arith.constant 0 : i32
    %c0_i32_0 = arith.constant 0 : i32
    %c0_i32_1 = arith.constant 0 : i32
    return %arg0, %c0_i32, %c0_i32_0 : i32, i32, i32
  }
  func.func @transform_24(%arg0: i32) -> (i32, i32, i32) {
    %c0_i32 = arith.constant 0 : i32
    %c0_i32_0 = arith.constant 0 : i32
    %c0_i32_1 = arith.constant 0 : i32
    return %arg0, %c0_i32, %c0_i32_0 : i32, i32, i32
  }
  func.func @transform_25(%arg0: i32) -> (i32, i32, i32) {
    %c0_i32 = arith.constant 0 : i32
    %c0_i32_0 = arith.constant 0 : i32
    %c0_i32_1 = arith.constant 0 : i32
    return %arg0, %c0_i32, %c0_i32_0 : i32, i32, i32
  }
  func.func @transform_26(%arg0: i32) -> (i32, i32, i32) {
    %c0_i32 = arith.constant 0 : i32
    %c0_i32_0 = arith.constant 0 : i32
    %c0_i32_1 = arith.constant 0 : i32
    return %arg0, %c0_i32, %c0_i32_0 : i32, i32, i32
  }
}

module attributes {stable_mosaic.version = 11 : i64} {
  func.func @_enc_layer_kernel(%arg0: i32, %arg1: memref<1x16x32xf32, #tpu.memory_space<vmem>>, %arg2: memref<1x3x32xf32, #tpu.memory_space<vmem>>, %arg3: memref<1x3x32xf32, #tpu.memory_space<vmem>>, %arg4: memref<1x3x32xf32, #tpu.memory_space<vmem>>, %arg5: memref<1x16x4xf32, #tpu.memory_space<vmem>>, %arg6: memref<32x32xbf16, #tpu.memory_space<vmem>>, %arg7: memref<1x32xf32, #tpu.memory_space<vmem>>, %arg8: memref<4x8x32xbf16, #tpu.memory_space<vmem>>, %arg9: memref<4x32x16xf32, #tpu.memory_space<vmem>>, %arg10: memref<32x32xf32, #tpu.memory_space<vmem>>, %arg11: memref<1x32xf32, #tpu.memory_space<vmem>>, %arg12: memref<1x32xf32, #tpu.memory_space<vmem>>, %arg13: memref<32x64xbf16, #tpu.memory_space<vmem>>, %arg14: memref<64x32xbf16, #tpu.memory_space<vmem>>, %arg15: memref<1x32xf32, #tpu.memory_space<vmem>>, %arg16: memref<1x32xf32, #tpu.memory_space<vmem>>, %arg17: memref<32x4xbf16, #tpu.memory_space<vmem>>, %arg18: memref<1x4xf32, #tpu.memory_space<vmem>>, %arg19: memref<32x4xbf16, #tpu.memory_space<vmem>>, %arg20: memref<1x4xf32, #tpu.memory_space<vmem>>, %arg21: memref<16x16x4xf32, #tpu.memory_space<vmem>>, %arg22: memref<16x16x4xf32, #tpu.memory_space<vmem>>, %arg23: memref<16x4xf32, #tpu.memory_space<vmem>>, %arg24: memref<1x16x32xf32, #tpu.memory_space<vmem>>, %arg25: memref<1x16x4xf32, #tpu.memory_space<vmem>>, %arg26: memref<1x1x32xf32, #tpu.memory_space<vmem>>, %arg27: memref<1x8x32xf32, #tpu.memory_space<vmem>>) attributes {dimension_semantics = [#tpu.dimension_semantics<parallel>], iteration_bounds = array<i64: 2>, scalar_prefetch = 0 : i64, scratch_operands = 0 : i64, tpu.core_type = #tpu.core_type<tc>, window_params = [{transform_indices = @transform_0, window_bounds = array<i64: 1, 16, 32>}, {transform_indices = @transform_1, window_bounds = array<i64: 1, 3, 32>}, {transform_indices = @transform_2, window_bounds = array<i64: 1, 3, 32>}, {transform_indices = @transform_3, window_bounds = array<i64: 1, 3, 32>}, {transform_indices = @transform_4, window_bounds = array<i64: 1, 16, 4>}, {pipeline_mode = #tpu.pipeline_mode<synchronous>, transform_indices = @transform_5, window_bounds = array<i64: 32, 32>}, {pipeline_mode = #tpu.pipeline_mode<synchronous>, transform_indices = @transform_6, window_bounds = array<i64: 1, 32>}, {pipeline_mode = #tpu.pipeline_mode<synchronous>, transform_indices = @transform_7, window_bounds = array<i64: 4, 8, 32>}, {pipeline_mode = #tpu.pipeline_mode<synchronous>, transform_indices = @transform_8, window_bounds = array<i64: 4, 32, 16>}, {pipeline_mode = #tpu.pipeline_mode<synchronous>, transform_indices = @transform_9, window_bounds = array<i64: 32, 32>}, {pipeline_mode = #tpu.pipeline_mode<synchronous>, transform_indices = @transform_10, window_bounds = array<i64: 1, 32>}, {pipeline_mode = #tpu.pipeline_mode<synchronous>, transform_indices = @transform_11, window_bounds = array<i64: 1, 32>}, {pipeline_mode = #tpu.pipeline_mode<synchronous>, transform_indices = @transform_12, window_bounds = array<i64: 32, 64>}, {pipeline_mode = #tpu.pipeline_mode<synchronous>, transform_indices = @transform_13, window_bounds = array<i64: 64, 32>}, {pipeline_mode = #tpu.pipeline_mode<synchronous>, transform_indices = @transform_14, window_bounds = array<i64: 1, 32>}, {pipeline_mode = #tpu.pipeline_mode<synchronous>, transform_indices = @transform_15, window_bounds = array<i64: 1, 32>}, {pipeline_mode = #tpu.pipeline_mode<synchronous>, transform_indices = @transform_16, window_bounds = array<i64: 32, 4>}, {pipeline_mode = #tpu.pipeline_mode<synchronous>, transform_indices = @transform_17, window_bounds = array<i64: 1, 4>}, {pipeline_mode = #tpu.pipeline_mode<synchronous>, transform_indices = @transform_18, window_bounds = array<i64: 32, 4>}, {pipeline_mode = #tpu.pipeline_mode<synchronous>, transform_indices = @transform_19, window_bounds = array<i64: 1, 4>}, {pipeline_mode = #tpu.pipeline_mode<synchronous>, transform_indices = @transform_20, window_bounds = array<i64: 16, 16, 4>}, {pipeline_mode = #tpu.pipeline_mode<synchronous>, transform_indices = @transform_21, window_bounds = array<i64: 16, 16, 4>}, {pipeline_mode = #tpu.pipeline_mode<synchronous>, transform_indices = @transform_22, window_bounds = array<i64: 16, 4>}, {transform_indices = @transform_23, window_bounds = array<i64: 1, 16, 32>}, {transform_indices = @transform_24, window_bounds = array<i64: 1, 16, 4>}, {transform_indices = @transform_25, window_bounds = array<i64: 1, 1, 32>}, {transform_indices = @transform_26, window_bounds = array<i64: 1, 8, 32>}]} {
    %0 = tpu.iota {dimensions = array<i32: 0>} : vector<24x32xi32>
    %1 = arith.sitofp %0 : vector<24x32xi32> to vector<24x32xf32>
    %c0 = arith.constant 0 : index
    %c0_0 = arith.constant 0 : index
    %c0_1 = arith.constant 0 : index
    %2 = vector.load %arg4[%c0, %c0_0, %c0_1] : memref<1x3x32xf32, #tpu.memory_space<vmem>>, vector<1x3x32xf32>
    %3 = vector.shape_cast %2 : vector<1x3x32xf32> to vector<3x32xf32>
    %c0_2 = arith.constant 0 : index
    %c0_3 = arith.constant 0 : index
    %c0_4 = arith.constant 0 : index
    %4 = vector.load %arg3[%c0_2, %c0_3, %c0_4] : memref<1x3x32xf32, #tpu.memory_space<vmem>>, vector<1x3x32xf32>
    %5 = vector.shape_cast %4 : vector<1x3x32xf32> to vector<3x32xf32>
    %c0_5 = arith.constant 0 : index
    %c0_6 = arith.constant 0 : index
    %c0_7 = arith.constant 0 : index
    %6 = vector.load %arg2[%c0_5, %c0_6, %c0_7] : memref<1x3x32xf32, #tpu.memory_space<vmem>>, vector<1x3x32xf32>
    %7 = vector.shape_cast %6 : vector<1x3x32xf32> to vector<3x32xf32>
    %8 = vector.shape_cast %3 : vector<3x32xf32> to vector<3x1x32xf32>
    %cst = arith.constant 6.28318548 : f32
    %9 = vector.broadcast %cst : f32 to vector<3x1x32xf32>
    %10 = arith.mulf %9, %8 : vector<3x1x32xf32>
    %11 = vector.shape_cast %1 : vector<24x32xf32> to vector<1x24x32xf32>
    %12 = vector.broadcast %10 : vector<3x1x32xf32> to vector<3x24x32xf32>
    %13 = vector.broadcast %11 : vector<1x24x32xf32> to vector<3x24x32xf32>
    %14 = arith.mulf %12, %13 : vector<3x24x32xf32>
    %15 = vector.shape_cast %5 : vector<3x32xf32> to vector<3x1x32xf32>
    %16 = vector.broadcast %15 : vector<3x1x32xf32> to vector<3x24x32xf32>
    %17 = arith.addf %14, %16 : vector<3x24x32xf32>
    %18 = vector.shape_cast %7 : vector<3x32xf32> to vector<3x1x32xf32>
    %19 = math.cos %17 : vector<3x24x32xf32>
    %20 = vector.broadcast %18 : vector<3x1x32xf32> to vector<3x24x32xf32>
    %21 = arith.mulf %20, %19 : vector<3x24x32xf32>
    %cst_8 = arith.constant dense<0.000000e+00> : vector<24x32xf32>
    %22 = vector.multi_reduction <add>, %21, %cst_8 [0] : vector<3x24x32xf32> to vector<24x32xf32>
    %cst_9 = arith.constant 2.000000e+00 : f32
    %23 = vector.broadcast %cst_9 : f32 to vector<24x32xf32>
    %24 = arith.mulf %23, %22 : vector<24x32xf32>
    %25 = vector.extract_strided_slice %24 {offsets = [0, 0], sizes = [16, 32], strides = [1, 1]} : vector<24x32xf32> to vector<16x32xf32>
    %26 = vector.extract_strided_slice %24 {offsets = [16, 0], sizes = [8, 32], strides = [1, 1]} : vector<24x32xf32> to vector<8x32xf32>
    %c0_10 = arith.constant 0 : index
    %c0_11 = arith.constant 0 : index
    %c0_12 = arith.constant 0 : index
    %27 = vector.load %arg27[%c0_10, %c0_11, %c0_12] : memref<1x8x32xf32, #tpu.memory_space<vmem>>, vector<1x8x32xf32>
    %28 = vector.shape_cast %27 : vector<1x8x32xf32> to vector<8x32xf32>
    %29 = vector.shape_cast %26 : vector<8x32xf32> to vector<1x8x32xf32>
    tpu.vector_store %arg27[%c0_10, %c0_11, %c0_12], %29 {strides = array<i32>} : memref<1x8x32xf32, #tpu.memory_space<vmem>>, vector<1x8x32xf32>,
    %c0_13 = arith.constant 0 : index
    %c0_14 = arith.constant 0 : index
    %c0_15 = arith.constant 0 : index
    %30 = vector.load %arg1[%c0_13, %c0_14, %c0_15] : memref<1x16x32xf32, #tpu.memory_space<vmem>>, vector<1x16x32xf32>
    %31 = vector.shape_cast %30 : vector<1x16x32xf32> to vector<16x32xf32>
    %32 = arith.subf %31, %25 : vector<16x32xf32>
    %33 = arith.truncf %32 : vector<16x32xf32> to vector<16x32xbf16>
    %c0_16 = arith.constant 0 : index
    %c0_17 = arith.constant 0 : index
    %34 = vector.load %arg6[%c0_16, %c0_17] : memref<32x32xbf16, #tpu.memory_space<vmem>>, vector<32x32xbf16>
    %cst_18 = arith.constant dense<0.000000e+00> : vector<16x32xf32>
    %35 = tpu.matmul %33, %34, %cst_18 {dimension_numbers = #tpu.dot_dimension_numbers<[1], [0], [0], [1], [0, 0, 1, 1], [], []>} : vector<16x32xbf16>, vector<32x32xbf16>, vector<16x32xf32> -> vector<16x32xf32>
    %c0_19 = arith.constant 0 : index
    %c0_20 = arith.constant 0 : index
    %36 = vector.load %arg7[%c0_19, %c0_20] : memref<1x32xf32, #tpu.memory_space<vmem>>, vector<1x32xf32>
    %37 = vector.broadcast %36 : vector<1x32xf32> to vector<16x32xf32>
    %38 = arith.addf %35, %37 : vector<16x32xf32>
    %c0_21 = arith.constant 0 : index
    %c0_22 = arith.constant 0 : index
    %39 = vector.load %arg10[%c0_21, %c0_22] : memref<32x32xf32, #tpu.memory_space<vmem>>, vector<32x32xf32>
    %40 = vector.extract_strided_slice %38 {offsets = [0, 0], sizes = [16, 8], strides = [1, 1]} : vector<16x32xf32> to vector<16x8xf32>
    %41 = arith.truncf %40 : vector<16x8xf32> to vector<16x8xbf16>
    %c0_23 = arith.constant 0 : index
    %c0_24 = arith.constant 0 : index
    %c0_25 = arith.constant 0 : index
    %42 = vector.load %arg8[%c0_23, %c0_24, %c0_25] : memref<4x8x32xbf16, #tpu.memory_space<vmem>>, vector<1x8x32xbf16>
    %43 = vector.shape_cast %42 : vector<1x8x32xbf16> to vector<8x32xbf16>
    %cst_26 = arith.constant dense<0.000000e+00> : vector<16x32xf32>
    %44 = tpu.matmul %41, %43, %cst_26 {dimension_numbers = #tpu.dot_dimension_numbers<[1], [0], [0], [1], [0, 0, 1, 1], [], []>} : vector<16x8xbf16>, vector<8x32xbf16>, vector<16x32xf32> -> vector<16x32xf32>
    %c0_27 = arith.constant 0 : index
    %c0_28 = arith.constant 0 : index
    %c0_29 = arith.constant 0 : index
    %45 = vector.load %arg9[%c0_27, %c0_28, %c0_29] : memref<4x32x16xf32, #tpu.memory_space<vmem>>, vector<1x32x16xf32>
    %46 = vector.shape_cast %45 : vector<1x32x16xf32> to vector<32x16xf32>
    %cst_30 = arith.constant dense<0.000000e+00> : vector<32x32xf32>
    %47 = tpu.matmul %46, %44, %cst_30 {dimension_numbers = #tpu.dot_dimension_numbers<[1], [0], [0], [1], [0, 0, 1, 1], [], []>} : vector<32x16xf32>, vector<16x32xf32>, vector<32x32xf32> -> vector<32x32xf32>
    %48 = arith.addf %39, %47 : vector<32x32xf32>
    %49 = vector.extract_strided_slice %38 {offsets = [0, 8], sizes = [16, 8], strides = [1, 1]} : vector<16x32xf32> to vector<16x8xf32>
    %50 = arith.truncf %49 : vector<16x8xf32> to vector<16x8xbf16>
    %c1 = arith.constant 1 : index
    %c0_31 = arith.constant 0 : index
    %c0_32 = arith.constant 0 : index
    %51 = vector.load %arg8[%c1, %c0_31, %c0_32] : memref<4x8x32xbf16, #tpu.memory_space<vmem>>, vector<1x8x32xbf16>
    %52 = vector.shape_cast %51 : vector<1x8x32xbf16> to vector<8x32xbf16>
    %cst_33 = arith.constant dense<0.000000e+00> : vector<16x32xf32>
    %53 = tpu.matmul %50, %52, %cst_33 {dimension_numbers = #tpu.dot_dimension_numbers<[1], [0], [0], [1], [0, 0, 1, 1], [], []>} : vector<16x8xbf16>, vector<8x32xbf16>, vector<16x32xf32> -> vector<16x32xf32>
    %c1_34 = arith.constant 1 : index
    %c0_35 = arith.constant 0 : index
    %c0_36 = arith.constant 0 : index
    %54 = vector.load %arg9[%c1_34, %c0_35, %c0_36] : memref<4x32x16xf32, #tpu.memory_space<vmem>>, vector<1x32x16xf32>
    %55 = vector.shape_cast %54 : vector<1x32x16xf32> to vector<32x16xf32>
    %cst_37 = arith.constant dense<0.000000e+00> : vector<32x32xf32>
    %56 = tpu.matmul %55, %53, %cst_37 {dimension_numbers = #tpu.dot_dimension_numbers<[1], [0], [0], [1], [0, 0, 1, 1], [], []>} : vector<32x16xf32>, vector<16x32xf32>, vector<32x32xf32> -> vector<32x32xf32>
    %57 = arith.addf %48, %56 : vector<32x32xf32>
    %58 = vector.extract_strided_slice %38 {offsets = [0, 16], sizes = [16, 8], strides = [1, 1]} : vector<16x32xf32> to vector<16x8xf32>
    %59 = arith.truncf %58 : vector<16x8xf32> to vector<16x8xbf16>
    %c2 = arith.constant 2 : index
    %c0_38 = arith.constant 0 : index
    %c0_39 = arith.constant 0 : index
    %60 = vector.load %arg8[%c2, %c0_38, %c0_39] : memref<4x8x32xbf16, #tpu.memory_space<vmem>>, vector<1x8x32xbf16>
    %61 = vector.shape_cast %60 : vector<1x8x32xbf16> to vector<8x32xbf16>
    %cst_40 = arith.constant dense<0.000000e+00> : vector<16x32xf32>
    %62 = tpu.matmul %59, %61, %cst_40 {dimension_numbers = #tpu.dot_dimension_numbers<[1], [0], [0], [1], [0, 0, 1, 1], [], []>} : vector<16x8xbf16>, vector<8x32xbf16>, vector<16x32xf32> -> vector<16x32xf32>
    %c2_41 = arith.constant 2 : index
    %c0_42 = arith.constant 0 : index
    %c0_43 = arith.constant 0 : index
    %63 = vector.load %arg9[%c2_41, %c0_42, %c0_43] : memref<4x32x16xf32, #tpu.memory_space<vmem>>, vector<1x32x16xf32>
    %64 = vector.shape_cast %63 : vector<1x32x16xf32> to vector<32x16xf32>
    %cst_44 = arith.constant dense<0.000000e+00> : vector<32x32xf32>
    %65 = tpu.matmul %64, %62, %cst_44 {dimension_numbers = #tpu.dot_dimension_numbers<[1], [0], [0], [1], [0, 0, 1, 1], [], []>} : vector<32x16xf32>, vector<16x32xf32>, vector<32x32xf32> -> vector<32x32xf32>
    %66 = arith.addf %57, %65 : vector<32x32xf32>
    %67 = vector.extract_strided_slice %38 {offsets = [0, 24], sizes = [16, 8], strides = [1, 1]} : vector<16x32xf32> to vector<16x8xf32>
    %68 = arith.truncf %67 : vector<16x8xf32> to vector<16x8xbf16>
    %c3 = arith.constant 3 : index
    %c0_45 = arith.constant 0 : index
    %c0_46 = arith.constant 0 : index
    %69 = vector.load %arg8[%c3, %c0_45, %c0_46] : memref<4x8x32xbf16, #tpu.memory_space<vmem>>, vector<1x8x32xbf16>
    %70 = vector.shape_cast %69 : vector<1x8x32xbf16> to vector<8x32xbf16>
    %cst_47 = arith.constant dense<0.000000e+00> : vector<16x32xf32>
    %71 = tpu.matmul %68, %70, %cst_47 {dimension_numbers = #tpu.dot_dimension_numbers<[1], [0], [0], [1], [0, 0, 1, 1], [], []>} : vector<16x8xbf16>, vector<8x32xbf16>, vector<16x32xf32> -> vector<16x32xf32>
    %c3_48 = arith.constant 3 : index
    %c0_49 = arith.constant 0 : index
    %c0_50 = arith.constant 0 : index
    %72 = vector.load %arg9[%c3_48, %c0_49, %c0_50] : memref<4x32x16xf32, #tpu.memory_space<vmem>>, vector<1x32x16xf32>
    %73 = vector.shape_cast %72 : vector<1x32x16xf32> to vector<32x16xf32>
    %cst_51 = arith.constant dense<0.000000e+00> : vector<32x32xf32>
    %74 = tpu.matmul %73, %71, %cst_51 {dimension_numbers = #tpu.dot_dimension_numbers<[1], [0], [0], [1], [0, 0, 1, 1], [], []>} : vector<32x16xf32>, vector<16x32xf32>, vector<32x32xf32> -> vector<32x32xf32>
    %75 = arith.addf %66, %74 : vector<32x32xf32>
    %76 = vector.extract_strided_slice %75 {offsets = [0, 0], sizes = [16, 32], strides = [1, 1]} : vector<32x32xf32> to vector<16x32xf32>
    %77 = vector.extract_strided_slice %75 {offsets = [16, 0], sizes = [16, 32], strides = [1, 1]} : vector<32x32xf32> to vector<16x32xf32>
    %78 = vector.extract_strided_slice %76 {offsets = [15, 0], sizes = [1, 32], strides = [1, 1]} : vector<16x32xf32> to vector<1x32xf32>
    %c0_52 = arith.constant 0 : index
    %c0_53 = arith.constant 0 : index
    %c0_54 = arith.constant 0 : index
    %79 = vector.load %arg26[%c0_52, %c0_53, %c0_54] : memref<1x1x32xf32, #tpu.memory_space<vmem>>, vector<1x1x32xf32>
    %80 = vector.shape_cast %79 : vector<1x1x32xf32> to vector<1x32xf32>
    %81 = vector.shape_cast %78 : vector<1x32xf32> to vector<1x1x32xf32>
    tpu.vector_store %arg26[%c0_52, %c0_53, %c0_54], %81 {strides = array<i32>} : memref<1x1x32xf32, #tpu.memory_space<vmem>>, vector<1x1x32xf32>,
    %82 = arith.subf %32, %76 : vector<16x32xf32>
    %c0_55 = arith.constant 0 : index
    %c0_56 = arith.constant 0 : index
    %83 = vector.load %arg11[%c0_55, %c0_56] : memref<1x32xf32, #tpu.memory_space<vmem>>, vector<1x32xf32>
    %c0_57 = arith.constant 0 : index
    %c0_58 = arith.constant 0 : index
    %84 = vector.load %arg12[%c0_57, %c0_58] : memref<1x32xf32, #tpu.memory_space<vmem>>, vector<1x32xf32>
    %cst_59 = arith.constant dense<0.000000e+00> : vector<16xf32>
    %85 = vector.multi_reduction <add>, %82, %cst_59 [1] : vector<16x32xf32> to vector<16xf32>
    %86 = vector.shape_cast %85 : vector<16xf32> to vector<16x1xf32>
    %cst_60 = arith.constant 3.200000e+01 : f32
    %87 = vector.broadcast %cst_60 : f32 to vector<16x1xf32>
    %88 = arith.divf %86, %87 : vector<16x1xf32>
    %89 = vector.broadcast %88 : vector<16x1xf32> to vector<16x32xf32>
    %90 = arith.subf %82, %89 : vector<16x32xf32>
    %91 = arith.mulf %90, %90 : vector<16x32xf32>
    %cst_61 = arith.constant dense<0.000000e+00> : vector<16xf32>
    %92 = vector.multi_reduction <add>, %91, %cst_61 [1] : vector<16x32xf32> to vector<16xf32>
    %93 = vector.shape_cast %92 : vector<16xf32> to vector<16x1xf32>
    %cst_62 = arith.constant 3.200000e+01 : f32
    %94 = vector.broadcast %cst_62 : f32 to vector<16x1xf32>
    %95 = arith.divf %93, %94 : vector<16x1xf32>
    %96 = vector.broadcast %88 : vector<16x1xf32> to vector<16x32xf32>
    %97 = arith.subf %82, %96 : vector<16x32xf32>
    %cst_63 = arith.constant 9.99999974E-6 : f32
    %98 = vector.broadcast %cst_63 : f32 to vector<16x1xf32>
    %99 = arith.addf %95, %98 : vector<16x1xf32>
    %100 = math.rsqrt %99 : vector<16x1xf32>
    %101 = vector.broadcast %100 : vector<16x1xf32> to vector<16x32xf32>
    %102 = arith.mulf %97, %101 : vector<16x32xf32>
    %103 = vector.broadcast %83 : vector<1x32xf32> to vector<16x32xf32>
    %104 = arith.mulf %102, %103 : vector<16x32xf32>
    %105 = vector.broadcast %84 : vector<1x32xf32> to vector<16x32xf32>
    %106 = arith.addf %104, %105 : vector<16x32xf32>
    %107 = arith.truncf %106 : vector<16x32xf32> to vector<16x32xbf16>
    %c0_64 = arith.constant 0 : index
    %c0_65 = arith.constant 0 : index
    %108 = vector.load %arg13[%c0_64, %c0_65] : memref<32x64xbf16, #tpu.memory_space<vmem>>, vector<32x64xbf16>
    %cst_66 = arith.constant dense<0.000000e+00> : vector<16x64xf32>
    %109 = tpu.matmul %107, %108, %cst_66 {dimension_numbers = #tpu.dot_dimension_numbers<[1], [0], [0], [1], [0, 0, 1, 1], [], []>} : vector<16x32xbf16>, vector<32x64xbf16>, vector<16x64xf32> -> vector<16x64xf32>
    %110 = arith.negf %109 : vector<16x64xf32>
    %111 = math.exp %110 : vector<16x64xf32>
    %cst_67 = arith.constant 1.000000e+00 : f32
    %112 = vector.broadcast %cst_67 : f32 to vector<16x64xf32>
    %113 = arith.addf %112, %111 : vector<16x64xf32>
    %114 = arith.divf %112, %113 : vector<16x64xf32>
    %115 = arith.truncf %114 : vector<16x64xf32> to vector<16x64xbf16>
    %c0_68 = arith.constant 0 : index
    %c0_69 = arith.constant 0 : index
    %116 = vector.load %arg14[%c0_68, %c0_69] : memref<64x32xbf16, #tpu.memory_space<vmem>>, vector<64x32xbf16>
    %cst_70 = arith.constant dense<0.000000e+00> : vector<16x32xf32>
    %117 = tpu.matmul %115, %116, %cst_70 {dimension_numbers = #tpu.dot_dimension_numbers<[1], [0], [0], [1], [0, 0, 1, 1], [], []>} : vector<16x64xbf16>, vector<64x32xbf16>, vector<16x32xf32> -> vector<16x32xf32>
    %118 = arith.addf %106, %117 : vector<16x32xf32>
    %c0_71 = arith.constant 0 : index
    %c0_72 = arith.constant 0 : index
    %119 = vector.load %arg15[%c0_71, %c0_72] : memref<1x32xf32, #tpu.memory_space<vmem>>, vector<1x32xf32>
    %c0_73 = arith.constant 0 : index
    %c0_74 = arith.constant 0 : index
    %120 = vector.load %arg16[%c0_73, %c0_74] : memref<1x32xf32, #tpu.memory_space<vmem>>, vector<1x32xf32>
    %cst_75 = arith.constant dense<0.000000e+00> : vector<16xf32>
    %121 = vector.multi_reduction <add>, %118, %cst_75 [1] : vector<16x32xf32> to vector<16xf32>
    %122 = vector.shape_cast %121 : vector<16xf32> to vector<16x1xf32>
    %cst_76 = arith.constant 3.200000e+01 : f32
    %123 = vector.broadcast %cst_76 : f32 to vector<16x1xf32>
    %124 = arith.divf %122, %123 : vector<16x1xf32>
    %125 = vector.broadcast %124 : vector<16x1xf32> to vector<16x32xf32>
    %126 = arith.subf %118, %125 : vector<16x32xf32>
    %127 = arith.mulf %126, %126 : vector<16x32xf32>
    %cst_77 = arith.constant dense<0.000000e+00> : vector<16xf32>
    %128 = vector.multi_reduction <add>, %127, %cst_77 [1] : vector<16x32xf32> to vector<16xf32>
    %129 = vector.shape_cast %128 : vector<16xf32> to vector<16x1xf32>
    %cst_78 = arith.constant 3.200000e+01 : f32
    %130 = vector.broadcast %cst_78 : f32 to vector<16x1xf32>
    %131 = arith.divf %129, %130 : vector<16x1xf32>
    %132 = vector.broadcast %124 : vector<16x1xf32> to vector<16x32xf32>
    %133 = arith.subf %118, %132 : vector<16x32xf32>
    %cst_79 = arith.constant 9.99999974E-6 : f32
    %134 = vector.broadcast %cst_79 : f32 to vector<16x1xf32>
    %135 = arith.addf %131, %134 : vector<16x1xf32>
    %136 = math.rsqrt %135 : vector<16x1xf32>
    %137 = vector.broadcast %136 : vector<16x1xf32> to vector<16x32xf32>
    %138 = arith.mulf %133, %137 : vector<16x32xf32>
    %139 = vector.broadcast %119 : vector<1x32xf32> to vector<16x32xf32>
    %140 = arith.mulf %138, %139 : vector<16x32xf32>
    %141 = vector.broadcast %120 : vector<1x32xf32> to vector<16x32xf32>
    %142 = arith.addf %140, %141 : vector<16x32xf32>
    %c0_80 = arith.constant 0 : index
    %c0_81 = arith.constant 0 : index
    %c0_82 = arith.constant 0 : index
    %143 = vector.load %arg24[%c0_80, %c0_81, %c0_82] : memref<1x16x32xf32, #tpu.memory_space<vmem>>, vector<1x16x32xf32>
    %144 = vector.shape_cast %143 : vector<1x16x32xf32> to vector<16x32xf32>
    %145 = vector.shape_cast %142 : vector<16x32xf32> to vector<1x16x32xf32>
    tpu.vector_store %arg24[%c0_80, %c0_81, %c0_82], %145 {strides = array<i32>} : memref<1x16x32xf32, #tpu.memory_space<vmem>>, vector<1x16x32xf32>,
    %146 = arith.truncf %77 : vector<16x32xf32> to vector<16x32xbf16>
    %c0_83 = arith.constant 0 : index
    %c0_84 = arith.constant 0 : index
    %147 = vector.load %arg17[%c0_83, %c0_84] : memref<32x4xbf16, #tpu.memory_space<vmem>>, vector<32x4xbf16>
    %cst_85 = arith.constant dense<0.000000e+00> : vector<16x4xf32>
    %148 = tpu.matmul %146, %147, %cst_85 {dimension_numbers = #tpu.dot_dimension_numbers<[1], [0], [0], [1], [0, 0, 1, 1], [], []>} : vector<16x32xbf16>, vector<32x4xbf16>, vector<16x4xf32> -> vector<16x4xf32>
    %c0_86 = arith.constant 0 : index
    %c0_87 = arith.constant 0 : index
    %149 = vector.load %arg18[%c0_86, %c0_87] : memref<1x4xf32, #tpu.memory_space<vmem>>, vector<1x4xf32>
    %150 = vector.broadcast %149 : vector<1x4xf32> to vector<16x4xf32>
    %151 = arith.addf %148, %150 : vector<16x4xf32>
    %152 = arith.truncf %25 : vector<16x32xf32> to vector<16x32xbf16>
    %c0_88 = arith.constant 0 : index
    %c0_89 = arith.constant 0 : index
    %153 = vector.load %arg19[%c0_88, %c0_89] : memref<32x4xbf16, #tpu.memory_space<vmem>>, vector<32x4xbf16>
    %cst_90 = arith.constant dense<0.000000e+00> : vector<16x4xf32>
    %154 = tpu.matmul %152, %153, %cst_90 {dimension_numbers = #tpu.dot_dimension_numbers<[1], [0], [0], [1], [0, 0, 1, 1], [], []>} : vector<16x32xbf16>, vector<32x4xbf16>, vector<16x4xf32> -> vector<16x4xf32>
    %c0_91 = arith.constant 0 : index
    %c0_92 = arith.constant 0 : index
    %155 = vector.load %arg20[%c0_91, %c0_92] : memref<1x4xf32, #tpu.memory_space<vmem>>, vector<1x4xf32>
    %156 = vector.broadcast %155 : vector<1x4xf32> to vector<16x4xf32>
    %157 = arith.addf %154, %156 : vector<16x4xf32>
    %c0_93 = arith.constant 0 : index
    %c0_94 = arith.constant 0 : index
    %c0_95 = arith.constant 0 : index
    %158 = vector.load %arg5[%c0_93, %c0_94, %c0_95] : memref<1x16x4xf32, #tpu.memory_space<vmem>>, vector<1x16x4xf32>
    %159 = vector.shape_cast %158 : vector<1x16x4xf32> to vector<16x4xf32>
    %160 = arith.subf %159, %157 : vector<16x4xf32>
    %c0_96 = arith.constant 0 : index
    %c0_97 = arith.constant 0 : index
    %161 = vector.load %arg23[%c0_96, %c0_97] : memref<16x4xf32, #tpu.memory_space<vmem>>, vector<16x4xf32>
    %c0_98 = arith.constant 0 : index
    %c0_99 = arith.constant 0 : index
    %c0_100 = arith.constant 0 : index
    %162 = vector.load %arg21[%c0_98, %c0_99, %c0_100] : memref<16x16x4xf32, #tpu.memory_space<vmem>>, vector<16x16x4xf32>
    %163 = vector.shape_cast %160 : vector<16x4xf32> to vector<1x16x4xf32>
    %164 = vector.broadcast %163 : vector<1x16x4xf32> to vector<16x16x4xf32>
    %165 = arith.mulf %162, %164 : vector<16x16x4xf32>
    %cst_101 = arith.constant dense<0.000000e+00> : vector<16x4xf32>
    %166 = vector.multi_reduction <add>, %165, %cst_101 [1] : vector<16x16x4xf32> to vector<16x4xf32>
    %167 = arith.addf %161, %166 : vector<16x4xf32>
    %c0_102 = arith.constant 0 : index
    %c0_103 = arith.constant 0 : index
    %c0_104 = arith.constant 0 : index
    %168 = vector.load %arg22[%c0_102, %c0_103, %c0_104] : memref<16x16x4xf32, #tpu.memory_space<vmem>>, vector<16x16x4xf32>
    %169 = vector.shape_cast %151 : vector<16x4xf32> to vector<1x16x4xf32>
    %170 = vector.broadcast %169 : vector<1x16x4xf32> to vector<16x16x4xf32>
    %171 = arith.mulf %168, %170 : vector<16x16x4xf32>
    %cst_105 = arith.constant dense<0.000000e+00> : vector<16x4xf32>
    %172 = vector.multi_reduction <add>, %171, %cst_105 [1] : vector<16x16x4xf32> to vector<16x4xf32>
    %173 = arith.addf %167, %172 : vector<16x4xf32>
    %c0_106 = arith.constant 0 : index
    %c0_107 = arith.constant 0 : index
    %c0_108 = arith.constant 0 : index
    %174 = vector.load %arg25[%c0_106, %c0_107, %c0_108] : memref<1x16x4xf32, #tpu.memory_space<vmem>>, vector<1x16x4xf32>
    %175 = vector.shape_cast %174 : vector<1x16x4xf32> to vector<16x4xf32>
    %176 = vector.shape_cast %173 : vector<16x4xf32> to vector<1x16x4xf32>
    tpu.vector_store %arg25[%c0_106, %c0_107, %c0_108], %176 {strides = array<i32>} : memref<1x16x4xf32, #tpu.memory_space<vmem>>, vector<1x16x4xf32>,
    return
  }
  func.func @transform_0(%arg0: i32) -> (i32, i32, i32) {
    %c0_i32 = arith.constant 0 : i32
    %c0_i32_0 = arith.constant 0 : i32
    %c0_i32_1 = arith.constant 0 : i32
    return %arg0, %c0_i32, %c0_i32_0 : i32, i32, i32
  }
  func.func @transform_1(%arg0: i32) -> (i32, i32, i32) {
    %c0_i32 = arith.constant 0 : i32
    %c0_i32_0 = arith.constant 0 : i32
    %c0_i32_1 = arith.constant 0 : i32
    return %arg0, %c0_i32, %c0_i32_0 : i32, i32, i32
  }
  func.func @transform_2(%arg0: i32) -> (i32, i32, i32) {
    %c0_i32 = arith.constant 0 : i32
    %c0_i32_0 = arith.constant 0 : i32
    %c0_i32_1 = arith.constant 0 : i32
    return %arg0, %c0_i32, %c0_i32_0 : i32, i32, i32
  }
  func.func @transform_3(%arg0: i32) -> (i32, i32, i32) {
    %c0_i32 = arith.constant 0 : i32
    %c0_i32_0 = arith.constant 0 : i32
    %c0_i32_1 = arith.constant 0 : i32
    return %arg0, %c0_i32, %c0_i32_0 : i32, i32, i32
  }
  func.func @transform_4(%arg0: i32) -> (i32, i32, i32) {
    %c0_i32 = arith.constant 0 : i32
    %c0_i32_0 = arith.constant 0 : i32
    %c0_i32_1 = arith.constant 0 : i32
    return %arg0, %c0_i32, %c0_i32_0 : i32, i32, i32
  }
  func.func @transform_5(%arg0: i32) -> (i32, i32) {
    %c0_i32 = arith.constant 0 : i32
    %c0_i32_0 = arith.constant 0 : i32
    %c0_i32_1 = arith.constant 0 : i32
    return %c0_i32, %c0_i32_0 : i32, i32
  }
  func.func @transform_6(%arg0: i32) -> (i32, i32) {
    %c0_i32 = arith.constant 0 : i32
    %c0_i32_0 = arith.constant 0 : i32
    %c0_i32_1 = arith.constant 0 : i32
    return %c0_i32, %c0_i32_0 : i32, i32
  }
  func.func @transform_7(%arg0: i32) -> (i32, i32, i32) {
    %c0_i32 = arith.constant 0 : i32
    %c0_i32_0 = arith.constant 0 : i32
    %c0_i32_1 = arith.constant 0 : i32
    %c0_i32_2 = arith.constant 0 : i32
    return %c0_i32, %c0_i32_0, %c0_i32_1 : i32, i32, i32
  }
  func.func @transform_8(%arg0: i32) -> (i32, i32, i32) {
    %c0_i32 = arith.constant 0 : i32
    %c0_i32_0 = arith.constant 0 : i32
    %c0_i32_1 = arith.constant 0 : i32
    %c0_i32_2 = arith.constant 0 : i32
    return %c0_i32, %c0_i32_0, %c0_i32_1 : i32, i32, i32
  }
  func.func @transform_9(%arg0: i32) -> (i32, i32) {
    %c0_i32 = arith.constant 0 : i32
    %c0_i32_0 = arith.constant 0 : i32
    %c0_i32_1 = arith.constant 0 : i32
    return %c0_i32, %c0_i32_0 : i32, i32
  }
  func.func @transform_10(%arg0: i32) -> (i32, i32) {
    %c0_i32 = arith.constant 0 : i32
    %c0_i32_0 = arith.constant 0 : i32
    %c0_i32_1 = arith.constant 0 : i32
    return %c0_i32, %c0_i32_0 : i32, i32
  }
  func.func @transform_11(%arg0: i32) -> (i32, i32) {
    %c0_i32 = arith.constant 0 : i32
    %c0_i32_0 = arith.constant 0 : i32
    %c0_i32_1 = arith.constant 0 : i32
    return %c0_i32, %c0_i32_0 : i32, i32
  }
  func.func @transform_12(%arg0: i32) -> (i32, i32) {
    %c0_i32 = arith.constant 0 : i32
    %c0_i32_0 = arith.constant 0 : i32
    %c0_i32_1 = arith.constant 0 : i32
    return %c0_i32, %c0_i32_0 : i32, i32
  }
  func.func @transform_13(%arg0: i32) -> (i32, i32) {
    %c0_i32 = arith.constant 0 : i32
    %c0_i32_0 = arith.constant 0 : i32
    %c0_i32_1 = arith.constant 0 : i32
    return %c0_i32, %c0_i32_0 : i32, i32
  }
  func.func @transform_14(%arg0: i32) -> (i32, i32) {
    %c0_i32 = arith.constant 0 : i32
    %c0_i32_0 = arith.constant 0 : i32
    %c0_i32_1 = arith.constant 0 : i32
    return %c0_i32, %c0_i32_0 : i32, i32
  }
  func.func @transform_15(%arg0: i32) -> (i32, i32) {
    %c0_i32 = arith.constant 0 : i32
    %c0_i32_0 = arith.constant 0 : i32
    %c0_i32_1 = arith.constant 0 : i32
    return %c0_i32, %c0_i32_0 : i32, i32
  }
  func.func @transform_16(%arg0: i32) -> (i32, i32) {
    %c0_i32 = arith.constant 0 : i32
    %c0_i32_0 = arith.constant 0 : i32
    %c0_i32_1 = arith.constant 0 : i32
    return %c0_i32, %c0_i32_0 : i32, i32
  }
  func.func @transform_17(%arg0: i32) -> (i32, i32) {
    %c0_i32 = arith.constant 0 : i32
    %c0_i32_0 = arith.constant 0 : i32
    %c0_i32_1 = arith.constant 0 : i32
    return %c0_i32, %c0_i32_0 : i32, i32
  }
  func.func @transform_18(%arg0: i32) -> (i32, i32) {
    %c0_i32 = arith.constant 0 : i32
    %c0_i32_0 = arith.constant 0 : i32
    %c0_i32_1 = arith.constant 0 : i32
    return %c0_i32, %c0_i32_0 : i32, i32
  }
  func.func @transform_19(%arg0: i32) -> (i32, i32) {
    %c0_i32 = arith.constant 0 : i32
    %c0_i32_0 = arith.constant 0 : i32
    %c0_i32_1 = arith.constant 0 : i32
    return %c0_i32, %c0_i32_0 : i32, i32
  }
  func.func @transform_20(%arg0: i32) -> (i32, i32, i32) {
    %c0_i32 = arith.constant 0 : i32
    %c0_i32_0 = arith.constant 0 : i32
    %c0_i32_1 = arith.constant 0 : i32
    %c0_i32_2 = arith.constant 0 : i32
    return %c0_i32, %c0_i32_0, %c0_i32_1 : i32, i32, i32
  }
  func.func @transform_21(%arg0: i32) -> (i32, i32, i32) {
    %c0_i32 = arith.constant 0 : i32
    %c0_i32_0 = arith.constant 0 : i32
    %c0_i32_1 = arith.constant 0 : i32
    %c0_i32_2 = arith.constant 0 : i32
    return %c0_i32, %c0_i32_0, %c0_i32_1 : i32, i32, i32
  }
  func.func @transform_22(%arg0: i32) -> (i32, i32) {
    %c0_i32 = arith.constant 0 : i32
    %c0_i32_0 = arith.constant 0 : i32
    %c0_i32_1 = arith.constant 0 : i32
    return %c0_i32, %c0_i32_0 : i32, i32
  }
  func.func @transform_23(%arg0: i32) -> (i32, i32, i32) {
    %c0_i32 = arith.constant 0 : i32
    %c0_i32_0 = arith.constant 0 : i32
    %c0_i32_1 = arith.constant 0 : i32
    return %arg0, %c0_i32, %c0_i32_0 : i32, i32, i32
  }
  func.func @transform_24(%arg0: i32) -> (i32, i32, i32) {
    %c0_i32 = arith.constant 0 : i32
    %c0_i32_0 = arith.constant 0 : i32
    %c0_i32_1 = arith.constant 0 : i32
    return %arg0, %c0_i32, %c0_i32_0 : i32, i32, i32
  }
  func.func @transform_25(%arg0: i32) -> (i32, i32, i32) {
    %c0_i32 = arith.constant 0 : i32
    %c0_i32_0 = arith.constant 0 : i32
    %c0_i32_1 = arith.constant 0 : i32
    return %arg0, %c0_i32, %c0_i32_0 : i32, i32, i32
  }
  func.func @transform_26(%arg0: i32) -> (i32, i32, i32) {
    %c0_i32 = arith.constant 0 : i32
    %c0_i32_0 = arith.constant 0 : i32
    %c0_i32_1 = arith.constant 0 : i32
    return %arg0, %c0_i32, %c0_i32_0 : i32, i32, i32
  }
}

module attributes {stable_mosaic.version = 11 : i64} {
  func.func @_linear_kernel(%arg0: i32, %arg1: memref<16x32xf32, #tpu.memory_space<vmem>>, %arg2: memref<32x4xbf16, #tpu.memory_space<vmem>>, %arg3: memref<1x4xf32, #tpu.memory_space<vmem>>, %arg4: memref<16x4xf32, #tpu.memory_space<vmem>>) attributes {dimension_semantics = [#tpu.dimension_semantics<parallel>], iteration_bounds = array<i64: 1>, scalar_prefetch = 0 : i64, scratch_operands = 0 : i64, tpu.core_type = #tpu.core_type<tc>, window_params = [{transform_indices = @transform_0, window_bounds = array<i64: 16, 32>}, {pipeline_mode = #tpu.pipeline_mode<synchronous>, transform_indices = @transform_1, window_bounds = array<i64: 32, 4>}, {pipeline_mode = #tpu.pipeline_mode<synchronous>, transform_indices = @transform_2, window_bounds = array<i64: 1, 4>}, {transform_indices = @transform_3, window_bounds = array<i64: 16, 4>}]} {
    %c0 = arith.constant 0 : index
    %c0_0 = arith.constant 0 : index
    %0 = vector.load %arg1[%c0, %c0_0] : memref<16x32xf32, #tpu.memory_space<vmem>>, vector<16x32xf32>
    %1 = arith.truncf %0 : vector<16x32xf32> to vector<16x32xbf16>
    %c0_1 = arith.constant 0 : index
    %c0_2 = arith.constant 0 : index
    %2 = vector.load %arg2[%c0_1, %c0_2] : memref<32x4xbf16, #tpu.memory_space<vmem>>, vector<32x4xbf16>
    %cst = arith.constant dense<0.000000e+00> : vector<16x4xf32>
    %3 = tpu.matmul %1, %2, %cst {dimension_numbers = #tpu.dot_dimension_numbers<[1], [0], [0], [1], [0, 0, 1, 1], [], []>} : vector<16x32xbf16>, vector<32x4xbf16>, vector<16x4xf32> -> vector<16x4xf32>
    %c0_3 = arith.constant 0 : index
    %c0_4 = arith.constant 0 : index
    %4 = vector.load %arg3[%c0_3, %c0_4] : memref<1x4xf32, #tpu.memory_space<vmem>>, vector<1x4xf32>
    %5 = vector.broadcast %4 : vector<1x4xf32> to vector<16x4xf32>
    %6 = arith.addf %3, %5 : vector<16x4xf32>
    %c0_5 = arith.constant 0 : index
    %c0_6 = arith.constant 0 : index
    %7 = vector.load %arg4[%c0_5, %c0_6] : memref<16x4xf32, #tpu.memory_space<vmem>>, vector<16x4xf32>
    tpu.vector_store %arg4[%c0_5, %c0_6], %6 {strides = array<i32>} : memref<16x4xf32, #tpu.memory_space<vmem>>, vector<16x4xf32>,
    return
  }
  func.func @transform_0(%arg0: i32) -> (i32, i32) {
    %c0_i32 = arith.constant 0 : i32
    %c0_i32_0 = arith.constant 0 : i32
    return %arg0, %c0_i32 : i32, i32
  }
  func.func @transform_1(%arg0: i32) -> (i32, i32) {
    %c0_i32 = arith.constant 0 : i32
    %c0_i32_0 = arith.constant 0 : i32
    %c0_i32_1 = arith.constant 0 : i32
    return %c0_i32, %c0_i32_0 : i32, i32
  }
  func.func @transform_2(%arg0: i32) -> (i32, i32) {
    %c0_i32 = arith.constant 0 : i32
    %c0_i32_0 = arith.constant 0 : i32
    %c0_i32_1 = arith.constant 0 : i32
    return %c0_i32, %c0_i32_0 : i32, i32
  }
  func.func @transform_3(%arg0: i32) -> (i32, i32) {
    %c0_i32 = arith.constant 0 : i32
    %c0_i32_0 = arith.constant 0 : i32
    return %arg0, %c0_i32 : i32, i32
  }
}

</mosaic_0001>

<llo_original>
// kernel: _lambda_.4
$region0: #{_lambda_.4}
  #allocation0 [shape = 'u32[]', space=smem, size = 0x4, offset = 0x4, fixed_abs, tag = 'smem constant byte address 0x4 - core index']
  #allocation1 [shape = 'u32[144,128]{1,0:T(1,128)}', space=vmem, size = 0x12000, scoped, tag = 'internal scratch']
  %s0 = inlined_call_operand.vmem [shape: f32[32,12], index: 0, kind: input, shape index: {}]
  %s1 = inlined_call_operand.vmem [shape: bf16[12,32], index: 1, kind: input, shape index: {}]
  %s2 = inlined_call_operand.vmem [shape: f32[32,32], index: 2, kind: output, shape index: {}]
  %s3 = sld [smem:[#allocation0]]
  $region18: #{_lambda_.4} parent=0
    _
  %s5 = ssub.s32 1, %s3
  %s6 = scalar_select 0, %s5, %s3
  // Predicated region
  $region2: #{_lambda_.4} parent=0 // pred_check
    _
  $region3: #{_lambda_.4} parent=0 // pred_check_branch
    %8 = sbr.rel (0) target = $region5
  $region4: #{_lambda_.4} parent=0 // pred_region
    _
  $region5: #{_lambda_.4} parent=0 // pred_fallthru
    _
  // Predicated region
  $region6: #{_lambda_.4} parent=0 // pred_check
    _
  $region7: #{_lambda_.4} parent=0 // pred_check_branch
    %10 = sbr.rel (0) target = $region9
  $region8: #{_lambda_.4} parent=0 // pred_region
    _
  $region9: #{_lambda_.4} parent=0 // pred_fallthru
    _
  %v12 = vld [vmem:[%s0] sm:$0xff]
  %v13 = vld [vmem:[%s0 + $0x8] sm:$0xff]
  %v14 = vld [vmem:[%s0 + $0x10] sm:$0xff]
  %v15 = vld [vmem:[%s0 + $0x18] sm:$0xff]
  %v16 = vpack.c.bf16 %v13, %v12
  %v17 = vpack.c.bf16 %v15, %v14
  %v18 = vld [vmem:[%s1] sm:$0xf]
  %v19 = vld [vmem:[%s1 + $0x4] sm:$0x3]
  %v22 = vunpack.c.l.b16 %v18
  %v23 = vunpack.c.l.b16 %v19
  %v24 = vpack.c.b16 %v23, %v22
  %vm25 = vcmask 97280
  %v27 = vsel %vm25, %v16, 0
  %v30 = vsel %vm25, %v17, 0
  %vm32 = vcmask 1045504
  %v34 = vsel %vm32, %v24, 0
  %36 = vmatprep.subr.bf16.mxu0 0
  %37 = vmatpush1.bf16.msra.mxu0 0
  %38 = vmatprep.subr.bf16.mxu0 0
  %39 = vmatpush1.bf16.msra.mxu0 0
  %40 = vmatprep.subr.bf16.mxu0 0
  %41 = vmatpush1.bf16.msra.mxu0 0
  %42 = vmatprep.subr.bf16.mxu0 0
  %43 = vmatpush1.bf16.msra.mxu0 0
  %44 = vmatprep.subr.bf16.mxu0 0
  %45 = vmatpush1.bf16.msra.mxu0 0
  %46 = vmatprep.subr.bf16.mxu0 0
  %47 = vmatpush1.bf16.msra.mxu0 0
  %48 = vmatprep.subr.bf16.mxu0 0
  %49 = vmatpush1.bf16.msra.mxu0 0
  %50 = vmatprep.subr.bf16.mxu0 0
  %51 = vmatpush1.bf16.msra.mxu0 %v34
  %52 = vmatprep.subr.bf16.mxu0 0
  %53 = vmatpush2.bf16.msra.mxu0 0
  %54 = vmatprep.subr.bf16.mxu0 0
  %55 = vmatpush2.bf16.msra.mxu0 0
  %56 = vmatprep.subr.bf16.mxu0 0
  %57 = vmatpush2.bf16.msra.mxu0 0
  %58 = vmatprep.subr.bf16.mxu0 0
  %59 = vmatpush2.bf16.msra.mxu0 0
  %60 = vmatprep.subr.bf16.mxu0 0
  %61 = vmatpush2.bf16.msra.mxu0 0
  %62 = vmatprep.subr.bf16.mxu0 0
  %63 = vmatpush2.bf16.msra.mxu0 0
  %64 = vmatprep.subr.bf16.mxu0 0
  %65 = vmatpush2.bf16.msra.mxu0 0
  %66 = vmatprep.subr.bf16.mxu0 0
  %67 = vmatpush2.bf16.msra.mxu0 0
  %68 = vmatprep.mubr.bf16.mxu0 0
  %69 = vmatmul.mubr.bf16.gmra.mxu0 %v27
  %v70 = vpop.f32.mrf.mxu0
  %v71 = vadd.f32 0.0, %v70
  %v72 = vpop.f32.mrf.mxu0
  %v73 = vpop.f32.mrf.mxu0
  %v74 = vadd.f32 0.0, %v73
  %v75 = vpop.f32.mrf.mxu0
  %76 = vmatprep.mubr.bf16.mxu0 0
  %77 = vmatmul.mubr.bf16.gmra.mxu0 %v30
  %v78 = vpop.f32.mrf.mxu0
  %v79 = vadd.f32 0.0, %v78
  %v80 = vpop.f32.mrf.mxu0
  %v81 = vpop.f32.mrf.mxu0
  %v82 = vadd.f32 0.0, %v81
  %v83 = vpop.f32.mrf.mxu0
  %84 = vdwg.mxu0
  %vm85 = vcmask 261120
  %86 = vst.msk [vmem:[%s2] sm:$0xff] %vm85, %v71
  %87 = vst.msk [vmem:[%s2 + $0x8] sm:$0xff] %vm85, %v74
  %88 = vst.msk [vmem:[%s2 + $0x10] sm:$0xff] %vm85, %v79
  %89 = vst.msk [vmem:[%s2 + $0x18] sm:$0xff] %vm85, %v82
  // Predicated region
  $region10: #{_lambda_.4} parent=0 // pred_check
    _
  $region11: #{_lambda_.4} parent=0 // pred_check_branch
    %91 = sbr.rel (0) target = $region13
  $region12: #{_lambda_.4} parent=0 // pred_region
    _
  $region13: #{_lambda_.4} parent=0 // pred_fallthru
    _
  // Predicated region
  $region14: #{_lambda_.4} parent=0 // pred_check
    _
  $region15: #{_lambda_.4} parent=0 // pred_check_branch
    %93 = sbr.rel (0) target = $region17
  $region16: #{_lambda_.4} parent=0 // pred_region
    _
  $region17: #{_lambda_.4} parent=0 // pred_fallthru
    _

// kernel: _lambda_.5
$region0: #{_lambda_.5}
  #allocation0 [shape = 'u32[]', space=smem, size = 0x4, offset = 0x4, fixed_abs, tag = 'smem constant byte address 0x4 - core index']
  #allocation1 [shape = 'u32[144,128]{1,0:T(1,128)}', space=vmem, size = 0x12000, scoped, tag = 'internal scratch']
  %s0 = inlined_call_operand.vmem [shape: f32[2,16,32], index: 0, kind: input, shape index: {}]
  %s1 = inlined_call_operand.vmem [shape: f32[2,3,32], index: 1, kind: input, shape index: {}]
  %s2 = inlined_call_operand.vmem [shape: f32[2,3,32], index: 2, kind: input, shape index: {}]
  %s3 = inlined_call_operand.vmem [shape: f32[2,3,32], index: 3, kind: input, shape index: {}]
  %s4 = inlined_call_operand.vmem [shape: f32[2,16,4], index: 4, kind: input, shape index: {}]
  %s5 = inlined_call_operand.vmem [shape: bf16[32,32], index: 5, kind: input, shape index: {}]
  %s6 = inlined_call_operand.vmem [shape: f32[1,32], index: 6, kind: input, shape index: {}]
  %s7 = inlined_call_operand.vmem [shape: bf16[4,8,32], index: 7, kind: input, shape index: {}]
  %s8 = inlined_call_operand.vmem [shape: f32[4,32,16], index: 8, kind: input, shape index: {}]
  %s9 = inlined_call_operand.vmem [shape: f32[32,32], index: 9, kind: input, shape index: {}]
  %s10 = inlined_call_operand.vmem [shape: f32[1,32], index: 10, kind: input, shape index: {}]
  %s11 = inlined_call_operand.vmem [shape: f32[1,32], index: 11, kind: input, shape index: {}]
  %s12 = inlined_call_operand.vmem [shape: bf16[32,64], index: 12, kind: input, shape index: {}]
  %s13 = inlined_call_operand.vmem [shape: bf16[64,32], index: 13, kind: input, shape index: {}]
  %s14 = inlined_call_operand.vmem [shape: f32[1,32], index: 14, kind: input, shape index: {}]
  %s15 = inlined_call_operand.vmem [shape: f32[1,32], index: 15, kind: input, shape index: {}]
  %s16 = inlined_call_operand.vmem [shape: bf16[32,4], index: 16, kind: input, shape index: {}]
  %s17 = inlined_call_operand.vmem [shape: f32[1,4], index: 17, kind: input, shape index: {}]
  %s18 = inlined_call_operand.vmem [shape: bf16[32,4], index: 18, kind: input, shape index: {}]
  %s19 = inlined_call_operand.vmem [shape: f32[1,4], index: 19, kind: input, shape index: {}]
  %s20 = inlined_call_operand.vmem [shape: f32[16,16,4], index: 20, kind: input, shape index: {}]
  %s21 = inlined_call_operand.vmem [shape: f32[16,16,4], index: 21, kind: input, shape index: {}]
  %s22 = inlined_call_operand.vmem [shape: f32[16,4], index: 22, kind: input, shape index: {}]
  %s23 = inlined_call_operand.vmem [shape: f32[2,16,32], index: 23, kind: output, shape index: {0}]
  %s24 = inlined_call_operand.vmem [shape: f32[2,16,4], index: 24, kind: output, shape index: {1}]
  %s25 = inlined_call_operand.vmem [shape: f32[2,1,32], index: 25, kind: output, shape index: {2}]
  %s26 = inlined_call_operand.vmem [shape: f32[2,8,32], index: 26, kind: output, shape index: {3}]
  %27 = xla_tuple %s23, %s24, %s25, %s26
  %s28 = sld [smem:[#allocation0]]
  $region149: #{_lambda_.5} parent=0
    _
  %s30 = ssub.s32 1, %s28
  %s31 = scalar_select 0, %s30, %s28
  loop: start=0, step=1, limit=4
  $region2: #{_lambda_.5} parent=0 // loop_pre_header
    _
  $region3: #{_lambda_.5} parent=0 // loop_header
    %s33 = sphi 0, %s37
    %p34 = scmp.ge.s32.totalorder %s33, 4
    %s43 = sphi 0, %s45
    %s46 = sphi 0, %s43
    %s47 = sphi 0, %s46
    %s63 = sphi 0, %s47
    %s69 = sphi 0, %s71
    %s72 = sphi 0, %s69
    %s73 = sphi 0, %s72
    %s89 = sphi 0, %s73
    %s95 = sphi 0, %s97
    %s98 = sphi 0, %s95
    %s99 = sphi 0, %s98
    %s115 = sphi 0, %s99
    %s121 = sphi 0, %s123
    %s124 = sphi 0, %s121
    %s125 = sphi 0, %s124
    %s141 = sphi 0, %s125
    %s147 = sphi 0, %s149
    %s150 = sphi 0, %s147
    %s151 = sphi 0, %s150
    %s167 = sphi 0, %s151
    %s171 = sphi 0, %s171
    %s173 = sphi 0, %s171
    %s174 = sphi 0, %s173
    %s188 = sphi 0, %s174
    %s192 = sphi 0, %s192
    %s194 = sphi 0, %s192
    %s195 = sphi 0, %s194
    %s209 = sphi 0, %s195
    %s213 = sphi 0, %s213
    %s215 = sphi 0, %s213
    %s216 = sphi 0, %s215
    %s230 = sphi 0, %s216
    %s234 = sphi 0, %s234
    %s236 = sphi 0, %s234
    %s237 = sphi 0, %s236
    %s251 = sphi 0, %s237
    %s255 = sphi 0, %s255
    %s257 = sphi 0, %s255
    %s258 = sphi 0, %s257
    %s272 = sphi 0, %s258
    %s276 = sphi 0, %s276
    %s278 = sphi 0, %s276
    %s279 = sphi 0, %s278
    %s293 = sphi 0, %s279
    %s297 = sphi 0, %s297
    %s299 = sphi 0, %s297
    %s300 = sphi 0, %s299
    %s314 = sphi 0, %s300
    %s318 = sphi 0, %s318
    %s320 = sphi 0, %s318
    %s321 = sphi 0, %s320
    %s335 = sphi 0, %s321
    %s339 = sphi 0, %s339
    %s341 = sphi 0, %s339
    %s342 = sphi 0, %s341
    %s356 = sphi 0, %s342
    %s360 = sphi 0, %s360
    %s362 = sphi 0, %s360
    %s363 = sphi 0, %s362
    %s377 = sphi 0, %s363
    %s381 = sphi 0, %s381
    %s383 = sphi 0, %s381
    %s384 = sphi 0, %s383
    %s398 = sphi 0, %s384
    %s402 = sphi 0, %s402
    %s404 = sphi 0, %s402
    %s405 = sphi 0, %s404
    %s419 = sphi 0, %s405
    %s423 = sphi 0, %s423
    %s425 = sphi 0, %s423
    %s426 = sphi 0, %s425
    %s440 = sphi 0, %s426
    %s444 = sphi 0, %s444
    %s446 = sphi 0, %s444
    %s447 = sphi 0, %s446
    %s461 = sphi 0, %s447
    %s465 = sphi 0, %s465
    %s467 = sphi 0, %s465
    %s468 = sphi 0, %s467
    %s482 = sphi 0, %s468
    %s486 = sphi 0, %s486
    %s488 = sphi 0, %s486
    %s489 = sphi 0, %s488
    %s503 = sphi 0, %s489
    %s507 = sphi 0, %s507
    %s509 = sphi 0, %s507
    %s510 = sphi 0, %s509
    %s524 = sphi 0, %s510
    %s528 = sphi 0, %s528
    %s530 = sphi 0, %s528
    %s531 = sphi 0, %s530
    %s545 = sphi 0, %s531
    %s551 = sphi 0, %s553
    %s554 = sphi 0, %s551
    %s555 = sphi 0, %s554
    %s571 = sphi 0, %s555
    %s577 = sphi 0, %s579
    %s580 = sphi 0, %s577
    %s581 = sphi 0, %s580
    %s597 = sphi 0, %s581
    %s603 = sphi 0, %s605
    %s606 = sphi 0, %s603
    %s607 = sphi 0, %s606
    %s623 = sphi 0, %s607
    %s629 = sphi 0, %s631
    %s632 = sphi 0, %s629
    %s633 = sphi 0, %s632
    %s649 = sphi 0, %s633
  $region4: #{_lambda_.5} parent=0 // loop_header_branch
    %36 = sbr.rel (%p34) target = $region8
  $region5: #{_lambda_.5} parent=0 // loop_body
    %s38 = ssub.s32 %s33, 1
    %s39 = ssub.s32 %s33, 2
    %s40 = sadd.s32 %s33, 1
    %s41 = ssub.s32 %s33, %s40
    %p42 = scmp.eq.s32.totalorder %s41, 0
    %s44 = sadd.s32 %s43, 1
    %s45 = scalar_select %p42, %s43, %s44
    %p48 = pneg %p42
    %p49 = scmp.eq.s32.totalorder %s33, 1
    %p50 = por %p48, %p49
    %p51 = scmp.ne.s32.totalorder %s43, %s46
    %p52 = scmp.eq.s32.totalorder %s33, 0
    %p53 = por %p51, %p52
    %p54 = scmp.ne.s32.totalorder %s43, %s46
    %p55 = scmp.eq.s32.totalorder %s38, 1
    %p56 = por %p54, %p55
    %p57 = scmp.ne.s32.totalorder %s46, %s47
    %p58 = scmp.eq.s32.totalorder %s38, 0
    %p59 = por %p57, %p58
    %p60 = scmp.ne.s32.totalorder %s46, %s47
    %p61 = scmp.eq.s32.totalorder %s39, 1
    %p62 = por %p60, %p61
    %p64 = scmp.ne.s32.totalorder %s47, %s63
    %p65 = scmp.eq.s32.totalorder %s39, 0
    %p66 = por %p64, %p65
    %s67 = ssub.s32 %s33, %s40
    %p68 = scmp.eq.s32.totalorder %s67, 0
    %s70 = sadd.s32 %s69, 1
    %s71 = scalar_select %p68, %s69, %s70
    %p74 = pneg %p68
    %p75 = scmp.eq.s32.totalorder %s33, 1
    %p76 = por %p74, %p75
    %p77 = scmp.ne.s32.totalorder %s69, %s72
    %p78 = scmp.eq.s32.totalorder %s33, 0
    %p79 = por %p77, %p78
    %p80 = scmp.ne.s32.totalorder %s69, %s72
    %p81 = scmp.eq.s32.totalorder %s38, 1
    %p82 = por %p80, %p81
    %p83 = scmp.ne.s32.totalorder %s72, %s73
    %p84 = scmp.eq.s32.totalorder %s38, 0
    %p85 = por %p83, %p84
    %p86 = scmp.ne.s32.totalorder %s72, %s73
    %p87 = scmp.eq.s32.totalorder %s39, 1
    %p88 = por %p86, %p87
    %p90 = scmp.ne.s32.totalorder %s73, %s89
    %p91 = scmp.eq.s32.totalorder %s39, 0
    %p92 = por %p90, %p91
    %s93 = ssub.s32 %s33, %s40
    %p94 = scmp.eq.s32.totalorder %s93, 0
    %s96 = sadd.s32 %s95, 1
    %s97 = scalar_select %p94, %s95, %s96
    %p100 = pneg %p94
    %p101 = scmp.eq.s32.totalorder %s33, 1
    %p102 = por %p100, %p101
    %p103 = scmp.ne.s32.totalorder %s95, %s98
    %p104 = scmp.eq.s32.totalorder %s33, 0
    %p105 = por %p103, %p104
    %p106 = scmp.ne.s32.totalorder %s95, %s98
    %p107 = scmp.eq.s32.totalorder %s38, 1
    %p108 = por %p106, %p107
    %p109 = scmp.ne.s32.totalorder %s98, %s99
    %p110 = scmp.eq.s32.totalorder %s38, 0
    %p111 = por %p109, %p110
    %p112 = scmp.ne.s32.totalorder %s98, %s99
    %p113 = scmp.eq.s32.totalorder %s39, 1
    %p114 = por %p112, %p113
    %p116 = scmp.ne.s32.totalorder %s99, %s115
    %p117 = scmp.eq.s32.totalorder %s39, 0
    %p118 = por %p116, %p117
    %s119 = ssub.s32 %s33, %s40
    %p120 = scmp.eq.s32.totalorder %s119, 0
    %s122 = sadd.s32 %s121, 1
    %s123 = scalar_select %p120, %s121, %s122
    %p126 = pneg %p120
    %p127 = scmp.eq.s32.totalorder %s33, 1
    %p128 = por %p126, %p127
    %p129 = scmp.ne.s32.totalorder %s121, %s124
    %p130 = scmp.eq.s32.totalorder %s33, 0
    %p131 = por %p129, %p130
    %p132 = scmp.ne.s32.totalorder %s121, %s124
    %p133 = scmp.eq.s32.totalorder %s38, 1
    %p134 = por %p132, %p133
    %p135 = scmp.ne.s32.totalorder %s124, %s125
    %p136 = scmp.eq.s32.totalorder %s38, 0
    %p137 = por %p135, %p136
    %p138 = scmp.ne.s32.totalorder %s124, %s125
    %p139 = scmp.eq.s32.totalorder %s39, 1
    %p140 = por %p138, %p139
    %p142 = scmp.ne.s32.totalorder %s125, %s141
    %p143 = scmp.eq.s32.totalorder %s39, 0
    %p144 = por %p142, %p143
    %s145 = ssub.s32 %s33, %s40
    %p146 = scmp.eq.s32.totalorder %s145, 0
    %s148 = sadd.s32 %s147, 1
    %s149 = scalar_select %p146, %s147, %s148
    %p152 = pneg %p146
    %p153 = scmp.eq.s32.totalorder %s33, 1
    %p154 = por %p152, %p153
    %p155 = scmp.ne.s32.totalorder %s147, %s150
    %p156 = scmp.eq.s32.totalorder %s33, 0
    %p157 = por %p155, %p156
    %p158 = scmp.ne.s32.totalorder %s147, %s150
    %p159 = scmp.eq.s32.totalorder %s38, 1
    %p160 = por %p158, %p159
    %p161 = scmp.ne.s32.totalorder %s150, %s151
    %p162 = scmp.eq.s32.totalorder %s38, 0
    %p163 = por %p161, %p162
    %p164 = scmp.ne.s32.totalorder %s150, %s151
    %p165 = scmp.eq.s32.totalorder %s39, 1
    %p166 = por %p164, %p165
    %p168 = scmp.ne.s32.totalorder %s151, %s167
    %p169 = scmp.eq.s32.totalorder %s39, 0
    %p170 = por %p168, %p169
    %s172 = sadd.s32 %s171, 1
    %p175 = scmp.eq.s32.totalorder %s33, 1
    %p176 = scmp.ne.s32.totalorder %s171, %s173
    %p177 = scmp.eq.s32.totalorder %s33, 0
    %p178 = por %p176, %p177
    %p179 = scmp.ne.s32.totalorder %s171, %s173
    %p180 = scmp.eq.s32.totalorder %s38, 1
    %p181 = por %p179, %p180
    %p182 = scmp.ne.s32.totalorder %s173, %s174
    %p183 = scmp.eq.s32.totalorder %s38, 0
    %p184 = por %p182, %p183
    %p185 = scmp.ne.s32.totalorder %s173, %s174
    %p186 = scmp.eq.s32.totalorder %s39, 1
    %p187 = por %p185, %p186
    %p189 = scmp.ne.s32.totalorder %s174, %s188
    %p190 = scmp.eq.s32.totalorder %s39, 0
    %p191 = por %p189, %p190
    %s193 = sadd.s32 %s192, 1
    %p196 = scmp.eq.s32.totalorder %s33, 1
    %p197 = scmp.ne.s32.totalorder %s192, %s194
    %p198 = scmp.eq.s32.totalorder %s33, 0
    %p199 = por %p197, %p198
    %p200 = scmp.ne.s32.totalorder %s192, %s194
    %p201 = scmp.eq.s32.totalorder %s38, 1
    %p202 = por %p200, %p201
    %p203 = scmp.ne.s32.totalorder %s194, %s195
    %p204 = scmp.eq.s32.totalorder %s38, 0
    %p205 = por %p203, %p204
    %p206 = scmp.ne.s32.totalorder %s194, %s195
    %p207 = scmp.eq.s32.totalorder %s39, 1
    %p208 = por %p206, %p207
    %p210 = scmp.ne.s32.totalorder %s195, %s209
    %p211 = scmp.eq.s32.totalorder %s39, 0
    %p212 = por %p210, %p211
    %s214 = sadd.s32 %s213, 1
    %p217 = scmp.eq.s32.totalorder %s33, 1
    %p218 = scmp.ne.s32.totalorder %s213, %s215
    %p219 = scmp.eq.s32.totalorder %s33, 0
    %p220 = por %p218, %p219
    %p221 = scmp.ne.s32.totalorder %s213, %s215
    %p222 = scmp.eq.s32.totalorder %s38, 1
    %p223 = por %p221, %p222
    %p224 = scmp.ne.s32.totalorder %s215, %s216
    %p225 = scmp.eq.s32.totalorder %s38, 0
    %p226 = por %p224, %p225
    %p227 = scmp.ne.s32.totalorder %s215, %s216
    %p228 = scmp.eq.s32.totalorder %s39, 1
    %p229 = por %p227, %p228
    %p231 = scmp.ne.s32.totalorder %s216, %s230
    %p232 = scmp.eq.s32.totalorder %s39, 0
    %p233 = por %p231, %p232
    %s235 = sadd.s32 %s234, 1
    %p238 = scmp.eq.s32.totalorder %s33, 1
    %p239 = scmp.ne.s32.totalorder %s234, %s236
    %p240 = scmp.eq.s32.totalorder %s33, 0
    %p241 = por %p239, %p240
    %p242 = scmp.ne.s32.totalorder %s234, %s236
    %p243 = scmp.eq.s32.totalorder %s38, 1
    %p244 = por %p242, %p243
    %p245 = scmp.ne.s32.totalorder %s236, %s237
    %p246 = scmp.eq.s32.totalorder %s38, 0
    %p247 = por %p245, %p246
    %p248 = scmp.ne.s32.totalorder %s236, %s237
    %p249 = scmp.eq.s32.totalorder %s39, 1
    %p250 = por %p248, %p249
    %p252 = scmp.ne.s32.totalorder %s237, %s251
    %p253 = scmp.eq.s32.totalorder %s39, 0
    %p254 = por %p252, %p253
    %s256 = sadd.s32 %s255, 1
    %p259 = scmp.eq.s32.totalorder %s33, 1
    %p260 = scmp.ne.s32.totalorder %s255, %s257
    %p261 = scmp.eq.s32.totalorder %s33, 0
    %p262 = por %p260, %p261
    %p263 = scmp.ne.s32.totalorder %s255, %s257
    %p264 = scmp.eq.s32.totalorder %s38, 1
    %p265 = por %p263, %p264
    %p266 = scmp.ne.s32.totalorder %s257, %s258
    %p267 = scmp.eq.s32.totalorder %s38, 0
    %p268 = por %p266, %p267
    %p269 = scmp.ne.s32.totalorder %s257, %s258
    %p270 = scmp.eq.s32.totalorder %s39, 1
    %p271 = por %p269, %p270
    %p273 = scmp.ne.s32.totalorder %s258, %s272
    %p274 = scmp.eq.s32.totalorder %s39, 0
    %p275 = por %p273, %p274
    %s277 = sadd.s32 %s276, 1
    %p280 = scmp.eq.s32.totalorder %s33, 1
    %p281 = scmp.ne.s32.totalorder %s276, %s278
    %p282 = scmp.eq.s32.totalorder %s33, 0
    %p283 = por %p281, %p282
    %p284 = scmp.ne.s32.totalorder %s276, %s278
    %p285 = scmp.eq.s32.totalorder %s38, 1
    %p286 = por %p284, %p285
    %p287 = scmp.ne.s32.totalorder %s278, %s279
    %p288 = scmp.eq.s32.totalorder %s38, 0
    %p289 = por %p287, %p288
    %p290 = scmp.ne.s32.totalorder %s278, %s279
    %p291 = scmp.eq.s32.totalorder %s39, 1
    %p292 = por %p290, %p291
    %p294 = scmp.ne.s32.totalorder %s279, %s293
    %p295 = scmp.eq.s32.totalorder %s39, 0
    %p296 = por %p294, %p295
    %s298 = sadd.s32 %s297, 1
    %p301 = scmp.eq.s32.totalorder %s33, 1
    %p302 = scmp.ne.s32.totalorder %s297, %s299
    %p303 = scmp.eq.s32.totalorder %s33, 0
    %p304 = por %p302, %p303
    %p305 = scmp.ne.s32.totalorder %s297, %s299
    %p306 = scmp.eq.s32.totalorder %s38, 1
    %p307 = por %p305, %p306
    %p308 = scmp.ne.s32.totalorder %s299, %s300
    %p309 = scmp.eq.s32.totalorder %s38, 0
    %p310 = por %p308, %p309
    %p311 = scmp.ne.s32.totalorder %s299, %s300
    %p312 = scmp.eq.s32.totalorder %s39, 1
    %p313 = por %p311, %p312
    %p315 = scmp.ne.s32.totalorder %s300, %s314
    %p316 = scmp.eq.s32.totalorder %s39, 0
    %p317 = por %p315, %p316
    %s319 = sadd.s32 %s318, 1
    %p322 = scmp.eq.s32.totalorder %s33, 1
    %p323 = scmp.ne.s32.totalorder %s318, %s320
    %p324 = scmp.eq.s32.totalorder %s33, 0
    %p325 = por %p323, %p324
    %p326 = scmp.ne.s32.totalorder %s318, %s320
    %p327 = scmp.eq.s32.totalorder %s38, 1
    %p328 = por %p326, %p327
    %p329 = scmp.ne.s32.totalorder %s320, %s321
    %p330 = scmp.eq.s32.totalorder %s38, 0
    %p331 = por %p329, %p330
    %p332 = scmp.ne.s32.totalorder %s320, %s321
    %p333 = scmp.eq.s32.totalorder %s39, 1
    %p334 = por %p332, %p333
    %p336 = scmp.ne.s32.totalorder %s321, %s335
    %p337 = scmp.eq.s32.totalorder %s39, 0
    %p338 = por %p336, %p337
    %s340 = sadd.s32 %s339, 1
    %p343 = scmp.eq.s32.totalorder %s33, 1
    %p344 = scmp.ne.s32.totalorder %s339, %s341
    %p345 = scmp.eq.s32.totalorder %s33, 0
    %p346 = por %p344, %p345
    %p347 = scmp.ne.s32.totalorder %s339, %s341
    %p348 = scmp.eq.s32.totalorder %s38, 1
    %p349 = por %p347, %p348
    %p350 = scmp.ne.s32.totalorder %s341, %s342
    %p351 = scmp.eq.s32.totalorder %s38, 0
    %p352 = por %p350, %p351
    %p353 = scmp.ne.s32.totalorder %s341, %s342
    %p354 = scmp.eq.s32.totalorder %s39, 1
    %p355 = por %p353, %p354
    %p357 = scmp.ne.s32.totalorder %s342, %s356
    %p358 = scmp.eq.s32.totalorder %s39, 0
    %p359 = por %p357, %p358
    %s361 = sadd.s32 %s360, 1
    %p364 = scmp.eq.s32.totalorder %s33, 1
    %p365 = scmp.ne.s32.totalorder %s360, %s362
    %p366 = scmp.eq.s32.totalorder %s33, 0
    %p367 = por %p365, %p366
    %p368 = scmp.ne.s32.totalorder %s360, %s362
    %p369 = scmp.eq.s32.totalorder %s38, 1
    %p370 = por %p368, %p369
    %p371 = scmp.ne.s32.totalorder %s362, %s363
    %p372 = scmp.eq.s32.totalorder %s38, 0
    %p373 = por %p371, %p372
    %p374 = scmp.ne.s32.totalorder %s362, %s363
    %p375 = scmp.eq.s32.totalorder %s39, 1
    %p376 = por %p374, %p375
    %p378 = scmp.ne.s32.totalorder %s363, %s377
    %p379 = scmp.eq.s32.totalorder %s39, 0
    %p380 = por %p378, %p379
    %s382 = sadd.s32 %s381, 1
    %p385 = scmp.eq.s32.totalorder %s33, 1
    %p386 = scmp.ne.s32.totalorder %s381, %s383
    %p387 = scmp.eq.s32.totalorder %s33, 0
    %p388 = por %p386, %p387
    %p389 = scmp.ne.s32.totalorder %s381, %s383
    %p390 = scmp.eq.s32.totalorder %s38, 1
    %p391 = por %p389, %p390
    %p392 = scmp.ne.s32.totalorder %s383, %s384
    %p393 = scmp.eq.s32.totalorder %s38, 0
    %p394 = por %p392, %p393
    %p395 = scmp.ne.s32.totalorder %s383, %s384
    %p396 = scmp.eq.s32.totalorder %s39, 1
    %p397 = por %p395, %p396
    %p399 = scmp.ne.s32.totalorder %s384, %s398
    %p400 = scmp.eq.s32.totalorder %s39, 0
    %p401 = por %p399, %p400
    %s403 = sadd.s32 %s402, 1
    %p406 = scmp.eq.s32.totalorder %s33, 1
    %p407 = scmp.ne.s32.totalorder %s402, %s404
    %p408 = scmp.eq.s32.totalorder %s33, 0
    %p409 = por %p407, %p408
    %p410 = scmp.ne.s32.totalorder %s402, %s404
    %p411 = scmp.eq.s32.totalorder %s38, 1
    %p412 = por %p410, %p411
    %p413 = scmp.ne.s32.totalorder %s404, %s405
    %p414 = scmp.eq.s32.totalorder %s38, 0
    %p415 = por %p413, %p414
    %p416 = scmp.ne.s32.totalorder %s404, %s405
    %p417 = scmp.eq.s32.totalorder %s39, 1
    %p418 = por %p416, %p417
    %p420 = scmp.ne.s32.totalorder %s405, %s419
    %p421 = scmp.eq.s32.totalorder %s39, 0
    %p422 = por %p420, %p421
    %s424 = sadd.s32 %s423, 1
    %p427 = scmp.eq.s32.totalorder %s33, 1
    %p428 = scmp.ne.s32.totalorder %s423, %s425
    %p429 = scmp.eq.s32.totalorder %s33, 0
    %p430 = por %p428, %p429
    %p431 = scmp.ne.s32.totalorder %s423, %s425
    %p432 = scmp.eq.s32.totalorder %s38, 1
    %p433 = por %p431, %p432
    %p434 = scmp.ne.s32.totalorder %s425, %s426
    %p435 = scmp.eq.s32.totalorder %s38, 0
    %p436 = por %p434, %p435
    %p437 = scmp.ne.s32.totalorder %s425, %s426
    %p438 = scmp.eq.s32.totalorder %s39, 1
    %p439 = por %p437, %p438
    %p441 = scmp.ne.s32.totalorder %s426, %s440
    %p442 = scmp.eq.s32.totalorder %s39, 0
    %p443 = por %p441, %p442
    %s445 = sadd.s32 %s444, 1
    %p448 = scmp.eq.s32.totalorder %s33, 1
    %p449 = scmp.ne.s32.totalorder %s444, %s446
    %p450 = scmp.eq.s32.totalorder %s33, 0
    %p451 = por %p449, %p450
    %p452 = scmp.ne.s32.totalorder %s444, %s446
    %p453 = scmp.eq.s32.totalorder %s38, 1
    %p454 = por %p452, %p453
    %p455 = scmp.ne.s32.totalorder %s446, %s447
    %p456 = scmp.eq.s32.totalorder %s38, 0
    %p457 = por %p455, %p456
    %p458 = scmp.ne.s32.totalorder %s446, %s447
    %p459 = scmp.eq.s32.totalorder %s39, 1
    %p460 = por %p458, %p459
    %p462 = scmp.ne.s32.totalorder %s447, %s461
    %p463 = scmp.eq.s32.totalorder %s39, 0
    %p464 = por %p462, %p463
    %s466 = sadd.s32 %s465, 1
    %p469 = scmp.eq.s32.totalorder %s33, 1
    %p470 = scmp.ne.s32.totalorder %s465, %s467
    %p471 = scmp.eq.s32.totalorder %s33, 0
    %p472 = por %p470, %p471
    %p473 = scmp.ne.s32.totalorder %s465, %s467
    %p474 = scmp.eq.s32.totalorder %s38, 1
    %p475 = por %p473, %p474
    %p476 = scmp.ne.s32.totalorder %s467, %s468
    %p477 = scmp.eq.s32.totalorder %s38, 0
    %p478 = por %p476, %p477
    %p479 = scmp.ne.s32.totalorder %s467, %s468
    %p480 = scmp.eq.s32.totalorder %s39, 1
    %p481 = por %p479, %p480
    %p483 = scmp.ne.s32.totalorder %s468, %s482
    %p484 = scmp.eq.s32.totalorder %s39, 0
    %p485 = por %p483, %p484
    %s487 = sadd.s32 %s486, 1
    %p490 = scmp.eq.s32.totalorder %s33, 1
    %p491 = scmp.ne.s32.totalorder %s486, %s488
    %p492 = scmp.eq.s32.totalorder %s33, 0
    %p493 = por %p491, %p492
    %p494 = scmp.ne.s32.totalorder %s486, %s488
    %p495 = scmp.eq.s32.totalorder %s38, 1
    %p496 = por %p494, %p495
    %p497 = scmp.ne.s32.totalorder %s488, %s489
    %p498 = scmp.eq.s32.totalorder %s38, 0
    %p499 = por %p497, %p498
    %p500 = scmp.ne.s32.totalorder %s488, %s489
    %p501 = scmp.eq.s32.totalorder %s39, 1
    %p502 = por %p500, %p501
    %p504 = scmp.ne.s32.totalorder %s489, %s503
    %p505 = scmp.eq.s32.totalorder %s39, 0
    %p506 = por %p504, %p505
    %s508 = sadd.s32 %s507, 1
    %p511 = scmp.eq.s32.totalorder %s33, 1
    %p512 = scmp.ne.s32.totalorder %s507, %s509
    %p513 = scmp.eq.s32.totalorder %s33, 0
    %p514 = por %p512, %p513
    %p515 = scmp.ne.s32.totalorder %s507, %s509
    %p516 = scmp.eq.s32.totalorder %s38, 1
    %p517 = por %p515, %p516
    %p518 = scmp.ne.s32.totalorder %s509, %s510
    %p519 = scmp.eq.s32.totalorder %s38, 0
    %p520 = por %p518, %p519
    %p521 = scmp.ne.s32.totalorder %s509, %s510
    %p522 = scmp.eq.s32.totalorder %s39, 1
    %p523 = por %p521, %p522
    %p525 = scmp.ne.s32.totalorder %s510, %s524
    %p526 = scmp.eq.s32.totalorder %s39, 0
    %p527 = por %p525, %p526
    %s529 = sadd.s32 %s528, 1
    %p532 = scmp.eq.s32.totalorder %s33, 1
    %p533 = scmp.ne.s32.totalorder %s528, %s530
    %p534 = scmp.eq.s32.totalorder %s33, 0
    %p535 = por %p533, %p534
    %p536 = scmp.ne.s32.totalorder %s528, %s530
    %p537 = scmp.eq.s32.totalorder %s38, 1
    %p538 = por %p536, %p537
    %p539 = scmp.ne.s32.totalorder %s530, %s531
    %p540 = scmp.eq.s32.totalorder %s38, 0
    %p541 = por %p539, %p540
    %p542 = scmp.ne.s32.totalorder %s530, %s531
    %p543 = scmp.eq.s32.totalorder %s39, 1
    %p544 = por %p542, %p543
    %p546 = scmp.ne.s32.totalorder %s531, %s545
    %p547 = scmp.eq.s32.totalorder %s39, 0
    %p548 = por %p546, %p547
    %s549 = ssub.s32 %s33, %s40
    %p550 = scmp.eq.s32.totalorder %s549, 0
    %s552 = sadd.s32 %s551, 1
    %s553 = scalar_select %p550, %s551, %s552
    %p556 = pneg %p550
    %p557 = scmp.eq.s32.totalorder %s33, 1
    %p558 = por %p556, %p557
    %p559 = scmp.ne.s32.totalorder %s551, %s554
    %p560 = scmp.eq.s32.totalorder %s33, 0
    %p561 = por %p559, %p560
    %p562 = scmp.ne.s32.totalorder %s551, %s554
    %p563 = scmp.eq.s32.totalorder %s38, 1
    %p564 = por %p562, %p563
    %p565 = scmp.ne.s32.totalorder %s554, %s555
    %p566 = scmp.eq.s32.totalorder %s38, 0
    %p567 = por %p565, %p566
    %p568 = scmp.ne.s32.totalorder %s554, %s555
    %p569 = scmp.eq.s32.totalorder %s39, 1
    %p570 = por %p568, %p569
    %p572 = scmp.ne.s32.totalorder %s555, %s571
    %p573 = scmp.eq.s32.totalorder %s39, 0
    %p574 = por %p572, %p573
    %s575 = ssub.s32 %s33, %s40
    %p576 = scmp.eq.s32.totalorder %s575, 0
    %s578 = sadd.s32 %s577, 1
    %s579 = scalar_select %p576, %s577, %s578
    %p582 = pneg %p576
    %p583 = scmp.eq.s32.totalorder %s33, 1
    %p584 = por %p582, %p583
    %p585 = scmp.ne.s32.totalorder %s577, %s580
    %p586 = scmp.eq.s32.totalorder %s33, 0
    %p587 = por %p585, %p586
    %p588 = scmp.ne.s32.totalorder %s577, %s580
    %p589 = scmp.eq.s32.totalorder %s38, 1
    %p590 = por %p588, %p589
    %p591 = scmp.ne.s32.totalorder %s580, %s581
    %p592 = scmp.eq.s32.totalorder %s38, 0
    %p593 = por %p591, %p592
    %p594 = scmp.ne.s32.totalorder %s580, %s581
    %p595 = scmp.eq.s32.totalorder %s39, 1
    %p596 = por %p594, %p595
    %p598 = scmp.ne.s32.totalorder %s581, %s597
    %p599 = scmp.eq.s32.totalorder %s39, 0
    %p600 = por %p598, %p599
    %s601 = ssub.s32 %s33, %s40
    %p602 = scmp.eq.s32.totalorder %s601, 0
    %s604 = sadd.s32 %s603, 1
    %s605 = scalar_select %p602, %s603, %s604
    %p608 = pneg %p602
    %p609 = scmp.eq.s32.totalorder %s33, 1
    %p610 = por %p608, %p609
    %p611 = scmp.ne.s32.totalorder %s603, %s606
    %p612 = scmp.eq.s32.totalorder %s33, 0
    %p613 = por %p611, %p612
    %p614 = scmp.ne.s32.totalorder %s603, %s606
    %p615 = scmp.eq.s32.totalorder %s38, 1
    %p616 = por %p614, %p615
    %p617 = scmp.ne.s32.totalorder %s606, %s607
    %p618 = scmp.eq.s32.totalorder %s38, 0
    %p619 = por %p617, %p618
    %p620 = scmp.ne.s32.totalorder %s606, %s607
    %p621 = scmp.eq.s32.totalorder %s39, 1
    %p622 = por %p620, %p621
    %p624 = scmp.ne.s32.totalorder %s607, %s623
    %p625 = scmp.eq.s32.totalorder %s39, 0
    %p626 = por %p624, %p625
    %s627 = ssub.s32 %s33, %s40
    %p628 = scmp.eq.s32.totalorder %s627, 0
    %s630 = sadd.s32 %s629, 1
    %s631 = scalar_select %p628, %s629, %s630
    %p634 = pneg %p628
    %p635 = scmp.eq.s32.totalorder %s33, 1
    %p636 = por %p634, %p635
    %p637 = scmp.ne.s32.totalorder %s629, %s632
    %p638 = scmp.eq.s32.totalorder %s33, 0
    %p639 = por %p637, %p638
    %p640 = scmp.ne.s32.totalorder %s629, %s632
    %p641 = scmp.eq.s32.totalorder %s38, 1
    %p642 = por %p640, %p641
    %p643 = scmp.ne.s32.totalorder %s632, %s633
    %p644 = scmp.eq.s32.totalorder %s38, 0
    %p645 = por %p643, %p644
    %p646 = scmp.ne.s32.totalorder %s632, %s633
    %p647 = scmp.eq.s32.totalorder %s39, 1
    %p648 = por %p646, %p647
    %p650 = scmp.ne.s32.totalorder %s633, %s649
    %p651 = scmp.eq.s32.totalorder %s39, 0
    %p652 = por %p650, %p651
    %p653 = scmp.le.s32.totalorder 1, %s33
    %p654 = scmp.lt.s32.totalorder %s33, 3
    %p655 = pnand %p653, %p654
    %p656 = pneg %p655
    // Predicated region
    $region9: #{_lambda_.5} parent=5 // pred_check
      _
    $region10: #{_lambda_.5} parent=5 // pred_check_branch
      %658 = sbr.rel (%p655) target = $region12
    $region11: #{_lambda_.5} parent=5 // pred_region
      %s659 = ssub.s32 %s33, 1
      // Predicated region
      $region13: #{_lambda_.5} parent=11 // pred_check
        %p660 = pneg %p184
      $region14: #{_lambda_.5} parent=11 // pred_check_branch
        %662 = sbr.rel (%p660) target = $region16
      $region15: #{_lambda_.5} parent=11 // pred_region
        _
      $region16: #{_lambda_.5} parent=11 // pred_fallthru
        _
      // Predicated region
      $region17: #{_lambda_.5} parent=11 // pred_check
        %p663 = pneg %p205
      $region18: #{_lambda_.5} parent=11 // pred_check_branch
        %665 = sbr.rel (%p663) target = $region20
      $region19: #{_lambda_.5} parent=11 // pred_region
        _
      $region20: #{_lambda_.5} parent=11 // pred_fallthru
        _
      // Predicated region
      $region21: #{_lambda_.5} parent=11 // pred_check
        %p666 = pneg %p226
      $region22: #{_lambda_.5} parent=11 // pred_check_branch
        %668 = sbr.rel (%p666) target = $region24
      $region23: #{_lambda_.5} parent=11 // pred_region
        _
      $region24: #{_lambda_.5} parent=11 // pred_fallthru
        _
      // Predicated region
      $region25: #{_lambda_.5} parent=11 // pred_check
        %p669 = pneg %p247
      $region26: #{_lambda_.5} parent=11 // pred_check_branch
        %671 = sbr.rel (%p669) target = $region28
      $region27: #{_lambda_.5} parent=11 // pred_region
        _
      $region28: #{_lambda_.5} parent=11 // pred_fallthru
        _
      // Predicated region
      $region29: #{_lambda_.5} parent=11 // pred_check
        %p672 = pneg %p268
      $region30: #{_lambda_.5} parent=11 // pred_check_branch
        %674 = sbr.rel (%p672) target = $region32
      $region31: #{_lambda_.5} parent=11 // pred_region
        _
      $region32: #{_lambda_.5} parent=11 // pred_fallthru
        _
      // Predicated region
      $region33: #{_lambda_.5} parent=11 // pred_check
        %p675 = pneg %p289
      $region34: #{_lambda_.5} parent=11 // pred_check_branch
        %677 = sbr.rel (%p675) target = $region36
      $region35: #{_lambda_.5} parent=11 // pred_region
        _
      $region36: #{_lambda_.5} parent=11 // pred_fallthru
        _
      // Predicated region
      $region37: #{_lambda_.5} parent=11 // pred_check
        %p678 = pneg %p310
      $region38: #{_lambda_.5} parent=11 // pred_check_branch
        %680 = sbr.rel (%p678) target = $region40
      $region39: #{_lambda_.5} parent=11 // pred_region
        _
      $region40: #{_lambda_.5} parent=11 // pred_fallthru
        _
      // Predicated region
      $region41: #{_lambda_.5} parent=11 // pred_check
        %p681 = pneg %p331
      $region42: #{_lambda_.5} parent=11 // pred_check_branch
        %683 = sbr.rel (%p681) target = $region44
      $region43: #{_lambda_.5} parent=11 // pred_region
        _
      $region44: #{_lambda_.5} parent=11 // pred_fallthru
        _
      // Predicated region
      $region45: #{_lambda_.5} parent=11 // pred_check
        %p684 = pneg %p352
      $region46: #{_lambda_.5} parent=11 // pred_check_branch
        %686 = sbr.rel (%p684) target = $region48
      $region47: #{_lambda_.5} parent=11 // pred_region
        _
      $region48: #{_lambda_.5} parent=11 // pred_fallthru
        _
      // Predicated region
      $region49: #{_lambda_.5} parent=11 // pred_check
        %p687 = pneg %p373
      $region50: #{_lambda_.5} parent=11 // pred_check_branch
        %689 = sbr.rel (%p687) target = $region52
      $region51: #{_lambda_.5} parent=11 // pred_region
        _
      $region52: #{_lambda_.5} parent=11 // pred_fallthru
        _
      // Predicated region
      $region53: #{_lambda_.5} parent=11 // pred_check
        %p690 = pneg %p394
      $region54: #{_lambda_.5} parent=11 // pred_check_branch
        %692 = sbr.rel (%p690) target = $region56
      $region55: #{_lambda_.5} parent=11 // pred_region
        _
      $region56: #{_lambda_.5} parent=11 // pred_fallthru
        _
      // Predicated region
      $region57: #{_lambda_.5} parent=11 // pred_check
        %p693 = pneg %p415
      $region58: #{_lambda_.5} parent=11 // pred_check_branch
        %695 = sbr.rel (%p693) target = $region60
      $region59: #{_lambda_.5} parent=11 // pred_region
        _
      $region60: #{_lambda_.5} parent=11 // pred_fallthru
        _
      // Predicated region
      $region61: #{_lambda_.5} parent=11 // pred_check
        %p696 = pneg %p436
      $region62: #{_lambda_.5} parent=11 // pred_check_branch
        %698 = sbr.rel (%p696) target = $region64
      $region63: #{_lambda_.5} parent=11 // pred_region
        _
      $region64: #{_lambda_.5} parent=11 // pred_fallthru
        _
      // Predicated region
      $region65: #{_lambda_.5} parent=11 // pred_check
        %p699 = pneg %p457
      $region66: #{_lambda_.5} parent=11 // pred_check_branch
        %701 = sbr.rel (%p699) target = $region68
      $region67: #{_lambda_.5} parent=11 // pred_region
        _
      $region68: #{_lambda_.5} parent=11 // pred_fallthru
        _
      // Predicated region
      $region69: #{_lambda_.5} parent=11 // pred_check
        %p702 = pneg %p478
      $region70: #{_lambda_.5} parent=11 // pred_check_branch
        %704 = sbr.rel (%p702) target = $region72
      $region71: #{_lambda_.5} parent=11 // pred_region
        _
      $region72: #{_lambda_.5} parent=11 // pred_fallthru
        _
      // Predicated region
      $region73: #{_lambda_.5} parent=11 // pred_check
        %p705 = pneg %p499
      $region74: #{_lambda_.5} parent=11 // pred_check_branch
        %707 = sbr.rel (%p705) target = $region76
      $region75: #{_lambda_.5} parent=11 // pred_region
        _
      $region76: #{_lambda_.5} parent=11 // pred_fallthru
        _
      // Predicated region
      $region77: #{_lambda_.5} parent=11 // pred_check
        %p708 = pneg %p520
      $region78: #{_lambda_.5} parent=11 // pred_check_branch
        %710 = sbr.rel (%p708) target = $region80
      $region79: #{_lambda_.5} parent=11 // pred_region
        _
      $region80: #{_lambda_.5} parent=11 // pred_fallthru
        _
      // Predicated region
      $region81: #{_lambda_.5} parent=11 // pred_check
        %p711 = pneg %p541
      $region82: #{_lambda_.5} parent=11 // pred_check_branch
        %713 = sbr.rel (%p711) target = $region84
      $region83: #{_lambda_.5} parent=11 // pred_region
        _
      $region84: #{_lambda_.5} parent=11 // pred_fallthru
        _
    $region12: #{_lambda_.5} parent=5 // pred_fallthru
      _
    %p714 = scmp.lt.s32.totalorder %s33, 2
    // Predicated region
    $region85: #{_lambda_.5} parent=5 // pred_check
      %p715 = pneg %p714
    $region86: #{_lambda_.5} parent=5 // pred_check_branch
      %717 = sbr.rel (%p715) target = $region88
    $region87: #{_lambda_.5} parent=5 // pred_region
      // Predicated region
      $region89: #{_lambda_.5} parent=87 // pred_check
        %p718 = pneg %p53
      $region90: #{_lambda_.5} parent=87 // pred_check_branch
        %720 = sbr.rel (%p718) target = $region92
      $region91: #{_lambda_.5} parent=87 // pred_region
        %p721 = scmp.lt.s32.totalorder %s33, 1
        %s722 = scalar_select %p721, %s33, 1
        %s723 = smul.addr %s722, 2
        %s724 = smul.addr %s723, 8
        %s725 = scalar_lea.vmem %s0, %s724
      $region92: #{_lambda_.5} parent=87 // pred_fallthru
        _
      // Predicated region
      $region93: #{_lambda_.5} parent=87 // pred_check
        %p726 = pneg %p79
      $region94: #{_lambda_.5} parent=87 // pred_check_branch
        %728 = sbr.rel (%p726) target = $region96
      $region95: #{_lambda_.5} parent=87 // pred_region
        %p729 = scmp.lt.s32.totalorder %s33, 1
        %s730 = scalar_select %p729, %s33, 1
        %s731 = smul.addr %s730, 4
        %s732 = scalar_lea.vmem %s1, %s731
      $region96: #{_lambda_.5} parent=87 // pred_fallthru
        _
      // Predicated region
      $region97: #{_lambda_.5} parent=87 // pred_check
        %p733 = pneg %p105
      $region98: #{_lambda_.5} parent=87 // pred_check_branch
        %735 = sbr.rel (%p733) target = $region100
      $region99: #{_lambda_.5} parent=87 // pred_region
        %p736 = scmp.lt.s32.totalorder %s33, 1
        %s737 = scalar_select %p736, %s33, 1
        %s738 = smul.addr %s737, 4
        %s739 = scalar_lea.vmem %s2, %s738
      $region100: #{_lambda_.5} parent=87 // pred_fallthru
        _
      // Predicated region
      $region101: #{_lambda_.5} parent=87 // pred_check
        %p740 = pneg %p131
      $region102: #{_lambda_.5} parent=87 // pred_check_branch
        %742 = sbr.rel (%p740) target = $region104
      $region103: #{_lambda_.5} parent=87 // pred_region
        %p743 = scmp.lt.s32.totalorder %s33, 1
        %s744 = scalar_select %p743, %s33, 1
        %s745 = smul.addr %s744, 4
        %s746 = scalar_lea.vmem %s3, %s745
      $region104: #{_lambda_.5} parent=87 // pred_fallthru
        _
      // Predicated region
      $region105: #{_lambda_.5} parent=87 // pred_check
        %p747 = pneg %p157
      $region106: #{_lambda_.5} parent=87 // pred_check_branch
        %749 = sbr.rel (%p747) target = $region108
      $region107: #{_lambda_.5} parent=87 // pred_region
        %p750 = scmp.lt.s32.totalorder %s33, 1
        %s751 = scalar_select %p750, %s33, 1
        %s752 = smul.addr %s751, 2
        %s753 = smul.addr %s752, 8
        %s754 = scalar_lea.vmem %s4, %s753
      $region108: #{_lambda_.5} parent=87 // pred_fallthru
        _
    $region88: #{_lambda_.5} parent=5 // pred_fallthru
      _
    %p755 = scmp.le.s32.totalorder 1, %s33
    %p756 = scmp.lt.s32.totalorder %s33, 3
    %p757 = pnand %p755, %p756
    %p758 = pneg %p757
    // Predicated region
    $region109: #{_lambda_.5} parent=5 // pred_check
      _
    $region110: #{_lambda_.5} parent=5 // pred_check_branch
      %760 = sbr.rel (%p757) target = $region112
    $region111: #{_lambda_.5} parent=5 // pred_region
      %s761 = ssub.s32 %s33, 1
      %p762 = scmp.lt.s32.totalorder %s38, 1
      %s763 = scalar_select %p762, %s38, 1
      %s764 = smul.addr %s763, 2
      %s765 = smul.addr %s764, 8
      %s766 = scalar_lea.vmem %s0, %s765
      %p767 = pneg %p59
      %p768 = pneg %p56
      %p769 = scmp.lt.s32.totalorder %s38, 1
      %s770 = scalar_select %p769, %s38, 1
      %s771 = smul.addr %s770, 4
      %s772 = scalar_lea.vmem %s1, %s771
      %p773 = pneg %p85
      %p774 = pneg %p82
      %p775 = scmp.lt.s32.totalorder %s38, 1
      %s776 = scalar_select %p775, %s38, 1
      %s777 = smul.addr %s776, 4
      %s778 = scalar_lea.vmem %s2, %s777
      %p779 = pneg %p111
      %p780 = pneg %p108
      %p781 = scmp.lt.s32.totalorder %s38, 1
      %s782 = scalar_select %p781, %s38, 1
      %s783 = smul.addr %s782, 4
      %s784 = scalar_lea.vmem %s3, %s783
      %p785 = pneg %p137
      %p786 = pneg %p134
      %p787 = scmp.lt.s32.totalorder %s38, 1
      %s788 = scalar_select %p787, %s38, 1
      %s789 = smul.addr %s788, 2
      %s790 = smul.addr %s789, 8
      %s791 = scalar_lea.vmem %s4, %s790
      %p792 = pneg %p163
      %p793 = pneg %p160
      %p794 = pneg %p184
      %p795 = pneg %p181
      %p796 = pneg %p205
      %p797 = pneg %p202
      %p798 = pneg %p226
      %p799 = pneg %p223
      %p800 = pneg %p247
      %p801 = pneg %p244
      %p802 = pneg %p268
      %p803 = pneg %p265
      %p804 = pneg %p289
      %p805 = pneg %p286
      %p806 = pneg %p310
      %p807 = pneg %p307
      %p808 = pneg %p331
      %p809 = pneg %p328
      %p810 = pneg %p352
      %p811 = pneg %p349
      %p812 = pneg %p373
      %p813 = pneg %p370
      %p814 = pneg %p394
      %p815 = pneg %p391
      %p816 = pneg %p415
      %p817 = pneg %p412
      %p818 = pneg %p436
      %p819 = pneg %p433
      %p820 = pneg %p457
      %p821 = pneg %p454
      %p822 = pneg %p478
      %p823 = pneg %p475
      %p824 = pneg %p499
      %p825 = pneg %p496
      %p826 = pneg %p520
      %p827 = pneg %p517
      %p828 = pneg %p541
      %p829 = pneg %p538
      %p830 = pneg %p567
      %p831 = pneg %p564
      %p832 = scmp.lt.s32.totalorder %s38, 1
      %s833 = scalar_select %p832, %s38, 1
      %s834 = smul.addr %s833, 2
      %s835 = smul.addr %s834, 8
      %s836 = scalar_lea.vmem %s23, %s835
      %p837 = pneg %p593
      %p838 = pneg %p590
      %p839 = scmp.lt.s32.totalorder %s38, 1
      %s840 = scalar_select %p839, %s38, 1
      %s841 = smul.addr %s840, 2
      %s842 = smul.addr %s841, 8
      %s843 = scalar_lea.vmem %s24, %s842
      %p844 = pneg %p619
      %p845 = pneg %p616
      %p846 = scmp.lt.s32.totalorder %s38, 1
      %s847 = scalar_select %p846, %s38, 1
      %s848 = scalar_lea.vmem %s25, %s847
      %p849 = pneg %p645
      %p850 = pneg %p642
      %p851 = scmp.lt.s32.totalorder %s38, 1
      %s852 = scalar_select %p851, %s38, 1
      %s853 = smul.addr %s852, 8
      %s854 = scalar_lea.vmem %s26, %s853
      %p855 = scmp.lt.s32.totalorder %s38, 1
      %s856 = scalar_select %p855, %s38, 1
      %s857 = smul.addr %s856, 2
      %s858 = smul.addr %s857, 8
      %s859 = scalar_lea.vmem %s0, %s858
      %p860 = scmp.lt.s32.totalorder %s38, 1
      %s861 = scalar_select %p860, %s38, 1
      %s862 = smul.addr %s861, 4
      %s863 = scalar_lea.vmem %s1, %s862
      %p864 = scmp.lt.s32.totalorder %s38, 1
      %s865 = scalar_select %p864, %s38, 1
      %s866 = smul.addr %s865, 4
      %s867 = scalar_lea.vmem %s2, %s866
      %p868 = scmp.lt.s32.totalorder %s38, 1
      %s869 = scalar_select %p868, %s38, 1
      %s870 = smul.addr %s869, 4
      %s871 = scalar_lea.vmem %s3, %s870
      %p872 = scmp.lt.s32.totalorder %s38, 1
      %s873 = scalar_select %p872, %s38, 1
      %s874 = smul.addr %s873, 2
      %s875 = smul.addr %s874, 8
      %s876 = scalar_lea.vmem %s4, %s875
      %p877 = scmp.lt.s32.totalorder %s38, 1
      %s878 = scalar_select %p877, %s38, 1
      %s879 = smul.addr %s878, 2
      %s880 = smul.addr %s879, 8
      %s881 = scalar_lea.vmem %s23, %s880
      %p882 = scmp.lt.s32.totalorder %s38, 1
      %s883 = scalar_select %p882, %s38, 1
      %s884 = smul.addr %s883, 2
      %s885 = smul.addr %s884, 8
      %s886 = scalar_lea.vmem %s24, %s885
      %p887 = scmp.lt.s32.totalorder %s38, 1
      %s888 = scalar_select %p887, %s38, 1
      %s889 = scalar_lea.vmem %s25, %s888
      %p890 = scmp.lt.s32.totalorder %s38, 1
      %s891 = scalar_select %p890, %s38, 1
      %s892 = smul.addr %s891, 8
      %s893 = scalar_lea.vmem %s26, %s892
      %v895 = vlaneseq
      %v896 = vshrl.u32 %v895, 7
      %v897 = vadd.s32 %v896, 8
      %v898 = vadd.s32 %v896, 16
      %v899 = vcvt.s32.f32 %v896
      %v900 = vcvt.s32.f32 %v897
      %v901 = vcvt.s32.f32 %v898
      %v902 = vld [vmem:[%s871] sm:$0x7]
      %v903 = vld [vmem:[%s867] sm:$0x7]
      %v904 = vld [vmem:[%s863] sm:$0x7]
      %v907 = vunpack.c.l.s4 1966171168
      %v908 = vunpack.c.0.s8 %v907
      %v909 = vlaneseq
      %v910 = vshrl.u32 %v909, 7
      %v911 = vsub.s32 %v908, %v910
      %v912 = vrot.slane %v902, %v911
      %v913 = vcombine.high %v912, %v912
      %v915 = vunpack.c.l.s4 1966171168
      %v916 = vunpack.c.0.s8 %v915
      %v917 = vlaneseq
      %v918 = vshrl.u32 %v917, 7
      %v919 = vsub.s32 %v916, %v918
      %v920 = vrot.slane %v912, %v919
      %v922 = vunpack.c.l.s4 1966171168
      %v923 = vunpack.c.0.s8 %v922
      %v924 = vlaneseq
      %v925 = vshrl.u32 %v924, 7
      %v926 = vsub.s32 %v923, %v925
      %v927 = vrot.slane %v913, %v926
      %v928 = vcombine.high %v920, %v920
      %v932 = vmul.f32 %v920, 6.2831855
      %v933 = vmul.f32 %v927, 6.2831855
      %v934 = vmul.f32 %v928, 6.2831855
      %v938 = vlaneseq
      %v939 = vshrl.u32 %v938, 7
      %v940 = vsub.s32 0, %v939
      %v941 = vrot.slane %v932, %v940
      %v942 = vlaneseq
      %v943 = vshrl.u32 %v942, 7
      %v944 = vsub.s32 0, %v943
      %v945 = vrot.slane %v933, %v944
      %v946 = vlaneseq
      %v947 = vshrl.u32 %v946, 7
      %v948 = vsub.s32 0, %v947
      %v949 = vrot.slane %v934, %v948
      %v953 = vmul.f32 %v941, %v899
      %v954 = vmul.f32 %v941, %v900
      %v955 = vmul.f32 %v941, %v901
      %v956 = vmul.f32 %v945, %v899
      %v957 = vmul.f32 %v945, %v900
      %v958 = vmul.f32 %v945, %v901
      %v959 = vmul.f32 %v949, %v899
      %v960 = vmul.f32 %v949, %v900
      %v961 = vmul.f32 %v949, %v901
      %v964 = vunpack.c.l.s4 1966171168
      %v965 = vunpack.c.0.s8 %v964
      %v966 = vlaneseq
      %v967 = vshrl.u32 %v966, 7
      %v968 = vsub.s32 %v965, %v967
      %v969 = vrot.slane %v903, %v968
      %v970 = vcombine.high %v969, %v969
      %v972 = vunpack.c.l.s4 1966171168
      %v973 = vunpack.c.0.s8 %v972
      %v974 = vlaneseq
      %v975 = vshrl.u32 %v974, 7
      %v976 = vsub.s32 %v973, %v975
      %v977 = vrot.slane %v969, %v976
      %v979 = vunpack.c.l.s4 1966171168
      %v980 = vunpack.c.0.s8 %v979
      %v981 = vlaneseq
      %v982 = vshrl.u32 %v981, 7
      %v983 = vsub.s32 %v980, %v982
      %v984 = vrot.slane %v970, %v983
      %v985 = vcombine.high %v977, %v977
      %v986 = vlaneseq
      %v987 = vshrl.u32 %v986, 7
      %v988 = vsub.s32 0, %v987
      %v989 = vrot.slane %v977, %v988
      %v990 = vlaneseq
      %v991 = vshrl.u32 %v990, 7
      %v992 = vsub.s32 0, %v991
      %v993 = vrot.slane %v984, %v992
      %v994 = vlaneseq
      %v995 = vshrl.u32 %v994, 7
      %v996 = vsub.s32 0, %v995
      %v997 = vrot.slane %v985, %v996
      %v1001 = vadd.f32 %v953, %v989
      %v1002 = vadd.f32 %v954, %v989
      %v1003 = vadd.f32 %v955, %v989
      %v1004 = vadd.f32 %v956, %v993
      %v1005 = vadd.f32 %v957, %v993
      %v1006 = vadd.f32 %v958, %v993
      %v1007 = vadd.f32 %v959, %v997
      %v1008 = vadd.f32 %v960, %v997
      %v1009 = vadd.f32 %v961, %v997
      %v1012 = vunpack.c.l.s4 1966171168
      %v1013 = vunpack.c.0.s8 %v1012
      %v1014 = vlaneseq
      %v1015 = vshrl.u32 %v1014, 7
      %v1016 = vsub.s32 %v1013, %v1015
      %v1017 = vrot.slane %v904, %v1016
      %v1018 = vcombine.high %v1017, %v1017
      %v1020 = vunpack.c.l.s4 1966171168
      %v1021 = vunpack.c.0.s8 %v1020
      %v1022 = vlaneseq
      %v1023 = vshrl.u32 %v1022, 7
      %v1024 = vsub.s32 %v1021, %v1023
      %v1025 = vrot.slane %v1017, %v1024
      %v1027 = vunpack.c.l.s4 1966171168
      %v1028 = vunpack.c.0.s8 %v1027
      %v1029 = vlaneseq
      %v1030 = vshrl.u32 %v1029, 7
      %v1031 = vsub.s32 %v1028, %v1030
      %v1032 = vrot.slane %v1018, %v1031
      %v1033 = vcombine.high %v1025, %v1025
      %v1034 = vand.u32 2147483647, %v1001
      %vm1035 = vcmp.le.f32.partialorder %v1034, 0.7853982
      %vm1036 = vcmp.lt.s32.totalorder %v1001, 0
      %v1037 = vand.u32 %v1001, 2139095040
      %v1038 = vshrl.u32 %v1037, 23
      %v1039 = vsub.s32 %v1038, 127
      %v1040 = vand.u32 2147483647, %v1001
      %v1041 = vand.u32 %v1040, 8388607
      %v1042 = vor.u32 %v1041, 8388608
      %v1043 = vsub.s32 0, %v1042
      %v1044 = vadd.s32 %v1039, 1
      %vm1045 = vcmp.gt.s32.totalorder %v1044, 0
      %v1046 = vsel %vm1045, %v1044, 0
      %v1047 = vshrl.u32 %v1046, 5
      %v1048 = vand.u32 %v1046, 31
      %v1049 = vsub.s32 32, %v1048
      %v1050 = vshrl.u32 683565275, %v1049
      %v1051 = vshll.u32 683565275, %v1048
      %v1052 = vshrl.u32 2475754826, %v1049
      %v1053 = vor.u32 %v1051, %v1052
      %v1054 = vshll.u32 2475754826, %v1048
      %v1055 = vshrl.u32 2131351028, %v1049
      %v1056 = vor.u32 %v1054, %v1055
      %v1057 = vshll.u32 2131351028, %v1048
      %v1058 = vshrl.u32 2102212464, %v1049
      %v1059 = vor.u32 %v1057, %v1058
      %v1060 = vshll.u32 2102212464, %v1048
      %v1061 = vshrl.u32 920167782, %v1049
      %v1062 = vor.u32 %v1060, %v1061
      %v1063 = vshll.u32 920167782, %v1048
      %v1064 = vshrl.u32 1326507024, %v1049
      %v1065 = vor.u32 %v1063, %v1064
      %vm1066 = vcmp.lt.s32.totalorder %v1047, 1
      %vm1067 = vcmp.lt.s32.totalorder %v1047, 2
      %vm1068 = vcmp.lt.s32.totalorder %v1047, 3
      %vm1069 = vcmp.lt.s32.totalorder %v1047, 4
      %v1070 = vsel %vm1066, %v1050, %v1053
      %v1071 = vsel %vm1069, %v1059, 2102212464
      %v1072 = vsel %vm1068, %v1056, %v1071
      %v1073 = vsel %vm1067, %v1070, %v1072
      %v1074 = vsel %vm1066, %v1053, %v1056
      %v1075 = vsel %vm1069, %v1062, 920167782
      %v1076 = vsel %vm1068, %v1059, %v1075
      %v1077 = vsel %vm1067, %v1074, %v1076
      %v1078 = vsel %vm1066, %v1056, %v1059
      %v1079 = vsel %vm1069, %v1065, 1326507024
      %v1080 = vsel %vm1068, %v1062, %v1079
      %v1081 = vsel %vm1067, %v1078, %v1080
      %v1082 = vshll.u32 %v1042, 8
      %v1083 = vmul.u32.u64.compose %v1082, %v1081
      %v1084 = vextract.low.u32 %v1083
      %v1085 = vextract.high.u32 %v1083
      %v1086 = vmul.u32.u64.compose %v1082, %v1077
      %v1087 = vextract.low.u32 %v1086
      %v1088 = vextract.high.u32 %v1086
      %v1089 = vmul.u32 %v1082, %v1073
      %v1090 = vadd.s32 %v1085, %v1087
      %vm1091 = vc.u32 %v1085, %v1087
      %v1092 = vadd.s32 %v1088, 1
      %v1093 = vsel %vm1091, %v1092, %v1088
      %v1094 = vadd.s32 %v1089, %v1093
      %v1095 = vadd.s32 %v1094, 536870912
      %v1096 = vshrl.u32 %v1095, 30
      %v1097 = vshll.u32 %v1096, 30
      %v1098 = vsub.s32 %v1094, %v1097
      %vm1099 = vcmp.lt.s32.totalorder %v1098, 0
      %v1100 = vsub.s32 0, %v1098
      %v1101 = vsel %vm1099, %v1100, %v1098
      %v1102 = vclz %v1101
      %v1103 = vsub.s32 %v1102, 2
      %vm1104 = vcmp.gt.s32.totalorder 0, %v1103
      %v1105 = vsel %vm1104, 0, %v1103
      %v1106 = vsub.s32 32, %v1105
      %v1107 = vshll.u32 %v1098, %v1105
      %v1108 = vshrl.u32 %v1090, %v1106
      %v1109 = vor.u32 %v1107, %v1108
      %v1110 = vsub.s32 4294967266, %v1105
      %v1111 = vadd.s32 %v1110, 127
      %v1112 = vshll.u32 %v1111, 23
      %v1113 = vor.u32 4788187, %v1112
      %v1114 = vand.u32 2147483647, %v1113
      %v1116 = vcvt.s32.f32 %v1109
      %v1117 = vmul.f32 %v1116, %v1114
      %v1118 = vxor.u32 %v1117, 2147483648
      %v1119 = vsel %vm1036, %v1118, %v1117
      %v1120 = vsub.s32 4, %v1096
      %v1121 = vsel %vm1036, %v1120, %v1096
      %v1122 = vsel %vm1035, %v1001, %v1119
      %v1123 = vsel %vm1035, 0, %v1121
      %v1124 = vcosq.f32.pop %v1122
      %v1125 = vsinq.f32.pop %v1122
      %vm1126 = vweird.f32 %v1001
      %v1127 = vand.u32 %v1123, 3
      %vm1128 = vcmp.lt.s32.totalorder %v1127, 2
      %vm1129 = vcmp.eq.s32.totalorder %v1127, 0
      %v1130 = vxor.u32 %v1125, 2147483648
      %v1131 = vsel %vm1129, %v1124, %v1130
      %vm1132 = vcmp.eq.s32.totalorder %v1127, 2
      %v1133 = vxor.u32 %v1124, 2147483648
      %v1134 = vsel %vm1132, %v1133, %v1125
      %v1135 = vsel %vm1128, %v1131, %v1134
      %v1136 = vsel %vm1126, nan, %v1135
      %v1137 = vand.u32 2147483647, %v1002
      %vm1138 = vcmp.le.f32.partialorder %v1137, 0.7853982
      %vm1139 = vcmp.lt.s32.totalorder %v1002, 0
      %v1140 = vand.u32 %v1002, 2139095040
      %v1141 = vshrl.u32 %v1140, 23
      %v1142 = vsub.s32 %v1141, 127
      %v1143 = vand.u32 2147483647, %v1002
      %v1144 = vand.u32 %v1143, 8388607
      %v1145 = vor.u32 %v1144, 8388608
      %v1146 = vsub.s32 0, %v1145
      %v1147 = vadd.s32 %v1142, 1
      %vm1148 = vcmp.gt.s32.totalorder %v1147, 0
      %v1149 = vsel %vm1148, %v1147, 0
      %v1150 = vshrl.u32 %v1149, 5
      %v1151 = vand.u32 %v1149, 31
      %v1152 = vsub.s32 32, %v1151
      %v1153 = vshrl.u32 683565275, %v1152
      %v1154 = vshll.u32 683565275, %v1151
      %v1155 = vshrl.u32 2475754826, %v1152
      %v1156 = vor.u32 %v1154, %v1155
      %v1157 = vshll.u32 2475754826, %v1151
      %v1158 = vshrl.u32 2131351028, %v1152
      %v1159 = vor.u32 %v1157, %v1158
      %v1160 = vshll.u32 2131351028, %v1151
      %v1161 = vshrl.u32 2102212464, %v1152
      %v1162 = vor.u32 %v1160, %v1161
      %v1163 = vshll.u32 2102212464, %v1151
      %v1164 = vshrl.u32 920167782, %v1152
      %v1165 = vor.u32 %v1163, %v1164
      %v1166 = vshll.u32 920167782, %v1151
      %v1167 = vshrl.u32 1326507024, %v1152
      %v1168 = vor.u32 %v1166, %v1167
      %vm1169 = vcmp.lt.s32.totalorder %v1150, 1
      %vm1170 = vcmp.lt.s32.totalorder %v1150, 2
      %vm1171 = vcmp.lt.s32.totalorder %v1150, 3
      %vm1172 = vcmp.lt.s32.totalorder %v1150, 4
      %v1173 = vsel %vm1169, %v1153, %v1156
      %v1174 = vsel %vm1172, %v1162, 2102212464
      %v1175 = vsel %vm1171, %v1159, %v1174
      %v1176 = vsel %vm1170, %v1173, %v1175
      %v1177 = vsel %vm1169, %v1156, %v1159
      %v1178 = vsel %vm1172, %v1165, 920167782
      %v1179 = vsel %vm1171, %v1162, %v1178
      %v1180 = vsel %vm1170, %v1177, %v1179
      %v1181 = vsel %vm1169, %v1159, %v1162
      %v1182 = vsel %vm1172, %v1168, 1326507024
      %v1183 = vsel %vm1171, %v1165, %v1182
      %v1184 = vsel %vm1170, %v1181, %v1183
      %v1185 = vshll.u32 %v1145, 8
      %v1186 = vmul.u32.u64.compose %v1185, %v1184
      %v1187 = vextract.low.u32 %v1186
      %v1188 = vextract.high.u32 %v1186
      %v1189 = vmul.u32.u64.compose %v1185, %v1180
      %v1190 = vextract.low.u32 %v1189
      %v1191 = vextract.high.u32 %v1189
      %v1192 = vmul.u32 %v1185, %v1176
      %v1193 = vadd.s32 %v1188, %v1190
      %vm1194 = vc.u32 %v1188, %v1190
      %v1195 = vadd.s32 %v1191, 1
      %v1196 = vsel %vm1194, %v1195, %v1191
      %v1197 = vadd.s32 %v1192, %v1196
      %v1198 = vadd.s32 %v1197, 536870912
      %v1199 = vshrl.u32 %v1198, 30
      %v1200 = vshll.u32 %v1199, 30
      %v1201 = vsub.s32 %v1197, %v1200
      %vm1202 = vcmp.lt.s32.totalorder %v1201, 0
      %v1203 = vsub.s32 0, %v1201
      %v1204 = vsel %vm1202, %v1203, %v1201
      %v1205 = vclz %v1204
      %v1206 = vsub.s32 %v1205, 2
      %vm1207 = vcmp.gt.s32.totalorder 0, %v1206
      %v1208 = vsel %vm1207, 0, %v1206
      %v1209 = vsub.s32 32, %v1208
      %v1210 = vshll.u32 %v1201, %v1208
      %v1211 = vshrl.u32 %v1193, %v1209
      %v1212 = vor.u32 %v1210, %v1211
      %v1213 = vsub.s32 4294967266, %v1208
      %v1214 = vadd.s32 %v1213, 127
      %v1215 = vshll.u32 %v1214, 23
      %v1216 = vor.u32 4788187, %v1215
      %v1217 = vand.u32 2147483647, %v1216
      %v1219 = vcvt.s32.f32 %v1212
      %v1220 = vmul.f32 %v1219, %v1217
      %v1221 = vxor.u32 %v1220, 2147483648
      %v1222 = vsel %vm1139, %v1221, %v1220
      %v1223 = vsub.s32 4, %v1199
      %v1224 = vsel %vm1139, %v1223, %v1199
      %v1225 = vsel %vm1138, %v1002, %v1222
      %v1226 = vsel %vm1138, 0, %v1224
      %v1227 = vcosq.f32.pop %v1225
      %v1228 = vsinq.f32.pop %v1225
      %vm1229 = vweird.f32 %v1002
      %v1230 = vand.u32 %v1226, 3
      %vm1231 = vcmp.lt.s32.totalorder %v1230, 2
      %vm1232 = vcmp.eq.s32.totalorder %v1230, 0
      %v1233 = vxor.u32 %v1228, 2147483648
      %v1234 = vsel %vm1232, %v1227, %v1233
      %vm1235 = vcmp.eq.s32.totalorder %v1230, 2
      %v1236 = vxor.u32 %v1227, 2147483648
      %v1237 = vsel %vm1235, %v1236, %v1228
      %v1238 = vsel %vm1231, %v1234, %v1237
      %v1239 = vsel %vm1229, nan, %v1238
      %v1240 = vand.u32 2147483647, %v1003
      %vm1241 = vcmp.le.f32.partialorder %v1240, 0.7853982
      %vm1242 = vcmp.lt.s32.totalorder %v1003, 0
      %v1243 = vand.u32 %v1003, 2139095040
      %v1244 = vshrl.u32 %v1243, 23
      %v1245 = vsub.s32 %v1244, 127
      %v1246 = vand.u32 2147483647, %v1003
      %v1247 = vand.u32 %v1246, 8388607
      %v1248 = vor.u32 %v1247, 8388608
      %v1249 = vsub.s32 0, %v1248
      %v1250 = vadd.s32 %v1245, 1
      %vm1251 = vcmp.gt.s32.totalorder %v1250, 0
      %v1252 = vsel %vm1251, %v1250, 0
      %v1253 = vshrl.u32 %v1252, 5
      %v1254 = vand.u32 %v1252, 31
      %v1255 = vsub.s32 32, %v1254
      %v1256 = vshrl.u32 683565275, %v1255
      %v1257 = vshll.u32 683565275, %v1254
      %v1258 = vshrl.u32 2475754826, %v1255
      %v1259 = vor.u32 %v1257, %v1258
      %v1260 = vshll.u32 2475754826, %v1254
      %v1261 = vshrl.u32 2131351028, %v1255
      %v1262 = vor.u32 %v1260, %v1261
      %v1263 = vshll.u32 2131351028, %v1254
      %v1264 = vshrl.u32 2102212464, %v1255
      %v1265 = vor.u32 %v1263, %v1264
      %v1266 = vshll.u32 2102212464, %v1254
      %v1267 = vshrl.u32 920167782, %v1255
      %v1268 = vor.u32 %v1266, %v1267
      %v1269 = vshll.u32 920167782, %v1254
      %v1270 = vshrl.u32 1326507024, %v1255
      %v1271 = vor.u32 %v1269, %v1270
      %vm1272 = vcmp.lt.s32.totalorder %v1253, 1
      %vm1273 = vcmp.lt.s32.totalorder %v1253, 2
      %vm1274 = vcmp.lt.s32.totalorder %v1253, 3
      %vm1275 = vcmp.lt.s32.totalorder %v1253, 4
      %v1276 = vsel %vm1272, %v1256, %v1259
      %v1277 = vsel %vm1275, %v1265, 2102212464
      %v1278 = vsel %vm1274, %v1262, %v1277
      %v1279 = vsel %vm1273, %v1276, %v1278
      %v1280 = vsel %vm1272, %v1259, %v1262
      %v1281 = vsel %vm1275, %v1268, 920167782
      %v1282 = vsel %vm1274, %v1265, %v1281
      %v1283 = vsel %vm1273, %v1280, %v1282
      %v1284 = vsel %vm1272, %v1262, %v1265
      %v1285 = vsel %vm1275, %v1271, 1326507024
      %v1286 = vsel %vm1274, %v1268, %v1285
      %v1287 = vsel %vm1273, %v1284, %v1286
      %v1288 = vshll.u32 %v1248, 8
      %v1289 = vmul.u32.u64.compose %v1288, %v1287
      %v1290 = vextract.low.u32 %v1289
      %v1291 = vextract.high.u32 %v1289
      %v1292 = vmul.u32.u64.compose %v1288, %v1283
      %v1293 = vextract.low.u32 %v1292
      %v1294 = vextract.high.u32 %v1292
      %v1295 = vmul.u32 %v1288, %v1279
      %v1296 = vadd.s32 %v1291, %v1293
      %vm1297 = vc.u32 %v1291, %v1293
      %v1298 = vadd.s32 %v1294, 1
      %v1299 = vsel %vm1297, %v1298, %v1294
      %v1300 = vadd.s32 %v1295, %v1299
      %v1301 = vadd.s32 %v1300, 536870912
      %v1302 = vshrl.u32 %v1301, 30
      %v1303 = vshll.u32 %v1302, 30
      %v1304 = vsub.s32 %v1300, %v1303
      %vm1305 = vcmp.lt.s32.totalorder %v1304, 0
      %v1306 = vsub.s32 0, %v1304
      %v1307 = vsel %vm1305, %v1306, %v1304
      %v1308 = vclz %v1307
      %v1309 = vsub.s32 %v1308, 2
      %vm1310 = vcmp.gt.s32.totalorder 0, %v1309
      %v1311 = vsel %vm1310, 0, %v1309
      %v1312 = vsub.s32 32, %v1311
      %v1313 = vshll.u32 %v1304, %v1311
      %v1314 = vshrl.u32 %v1296, %v1312
      %v1315 = vor.u32 %v1313, %v1314
      %v1316 = vsub.s32 4294967266, %v1311
      %v1317 = vadd.s32 %v1316, 127
      %v1318 = vshll.u32 %v1317, 23
      %v1319 = vor.u32 4788187, %v1318
      %v1320 = vand.u32 2147483647, %v1319
      %v1322 = vcvt.s32.f32 %v1315
      %v1323 = vmul.f32 %v1322, %v1320
      %v1324 = vxor.u32 %v1323, 2147483648
      %v1325 = vsel %vm1242, %v1324, %v1323
      %v1326 = vsub.s32 4, %v1302
      %v1327 = vsel %vm1242, %v1326, %v1302
      %v1328 = vsel %vm1241, %v1003, %v1325
      %v1329 = vsel %vm1241, 0, %v1327
      %v1330 = vcosq.f32.pop %v1328
      %v1331 = vsinq.f32.pop %v1328
      %vm1332 = vweird.f32 %v1003
      %v1333 = vand.u32 %v1329, 3
      %vm1334 = vcmp.lt.s32.totalorder %v1333, 2
      %vm1335 = vcmp.eq.s32.totalorder %v1333, 0
      %v1336 = vxor.u32 %v1331, 2147483648
      %v1337 = vsel %vm1335, %v1330, %v1336
      %vm1338 = vcmp.eq.s32.totalorder %v1333, 2
      %v1339 = vxor.u32 %v1330, 2147483648
      %v1340 = vsel %vm1338, %v1339, %v1331
      %v1341 = vsel %vm1334, %v1337, %v1340
      %v1342 = vsel %vm1332, nan, %v1341
      %v1343 = vand.u32 2147483647, %v1004
      %vm1344 = vcmp.le.f32.partialorder %v1343, 0.7853982
      %vm1345 = vcmp.lt.s32.totalorder %v1004, 0
      %v1346 = vand.u32 %v1004, 2139095040
      %v1347 = vshrl.u32 %v1346, 23
      %v1348 = vsub.s32 %v1347, 127
      %v1349 = vand.u32 2147483647, %v1004
      %v1350 = vand.u32 %v1349, 8388607
      %v1351 = vor.u32 %v1350, 8388608
      %v1352 = vsub.s32 0, %v1351
      %v1353 = vadd.s32 %v1348, 1
      %vm1354 = vcmp.gt.s32.totalorder %v1353, 0
      %v1355 = vsel %vm1354, %v1353, 0
      %v1356 = vshrl.u32 %v1355, 5
      %v1357 = vand.u32 %v1355, 31
      %v1358 = vsub.s32 32, %v1357
      %v1359 = vshrl.u32 683565275, %v1358
      %v1360 = vshll.u32 683565275, %v1357
      %v1361 = vshrl.u32 2475754826, %v1358
      %v1362 = vor.u32 %v1360, %v1361
      %v1363 = vshll.u32 2475754826, %v1357
      %v1364 = vshrl.u32 2131351028, %v1358
      %v1365 = vor.u32 %v1363, %v1364
      %v1366 = vshll.u32 2131351028, %v1357
      %v1367 = vshrl.u32 2102212464, %v1358
      %v1368 = vor.u32 %v1366, %v1367
      %v1369 = vshll.u32 2102212464, %v1357
      %v1370 = vshrl.u32 920167782, %v1358
      %v1371 = vor.u32 %v1369, %v1370
      %v1372 = vshll.u32 920167782, %v1357
      %v1373 = vshrl.u32 1326507024, %v1358
      %v1374 = vor.u32 %v1372, %v1373
      %vm1375 = vcmp.lt.s32.totalorder %v1356, 1
      %vm1376 = vcmp.lt.s32.totalorder %v1356, 2
      %vm1377 = vcmp.lt.s32.totalorder %v1356, 3
      %vm1378 = vcmp.lt.s32.totalorder %v1356, 4
      %v1379 = vsel %vm1375, %v1359, %v1362
      %v1380 = vsel %vm1378, %v1368, 2102212464
      %v1381 = vsel %vm1377, %v1365, %v1380
      %v1382 = vsel %vm1376, %v1379, %v1381
      %v1383 = vsel %vm1375, %v1362, %v1365
      %v1384 = vsel %vm1378, %v1371, 920167782
      %v1385 = vsel %vm1377, %v1368, %v1384
      %v1386 = vsel %vm1376, %v1383, %v1385
      %v1387 = vsel %vm1375, %v1365, %v1368
      %v1388 = vsel %vm1378, %v1374, 1326507024
      %v1389 = vsel %vm1377, %v1371, %v1388
      %v1390 = vsel %vm1376, %v1387, %v1389
      %v1391 = vshll.u32 %v1351, 8
      %v1392 = vmul.u32.u64.compose %v1391, %v1390
      %v1393 = vextract.low.u32 %v1392
      %v1394 = vextract.high.u32 %v1392
      %v1395 = vmul.u32.u64.compose %v1391, %v1386
      %v1396 = vextract.low.u32 %v1395
      %v1397 = vextract.high.u32 %v1395
      %v1398 = vmul.u32 %v1391, %v1382
      %v1399 = vadd.s32 %v1394, %v1396
      %vm1400 = vc.u32 %v1394, %v1396
      %v1401 = vadd.s32 %v1397, 1
      %v1402 = vsel %vm1400, %v1401, %v1397
      %v1403 = vadd.s32 %v1398, %v1402
      %v1404 = vadd.s32 %v1403, 536870912
      %v1405 = vshrl.u32 %v1404, 30
      %v1406 = vshll.u32 %v1405, 30
      %v1407 = vsub.s32 %v1403, %v1406
      %vm1408 = vcmp.lt.s32.totalorder %v1407, 0
      %v1409 = vsub.s32 0, %v1407
      %v1410 = vsel %vm1408, %v1409, %v1407
      %v1411 = vclz %v1410
      %v1412 = vsub.s32 %v1411, 2
      %vm1413 = vcmp.gt.s32.totalorder 0, %v1412
      %v1414 = vsel %vm1413, 0, %v1412
      %v1415 = vsub.s32 32, %v1414
      %v1416 = vshll.u32 %v1407, %v1414
      %v1417 = vshrl.u32 %v1399, %v1415
      %v1418 = vor.u32 %v1416, %v1417
      %v1419 = vsub.s32 4294967266, %v1414
      %v1420 = vadd.s32 %v1419, 127
      %v1421 = vshll.u32 %v1420, 23
      %v1422 = vor.u32 4788187, %v1421
      %v1423 = vand.u32 2147483647, %v1422
      %v1425 = vcvt.s32.f32 %v1418
      %v1426 = vmul.f32 %v1425, %v1423
      %v1427 = vxor.u32 %v1426, 2147483648
      %v1428 = vsel %vm1345, %v1427, %v1426
      %v1429 = vsub.s32 4, %v1405
      %v1430 = vsel %vm1345, %v1429, %v1405
      %v1431 = vsel %vm1344, %v1004, %v1428
      %v1432 = vsel %vm1344, 0, %v1430
      %v1433 = vcosq.f32.pop %v1431
      %v1434 = vsinq.f32.pop %v1431
      %vm1435 = vweird.f32 %v1004
      %v1436 = vand.u32 %v1432, 3
      %vm1437 = vcmp.lt.s32.totalorder %v1436, 2
      %vm1438 = vcmp.eq.s32.totalorder %v1436, 0
      %v1439 = vxor.u32 %v1434, 2147483648
      %v1440 = vsel %vm1438, %v1433, %v1439
      %vm1441 = vcmp.eq.s32.totalorder %v1436, 2
      %v1442 = vxor.u32 %v1433, 2147483648
      %v1443 = vsel %vm1441, %v1442, %v1434
      %v1444 = vsel %vm1437, %v1440, %v1443
      %v1445 = vsel %vm1435, nan, %v1444
      %v1446 = vand.u32 2147483647, %v1005
      %vm1447 = vcmp.le.f32.partialorder %v1446, 0.7853982
      %vm1448 = vcmp.lt.s32.totalorder %v1005, 0
      %v1449 = vand.u32 %v1005, 2139095040
      %v1450 = vshrl.u32 %v1449, 23
      %v1451 = vsub.s32 %v1450, 127
      %v1452 = vand.u32 2147483647, %v1005
      %v1453 = vand.u32 %v1452, 8388607
      %v1454 = vor.u32 %v1453, 8388608
      %v1455 = vsub.s32 0, %v1454
      %v1456 = vadd.s32 %v1451, 1
      %vm1457 = vcmp.gt.s32.totalorder %v1456, 0
      %v1458 = vsel %vm1457, %v1456, 0
      %v1459 = vshrl.u32 %v1458, 5
      %v1460 = vand.u32 %v1458, 31
      %v1461 = vsub.s32 32, %v1460
      %v1462 = vshrl.u32 683565275, %v1461
      %v1463 = vshll.u32 683565275, %v1460
      %v1464 = vshrl.u32 2475754826, %v1461
      %v1465 = vor.u32 %v1463, %v1464
      %v1466 = vshll.u32 2475754826, %v1460
      %v1467 = vshrl.u32 2131351028, %v1461
      %v1468 = vor.u32 %v1466, %v1467
      %v1469 = vshll.u32 2131351028, %v1460
      %v1470 = vshrl.u32 2102212464, %v1461
      %v1471 = vor.u32 %v1469, %v1470
      %v1472 = vshll.u32 2102212464, %v1460
      %v1473 = vshrl.u32 920167782, %v1461
      %v1474 = vor.u32 %v1472, %v1473
      %v1475 = vshll.u32 920167782, %v1460
      %v1476 = vshrl.u32 1326507024, %v1461
      %v1477 = vor.u32 %v1475, %v1476
      %vm1478 = vcmp.lt.s32.totalorder %v1459, 1
      %vm1479 = vcmp.lt.s32.totalorder %v1459, 2
      %vm1480 = vcmp.lt.s32.totalorder %v1459, 3
      %vm1481 = vcmp.lt.s32.totalorder %v1459, 4
      %v1482 = vsel %vm1478, %v1462, %v1465
      %v1483 = vsel %vm1481, %v1471, 2102212464
      %v1484 = vsel %vm1480, %v1468, %v1483
      %v1485 = vsel %vm1479, %v1482, %v1484
      %v1486 = vsel %vm1478, %v1465, %v1468
      %v1487 = vsel %vm1481, %v1474, 920167782
      %v1488 = vsel %vm1480, %v1471, %v1487
      %v1489 = vsel %vm1479, %v1486, %v1488
      %v1490 = vsel %vm1478, %v1468, %v1471
      %v1491 = vsel %vm1481, %v1477, 1326507024
      %v1492 = vsel %vm1480, %v1474, %v1491
      %v1493 = vsel %vm1479, %v1490, %v1492
      %v1494 = vshll.u32 %v1454, 8
      %v1495 = vmul.u32.u64.compose %v1494, %v1493
      %v1496 = vextract.low.u32 %v1495
      %v1497 = vextract.high.u32 %v1495
      %v1498 = vmul.u32.u64.compose %v1494, %v1489
      %v1499 = vextract.low.u32 %v1498
      %v1500 = vextract.high.u32 %v1498
      %v1501 = vmul.u32 %v1494, %v1485
      %v1502 = vadd.s32 %v1497, %v1499
      %vm1503 = vc.u32 %v1497, %v1499
      %v1504 = vadd.s32 %v1500, 1
      %v1505 = vsel %vm1503, %v1504, %v1500
      %v1506 = vadd.s32 %v1501, %v1505
      %v1507 = vadd.s32 %v1506, 536870912
      %v1508 = vshrl.u32 %v1507, 30
      %v1509 = vshll.u32 %v1508, 30
      %v1510 = vsub.s32 %v1506, %v1509
      %vm1511 = vcmp.lt.s32.totalorder %v1510, 0
      %v1512 = vsub.s32 0, %v1510
      %v1513 = vsel %vm1511, %v1512, %v1510
      %v1514 = vclz %v1513
      %v1515 = vsub.s32 %v1514, 2
      %vm1516 = vcmp.gt.s32.totalorder 0, %v1515
      %v1517 = vsel %vm1516, 0, %v1515
      %v1518 = vsub.s32 32, %v1517
      %v1519 = vshll.u32 %v1510, %v1517
      %v1520 = vshrl.u32 %v1502, %v1518
      %v1521 = vor.u32 %v1519, %v1520
      %v1522 = vsub.s32 4294967266, %v1517
      %v1523 = vadd.s32 %v1522, 127
      %v1524 = vshll.u32 %v1523, 23
      %v1525 = vor.u32 4788187, %v1524
      %v1526 = vand.u32 2147483647, %v1525
      %v1528 = vcvt.s32.f32 %v1521
      %v1529 = vmul.f32 %v1528, %v1526
      %v1530 = vxor.u32 %v1529, 2147483648
      %v1531 = vsel %vm1448, %v1530, %v1529
      %v1532 = vsub.s32 4, %v1508
      %v1533 = vsel %vm1448, %v1532, %v1508
      %v1534 = vsel %vm1447, %v1005, %v1531
      %v1535 = vsel %vm1447, 0, %v1533
      %v1536 = vcosq.f32.pop %v1534
      %v1537 = vsinq.f32.pop %v1534
      %vm1538 = vweird.f32 %v1005
      %v1539 = vand.u32 %v1535, 3
      %vm1540 = vcmp.lt.s32.totalorder %v1539, 2
      %vm1541 = vcmp.eq.s32.totalorder %v1539, 0
      %v1542 = vxor.u32 %v1537, 2147483648
      %v1543 = vsel %vm1541, %v1536, %v1542
      %vm1544 = vcmp.eq.s32.totalorder %v1539, 2
      %v1545 = vxor.u32 %v1536, 2147483648
      %v1546 = vsel %vm1544, %v1545, %v1537
      %v1547 = vsel %vm1540, %v1543, %v1546
      %v1548 = vsel %vm1538, nan, %v1547
      %v1549 = vand.u32 2147483647, %v1006
      %vm1550 = vcmp.le.f32.partialorder %v1549, 0.7853982
      %vm1551 = vcmp.lt.s32.totalorder %v1006, 0
      %v1552 = vand.u32 %v1006, 2139095040
      %v1553 = vshrl.u32 %v1552, 23
      %v1554 = vsub.s32 %v1553, 127
      %v1555 = vand.u32 2147483647, %v1006
      %v1556 = vand.u32 %v1555, 8388607
      %v1557 = vor.u32 %v1556, 8388608
      %v1558 = vsub.s32 0, %v1557
      %v1559 = vadd.s32 %v1554, 1
      %vm1560 = vcmp.gt.s32.totalorder %v1559, 0
      %v1561 = vsel %vm1560, %v1559, 0
      %v1562 = vshrl.u32 %v1561, 5
      %v1563 = vand.u32 %v1561, 31
      %v1564 = vsub.s32 32, %v1563
      %v1565 = vshrl.u32 683565275, %v1564
      %v1566 = vshll.u32 683565275, %v1563
      %v1567 = vshrl.u32 2475754826, %v1564
      %v1568 = vor.u32 %v1566, %v1567
      %v1569 = vshll.u32 2475754826, %v1563
      %v1570 = vshrl.u32 2131351028, %v1564
      %v1571 = vor.u32 %v1569, %v1570
      %v1572 = vshll.u32 2131351028, %v1563
      %v1573 = vshrl.u32 2102212464, %v1564
      %v1574 = vor.u32 %v1572, %v1573
      %v1575 = vshll.u32 2102212464, %v1563
      %v1576 = vshrl.u32 920167782, %v1564
      %v1577 = vor.u32 %v1575, %v1576
      %v1578 = vshll.u32 920167782, %v1563
      %v1579 = vshrl.u32 1326507024, %v1564
      %v1580 = vor.u32 %v1578, %v1579
      %vm1581 = vcmp.lt.s32.totalorder %v1562, 1
      %vm1582 = vcmp.lt.s32.totalorder %v1562, 2
      %vm1583 = vcmp.lt.s32.totalorder %v1562, 3
      %vm1584 = vcmp.lt.s32.totalorder %v1562, 4
      %v1585 = vsel %vm1581, %v1565, %v1568
      %v1586 = vsel %vm1584, %v1574, 2102212464
      %v1587 = vsel %vm1583, %v1571, %v1586
      %v1588 = vsel %vm1582, %v1585, %v1587
      %v1589 = vsel %vm1581, %v1568, %v1571
      %v1590 = vsel %vm1584, %v1577, 920167782
      %v1591 = vsel %vm1583, %v1574, %v1590
      %v1592 = vsel %vm1582, %v1589, %v1591
      %v1593 = vsel %vm1581, %v1571, %v1574
      %v1594 = vsel %vm1584, %v1580, 1326507024
      %v1595 = vsel %vm1583, %v1577, %v1594
      %v1596 = vsel %vm1582, %v1593, %v1595
      %v1597 = vshll.u32 %v1557, 8
      %v1598 = vmul.u32.u64.compose %v1597, %v1596
      %v1599 = vextract.low.u32 %v1598
      %v1600 = vextract.high.u32 %v1598
      %v1601 = vmul.u32.u64.compose %v1597, %v1592
      %v1602 = vextract.low.u32 %v1601
      %v1603 = vextract.high.u32 %v1601
      %v1604 = vmul.u32 %v1597, %v1588
      %v1605 = vadd.s32 %v1600, %v1602
      %vm1606 = vc.u32 %v1600, %v1602
      %v1607 = vadd.s32 %v1603, 1
      %v1608 = vsel %vm1606, %v1607, %v1603
      %v1609 = vadd.s32 %v1604, %v1608
      %v1610 = vadd.s32 %v1609, 536870912
      %v1611 = vshrl.u32 %v1610, 30
      %v1612 = vshll.u32 %v1611, 30
      %v1613 = vsub.s32 %v1609, %v1612
      %vm1614 = vcmp.lt.s32.totalorder %v1613, 0
      %v1615 = vsub.s32 0, %v1613
      %v1616 = vsel %vm1614, %v1615, %v1613
      %v1617 = vclz %v1616
      %v1618 = vsub.s32 %v1617, 2
      %vm1619 = vcmp.gt.s32.totalorder 0, %v1618
      %v1620 = vsel %vm1619, 0, %v1618
      %v1621 = vsub.s32 32, %v1620
      %v1622 = vshll.u32 %v1613, %v1620
      %v1623 = vshrl.u32 %v1605, %v1621
      %v1624 = vor.u32 %v1622, %v1623
      %v1625 = vsub.s32 4294967266, %v1620
      %v1626 = vadd.s32 %v1625, 127
      %v1627 = vshll.u32 %v1626, 23
      %v1628 = vor.u32 4788187, %v1627
      %v1629 = vand.u32 2147483647, %v1628
      %v1631 = vcvt.s32.f32 %v1624
      %v1632 = vmul.f32 %v1631, %v1629
      %v1633 = vxor.u32 %v1632, 2147483648
      %v1634 = vsel %vm1551, %v1633, %v1632
      %v1635 = vsub.s32 4, %v1611
      %v1636 = vsel %vm1551, %v1635, %v1611
      %v1637 = vsel %vm1550, %v1006, %v1634
      %v1638 = vsel %vm1550, 0, %v1636
      %v1639 = vcosq.f32.pop %v1637
      %v1640 = vsinq.f32.pop %v1637
      %vm1641 = vweird.f32 %v1006
      %v1642 = vand.u32 %v1638, 3
      %vm1643 = vcmp.lt.s32.totalorder %v1642, 2
      %vm1644 = vcmp.eq.s32.totalorder %v1642, 0
      %v1645 = vxor.u32 %v1640, 2147483648
      %v1646 = vsel %vm1644, %v1639, %v1645
      %vm1647 = vcmp.eq.s32.totalorder %v1642, 2
      %v1648 = vxor.u32 %v1639, 2147483648
      %v1649 = vsel %vm1647, %v1648, %v1640
      %v1650 = vsel %vm1643, %v1646, %v1649
      %v1651 = vsel %vm1641, nan, %v1650
      %v1652 = vand.u32 2147483647, %v1007
      %vm1653 = vcmp.le.f32.partialorder %v1652, 0.7853982
      %vm1654 = vcmp.lt.s32.totalorder %v1007, 0
      %v1655 = vand.u32 %v1007, 2139095040
      %v1656 = vshrl.u32 %v1655, 23
      %v1657 = vsub.s32 %v1656, 127
      %v1658 = vand.u32 2147483647, %v1007
      %v1659 = vand.u32 %v1658, 8388607
      %v1660 = vor.u32 %v1659, 8388608
      %v1661 = vsub.s32 0, %v1660
      %v1662 = vadd.s32 %v1657, 1
      %vm1663 = vcmp.gt.s32.totalorder %v1662, 0
      %v1664 = vsel %vm1663, %v1662, 0
      %v1665 = vshrl.u32 %v1664, 5
      %v1666 = vand.u32 %v1664, 31
      %v1667 = vsub.s32 32, %v1666
      %v1668 = vshrl.u32 683565275, %v1667
      %v1669 = vshll.u32 683565275, %v1666
      %v1670 = vshrl.u32 2475754826, %v1667
      %v1671 = vor.u32 %v1669, %v1670
      %v1672 = vshll.u32 2475754826, %v1666
      %v1673 = vshrl.u32 2131351028, %v1667
      %v1674 = vor.u32 %v1672, %v1673
      %v1675 = vshll.u32 2131351028, %v1666
      %v1676 = vshrl.u32 2102212464, %v1667
      %v1677 = vor.u32 %v1675, %v1676
      %v1678 = vshll.u32 2102212464, %v1666
      %v1679 = vshrl.u32 920167782, %v1667
      %v1680 = vor.u32 %v1678, %v1679
      %v1681 = vshll.u32 920167782, %v1666
      %v1682 = vshrl.u32 1326507024, %v1667
      %v1683 = vor.u32 %v1681, %v1682
      %vm1684 = vcmp.lt.s32.totalorder %v1665, 1
      %vm1685 = vcmp.lt.s32.totalorder %v1665, 2
      %vm1686 = vcmp.lt.s32.totalorder %v1665, 3
      %vm1687 = vcmp.lt.s32.totalorder %v1665, 4
      %v1688 = vsel %vm1684, %v1668, %v1671
      %v1689 = vsel %vm1687, %v1677, 2102212464
      %v1690 = vsel %vm1686, %v1674, %v1689
      %v1691 = vsel %vm1685, %v1688, %v1690
      %v1692 = vsel %vm1684, %v1671, %v1674
      %v1693 = vsel %vm1687, %v1680, 920167782
      %v1694 = vsel %vm1686, %v1677, %v1693
      %v1695 = vsel %vm1685, %v1692, %v1694
      %v1696 = vsel %vm1684, %v1674, %v1677
      %v1697 = vsel %vm1687, %v1683, 1326507024
      %v1698 = vsel %vm1686, %v1680, %v1697
      %v1699 = vsel %vm1685, %v1696, %v1698
      %v1700 = vshll.u32 %v1660, 8
      %v1701 = vmul.u32.u64.compose %v1700, %v1699
      %v1702 = vextract.low.u32 %v1701
      %v1703 = vextract.high.u32 %v1701
      %v1704 = vmul.u32.u64.compose %v1700, %v1695
      %v1705 = vextract.low.u32 %v1704
      %v1706 = vextract.high.u32 %v1704
      %v1707 = vmul.u32 %v1700, %v1691
      %v1708 = vadd.s32 %v1703, %v1705
      %vm1709 = vc.u32 %v1703, %v1705
      %v1710 = vadd.s32 %v1706, 1
      %v1711 = vsel %vm1709, %v1710, %v1706
      %v1712 = vadd.s32 %v1707, %v1711
      %v1713 = vadd.s32 %v1712, 536870912
      %v1714 = vshrl.u32 %v1713, 30
      %v1715 = vshll.u32 %v1714, 30
      %v1716 = vsub.s32 %v1712, %v1715
      %vm1717 = vcmp.lt.s32.totalorder %v1716, 0
      %v1718 = vsub.s32 0, %v1716
      %v1719 = vsel %vm1717, %v1718, %v1716
      %v1720 = vclz %v1719
      %v1721 = vsub.s32 %v1720, 2
      %vm1722 = vcmp.gt.s32.totalorder 0, %v1721
      %v1723 = vsel %vm1722, 0, %v1721
      %v1724 = vsub.s32 32, %v1723
      %v1725 = vshll.u32 %v1716, %v1723
      %v1726 = vshrl.u32 %v1708, %v1724
      %v1727 = vor.u32 %v1725, %v1726
      %v1728 = vsub.s32 4294967266, %v1723
      %v1729 = vadd.s32 %v1728, 127
      %v1730 = vshll.u32 %v1729, 23
      %v1731 = vor.u32 4788187, %v1730
      %v1732 = vand.u32 2147483647, %v1731
      %v1734 = vcvt.s32.f32 %v1727
      %v1735 = vmul.f32 %v1734, %v1732
      %v1736 = vxor.u32 %v1735, 2147483648
      %v1737 = vsel %vm1654, %v1736, %v1735
      %v1738 = vsub.s32 4, %v1714
      %v1739 = vsel %vm1654, %v1738, %v1714
      %v1740 = vsel %vm1653, %v1007, %v1737
      %v1741 = vsel %vm1653, 0, %v1739
      %v1742 = vcosq.f32.pop %v1740
      %v1743 = vsinq.f32.pop %v1740
      %vm1744 = vweird.f32 %v1007
      %v1745 = vand.u32 %v1741, 3
      %vm1746 = vcmp.lt.s32.totalorder %v1745, 2
      %vm1747 = vcmp.eq.s32.totalorder %v1745, 0
      %v1748 = vxor.u32 %v1743, 2147483648
      %v1749 = vsel %vm1747, %v1742, %v1748
      %vm1750 = vcmp.eq.s32.totalorder %v1745, 2
      %v1751 = vxor.u32 %v1742, 2147483648
      %v1752 = vsel %vm1750, %v1751, %v1743
      %v1753 = vsel %vm1746, %v1749, %v1752
      %v1754 = vsel %vm1744, nan, %v1753
      %v1755 = vand.u32 2147483647, %v1008
      %vm1756 = vcmp.le.f32.partialorder %v1755, 0.7853982
      %vm1757 = vcmp.lt.s32.totalorder %v1008, 0
      %v1758 = vand.u32 %v1008, 2139095040
      %v1759 = vshrl.u32 %v1758, 23
      %v1760 = vsub.s32 %v1759, 127
      %v1761 = vand.u32 2147483647, %v1008
      %v1762 = vand.u32 %v1761, 8388607
      %v1763 = vor.u32 %v1762, 8388608
      %v1764 = vsub.s32 0, %v1763
      %v1765 = vadd.s32 %v1760, 1
      %vm1766 = vcmp.gt.s32.totalorder %v1765, 0
      %v1767 = vsel %vm1766, %v1765, 0
      %v1768 = vshrl.u32 %v1767, 5
      %v1769 = vand.u32 %v1767, 31
      %v1770 = vsub.s32 32, %v1769
      %v1771 = vshrl.u32 683565275, %v1770
      %v1772 = vshll.u32 683565275, %v1769
      %v1773 = vshrl.u32 2475754826, %v1770
      %v1774 = vor.u32 %v1772, %v1773
      %v1775 = vshll.u32 2475754826, %v1769
      %v1776 = vshrl.u32 2131351028, %v1770
      %v1777 = vor.u32 %v1775, %v1776
      %v1778 = vshll.u32 2131351028, %v1769
      %v1779 = vshrl.u32 2102212464, %v1770
      %v1780 = vor.u32 %v1778, %v1779
      %v1781 = vshll.u32 2102212464, %v1769
      %v1782 = vshrl.u32 920167782, %v1770
      %v1783 = vor.u32 %v1781, %v1782
      %v1784 = vshll.u32 920167782, %v1769
      %v1785 = vshrl.u32 1326507024, %v1770
      %v1786 = vor.u32 %v1784, %v1785
      %vm1787 = vcmp.lt.s32.totalorder %v1768, 1
      %vm1788 = vcmp.lt.s32.totalorder %v1768, 2
      %vm1789 = vcmp.lt.s32.totalorder %v1768, 3
      %vm1790 = vcmp.lt.s32.totalorder %v1768, 4
      %v1791 = vsel %vm1787, %v1771, %v1774
      %v1792 = vsel %vm1790, %v1780, 2102212464
      %v1793 = vsel %vm1789, %v1777, %v1792
      %v1794 = vsel %vm1788, %v1791, %v1793
      %v1795 = vsel %vm1787, %v1774, %v1777
      %v1796 = vsel %vm1790, %v1783, 920167782
      %v1797 = vsel %vm1789, %v1780, %v1796
      %v1798 = vsel %vm1788, %v1795, %v1797
      %v1799 = vsel %vm1787, %v1777, %v1780
      %v1800 = vsel %vm1790, %v1786, 1326507024
      %v1801 = vsel %vm1789, %v1783, %v1800
      %v1802 = vsel %vm1788, %v1799, %v1801
      %v1803 = vshll.u32 %v1763, 8
      %v1804 = vmul.u32.u64.compose %v1803, %v1802
      %v1805 = vextract.low.u32 %v1804
      %v1806 = vextract.high.u32 %v1804
      %v1807 = vmul.u32.u64.compose %v1803, %v1798
      %v1808 = vextract.low.u32 %v1807
      %v1809 = vextract.high.u32 %v1807
      %v1810 = vmul.u32 %v1803, %v1794
      %v1811 = vadd.s32 %v1806, %v1808
      %vm1812 = vc.u32 %v1806, %v1808
      %v1813 = vadd.s32 %v1809, 1
      %v1814 = vsel %vm1812, %v1813, %v1809
      %v1815 = vadd.s32 %v1810, %v1814
      %v1816 = vadd.s32 %v1815, 536870912
      %v1817 = vshrl.u32 %v1816, 30
      %v1818 = vshll.u32 %v1817, 30
      %v1819 = vsub.s32 %v1815, %v1818
      %vm1820 = vcmp.lt.s32.totalorder %v1819, 0
      %v1821 = vsub.s32 0, %v1819
      %v1822 = vsel %vm1820, %v1821, %v1819
      %v1823 = vclz %v1822
      %v1824 = vsub.s32 %v1823, 2
      %vm1825 = vcmp.gt.s32.totalorder 0, %v1824
      %v1826 = vsel %vm1825, 0, %v1824
      %v1827 = vsub.s32 32, %v1826
      %v1828 = vshll.u32 %v1819, %v1826
      %v1829 = vshrl.u32 %v1811, %v1827
      %v1830 = vor.u32 %v1828, %v1829
      %v1831 = vsub.s32 4294967266, %v1826
      %v1832 = vadd.s32 %v1831, 127
      %v1833 = vshll.u32 %v1832, 23
      %v1834 = vor.u32 4788187, %v1833
      %v1835 = vand.u32 2147483647, %v1834
      %v1837 = vcvt.s32.f32 %v1830
      %v1838 = vmul.f32 %v1837, %v1835
      %v1839 = vxor.u32 %v1838, 2147483648
      %v1840 = vsel %vm1757, %v1839, %v1838
      %v1841 = vsub.s32 4, %v1817
      %v1842 = vsel %vm1757, %v1841, %v1817
      %v1843 = vsel %vm1756, %v1008, %v1840
      %v1844 = vsel %vm1756, 0, %v1842
      %v1845 = vcosq.f32.pop %v1843
      %v1846 = vsinq.f32.pop %v1843
      %vm1847 = vweird.f32 %v1008
      %v1848 = vand.u32 %v1844, 3
      %vm1849 = vcmp.lt.s32.totalorder %v1848, 2
      %vm1850 = vcmp.eq.s32.totalorder %v1848, 0
      %v1851 = vxor.u32 %v1846, 2147483648
      %v1852 = vsel %vm1850, %v1845, %v1851
      %vm1853 = vcmp.eq.s32.totalorder %v1848, 2
      %v1854 = vxor.u32 %v1845, 2147483648
      %v1855 = vsel %vm1853, %v1854, %v1846
      %v1856 = vsel %vm1849, %v1852, %v1855
      %v1857 = vsel %vm1847, nan, %v1856
      %v1858 = vand.u32 2147483647, %v1009
      %vm1859 = vcmp.le.f32.partialorder %v1858, 0.7853982
      %vm1860 = vcmp.lt.s32.totalorder %v1009, 0
      %v1861 = vand.u32 %v1009, 2139095040
      %v1862 = vshrl.u32 %v1861, 23
      %v1863 = vsub.s32 %v1862, 127
      %v1864 = vand.u32 2147483647, %v1009
      %v1865 = vand.u32 %v1864, 8388607
      %v1866 = vor.u32 %v1865, 8388608
      %v1867 = vsub.s32 0, %v1866
      %v1868 = vadd.s32 %v1863, 1
      %vm1869 = vcmp.gt.s32.totalorder %v1868, 0
      %v1870 = vsel %vm1869, %v1868, 0
      %v1871 = vshrl.u32 %v1870, 5
      %v1872 = vand.u32 %v1870, 31
      %v1873 = vsub.s32 32, %v1872
      %v1874 = vshrl.u32 683565275, %v1873
      %v1875 = vshll.u32 683565275, %v1872
      %v1876 = vshrl.u32 2475754826, %v1873
      %v1877 = vor.u32 %v1875, %v1876
      %v1878 = vshll.u32 2475754826, %v1872
      %v1879 = vshrl.u32 2131351028, %v1873
      %v1880 = vor.u32 %v1878, %v1879
      %v1881 = vshll.u32 2131351028, %v1872
      %v1882 = vshrl.u32 2102212464, %v1873
      %v1883 = vor.u32 %v1881, %v1882
      %v1884 = vshll.u32 2102212464, %v1872
      %v1885 = vshrl.u32 920167782, %v1873
      %v1886 = vor.u32 %v1884, %v1885
      %v1887 = vshll.u32 920167782, %v1872
      %v1888 = vshrl.u32 1326507024, %v1873
      %v1889 = vor.u32 %v1887, %v1888
      %vm1890 = vcmp.lt.s32.totalorder %v1871, 1
      %vm1891 = vcmp.lt.s32.totalorder %v1871, 2
      %vm1892 = vcmp.lt.s32.totalorder %v1871, 3
      %vm1893 = vcmp.lt.s32.totalorder %v1871, 4
      %v1894 = vsel %vm1890, %v1874, %v1877
      %v1895 = vsel %vm1893, %v1883, 2102212464
      %v1896 = vsel %vm1892, %v1880, %v1895
      %v1897 = vsel %vm1891, %v1894, %v1896
      %v1898 = vsel %vm1890, %v1877, %v1880
      %v1899 = vsel %vm1893, %v1886, 920167782
      %v1900 = vsel %vm1892, %v1883, %v1899
      %v1901 = vsel %vm1891, %v1898, %v1900
      %v1902 = vsel %vm1890, %v1880, %v1883
      %v1903 = vsel %vm1893, %v1889, 1326507024
      %v1904 = vsel %vm1892, %v1886, %v1903
      %v1905 = vsel %vm1891, %v1902, %v1904
      %v1906 = vshll.u32 %v1866, 8
      %v1907 = vmul.u32.u64.compose %v1906, %v1905
      %v1908 = vextract.low.u32 %v1907
      %v1909 = vextract.high.u32 %v1907
      %v1910 = vmul.u32.u64.compose %v1906, %v1901
      %v1911 = vextract.low.u32 %v1910
      %v1912 = vextract.high.u32 %v1910
      %v1913 = vmul.u32 %v1906, %v1897
      %v1914 = vadd.s32 %v1909, %v1911
      %vm1915 = vc.u32 %v1909, %v1911
      %v1916 = vadd.s32 %v1912, 1
      %v1917 = vsel %vm1915, %v1916, %v1912
      %v1918 = vadd.s32 %v1913, %v1917
      %v1919 = vadd.s32 %v1918, 536870912
      %v1920 = vshrl.u32 %v1919, 30
      %v1921 = vshll.u32 %v1920, 30
      %v1922 = vsub.s32 %v1918, %v1921
      %vm1923 = vcmp.lt.s32.totalorder %v1922, 0
      %v1924 = vsub.s32 0, %v1922
      %v1925 = vsel %vm1923, %v1924, %v1922
      %v1926 = vclz %v1925
      %v1927 = vsub.s32 %v1926, 2
      %vm1928 = vcmp.gt.s32.totalorder 0, %v1927
      %v1929 = vsel %vm1928, 0, %v1927
      %v1930 = vsub.s32 32, %v1929
      %v1931 = vshll.u32 %v1922, %v1929
      %v1932 = vshrl.u32 %v1914, %v1930
      %v1933 = vor.u32 %v1931, %v1932
      %v1934 = vsub.s32 4294967266, %v1929
      %v1935 = vadd.s32 %v1934, 127
      %v1936 = vshll.u32 %v1935, 23
      %v1937 = vor.u32 4788187, %v1936
      %v1938 = vand.u32 2147483647, %v1937
      %v1940 = vcvt.s32.f32 %v1933
      %v1941 = vmul.f32 %v1940, %v1938
      %v1942 = vxor.u32 %v1941, 2147483648
      %v1943 = vsel %vm1860, %v1942, %v1941
      %v1944 = vsub.s32 4, %v1920
      %v1945 = vsel %vm1860, %v1944, %v1920
      %v1946 = vsel %vm1859, %v1009, %v1943
      %v1947 = vsel %vm1859, 0, %v1945
      %v1948 = vcosq.f32.pop %v1946
      %v1949 = vsinq.f32.pop %v1946
      %vm1950 = vweird.f32 %v1009
      %v1951 = vand.u32 %v1947, 3
      %vm1952 = vcmp.lt.s32.totalorder %v1951, 2
      %vm1953 = vcmp.eq.s32.totalorder %v1951, 0
      %v1954 = vxor.u32 %v1949, 2147483648
      %v1955 = vsel %vm1953, %v1948, %v1954
      %vm1956 = vcmp.eq.s32.totalorder %v1951, 2
      %v1957 = vxor.u32 %v1948, 2147483648
      %v1958 = vsel %vm1956, %v1957, %v1949
      %v1959 = vsel %vm1952, %v1955, %v1958
      %v1960 = vsel %vm1950, nan, %v1959
      %v1961 = vlaneseq
      %v1962 = vshrl.u32 %v1961, 7
      %v1963 = vsub.s32 0, %v1962
      %v1964 = vrot.slane %v1025, %v1963
      %v1965 = vlaneseq
      %v1966 = vshrl.u32 %v1965, 7
      %v1967 = vsub.s32 0, %v1966
      %v1968 = vrot.slane %v1032, %v1967
      %v1969 = vlaneseq
      %v1970 = vshrl.u32 %v1969, 7
      %v1971 = vsub.s32 0, %v1970
      %v1972 = vrot.slane %v1033, %v1971
      %v1976 = vmul.f32 %v1964, %v1136
      %v1977 = vmul.f32 %v1964, %v1239
      %v1978 = vmul.f32 %v1964, %v1342
      %v1979 = vmul.f32 %v1968, %v1445
      %v1980 = vmul.f32 %v1968, %v1548
      %v1981 = vmul.f32 %v1968, %v1651
      %v1982 = vmul.f32 %v1972, %v1754
      %v1983 = vmul.f32 %v1972, %v1857
      %v1984 = vmul.f32 %v1972, %v1960
      %vm1985 = vcmask 261120
      %v1986 = vsel %vm1985, %v1976, 0.0
      %v1987 = vsel %vm1985, %v1979, 0.0
      %v1988 = vadd.f32 %v1986, %v1987
      %v1989 = vsel %vm1985, %v1982, 0.0
      %v1990 = vadd.f32 %v1988, %v1989
      %v1991 = vsel %vm1985, %v1977, 0.0
      %v1992 = vsel %vm1985, %v1980, 0.0
      %v1993 = vadd.f32 %v1991, %v1992
      %v1994 = vsel %vm1985, %v1983, 0.0
      %v1995 = vadd.f32 %v1993, %v1994
      %v1996 = vsel %vm1985, %v1978, 0.0
      %v1997 = vsel %vm1985, %v1981, 0.0
      %v1998 = vadd.f32 %v1996, %v1997
      %v1999 = vsel %vm1985, %v1984, 0.0
      %v2000 = vadd.f32 %v1998, %v1999
      %v2001 = vmul.f32 %v1990, 2.0
      %v2002 = vmul.f32 %v1995, 2.0
      %v2003 = vmul.f32 %v2000, 2.0
      %2004 = vst.msk [vmem:[%s893] sm:$0xff] %vm1985, %v2003
      %v2005 = vld [vmem:[%s859] sm:$0xff]
      %v2006 = vld [vmem:[%s859 + $0x8] sm:$0xff]
      %v2007 = vsub.f32 %v2005, %v2001
      %v2008 = vsub.f32 %v2006, %v2002
      %v2009 = vpack.c.bf16 %v2008, %v2007
      %v2010 = vld [vmem:[%s5] sm:$0xf]
      %v2011 = vld [vmem:[%s5 + $0x4] sm:$0xf]
      %v2012 = vld [vmem:[%s5 + $0x8] sm:$0xf]
      %v2013 = vld [vmem:[%s5 + $0xc] sm:$0xf]
      %v2014 = vld [vmem:[%s6] sm:$0x1]
      %v2016 = vlaneseq
      %v2017 = vshrl.u32 %v2016, 7
      %v2018 = vsub.s32 0, %v2017
      %v2019 = vrot.slane %v2014, %v2018
      %v2025 = vunpack.c.l.b16 %v2010
      %v2026 = vunpack.c.l.b16 %v2011
      %v2027 = vunpack.c.l.b16 %v2012
      %v2028 = vunpack.c.l.b16 %v2013
      %v2029 = vpack.c.b16 %v2026, %v2025
      %v2030 = vpack.c.b16 %v2028, %v2027
      %v2034 = vsel %vm1985, %v2009, 0
      %2036 = vmatprep.subr.bf16.mxu0 0
      %2037 = vmatpush1.bf16.msra.mxu0 0
      %2038 = vmatprep.subr.bf16.mxu0 0
      %2039 = vmatpush1.bf16.msra.mxu0 0
      %2040 = vmatprep.subr.bf16.mxu0 0
      %2041 = vmatpush1.bf16.msra.mxu0 0
      %2042 = vmatprep.subr.bf16.mxu0 0
      %2043 = vmatpush1.bf16.msra.mxu0 0
      %2044 = vmatprep.subr.bf16.mxu0 0
      %2045 = vmatpush1.bf16.msra.mxu0 0
      %2046 = vmatprep.subr.bf16.mxu0 0
      %2047 = vmatpush1.bf16.msra.mxu0 0
      %2048 = vmatprep.subr.bf16.mxu0 0
      %2049 = vmatpush1.bf16.msra.mxu0 %v2030
      %2050 = vmatprep.subr.bf16.mxu0 0
      %2051 = vmatpush1.bf16.msra.mxu0 %v2029
      %2052 = vmatprep.subr.bf16.mxu0 0
      %2053 = vmatpush2.bf16.msra.mxu0 0
      %2054 = vmatprep.subr.bf16.mxu0 0
      %2055 = vmatpush2.bf16.msra.mxu0 0
      %2056 = vmatprep.subr.bf16.mxu0 0
      %2057 = vmatpush2.bf16.msra.mxu0 0
      %2058 = vmatprep.subr.bf16.mxu0 0
      %2059 = vmatpush2.bf16.msra.mxu0 0
      %2060 = vmatprep.subr.bf16.mxu0 0
      %2061 = vmatpush2.bf16.msra.mxu0 0
      %2062 = vmatprep.subr.bf16.mxu0 0
      %2063 = vmatpush2.bf16.msra.mxu0 0
      %2064 = vmatprep.subr.bf16.mxu0 0
      %2065 = vmatpush2.bf16.msra.mxu0 0
      %2066 = vmatprep.subr.bf16.mxu0 0
      %2067 = vmatpush2.bf16.msra.mxu0 0
      %2068 = vmatprep.mubr.bf16.mxu0 0
      %2069 = vmatmul.mubr.bf16.gmra.mxu0 %v2034
      %v2070 = vpop.f32.mrf.mxu0
      %v2071 = vadd.f32 %v2019, %v2070
      %v2072 = vpop.f32.mrf.mxu0
      %v2073 = vpop.f32.mrf.mxu0
      %v2074 = vadd.f32 %v2019, %v2073
      %v2075 = vpop.f32.mrf.mxu0
      %2076 = vdwg.mxu0
      %v2077 = vld [vmem:[%s9] sm:$0xff]
      %v2078 = vld [vmem:[%s9 + $0x8] sm:$0xff]
      %v2079 = vld [vmem:[%s9 + $0x10] sm:$0xff]
      %v2080 = vld [vmem:[%s9 + $0x18] sm:$0xff]
      %v2081 = vpack.c.bf16 %v2074, %v2071
      %v2082 = vld [vmem:[%s7] sm:$0xf]
      %vm2083 = vcmask 64512
      %v2085 = vsel %vm2083, %v2081, 0
      %vm2087 = vcmask 1043456
      %v2089 = vsel %vm2087, %v2082, 0
      %2091 = vmatprep.subr.bf16.mxu0 0
      %2092 = vmatpush1.bf16.msra.mxu0 0
      %2093 = vmatprep.subr.bf16.mxu0 0
      %2094 = vmatpush1.bf16.msra.mxu0 0
      %2095 = vmatprep.subr.bf16.mxu0 0
      %2096 = vmatpush1.bf16.msra.mxu0 0
      %2097 = vmatprep.subr.bf16.mxu0 0
      %2098 = vmatpush1.bf16.msra.mxu0 0
      %2099 = vmatprep.subr.bf16.mxu0 0
      %2100 = vmatpush1.bf16.msra.mxu0 0
      %2101 = vmatprep.subr.bf16.mxu0 0
      %2102 = vmatpush1.bf16.msra.mxu0 0
      %2103 = vmatprep.subr.bf16.mxu0 0
      %2104 = vmatpush1.bf16.msra.mxu0 0
      %2105 = vmatprep.subr.bf16.mxu0 0
      %2106 = vmatpush1.bf16.msra.mxu0 %v2089
      %2107 = vmatprep.subr.bf16.mxu0 0
      %2108 = vmatpush2.bf16.msra.mxu0 0
      %2109 = vmatprep.subr.bf16.mxu0 0
      %2110 = vmatpush2.bf16.msra.mxu0 0
      %2111 = vmatprep.subr.bf16.mxu0 0
      %2112 = vmatpush2.bf16.msra.mxu0 0
      %2113 = vmatprep.subr.bf16.mxu0 0
      %2114 = vmatpush2.bf16.msra.mxu0 0
      %2115 = vmatprep.subr.bf16.mxu0 0
      %2116 = vmatpush2.bf16.msra.mxu0 0
      %2117 = vmatprep.subr.bf16.mxu0 0
      %2118 = vmatpush2.bf16.msra.mxu0 0
      %2119 = vmatprep.subr.bf16.mxu0 0
      %2120 = vmatpush2.bf16.msra.mxu0 0
      %2121 = vmatprep.subr.bf16.mxu0 0
      %2122 = vmatpush2.bf16.msra.mxu0 0
      %2123 = vmatprep.mubr.bf16.mxu0 0
      %2124 = vmatmul.mubr.bf16.gmra.mxu0 %v2085
      %v2125 = vpop.f32.mrf.mxu0
      %v2126 = vadd.f32 0.0, %v2125
      %v2127 = vpop.f32.mrf.mxu0
      %v2128 = vpop.f32.mrf.mxu0
      %v2129 = vadd.f32 0.0, %v2128
      %v2130 = vpop.f32.mrf.mxu0
      %2131 = vdwg.mxu0
      %v2132 = vld [vmem:[%s8] sm:$0xff]
      %v2133 = vld [vmem:[%s8 + $0x8] sm:$0xff]
      %v2134 = vld [vmem:[%s8 + $0x10] sm:$0xff]
      %v2135 = vld [vmem:[%s8 + $0x18] sm:$0xff]
      %vm2136 = vcmask 130048
      %v2138 = vsel %vm2136, %v2132, 0
      %v2141 = vsel %vm2136, %v2133, 0
      %v2144 = vsel %vm2136, %v2134, 0
      %v2147 = vsel %vm2136, %v2135, 0
      %2149 = vmatprep.subr.mxu0 0.0
      %2150 = vmatpush1.msra.mxu0 0.0
      %2151 = vmatprep.subr.mxu0 0.0
      %2152 = vmatpush1.msra.mxu0 0.0
      %2153 = vmatprep.subr.mxu0 0.0
      %2154 = vmatpush1.msra.mxu0 0.0
      %2155 = vmatprep.subr.mxu0 0.0
      %2156 = vmatpush1.msra.mxu0 0.0
      %2157 = vmatprep.subr.mxu0 0.0
      %2158 = vmatpush1.msra.mxu0 0.0
      %2159 = vmatprep.subr.mxu0 0.0
      %2160 = vmatpush1.msra.mxu0 0.0
      %2161 = vmatprep.subr.mxu0 0.0
      %2162 = vmatpush1.msra.mxu0 0.0
      %2163 = vmatprep.subr.mxu0 0.0
      %2164 = vmatpush1.msra.mxu0 0.0
      %2165 = vmatprep.subr.mxu0 0.0
      %2166 = vmatpush1.msra.mxu0 0.0
      %2167 = vmatprep.subr.mxu0 0.0
      %2168 = vmatpush1.msra.mxu0 0.0
      %2169 = vmatprep.subr.mxu0 0.0
      %2170 = vmatpush1.msra.mxu0 0.0
      %2171 = vmatprep.subr.mxu0 0.0
      %2172 = vmatpush1.msra.mxu0 0.0
      %2173 = vmatprep.subr.mxu0 0.0
      %2174 = vmatpush1.msra.mxu0 0.0
      %2175 = vmatprep.subr.mxu0 0.0
      %2176 = vmatpush1.msra.mxu0 0.0
      %2177 = vmatprep.subr.mxu0 0.0
      %2178 = vmatpush1.msra.mxu0 %v2129
      %2179 = vmatprep.subr.mxu0 0.0
      %2180 = vmatpush1.msra.mxu0 %v2126
      %2181 = vmatprep.subr.mxu0 0.0
      %2182 = vmatpush2.msra.mxu0 0.0
      %2183 = vmatprep.subr.mxu0 0.0
      %2184 = vmatpush2.msra.mxu0 0.0
      %2185 = vmatprep.subr.mxu0 0.0
      %2186 = vmatpush2.msra.mxu0 0.0
      %2187 = vmatprep.subr.mxu0 0.0
      %2188 = vmatpush2.msra.mxu0 0.0
      %2189 = vmatprep.subr.mxu0 0.0
      %2190 = vmatpush2.msra.mxu0 0.0
      %2191 = vmatprep.subr.mxu0 0.0
      %2192 = vmatpush2.msra.mxu0 0.0
      %2193 = vmatprep.subr.mxu0 0.0
      %2194 = vmatpush2.msra.mxu0 0.0
      %2195 = vmatprep.subr.mxu0 0.0
      %2196 = vmatpush2.msra.mxu0 0.0
      %2197 = vmatprep.subr.mxu0 0.0
      %2198 = vmatpush2.msra.mxu0 0.0
      %2199 = vmatprep.subr.mxu0 0.0
      %2200 = vmatpush2.msra.mxu0 0.0
      %2201 = vmatprep.subr.mxu0 0.0
      %2202 = vmatpush2.msra.mxu0 0.0
      %2203 = vmatprep.subr.mxu0 0.0
      %2204 = vmatpush2.msra.mxu0 0.0
      %2205 = vmatprep.subr.mxu0 0.0
      %2206 = vmatpush2.msra.mxu0 0.0
      %2207 = vmatprep.subr.mxu0 0.0
      %2208 = vmatpush2.msra.mxu0 0.0
      %2209 = vmatprep.subr.mxu0 0.0
      %2210 = vmatpush2.msra.mxu0 0.0
      %2211 = vmatprep.subr.mxu0 0.0
      %2212 = vmatpush2.msra.mxu0 0.0
      %2213 = vmatprep.mubr.f32.mxu0 0.0
      %2214 = vmatmul.mubr.f32.gmra.mxu0 %v2138
      %v2215 = vpop.f32.mrf.mxu0
      %v2216 = vadd.f32 0.0, %v2215
      %v2217 = vpop.f32.mrf.mxu0
      %2218 = vmatprep.mubr.f32.mxu0 0.0
      %2219 = vmatmul.mubr.f32.gmra.mxu0 %v2141
      %v2220 = vpop.f32.mrf.mxu0
      %v2221 = vadd.f32 0.0, %v2220
      %v2222 = vpop.f32.mrf.mxu0
      %2223 = vmatprep.mubr.f32.mxu0 0.0
      %2224 = vmatmul.mubr.f32.gmra.mxu0 %v2144
      %v2225 = vpop.f32.mrf.mxu0
      %v2226 = vadd.f32 0.0, %v2225
      %v2227 = vpop.f32.mrf.mxu0
      %2228 = vmatprep.mubr.f32.mxu0 0.0
      %2229 = vmatmul.mubr.f32.gmra.mxu0 %v2147
      %v2230 = vpop.f32.mrf.mxu0
      %v2231 = vadd.f32 0.0, %v2230
      %v2232 = vpop.f32.mrf.mxu0
      %2233 = vdwg.mxu0
      %v2234 = vadd.f32 %v2077, %v2216
      %v2235 = vadd.f32 %v2078, %v2221
      %v2236 = vadd.f32 %v2079, %v2226
      %v2237 = vadd.f32 %v2080, %v2231
      %s2238 = scalar_lea.vmem %s7, 4
      %v2239 = vld [vmem:[%s2238] sm:$0xf]
      %2241 = vrot.lane.b32.xlu0 %v2081, 120
      %v2242 = vpop.permute.xlu0 %2241
      %v2244 = vsel %vm2083, %v2242, 0
      %v2247 = vsel %vm2087, %v2239, 0
      %2249 = vmatprep.subr.bf16.mxu0 0
      %2250 = vmatpush1.bf16.msra.mxu0 0
      %2251 = vmatprep.subr.bf16.mxu0 0
      %2252 = vmatpush1.bf16.msra.mxu0 0
      %2253 = vmatprep.subr.bf16.mxu0 0
      %2254 = vmatpush1.bf16.msra.mxu0 0
      %2255 = vmatprep.subr.bf16.mxu0 0
      %2256 = vmatpush1.bf16.msra.mxu0 0
      %2257 = vmatprep.subr.bf16.mxu0 0
      %2258 = vmatpush1.bf16.msra.mxu0 0
      %2259 = vmatprep.subr.bf16.mxu0 0
      %2260 = vmatpush1.bf16.msra.mxu0 0
      %2261 = vmatprep.subr.bf16.mxu0 0
      %2262 = vmatpush1.bf16.msra.mxu0 0
      %2263 = vmatprep.subr.bf16.mxu0 0
      %2264 = vmatpush1.bf16.msra.mxu0 %v2247
      %2265 = vmatprep.subr.bf16.mxu0 0
      %2266 = vmatpush2.bf16.msra.mxu0 0
      %2267 = vmatprep.subr.bf16.mxu0 0
      %2268 = vmatpush2.bf16.msra.mxu0 0
      %2269 = vmatprep.subr.bf16.mxu0 0
      %2270 = vmatpush2.bf16.msra.mxu0 0
      %2271 = vmatprep.subr.bf16.mxu0 0
      %2272 = vmatpush2.bf16.msra.mxu0 0
      %2273 = vmatprep.subr.bf16.mxu0 0
      %2274 = vmatpush2.bf16.msra.mxu0 0
      %2275 = vmatprep.subr.bf16.mxu0 0
      %2276 = vmatpush2.bf16.msra.mxu0 0
      %2277 = vmatprep.subr.bf16.mxu0 0
      %2278 = vmatpush2.bf16.msra.mxu0 0
      %2279 = vmatprep.subr.bf16.mxu0 0
      %2280 = vmatpush2.bf16.msra.mxu0 0
      %2281 = vmatprep.mubr.bf16.mxu0 0
      %2282 = vmatmul.mubr.bf16.gmra.mxu0 %v2244
      %v2283 = vpop.f32.mrf.mxu0
      %v2284 = vadd.f32 0.0, %v2283
      %v2285 = vpop.f32.mrf.mxu0
      %v2286 = vpop.f32.mrf.mxu0
      %v2287 = vadd.f32 0.0, %v2286
      %v2288 = vpop.f32.mrf.mxu0
      %2289 = vdwg.mxu0
      %s2290 = scalar_lea.vmem %s8, 32
      %v2291 = vld [vmem:[%s2290] sm:$0xff]
      %v2292 = vld [vmem:[%s2290 + $0x8] sm:$0xff]
      %v2293 = vld [vmem:[%s2290 + $0x10] sm:$0xff]
      %v2294 = vld [vmem:[%s2290 + $0x18] sm:$0xff]
      %v2296 = vsel %vm2136, %v2291, 0
      %v2299 = vsel %vm2136, %v2292, 0
      %v2302 = vsel %vm2136, %v2293, 0
      %v2305 = vsel %vm2136, %v2294, 0
      %2307 = vmatprep.subr.mxu0 0.0
      %2308 = vmatpush1.msra.mxu0 0.0
      %2309 = vmatprep.subr.mxu0 0.0
      %2310 = vmatpush1.msra.mxu0 0.0
      %2311 = vmatprep.subr.mxu0 0.0
      %2312 = vmatpush1.msra.mxu0 0.0
      %2313 = vmatprep.subr.mxu0 0.0
      %2314 = vmatpush1.msra.mxu0 0.0
      %2315 = vmatprep.subr.mxu0 0.0
      %2316 = vmatpush1.msra.mxu0 0.0
      %2317 = vmatprep.subr.mxu0 0.0
      %2318 = vmatpush1.msra.mxu0 0.0
      %2319 = vmatprep.subr.mxu0 0.0
      %2320 = vmatpush1.msra.mxu0 0.0
      %2321 = vmatprep.subr.mxu0 0.0
      %2322 = vmatpush1.msra.mxu0 0.0
      %2323 = vmatprep.subr.mxu0 0.0
      %2324 = vmatpush1.msra.mxu0 0.0
      %2325 = vmatprep.subr.mxu0 0.0
      %2326 = vmatpush1.msra.mxu0 0.0
      %2327 = vmatprep.subr.mxu0 0.0
      %2328 = vmatpush1.msra.mxu0 0.0
      %2329 = vmatprep.subr.mxu0 0.0
      %2330 = vmatpush1.msra.mxu0 0.0
      %2331 = vmatprep.subr.mxu0 0.0
      %2332 = vmatpush1.msra.mxu0 0.0
      %2333 = vmatprep.subr.mxu0 0.0
      %2334 = vmatpush1.msra.mxu0 0.0
      %2335 = vmatprep.subr.mxu0 0.0
      %2336 = vmatpush1.msra.mxu0 %v2287
      %2337 = vmatprep.subr.mxu0 0.0
      %2338 = vmatpush1.msra.mxu0 %v2284
      %2339 = vmatprep.subr.mxu0 0.0
      %2340 = vmatpush2.msra.mxu0 0.0
      %2341 = vmatprep.subr.mxu0 0.0
      %2342 = vmatpush2.msra.mxu0 0.0
      %2343 = vmatprep.subr.mxu0 0.0
      %2344 = vmatpush2.msra.mxu0 0.0
      %2345 = vmatprep.subr.mxu0 0.0
      %2346 = vmatpush2.msra.mxu0 0.0
      %2347 = vmatprep.subr.mxu0 0.0
      %2348 = vmatpush2.msra.mxu0 0.0
      %2349 = vmatprep.subr.mxu0 0.0
      %2350 = vmatpush2.msra.mxu0 0.0
      %2351 = vmatprep.subr.mxu0 0.0
      %2352 = vmatpush2.msra.mxu0 0.0
      %2353 = vmatprep.subr.mxu0 0.0
      %2354 = vmatpush2.msra.mxu0 0.0
      %2355 = vmatprep.subr.mxu0 0.0
      %2356 = vmatpush2.msra.mxu0 0.0
      %2357 = vmatprep.subr.mxu0 0.0
      %2358 = vmatpush2.msra.mxu0 0.0
      %2359 = vmatprep.subr.mxu0 0.0
      %2360 = vmatpush2.msra.mxu0 0.0
      %2361 = vmatprep.subr.mxu0 0.0
      %2362 = vmatpush2.msra.mxu0 0.0
      %2363 = vmatprep.subr.mxu0 0.0
      %2364 = vmatpush2.msra.mxu0 0.0
      %2365 = vmatprep.subr.mxu0 0.0
      %2366 = vmatpush2.msra.mxu0 0.0
      %2367 = vmatprep.subr.mxu0 0.0
      %2368 = vmatpush2.msra.mxu0 0.0
      %2369 = vmatprep.subr.mxu0 0.0
      %2370 = vmatpush2.msra.mxu0 0.0
      %2371 = vmatprep.mubr.f32.mxu0 0.0
      %2372 = vmatmul.mubr.f32.gmra.mxu0 %v2296
      %v2373 = vpop.f32.mrf.mxu0
      %v2374 = vadd.f32 0.0, %v2373
      %v2375 = vpop.f32.mrf.mxu0
      %2376 = vmatprep.mubr.f32.mxu0 0.0
      %2377 = vmatmul.mubr.f32.gmra.mxu0 %v2299
      %v2378 = vpop.f32.mrf.mxu0
      %v2379 = vadd.f32 0.0, %v2378
      %v2380 = vpop.f32.mrf.mxu0
      %2381 = vmatprep.mubr.f32.mxu0 0.0
      %2382 = vmatmul.mubr.f32.gmra.mxu0 %v2302
      %v2383 = vpop.f32.mrf.mxu0
      %v2384 = vadd.f32 0.0, %v2383
      %v2385 = vpop.f32.mrf.mxu0
      %2386 = vmatprep.mubr.f32.mxu0 0.0
      %2387 = vmatmul.mubr.f32.gmra.mxu0 %v2305
      %v2388 = vpop.f32.mrf.mxu0
      %v2389 = vadd.f32 0.0, %v2388
      %v2390 = vpop.f32.mrf.mxu0
      %2391 = vdwg.mxu0
      %v2392 = vadd.f32 %v2234, %v2374
      %v2393 = vadd.f32 %v2235, %v2379
      %v2394 = vadd.f32 %v2236, %v2384
      %v2395 = vadd.f32 %v2237, %v2389
      %s2396 = scalar_lea.vmem %s7, 8
      %v2397 = vld [vmem:[%s2396] sm:$0xf]
      %2398 = vrot.lane.b32.xlu0 %v2081, 112
      %v2399 = vpop.permute.xlu0 %2398
      %v2401 = vsel %vm2083, %v2399, 0
      %v2404 = vsel %vm2087, %v2397, 0
      %2406 = vmatprep.subr.bf16.mxu0 0
      %2407 = vmatpush1.bf16.msra.mxu0 0
      %2408 = vmatprep.subr.bf16.mxu0 0
      %2409 = vmatpush1.bf16.msra.mxu0 0
      %2410 = vmatprep.subr.bf16.mxu0 0
      %2411 = vmatpush1.bf16.msra.mxu0 0
      %2412 = vmatprep.subr.bf16.mxu0 0
      %2413 = vmatpush1.bf16.msra.mxu0 0
      %2414 = vmatprep.subr.bf16.mxu0 0
      %2415 = vmatpush1.bf16.msra.mxu0 0
      %2416 = vmatprep.subr.bf16.mxu0 0
      %2417 = vmatpush1.bf16.msra.mxu0 0
      %2418 = vmatprep.subr.bf16.mxu0 0
      %2419 = vmatpush1.bf16.msra.mxu0 0
      %2420 = vmatprep.subr.bf16.mxu0 0
      %2421 = vmatpush1.bf16.msra.mxu0 %v2404
      %2422 = vmatprep.subr.bf16.mxu0 0
      %2423 = vmatpush2.bf16.msra.mxu0 0
      %2424 = vmatprep.subr.bf16.mxu0 0
      %2425 = vmatpush2.bf16.msra.mxu0 0
      %2426 = vmatprep.subr.bf16.mxu0 0
      %2427 = vmatpush2.bf16.msra.mxu0 0
      %2428 = vmatprep.subr.bf16.mxu0 0
      %2429 = vmatpush2.bf16.msra.mxu0 0
      %2430 = vmatprep.subr.bf16.mxu0 0
      %2431 = vmatpush2.bf16.msra.mxu0 0
      %2432 = vmatprep.subr.bf16.mxu0 0
      %2433 = vmatpush2.bf16.msra.mxu0 0
      %2434 = vmatprep.subr.bf16.mxu0 0
      %2435 = vmatpush2.bf16.msra.mxu0 0
      %2436 = vmatprep.subr.bf16.mxu0 0
      %2437 = vmatpush2.bf16.msra.mxu0 0
      %2438 = vmatprep.mubr.bf16.mxu0 0
      %2439 = vmatmul.mubr.bf16.gmra.mxu0 %v2401
      %v2440 = vpop.f32.mrf.mxu0
      %v2441 = vadd.f32 0.0, %v2440
      %v2442 = vpop.f32.mrf.mxu0
      %v2443 = vpop.f32.mrf.mxu0
      %v2444 = vadd.f32 0.0, %v2443
      %v2445 = vpop.f32.mrf.mxu0
      %2446 = vdwg.mxu0
      %s2447 = scalar_lea.vmem %s8, 64
      %v2448 = vld [vmem:[%s2447] sm:$0xff]
      %v2449 = vld [vmem:[%s2447 + $0x8] sm:$0xff]
      %v2450 = vld [vmem:[%s2447 + $0x10] sm:$0xff]
      %v2451 = vld [vmem:[%s2447 + $0x18] sm:$0xff]
      %v2453 = vsel %vm2136, %v2448, 0
      %v2456 = vsel %vm2136, %v2449, 0
      %v2459 = vsel %vm2136, %v2450, 0
      %v2462 = vsel %vm2136, %v2451, 0
      %2464 = vmatprep.subr.mxu0 0.0
      %2465 = vmatpush1.msra.mxu0 0.0
      %2466 = vmatprep.subr.mxu0 0.0
      %2467 = vmatpush1.msra.mxu0 0.0
      %2468 = vmatprep.subr.mxu0 0.0
      %2469 = vmatpush1.msra.mxu0 0.0
      %2470 = vmatprep.subr.mxu0 0.0
      %2471 = vmatpush1.msra.mxu0 0.0
      %2472 = vmatprep.subr.mxu0 0.0
      %2473 = vmatpush1.msra.mxu0 0.0
      %2474 = vmatprep.subr.mxu0 0.0
      %2475 = vmatpush1.msra.mxu0 0.0
      %2476 = vmatprep.subr.mxu0 0.0
      %2477 = vmatpush1.msra.mxu0 0.0
      %2478 = vmatprep.subr.mxu0 0.0
      %2479 = vmatpush1.msra.mxu0 0.0
      %2480 = vmatprep.subr.mxu0 0.0
      %2481 = vmatpush1.msra.mxu0 0.0
      %2482 = vmatprep.subr.mxu0 0.0
      %2483 = vmatpush1.msra.mxu0 0.0
      %2484 = vmatprep.subr.mxu0 0.0
      %2485 = vmatpush1.msra.mxu0 0.0
      %2486 = vmatprep.subr.mxu0 0.0
      %2487 = vmatpush1.msra.mxu0 0.0
      %2488 = vmatprep.subr.mxu0 0.0
      %2489 = vmatpush1.msra.mxu0 0.0
      %2490 = vmatprep.subr.mxu0 0.0
      %2491 = vmatpush1.msra.mxu0 0.0
      %2492 = vmatprep.subr.mxu0 0.0
      %2493 = vmatpush1.msra.mxu0 %v2444
      %2494 = vmatprep.subr.mxu0 0.0
      %2495 = vmatpush1.msra.mxu0 %v2441
      %2496 = vmatprep.subr.mxu0 0.0
      %2497 = vmatpush2.msra.mxu0 0.0
      %2498 = vmatprep.subr.mxu0 0.0
      %2499 = vmatpush2.msra.mxu0 0.0
      %2500 = vmatprep.subr.mxu0 0.0
      %2501 = vmatpush2.msra.mxu0 0.0
      %2502 = vmatprep.subr.mxu0 0.0
      %2503 = vmatpush2.msra.mxu0 0.0
      %2504 = vmatprep.subr.mxu0 0.0
      %2505 = vmatpush2.msra.mxu0 0.0
      %2506 = vmatprep.subr.mxu0 0.0
      %2507 = vmatpush2.msra.mxu0 0.0
      %2508 = vmatprep.subr.mxu0 0.0
      %2509 = vmatpush2.msra.mxu0 0.0
      %2510 = vmatprep.subr.mxu0 0.0
      %2511 = vmatpush2.msra.mxu0 0.0
      %2512 = vmatprep.subr.mxu0 0.0
      %2513 = vmatpush2.msra.mxu0 0.0
      %2514 = vmatprep.subr.mxu0 0.0
      %2515 = vmatpush2.msra.mxu0 0.0
      %2516 = vmatprep.subr.mxu0 0.0
      %2517 = vmatpush2.msra.mxu0 0.0
      %2518 = vmatprep.subr.mxu0 0.0
      %2519 = vmatpush2.msra.mxu0 0.0
      %2520 = vmatprep.subr.mxu0 0.0
      %2521 = vmatpush2.msra.mxu0 0.0
      %2522 = vmatprep.subr.mxu0 0.0
      %2523 = vmatpush2.msra.mxu0 0.0
      %2524 = vmatprep.subr.mxu0 0.0
      %2525 = vmatpush2.msra.mxu0 0.0
      %2526 = vmatprep.subr.mxu0 0.0
      %2527 = vmatpush2.msra.mxu0 0.0
      %2528 = vmatprep.mubr.f32.mxu0 0.0
      %2529 = vmatmul.mubr.f32.gmra.mxu0 %v2453
      %v2530 = vpop.f32.mrf.mxu0
      %v2531 = vadd.f32 0.0, %v2530
      %v2532 = vpop.f32.mrf.mxu0
      %2533 = vmatprep.mubr.f32.mxu0 0.0
      %2534 = vmatmul.mubr.f32.gmra.mxu0 %v2456
      %v2535 = vpop.f32.mrf.mxu0
      %v2536 = vadd.f32 0.0, %v2535
      %v2537 = vpop.f32.mrf.mxu0
      %2538 = vmatprep.mubr.f32.mxu0 0.0
      %2539 = vmatmul.mubr.f32.gmra.mxu0 %v2459
      %v2540 = vpop.f32.mrf.mxu0
      %v2541 = vadd.f32 0.0, %v2540
      %v2542 = vpop.f32.mrf.mxu0
      %2543 = vmatprep.mubr.f32.mxu0 0.0
      %2544 = vmatmul.mubr.f32.gmra.mxu0 %v2462
      %v2545 = vpop.f32.mrf.mxu0
      %v2546 = vadd.f32 0.0, %v2545
      %v2547 = vpop.f32.mrf.mxu0
      %2548 = vdwg.mxu0
      %v2549 = vadd.f32 %v2392, %v2531
      %v2550 = vadd.f32 %v2393, %v2536
      %v2551 = vadd.f32 %v2394, %v2541
      %v2552 = vadd.f32 %v2395, %v2546
      %s2553 = scalar_lea.vmem %s7, 12
      %v2554 = vld [vmem:[%s2553] sm:$0xf]
      %2555 = vrot.lane.b32.xlu0 %v2081, 104
      %v2556 = vpop.permute.xlu0 %2555
      %v2558 = vsel %vm2083, %v2556, 0
      %v2561 = vsel %vm2087, %v2554, 0
      %2563 = vmatprep.subr.bf16.mxu0 0
      %2564 = vmatpush1.bf16.msra.mxu0 0
      %2565 = vmatprep.subr.bf16.mxu0 0
      %2566 = vmatpush1.bf16.msra.mxu0 0
      %2567 = vmatprep.subr.bf16.mxu0 0
      %2568 = vmatpush1.bf16.msra.mxu0 0
      %2569 = vmatprep.subr.bf16.mxu0 0
      %2570 = vmatpush1.bf16.msra.mxu0 0
      %2571 = vmatprep.subr.bf16.mxu0 0
      %2572 = vmatpush1.bf16.msra.mxu0 0
      %2573 = vmatprep.subr.bf16.mxu0 0
      %2574 = vmatpush1.bf16.msra.mxu0 0
      %2575 = vmatprep.subr.bf16.mxu0 0
      %2576 = vmatpush1.bf16.msra.mxu0 0
      %2577 = vmatprep.subr.bf16.mxu0 0
      %2578 = vmatpush1.bf16.msra.mxu0 %v2561
      %2579 = vmatprep.subr.bf16.mxu0 0
      %2580 = vmatpush2.bf16.msra.mxu0 0
      %2581 = vmatprep.subr.bf16.mxu0 0
      %2582 = vmatpush2.bf16.msra.mxu0 0
      %2583 = vmatprep.subr.bf16.mxu0 0
      %2584 = vmatpush2.bf16.msra.mxu0 0
      %2585 = vmatprep.subr.bf16.mxu0 0
      %2586 = vmatpush2.bf16.msra.mxu0 0
      %2587 = vmatprep.subr.bf16.mxu0 0
      %2588 = vmatpush2.bf16.msra.mxu0 0
      %2589 = vmatprep.subr.bf16.mxu0 0
      %2590 = vmatpush2.bf16.msra.mxu0 0
      %2591 = vmatprep.subr.bf16.mxu0 0
      %2592 = vmatpush2.bf16.msra.mxu0 0
      %2593 = vmatprep.subr.bf16.mxu0 0
      %2594 = vmatpush2.bf16.msra.mxu0 0
      %2595 = vmatprep.mubr.bf16.mxu0 0
      %2596 = vmatmul.mubr.bf16.gmra.mxu0 %v2558
      %v2597 = vpop.f32.mrf.mxu0
      %v2598 = vadd.f32 0.0, %v2597
      %v2599 = vpop.f32.mrf.mxu0
      %v2600 = vpop.f32.mrf.mxu0
      %v2601 = vadd.f32 0.0, %v2600
      %v2602 = vpop.f32.mrf.mxu0
      %2603 = vdwg.mxu0
      %s2604 = scalar_lea.vmem %s8, 96
      %v2605 = vld [vmem:[%s2604] sm:$0xff]
      %v2606 = vld [vmem:[%s2604 + $0x8] sm:$0xff]
      %v2607 = vld [vmem:[%s2604 + $0x10] sm:$0xff]
      %v2608 = vld [vmem:[%s2604 + $0x18] sm:$0xff]
      %v2610 = vsel %vm2136, %v2605, 0
      %v2613 = vsel %vm2136, %v2606, 0
      %v2616 = vsel %vm2136, %v2607, 0
      %v2619 = vsel %vm2136, %v2608, 0
      %2621 = vmatprep.subr.mxu0 0.0
      %2622 = vmatpush1.msra.mxu0 0.0
      %2623 = vmatprep.subr.mxu0 0.0
      %2624 = vmatpush1.msra.mxu0 0.0
      %2625 = vmatprep.subr.mxu0 0.0
      %2626 = vmatpush1.msra.mxu0 0.0
      %2627 = vmatprep.subr.mxu0 0.0
      %2628 = vmatpush1.msra.mxu0 0.0
      %2629 = vmatprep.subr.mxu0 0.0
      %2630 = vmatpush1.msra.mxu0 0.0
      %2631 = vmatprep.subr.mxu0 0.0
      %2632 = vmatpush1.msra.mxu0 0.0
      %2633 = vmatprep.subr.mxu0 0.0
      %2634 = vmatpush1.msra.mxu0 0.0
      %2635 = vmatprep.subr.mxu0 0.0
      %2636 = vmatpush1.msra.mxu0 0.0
      %2637 = vmatprep.subr.mxu0 0.0
      %2638 = vmatpush1.msra.mxu0 0.0
      %2639 = vmatprep.subr.mxu0 0.0
      %2640 = vmatpush1.msra.mxu0 0.0
      %2641 = vmatprep.subr.mxu0 0.0
      %2642 = vmatpush1.msra.mxu0 0.0
      %2643 = vmatprep.subr.mxu0 0.0
      %2644 = vmatpush1.msra.mxu0 0.0
      %2645 = vmatprep.subr.mxu0 0.0
      %2646 = vmatpush1.msra.mxu0 0.0
      %2647 = vmatprep.subr.mxu0 0.0
      %2648 = vmatpush1.msra.mxu0 0.0
      %2649 = vmatprep.subr.mxu0 0.0
      %2650 = vmatpush1.msra.mxu0 %v2601
      %2651 = vmatprep.subr.mxu0 0.0
      %2652 = vmatpush1.msra.mxu0 %v2598
      %2653 = vmatprep.subr.mxu0 0.0
      %2654 = vmatpush2.msra.mxu0 0.0
      %2655 = vmatprep.subr.mxu0 0.0
      %2656 = vmatpush2.msra.mxu0 0.0
      %2657 = vmatprep.subr.mxu0 0.0
      %2658 = vmatpush2.msra.mxu0 0.0
      %2659 = vmatprep.subr.mxu0 0.0
      %2660 = vmatpush2.msra.mxu0 0.0
      %2661 = vmatprep.subr.mxu0 0.0
      %2662 = vmatpush2.msra.mxu0 0.0
      %2663 = vmatprep.subr.mxu0 0.0
      %2664 = vmatpush2.msra.mxu0 0.0
      %2665 = vmatprep.subr.mxu0 0.0
      %2666 = vmatpush2.msra.mxu0 0.0
      %2667 = vmatprep.subr.mxu0 0.0
      %2668 = vmatpush2.msra.mxu0 0.0
      %2669 = vmatprep.subr.mxu0 0.0
      %2670 = vmatpush2.msra.mxu0 0.0
      %2671 = vmatprep.subr.mxu0 0.0
      %2672 = vmatpush2.msra.mxu0 0.0
      %2673 = vmatprep.subr.mxu0 0.0
      %2674 = vmatpush2.msra.mxu0 0.0
      %2675 = vmatprep.subr.mxu0 0.0
      %2676 = vmatpush2.msra.mxu0 0.0
      %2677 = vmatprep.subr.mxu0 0.0
      %2678 = vmatpush2.msra.mxu0 0.0
      %2679 = vmatprep.subr.mxu0 0.0
      %2680 = vmatpush2.msra.mxu0 0.0
      %2681 = vmatprep.subr.mxu0 0.0
      %2682 = vmatpush2.msra.mxu0 0.0
      %2683 = vmatprep.subr.mxu0 0.0
      %2684 = vmatpush2.msra.mxu0 0.0
      %2685 = vmatprep.mubr.f32.mxu0 0.0
      %2686 = vmatmul.mubr.f32.gmra.mxu0 %v2610
      %v2687 = vpop.f32.mrf.mxu0
      %v2688 = vadd.f32 0.0, %v2687
      %v2689 = vpop.f32.mrf.mxu0
      %2690 = vmatprep.mubr.f32.mxu0 0.0
      %2691 = vmatmul.mubr.f32.gmra.mxu0 %v2613
      %v2692 = vpop.f32.mrf.mxu0
      %v2693 = vadd.f32 0.0, %v2692
      %v2694 = vpop.f32.mrf.mxu0
      %2695 = vmatprep.mubr.f32.mxu0 0.0
      %2696 = vmatmul.mubr.f32.gmra.mxu0 %v2616
      %v2697 = vpop.f32.mrf.mxu0
      %v2698 = vadd.f32 0.0, %v2697
      %v2699 = vpop.f32.mrf.mxu0
      %2700 = vmatprep.mubr.f32.mxu0 0.0
      %2701 = vmatmul.mubr.f32.gmra.mxu0 %v2619
      %v2702 = vpop.f32.mrf.mxu0
      %v2703 = vadd.f32 0.0, %v2702
      %v2704 = vpop.f32.mrf.mxu0
      %2705 = vdwg.mxu0
      %v2706 = vadd.f32 %v2549, %v2688
      %v2707 = vadd.f32 %v2550, %v2693
      %v2708 = vadd.f32 %v2551, %v2698
      %v2709 = vadd.f32 %v2552, %v2703
      %vm2710 = vcmask 261127
      %2711 = vst.msk [vmem:[%s889 - $0x7] sm:$0x80] %vm2710, %v2707
      %v2712 = vsub.f32 %v2007, %v2706
      %v2713 = vsub.f32 %v2008, %v2707
      %v2714 = vld [vmem:[%s10] sm:$0x1]
      %v2715 = vld [vmem:[%s11] sm:$0x1]
      %v2716 = vsel %vm1985, %v2712, 0.0
      %2717 = vadd.xlane.f32.xlu0 %v2716
      %v2718 = vpop.xlane.xlu0 %2717
      %v2719 = vsel %vm1985, %v2713, 0.0
      %2720 = vadd.xlane.f32.xlu0 %v2719
      %v2721 = vpop.xlane.xlu0 %2720
      %v2722 = vrcp.pop 32.0
      %v2723 = vmul.f32 %v2718, %v2722
      %v2724 = vmul.f32 %v2721, %v2722
      %v2725 = vsub.f32 %v2712, %v2723
      %v2726 = vsub.f32 %v2713, %v2724
      %v2727 = vmul.f32 %v2725, %v2725
      %v2728 = vmul.f32 %v2726, %v2726
      %v2729 = vsel %vm1985, %v2727, 0.0
      %2730 = vadd.xlane.f32.xlu0 %v2729
      %v2731 = vpop.xlane.xlu0 %2730
      %v2732 = vsel %vm1985, %v2728, 0.0
      %2733 = vadd.xlane.f32.xlu0 %v2732
      %v2734 = vpop.xlane.xlu0 %2733
      %v2735 = vmul.f32 %v2731, %v2722
      %v2736 = vmul.f32 %v2734, %v2722
      %v2737 = vadd.f32 %v2735, 1e-05
      %v2738 = vadd.f32 %v2736, 1e-05
      %v2739 = vrsqrt.pop %v2737
      %v2740 = vrsqrt.pop %v2738
      %v2741 = vmul.f32 %v2725, %v2739
      %v2742 = vmul.f32 %v2726, %v2740
      %v2744 = vlaneseq
      %v2745 = vshrl.u32 %v2744, 7
      %v2746 = vsub.s32 0, %v2745
      %v2747 = vrot.slane %v2714, %v2746
      %v2749 = vmul.f32 %v2741, %v2747
      %v2750 = vmul.f32 %v2742, %v2747
      %v2752 = vlaneseq
      %v2753 = vshrl.u32 %v2752, 7
      %v2754 = vsub.s32 0, %v2753
      %v2755 = vrot.slane %v2715, %v2754
      %v2757 = vadd.f32 %v2749, %v2755
      %v2758 = vadd.f32 %v2750, %v2755
      %v2759 = vpack.c.bf16 %v2758, %v2757
      %v2760 = vld [vmem:[%s12] sm:$0xf]
      %v2761 = vld [vmem:[%s12 + $0x4] sm:$0xf]
      %v2762 = vld [vmem:[%s12 + $0x8] sm:$0xf]
      %v2763 = vld [vmem:[%s12 + $0xc] sm:$0xf]
      %v2768 = vunpack.c.l.b16 %v2760
      %v2769 = vunpack.c.l.b16 %v2761
      %v2770 = vunpack.c.l.b16 %v2762
      %v2771 = vunpack.c.l.b16 %v2763
      %v2772 = vpack.c.b16 %v2769, %v2768
      %v2773 = vpack.c.b16 %v2771, %v2770
      %v2777 = vsel %vm1985, %v2759, 0
      %2779 = vmatprep.subr.bf16.mxu0 0
      %2780 = vmatpush1.bf16.msra.mxu0 0
      %2781 = vmatprep.subr.bf16.mxu0 0
      %2782 = vmatpush1.bf16.msra.mxu0 0
      %2783 = vmatprep.subr.bf16.mxu0 0
      %2784 = vmatpush1.bf16.msra.mxu0 0
      %2785 = vmatprep.subr.bf16.mxu0 0
      %2786 = vmatpush1.bf16.msra.mxu0 0
      %2787 = vmatprep.subr.bf16.mxu0 0
      %2788 = vmatpush1.bf16.msra.mxu0 0
      %2789 = vmatprep.subr.bf16.mxu0 0
      %2790 = vmatpush1.bf16.msra.mxu0 0
      %2791 = vmatprep.subr.bf16.mxu0 0
      %2792 = vmatpush1.bf16.msra.mxu0 %v2773
      %2793 = vmatprep.subr.bf16.mxu0 0
      %2794 = vmatpush1.bf16.msra.mxu0 %v2772
      %2795 = vmatprep.subr.bf16.mxu0 0
      %2796 = vmatpush2.bf16.msra.mxu0 0
      %2797 = vmatprep.subr.bf16.mxu0 0
      %2798 = vmatpush2.bf16.msra.mxu0 0
      %2799 = vmatprep.subr.bf16.mxu0 0
      %2800 = vmatpush2.bf16.msra.mxu0 0
      %2801 = vmatprep.subr.bf16.mxu0 0
      %2802 = vmatpush2.bf16.msra.mxu0 0
      %2803 = vmatprep.subr.bf16.mxu0 0
      %2804 = vmatpush2.bf16.msra.mxu0 0
      %2805 = vmatprep.subr.bf16.mxu0 0
      %2806 = vmatpush2.bf16.msra.mxu0 0
      %2807 = vmatprep.subr.bf16.mxu0 0
      %2808 = vmatpush2.bf16.msra.mxu0 0
      %2809 = vmatprep.subr.bf16.mxu0 0
      %2810 = vmatpush2.bf16.msra.mxu0 0
      %2811 = vmatprep.mubr.bf16.mxu0 0
      %2812 = vmatmul.mubr.bf16.gmra.mxu0 %v2777
      %v2813 = vpop.f32.mrf.mxu0
      %v2814 = vadd.f32 0.0, %v2813
      %v2815 = vpop.f32.mrf.mxu0
      %v2816 = vpop.f32.mrf.mxu0
      %v2817 = vadd.f32 0.0, %v2816
      %v2818 = vpop.f32.mrf.mxu0
      %2819 = vdwg.mxu0
      %v2820 = vxor.u32 %v2814, 2147483648
      %v2821 = vxor.u32 %v2817, 2147483648
      %v2822 = vmul.f32 %v2820, 1.442695
      %v2823 = vpow.pop %v2822
      %v2824 = vmul.f32 %v2821, 1.442695
      %v2825 = vpow.pop %v2824
      %v2826 = vadd.f32 %v2823, 1.0
      %v2827 = vadd.f32 %v2825, 1.0
      %v2828 = vrcp.pop %v2826
      %v2829 = vmul.f32 1.0, %v2828
      %v2830 = vrcp.pop %v2827
      %v2831 = vmul.f32 1.0, %v2830
      %v2832 = vpack.c.bf16 %v2831, %v2829
      %v2833 = vld [vmem:[%s13] sm:$0xf]
      %v2834 = vld [vmem:[%s13 + $0x4] sm:$0xf]
      %v2835 = vld [vmem:[%s13 + $0x8] sm:$0xf]
      %v2836 = vld [vmem:[%s13 + $0xc] sm:$0xf]
      %v2837 = vld [vmem:[%s13 + $0x10] sm:$0xf]
      %v2838 = vld [vmem:[%s13 + $0x14] sm:$0xf]
      %v2839 = vld [vmem:[%s13 + $0x18] sm:$0xf]
      %v2840 = vld [vmem:[%s13 + $0x1c] sm:$0xf]
      %v2849 = vunpack.c.l.b16 %v2833
      %v2850 = vunpack.c.l.b16 %v2834
      %v2851 = vunpack.c.l.b16 %v2835
      %v2852 = vunpack.c.l.b16 %v2836
      %v2853 = vunpack.c.l.b16 %v2837
      %v2854 = vunpack.c.l.b16 %v2838
      %v2855 = vunpack.c.l.b16 %v2839
      %v2856 = vunpack.c.l.b16 %v2840
      %v2857 = vpack.c.b16 %v2850, %v2849
      %v2858 = vpack.c.b16 %v2852, %v2851
      %v2859 = vpack.c.b16 %v2854, %v2853
      %v2860 = vpack.c.b16 %v2856, %v2855
      %vm2865 = vcmask 523264
      %v2867 = vsel %vm2865, %v2832, 0
      %2869 = vmatprep.subr.bf16.mxu0 0
      %2870 = vmatpush1.bf16.msra.mxu0 0
      %2871 = vmatprep.subr.bf16.mxu0 0
      %2872 = vmatpush1.bf16.msra.mxu0 0
      %2873 = vmatprep.subr.bf16.mxu0 0
      %2874 = vmatpush1.bf16.msra.mxu0 0
      %2875 = vmatprep.subr.bf16.mxu0 0
      %2876 = vmatpush1.bf16.msra.mxu0 0
      %2877 = vmatprep.subr.bf16.mxu0 0
      %2878 = vmatpush1.bf16.msra.mxu0 %v2860
      %2879 = vmatprep.subr.bf16.mxu0 0
      %2880 = vmatpush1.bf16.msra.mxu0 %v2859
      %2881 = vmatprep.subr.bf16.mxu0 0
      %2882 = vmatpush1.bf16.msra.mxu0 %v2858
      %2883 = vmatprep.subr.bf16.mxu0 0
      %2884 = vmatpush1.bf16.msra.mxu0 %v2857
      %2885 = vmatprep.subr.bf16.mxu0 0
      %2886 = vmatpush2.bf16.msra.mxu0 0
      %2887 = vmatprep.subr.bf16.mxu0 0
      %2888 = vmatpush2.bf16.msra.mxu0 0
      %2889 = vmatprep.subr.bf16.mxu0 0
      %2890 = vmatpush2.bf16.msra.mxu0 0
      %2891 = vmatprep.subr.bf16.mxu0 0
      %2892 = vmatpush2.bf16.msra.mxu0 0
      %2893 = vmatprep.subr.bf16.mxu0 0
      %2894 = vmatpush2.bf16.msra.mxu0 0
      %2895 = vmatprep.subr.bf16.mxu0 0
      %2896 = vmatpush2.bf16.msra.mxu0 0
      %2897 = vmatprep.subr.bf16.mxu0 0
      %2898 = vmatpush2.bf16.msra.mxu0 0
      %2899 = vmatprep.subr.bf16.mxu0 0
      %2900 = vmatpush2.bf16.msra.mxu0 0
      %2901 = vmatprep.mubr.bf16.mxu0 0
      %2902 = vmatmul.mubr.bf16.gmra.mxu0 %v2867
      %v2903 = vpop.f32.mrf.mxu0
      %v2904 = vadd.f32 0.0, %v2903
      %v2905 = vpop.f32.mrf.mxu0
      %v2906 = vpop.f32.mrf.mxu0
      %v2907 = vadd.f32 0.0, %v2906
      %v2908 = vpop.f32.mrf.mxu0
      %2909 = vdwg.mxu0
      %v2910 = vadd.f32 %v2757, %v2904
      %v2911 = vadd.f32 %v2758, %v2907
      %v2912 = vld [vmem:[%s14] sm:$0x1]
      %v2913 = vld [vmem:[%s15] sm:$0x1]
      %v2914 = vsel %vm1985, %v2910, 0.0
      %2915 = vadd.xlane.f32.xlu0 %v2914
      %v2916 = vpop.xlane.xlu0 %2915
      %v2917 = vsel %vm1985, %v2911, 0.0
      %2918 = vadd.xlane.f32.xlu0 %v2917
      %v2919 = vpop.xlane.xlu0 %2918
      %v2920 = vmul.f32 %v2916, %v2722
      %v2921 = vmul.f32 %v2919, %v2722
      %v2922 = vsub.f32 %v2910, %v2920
      %v2923 = vsub.f32 %v2911, %v2921
      %v2924 = vmul.f32 %v2922, %v2922
      %v2925 = vmul.f32 %v2923, %v2923
      %v2926 = vsel %vm1985, %v2924, 0.0
      %2927 = vadd.xlane.f32.xlu0 %v2926
      %v2928 = vpop.xlane.xlu0 %2927
      %v2929 = vsel %vm1985, %v2925, 0.0
      %2930 = vadd.xlane.f32.xlu0 %v2929
      %v2931 = vpop.xlane.xlu0 %2930
      %v2932 = vmul.f32 %v2928, %v2722
      %v2933 = vmul.f32 %v2931, %v2722
      %v2934 = vadd.f32 %v2932, 1e-05
      %v2935 = vadd.f32 %v2933, 1e-05
      %v2936 = vrsqrt.pop %v2934
      %v2937 = vrsqrt.pop %v2935
      %v2938 = vmul.f32 %v2922, %v2936
      %v2939 = vmul.f32 %v2923, %v2937
      %v2941 = vlaneseq
      %v2942 = vshrl.u32 %v2941, 7
      %v2943 = vsub.s32 0, %v2942
      %v2944 = vrot.slane %v2912, %v2943
      %v2946 = vmul.f32 %v2938, %v2944
      %v2947 = vmul.f32 %v2939, %v2944
      %v2949 = vlaneseq
      %v2950 = vshrl.u32 %v2949, 7
      %v2951 = vsub.s32 0, %v2950
      %v2952 = vrot.slane %v2913, %v2951
      %v2954 = vadd.f32 %v2946, %v2952
      %v2955 = vadd.f32 %v2947, %v2952
      %2956 = vst.msk [vmem:[%s881] sm:$0xff] %vm1985, %v2954
      %2957 = vst.msk [vmem:[%s881 + $0x8] sm:$0xff] %vm1985, %v2955
      %v2958 = vpack.c.bf16 %v2709, %v2708
      %v2959 = vld [vmem:[%s16] sm:$0xf]
      %v2960 = vld [vmem:[%s16 + $0x4] sm:$0xf]
      %v2961 = vld [vmem:[%s16 + $0x8] sm:$0xf]
      %v2962 = vld [vmem:[%s16 + $0xc] sm:$0xf]
      %v2963 = vld [vmem:[%s17] sm:$0x1]
      %v2965 = vlaneseq
      %v2966 = vshrl.u32 %v2965, 7
      %v2967 = vsub.s32 0, %v2966
      %v2968 = vrot.slane %v2963, %v2967
      %v2974 = vunpack.c.l.b16 %v2959
      %v2975 = vunpack.c.l.b16 %v2960
      %v2976 = vunpack.c.l.b16 %v2961
      %v2977 = vunpack.c.l.b16 %v2962
      %v2978 = vpack.c.b16 %v2975, %v2974
      %v2979 = vpack.c.b16 %v2977, %v2976
      %v2983 = vsel %vm1985, %v2958, 0
      %2985 = vmatprep.subr.bf16.mxu0 0
      %2986 = vmatpush1.bf16.msra.mxu0 0
      %2987 = vmatprep.subr.bf16.mxu0 0
      %2988 = vmatpush1.bf16.msra.mxu0 0
      %2989 = vmatprep.subr.bf16.mxu0 0
      %2990 = vmatpush1.bf16.msra.mxu0 0
      %2991 = vmatprep.subr.bf16.mxu0 0
      %2992 = vmatpush1.bf16.msra.mxu0 0
      %2993 = vmatprep.subr.bf16.mxu0 0
      %2994 = vmatpush1.bf16.msra.mxu0 0
      %2995 = vmatprep.subr.bf16.mxu0 0
      %2996 = vmatpush1.bf16.msra.mxu0 0
      %2997 = vmatprep.subr.bf16.mxu0 0
      %2998 = vmatpush1.bf16.msra.mxu0 %v2979
      %2999 = vmatprep.subr.bf16.mxu0 0
      %3000 = vmatpush1.bf16.msra.mxu0 %v2978
      %3001 = vmatprep.subr.bf16.mxu0 0
      %3002 = vmatpush2.bf16.msra.mxu0 0
      %3003 = vmatprep.subr.bf16.mxu0 0
      %3004 = vmatpush2.bf16.msra.mxu0 0
      %3005 = vmatprep.subr.bf16.mxu0 0
      %3006 = vmatpush2.bf16.msra.mxu0 0
      %3007 = vmatprep.subr.bf16.mxu0 0
      %3008 = vmatpush2.bf16.msra.mxu0 0
      %3009 = vmatprep.subr.bf16.mxu0 0
      %3010 = vmatpush2.bf16.msra.mxu0 0
      %3011 = vmatprep.subr.bf16.mxu0 0
      %3012 = vmatpush2.bf16.msra.mxu0 0
      %3013 = vmatprep.subr.bf16.mxu0 0
      %3014 = vmatpush2.bf16.msra.mxu0 0
      %3015 = vmatprep.subr.bf16.mxu0 0
      %3016 = vmatpush2.bf16.msra.mxu0 0
      %3017 = vmatprep.mubr.bf16.mxu0 0
      %3018 = vmatmul.mubr.bf16.gmra.mxu0 %v2983
      %v3019 = vpop.f32.mrf.mxu0
      %v3020 = vadd.f32 %v2968, %v3019
      %v3021 = vpop.f32.mrf.mxu0
      %v3022 = vpop.f32.mrf.mxu0
      %v3023 = vadd.f32 %v2968, %v3022
      %v3024 = vpop.f32.mrf.mxu0
      %3025 = vdwg.mxu0
      %v3026 = vpack.c.bf16 %v2002, %v2001
      %v3027 = vld [vmem:[%s18] sm:$0xf]
      %v3028 = vld [vmem:[%s18 + $0x4] sm:$0xf]
      %v3029 = vld [vmem:[%s18 + $0x8] sm:$0xf]
      %v3030 = vld [vmem:[%s18 + $0xc] sm:$0xf]
      %v3031 = vld [vmem:[%s19] sm:$0x1]
      %v3033 = vlaneseq
      %v3034 = vshrl.u32 %v3033, 7
      %v3035 = vsub.s32 0, %v3034
      %v3036 = vrot.slane %v3031, %v3035
      %v3042 = vunpack.c.l.b16 %v3027
      %v3043 = vunpack.c.l.b16 %v3028
      %v3044 = vunpack.c.l.b16 %v3029
      %v3045 = vunpack.c.l.b16 %v3030
      %v3046 = vpack.c.b16 %v3043, %v3042
      %v3047 = vpack.c.b16 %v3045, %v3044
      %v3051 = vsel %vm1985, %v3026, 0
      %3053 = vmatprep.subr.bf16.mxu0 0
      %3054 = vmatpush1.bf16.msra.mxu0 0
      %3055 = vmatprep.subr.bf16.mxu0 0
      %3056 = vmatpush1.bf16.msra.mxu0 0
      %3057 = vmatprep.subr.bf16.mxu0 0
      %3058 = vmatpush1.bf16.msra.mxu0 0
      %3059 = vmatprep.subr.bf16.mxu0 0
      %3060 = vmatpush1.bf16.msra.mxu0 0
      %3061 = vmatprep.subr.bf16.mxu0 0
      %3062 = vmatpush1.bf16.msra.mxu0 0
      %3063 = vmatprep.subr.bf16.mxu0 0
      %3064 = vmatpush1.bf16.msra.mxu0 0
      %3065 = vmatprep.subr.bf16.mxu0 0
      %3066 = vmatpush1.bf16.msra.mxu0 %v3047
      %3067 = vmatprep.subr.bf16.mxu0 0
      %3068 = vmatpush1.bf16.msra.mxu0 %v3046
      %3069 = vmatprep.subr.bf16.mxu0 0
      %3070 = vmatpush2.bf16.msra.mxu0 0
      %3071 = vmatprep.subr.bf16.mxu0 0
      %3072 = vmatpush2.bf16.msra.mxu0 0
      %3073 = vmatprep.subr.bf16.mxu0 0
      %3074 = vmatpush2.bf16.msra.mxu0 0
      %3075 = vmatprep.subr.bf16.mxu0 0
      %3076 = vmatpush2.bf16.msra.mxu0 0
      %3077 = vmatprep.subr.bf16.mxu0 0
      %3078 = vmatpush2.bf16.msra.mxu0 0
      %3079 = vmatprep.subr.bf16.mxu0 0
      %3080 = vmatpush2.bf16.msra.mxu0 0
      %3081 = vmatprep.subr.bf16.mxu0 0
      %3082 = vmatpush2.bf16.msra.mxu0 0
      %3083 = vmatprep.subr.bf16.mxu0 0
      %3084 = vmatpush2.bf16.msra.mxu0 0
      %3085 = vmatprep.mubr.bf16.mxu0 0
      %3086 = vmatmul.mubr.bf16.gmra.mxu0 %v3051
      %v3087 = vpop.f32.mrf.mxu0
      %v3088 = vadd.f32 %v3036, %v3087
      %v3089 = vpop.f32.mrf.mxu0
      %v3090 = vpop.f32.mrf.mxu0
      %v3091 = vadd.f32 %v3036, %v3090
      %v3092 = vpop.f32.mrf.mxu0
      %3093 = vdwg.mxu0
      %v3094 = vld [vmem:[%s876] sm:$0xff]
      %v3095 = vld [vmem:[%s876 + $0x8] sm:$0xff]
      %v3096 = vsub.f32 %v3094, %v3088
      %v3097 = vsub.f32 %v3095, %v3091
      %v3098 = vld [vmem:[%s22] sm:$0xff]
      %v3099 = vld [vmem:[%s22 + $0x8] sm:$0xff]
      %v3100 = vld [vmem:[%s20] sm:$0xff]
      %v3101 = vld [vmem:[%s20 + $0x8] sm:$0xff]
      %v3102 = vld [vmem:[%s20 + $0x10] sm:$0xff]
      %v3103 = vld [vmem:[%s20 + $0x18] sm:$0xff]
      %v3104 = vld [vmem:[%s20 + $0x20] sm:$0xff]
      %v3105 = vld [vmem:[%s20 + $0x28] sm:$0xff]
      %v3106 = vld [vmem:[%s20 + $0x30] sm:$0xff]
      %v3107 = vld [vmem:[%s20 + $0x38] sm:$0xff]
      %v3108 = vld [vmem:[%s20 + $0x40] sm:$0xff]
      %v3109 = vld [vmem:[%s20 + $0x48] sm:$0xff]
      %v3110 = vld [vmem:[%s20 + $0x50] sm:$0xff]
      %v3111 = vld [vmem:[%s20 + $0x58] sm:$0xff]
      %v3112 = vld [vmem:[%s20 + $0x60] sm:$0xff]
      %v3113 = vld [vmem:[%s20 + $0x68] sm:$0xff]
      %v3114 = vld [vmem:[%s20 + $0x70] sm:$0xff]
      %v3115 = vld [vmem:[%s20 + $0x78] sm:$0xff]
      %v3116 = vld [vmem:[%s20 + $0x80] sm:$0xff]
      %v3117 = vld [vmem:[%s20 + $0x88] sm:$0xff]
      %v3118 = vld [vmem:[%s20 + $0x90] sm:$0xff]
      %v3119 = vld [vmem:[%s20 + $0x98] sm:$0xff]
      %v3120 = vld [vmem:[%s20 + $0xa0] sm:$0xff]
      %v3121 = vld [vmem:[%s20 + $0xa8] sm:$0xff]
      %v3122 = vld [vmem:[%s20 + $0xb0] sm:$0xff]
      %v3123 = vld [vmem:[%s20 + $0xb8] sm:$0xff]
      %v3124 = vld [vmem:[%s20 + $0xc0] sm:$0xff]
      %v3125 = vld [vmem:[%s20 + $0xc8] sm:$0xff]
      %v3126 = vld [vmem:[%s20 + $0xd0] sm:$0xff]
      %v3127 = vld [vmem:[%s20 + $0xd8] sm:$0xff]
      %v3128 = vld [vmem:[%s20 + $0xe0] sm:$0xff]
      %v3129 = vld [vmem:[%s20 + $0xe8] sm:$0xff]
      %v3130 = vld [vmem:[%s20 + $0xf0] sm:$0xff]
      %v3131 = vld [vmem:[%s20 + $0xf8] sm:$0xff]
      %v3132 = vmul.f32 %v3100, %v3096
      %v3133 = vmul.f32 %v3101, %v3097
      %v3134 = vmul.f32 %v3102, %v3096
      %v3135 = vmul.f32 %v3103, %v3097
      %v3136 = vmul.f32 %v3104, %v3096
      %v3137 = vmul.f32 %v3105, %v3097
      %v3138 = vmul.f32 %v3106, %v3096
      %v3139 = vmul.f32 %v3107, %v3097
      %v3140 = vmul.f32 %v3108, %v3096
      %v3141 = vmul.f32 %v3109, %v3097
      %v3142 = vmul.f32 %v3110, %v3096
      %v3143 = vmul.f32 %v3111, %v3097
      %v3144 = vmul.f32 %v3112, %v3096
      %v3145 = vmul.f32 %v3113, %v3097
      %v3146 = vmul.f32 %v3114, %v3096
      %v3147 = vmul.f32 %v3115, %v3097
      %v3148 = vmul.f32 %v3116, %v3096
      %v3149 = vmul.f32 %v3117, %v3097
      %v3150 = vmul.f32 %v3118, %v3096
      %v3151 = vmul.f32 %v3119, %v3097
      %v3152 = vmul.f32 %v3120, %v3096
      %v3153 = vmul.f32 %v3121, %v3097
      %v3154 = vmul.f32 %v3122, %v3096
      %v3155 = vmul.f32 %v3123, %v3097
      %v3156 = vmul.f32 %v3124, %v3096
      %v3157 = vmul.f32 %v3125, %v3097
      %v3158 = vmul.f32 %v3126, %v3096
      %v3159 = vmul.f32 %v3127, %v3097
      %v3160 = vmul.f32 %v3128, %v3096
      %v3161 = vmul.f32 %v3129, %v3097
      %v3162 = vmul.f32 %v3130, %v3096
      %v3163 = vmul.f32 %v3131, %v3097
      %vm3164 = vcmask 31744
      %v3165 = vsel %vm3164, %v3132, 0.0
      %v3166 = vsel %vm3164, %v3133, 0.0
      %v3167 = vadd.f32 %v3165, %v3166
      %v3168 = vrot.slane %v3167, 4
      %v3169 = vadd.f32 %v3167, %v3168
      %v3170 = vrot.slane %v3169, 2
      %v3171 = vadd.f32 %v3169, %v3170
      %v3172 = vrot.slane %v3171, 1
      %v3173 = vadd.f32 %v3171, %v3172
      %v3174 = vsel %vm3164, %v3134, 0.0
      %v3175 = vsel %vm3164, %v3135, 0.0
      %v3176 = vadd.f32 %v3174, %v3175
      %v3177 = vrot.slane %v3176, 4
      %v3178 = vadd.f32 %v3176, %v3177
      %v3179 = vrot.slane %v3178, 2
      %v3180 = vadd.f32 %v3178, %v3179
      %v3181 = vrot.slane %v3180, 1
      %v3182 = vadd.f32 %v3180, %v3181
      %v3183 = vsel %vm3164, %v3136, 0.0
      %v3184 = vsel %vm3164, %v3137, 0.0
      %v3185 = vadd.f32 %v3183, %v3184
      %v3186 = vrot.slane %v3185, 4
      %v3187 = vadd.f32 %v3185, %v3186
      %v3188 = vrot.slane %v3187, 2
      %v3189 = vadd.f32 %v3187, %v3188
      %v3190 = vrot.slane %v3189, 1
      %v3191 = vadd.f32 %v3189, %v3190
      %v3192 = vsel %vm3164, %v3138, 0.0
      %v3193 = vsel %vm3164, %v3139, 0.0
      %v3194 = vadd.f32 %v3192, %v3193
      %v3195 = vrot.slane %v3194, 4
      %v3196 = vadd.f32 %v3194, %v3195
      %v3197 = vrot.slane %v3196, 2
      %v3198 = vadd.f32 %v3196, %v3197
      %v3199 = vrot.slane %v3198, 1
      %v3200 = vadd.f32 %v3198, %v3199
      %v3201 = vsel %vm3164, %v3140, 0.0
      %v3202 = vsel %vm3164, %v3141, 0.0
      %v3203 = vadd.f32 %v3201, %v3202
      %v3204 = vrot.slane %v3203, 4
      %v3205 = vadd.f32 %v3203, %v3204
      %v3206 = vrot.slane %v3205, 2
      %v3207 = vadd.f32 %v3205, %v3206
      %v3208 = vrot.slane %v3207, 1
      %v3209 = vadd.f32 %v3207, %v3208
      %v3210 = vsel %vm3164, %v3142, 0.0
      %v3211 = vsel %vm3164, %v3143, 0.0
      %v3212 = vadd.f32 %v3210, %v3211
      %v3213 = vrot.slane %v3212, 4
      %v3214 = vadd.f32 %v3212, %v3213
      %v3215 = vrot.slane %v3214, 2
      %v3216 = vadd.f32 %v3214, %v3215
      %v3217 = vrot.slane %v3216, 1
      %v3218 = vadd.f32 %v3216, %v3217
      %v3219 = vsel %vm3164, %v3144, 0.0
      %v3220 = vsel %vm3164, %v3145, 0.0
      %v3221 = vadd.f32 %v3219, %v3220
      %v3222 = vrot.slane %v3221, 4
      %v3223 = vadd.f32 %v3221, %v3222
      %v3224 = vrot.slane %v3223, 2
      %v3225 = vadd.f32 %v3223, %v3224
      %v3226 = vrot.slane %v3225, 1
      %v3227 = vadd.f32 %v3225, %v3226
      %v3228 = vsel %vm3164, %v3146, 0.0
      %v3229 = vsel %vm3164, %v3147, 0.0
      %v3230 = vadd.f32 %v3228, %v3229
      %v3231 = vrot.slane %v3230, 4
      %v3232 = vadd.f32 %v3230, %v3231
      %v3233 = vrot.slane %v3232, 2
      %v3234 = vadd.f32 %v3232, %v3233
      %v3235 = vrot.slane %v3234, 1
      %v3236 = vadd.f32 %v3234, %v3235
      %v3237 = vsel %vm3164, %v3148, 0.0
      %v3238 = vsel %vm3164, %v3149, 0.0
      %v3239 = vadd.f32 %v3237, %v3238
      %v3240 = vrot.slane %v3239, 4
      %v3241 = vadd.f32 %v3239, %v3240
      %v3242 = vrot.slane %v3241, 2
      %v3243 = vadd.f32 %v3241, %v3242
      %v3244 = vrot.slane %v3243, 1
      %v3245 = vadd.f32 %v3243, %v3244
      %v3246 = vsel %vm3164, %v3150, 0.0
      %v3247 = vsel %vm3164, %v3151, 0.0
      %v3248 = vadd.f32 %v3246, %v3247
      %v3249 = vrot.slane %v3248, 4
      %v3250 = vadd.f32 %v3248, %v3249
      %v3251 = vrot.slane %v3250, 2
      %v3252 = vadd.f32 %v3250, %v3251
      %v3253 = vrot.slane %v3252, 1
      %v3254 = vadd.f32 %v3252, %v3253
      %v3255 = vsel %vm3164, %v3152, 0.0
      %v3256 = vsel %vm3164, %v3153, 0.0
      %v3257 = vadd.f32 %v3255, %v3256
      %v3258 = vrot.slane %v3257, 4
      %v3259 = vadd.f32 %v3257, %v3258
      %v3260 = vrot.slane %v3259, 2
      %v3261 = vadd.f32 %v3259, %v3260
      %v3262 = vrot.slane %v3261, 1
      %v3263 = vadd.f32 %v3261, %v3262
      %v3264 = vsel %vm3164, %v3154, 0.0
      %v3265 = vsel %vm3164, %v3155, 0.0
      %v3266 = vadd.f32 %v3264, %v3265
      %v3267 = vrot.slane %v3266, 4
      %v3268 = vadd.f32 %v3266, %v3267
      %v3269 = vrot.slane %v3268, 2
      %v3270 = vadd.f32 %v3268, %v3269
      %v3271 = vrot.slane %v3270, 1
      %v3272 = vadd.f32 %v3270, %v3271
      %v3273 = vsel %vm3164, %v3156, 0.0
      %v3274 = vsel %vm3164, %v3157, 0.0
      %v3275 = vadd.f32 %v3273, %v3274
      %v3276 = vrot.slane %v3275, 4
      %v3277 = vadd.f32 %v3275, %v3276
      %v3278 = vrot.slane %v3277, 2
      %v3279 = vadd.f32 %v3277, %v3278
      %v3280 = vrot.slane %v3279, 1
      %v3281 = vadd.f32 %v3279, %v3280
      %v3282 = vsel %vm3164, %v3158, 0.0
      %v3283 = vsel %vm3164, %v3159, 0.0
      %v3284 = vadd.f32 %v3282, %v3283
      %v3285 = vrot.slane %v3284, 4
      %v3286 = vadd.f32 %v3284, %v3285
      %v3287 = vrot.slane %v3286, 2
      %v3288 = vadd.f32 %v3286, %v3287
      %v3289 = vrot.slane %v3288, 1
      %v3290 = vadd.f32 %v3288, %v3289
      %v3291 = vsel %vm3164, %v3160, 0.0
      %v3292 = vsel %vm3164, %v3161, 0.0
      %v3293 = vadd.f32 %v3291, %v3292
      %v3294 = vrot.slane %v3293, 4
      %v3295 = vadd.f32 %v3293, %v3294
      %v3296 = vrot.slane %v3295, 2
      %v3297 = vadd.f32 %v3295, %v3296
      %v3298 = vrot.slane %v3297, 1
      %v3299 = vadd.f32 %v3297, %v3298
      %v3300 = vsel %vm3164, %v3162, 0.0
      %v3301 = vsel %vm3164, %v3163, 0.0
      %v3302 = vadd.f32 %v3300, %v3301
      %v3303 = vrot.slane %v3302, 4
      %v3304 = vadd.f32 %v3302, %v3303
      %v3305 = vrot.slane %v3304, 2
      %v3306 = vadd.f32 %v3304, %v3305
      %v3307 = vrot.slane %v3306, 1
      %v3308 = vadd.f32 %v3306, %v3307
      %vm3325 = vcmask 1041409
      %v3326 = vsel %vm3325, %v3182, %v3173
      %vm3327 = vcmask 1042434
      %v3328 = vsel %vm3327, %v3191, %v3326
      %vm3329 = vcmask 1043459
      %v3330 = vsel %vm3329, %v3200, %v3328
      %vm3331 = vcmask 1044484
      %v3332 = vsel %vm3331, %v3209, %v3330
      %vm3333 = vcmask 1045509
      %v3334 = vsel %vm3333, %v3218, %v3332
      %vm3335 = vcmask 1046534
      %v3336 = vsel %vm3335, %v3227, %v3334
      %vm3337 = vcmask 1047559
      %v3338 = vsel %vm3337, %v3236, %v3336
      %v3339 = vsel %vm3325, %v3254, %v3245
      %v3340 = vsel %vm3327, %v3263, %v3339
      %v3341 = vsel %vm3329, %v3272, %v3340
      %v3342 = vsel %vm3331, %v3281, %v3341
      %v3343 = vsel %vm3333, %v3290, %v3342
      %v3344 = vsel %vm3335, %v3299, %v3343
      %v3345 = vsel %vm3337, %v3308, %v3344
      %v3348 = vadd.f32 %v3098, %v3338
      %v3349 = vadd.f32 %v3099, %v3345
      %v3350 = vld [vmem:[%s21] sm:$0xff]
      %v3351 = vld [vmem:[%s21 + $0x8] sm:$0xff]
      %v3352 = vld [vmem:[%s21 + $0x10] sm:$0xff]
      %v3353 = vld [vmem:[%s21 + $0x18] sm:$0xff]
      %v3354 = vld [vmem:[%s21 + $0x20] sm:$0xff]
      %v3355 = vld [vmem:[%s21 + $0x28] sm:$0xff]
      %v3356 = vld [vmem:[%s21 + $0x30] sm:$0xff]
      %v3357 = vld [vmem:[%s21 + $0x38] sm:$0xff]
      %v3358 = vld [vmem:[%s21 + $0x40] sm:$0xff]
      %v3359 = vld [vmem:[%s21 + $0x48] sm:$0xff]
      %v3360 = vld [vmem:[%s21 + $0x50] sm:$0xff]
      %v3361 = vld [vmem:[%s21 + $0x58] sm:$0xff]
      %v3362 = vld [vmem:[%s21 + $0x60] sm:$0xff]
      %v3363 = vld [vmem:[%s21 + $0x68] sm:$0xff]
      %v3364 = vld [vmem:[%s21 + $0x70] sm:$0xff]
      %v3365 = vld [vmem:[%s21 + $0x78] sm:$0xff]
      %v3366 = vld [vmem:[%s21 + $0x80] sm:$0xff]
      %v3367 = vld [vmem:[%s21 + $0x88] sm:$0xff]
      %v3368 = vld [vmem:[%s21 + $0x90] sm:$0xff]
      %v3369 = vld [vmem:[%s21 + $0x98] sm:$0xff]
      %v3370 = vld [vmem:[%s21 + $0xa0] sm:$0xff]
      %v3371 = vld [vmem:[%s21 + $0xa8] sm:$0xff]
      %v3372 = vld [vmem:[%s21 + $0xb0] sm:$0xff]
      %v3373 = vld [vmem:[%s21 + $0xb8] sm:$0xff]
      %v3374 = vld [vmem:[%s21 + $0xc0] sm:$0xff]
      %v3375 = vld [vmem:[%s21 + $0xc8] sm:$0xff]
      %v3376 = vld [vmem:[%s21 + $0xd0] sm:$0xff]
      %v3377 = vld [vmem:[%s21 + $0xd8] sm:$0xff]
      %v3378 = vld [vmem:[%s21 + $0xe0] sm:$0xff]
      %v3379 = vld [vmem:[%s21 + $0xe8] sm:$0xff]
      %v3380 = vld [vmem:[%s21 + $0xf0] sm:$0xff]
      %v3381 = vld [vmem:[%s21 + $0xf8] sm:$0xff]
      %v3382 = vmul.f32 %v3350, %v3020
      %v3383 = vmul.f32 %v3351, %v3023
      %v3384 = vmul.f32 %v3352, %v3020
      %v3385 = vmul.f32 %v3353, %v3023
      %v3386 = vmul.f32 %v3354, %v3020
      %v3387 = vmul.f32 %v3355, %v3023
      %v3388 = vmul.f32 %v3356, %v3020
      %v3389 = vmul.f32 %v3357, %v3023
      %v3390 = vmul.f32 %v3358, %v3020
      %v3391 = vmul.f32 %v3359, %v3023
      %v3392 = vmul.f32 %v3360, %v3020
      %v3393 = vmul.f32 %v3361, %v3023
      %v3394 = vmul.f32 %v3362, %v3020
      %v3395 = vmul.f32 %v3363, %v3023
      %v3396 = vmul.f32 %v3364, %v3020
      %v3397 = vmul.f32 %v3365, %v3023
      %v3398 = vmul.f32 %v3366, %v3020
      %v3399 = vmul.f32 %v3367, %v3023
      %v3400 = vmul.f32 %v3368, %v3020
      %v3401 = vmul.f32 %v3369, %v3023
      %v3402 = vmul.f32 %v3370, %v3020
      %v3403 = vmul.f32 %v3371, %v3023
      %v3404 = vmul.f32 %v3372, %v3020
      %v3405 = vmul.f32 %v3373, %v3023
      %v3406 = vmul.f32 %v3374, %v3020
      %v3407 = vmul.f32 %v3375, %v3023
      %v3408 = vmul.f32 %v3376, %v3020
      %v3409 = vmul.f32 %v3377, %v3023
      %v3410 = vmul.f32 %v3378, %v3020
      %v3411 = vmul.f32 %v3379, %v3023
      %v3412 = vmul.f32 %v3380, %v3020
      %v3413 = vmul.f32 %v3381, %v3023
      %v3414 = vsel %vm3164, %v3382, 0.0
      %v3415 = vsel %vm3164, %v3383, 0.0
      %v3416 = vadd.f32 %v3414, %v3415
      %v3417 = vrot.slane %v3416, 4
      %v3418 = vadd.f32 %v3416, %v3417
      %v3419 = vrot.slane %v3418, 2
      %v3420 = vadd.f32 %v3418, %v3419
      %v3421 = vrot.slane %v3420, 1
      %v3422 = vadd.f32 %v3420, %v3421
      %v3423 = vsel %vm3164, %v3384, 0.0
      %v3424 = vsel %vm3164, %v3385, 0.0
      %v3425 = vadd.f32 %v3423, %v3424
      %v3426 = vrot.slane %v3425, 4
      %v3427 = vadd.f32 %v3425, %v3426
      %v3428 = vrot.slane %v3427, 2
      %v3429 = vadd.f32 %v3427, %v3428
      %v3430 = vrot.slane %v3429, 1
      %v3431 = vadd.f32 %v3429, %v3430
      %v3432 = vsel %vm3164, %v3386, 0.0
      %v3433 = vsel %vm3164, %v3387, 0.0
      %v3434 = vadd.f32 %v3432, %v3433
      %v3435 = vrot.slane %v3434, 4
      %v3436 = vadd.f32 %v3434, %v3435
      %v3437 = vrot.slane %v3436, 2
      %v3438 = vadd.f32 %v3436, %v3437
      %v3439 = vrot.slane %v3438, 1
      %v3440 = vadd.f32 %v3438, %v3439
      %v3441 = vsel %vm3164, %v3388, 0.0
      %v3442 = vsel %vm3164, %v3389, 0.0
      %v3443 = vadd.f32 %v3441, %v3442
      %v3444 = vrot.slane %v3443, 4
      %v3445 = vadd.f32 %v3443, %v3444
      %v3446 = vrot.slane %v3445, 2
      %v3447 = vadd.f32 %v3445, %v3446
      %v3448 = vrot.slane %v3447, 1
      %v3449 = vadd.f32 %v3447, %v3448
      %v3450 = vsel %vm3164, %v3390, 0.0
      %v3451 = vsel %vm3164, %v3391, 0.0
      %v3452 = vadd.f32 %v3450, %v3451
      %v3453 = vrot.slane %v3452, 4
      %v3454 = vadd.f32 %v3452, %v3453
      %v3455 = vrot.slane %v3454, 2
      %v3456 = vadd.f32 %v3454, %v3455
      %v3457 = vrot.slane %v3456, 1
      %v3458 = vadd.f32 %v3456, %v3457
      %v3459 = vsel %vm3164, %v3392, 0.0
      %v3460 = vsel %vm3164, %v3393, 0.0
      %v3461 = vadd.f32 %v3459, %v3460
      %v3462 = vrot.slane %v3461, 4
      %v3463 = vadd.f32 %v3461, %v3462
      %v3464 = vrot.slane %v3463, 2
      %v3465 = vadd.f32 %v3463, %v3464
      %v3466 = vrot.slane %v3465, 1
      %v3467 = vadd.f32 %v3465, %v3466
      %v3468 = vsel %vm3164, %v3394, 0.0
      %v3469 = vsel %vm3164, %v3395, 0.0
      %v3470 = vadd.f32 %v3468, %v3469
      %v3471 = vrot.slane %v3470, 4
      %v3472 = vadd.f32 %v3470, %v3471
      %v3473 = vrot.slane %v3472, 2
      %v3474 = vadd.f32 %v3472, %v3473
      %v3475 = vrot.slane %v3474, 1
      %v3476 = vadd.f32 %v3474, %v3475
      %v3477 = vsel %vm3164, %v3396, 0.0
      %v3478 = vsel %vm3164, %v3397, 0.0
      %v3479 = vadd.f32 %v3477, %v3478
      %v3480 = vrot.slane %v3479, 4
      %v3481 = vadd.f32 %v3479, %v3480
      %v3482 = vrot.slane %v3481, 2
      %v3483 = vadd.f32 %v3481, %v3482
      %v3484 = vrot.slane %v3483, 1
      %v3485 = vadd.f32 %v3483, %v3484
      %v3486 = vsel %vm3164, %v3398, 0.0
      %v3487 = vsel %vm3164, %v3399, 0.0
      %v3488 = vadd.f32 %v3486, %v3487
      %v3489 = vrot.slane %v3488, 4
      %v3490 = vadd.f32 %v3488, %v3489
      %v3491 = vrot.slane %v3490, 2
      %v3492 = vadd.f32 %v3490, %v3491
      %v3493 = vrot.slane %v3492, 1
      %v3494 = vadd.f32 %v3492, %v3493
      %v3495 = vsel %vm3164, %v3400, 0.0
      %v3496 = vsel %vm3164, %v3401, 0.0
      %v3497 = vadd.f32 %v3495, %v3496
      %v3498 = vrot.slane %v3497, 4
      %v3499 = vadd.f32 %v3497, %v3498
      %v3500 = vrot.slane %v3499, 2
      %v3501 = vadd.f32 %v3499, %v3500
      %v3502 = vrot.slane %v3501, 1
      %v3503 = vadd.f32 %v3501, %v3502
      %v3504 = vsel %vm3164, %v3402, 0.0
      %v3505 = vsel %vm3164, %v3403, 0.0
      %v3506 = vadd.f32 %v3504, %v3505
      %v3507 = vrot.slane %v3506, 4
      %v3508 = vadd.f32 %v3506, %v3507
      %v3509 = vrot.slane %v3508, 2
      %v3510 = vadd.f32 %v3508, %v3509
      %v3511 = vrot.slane %v3510, 1
      %v3512 = vadd.f32 %v3510, %v3511
      %v3513 = vsel %vm3164, %v3404, 0.0
      %v3514 = vsel %vm3164, %v3405, 0.0
      %v3515 = vadd.f32 %v3513, %v3514
      %v3516 = vrot.slane %v3515, 4
      %v3517 = vadd.f32 %v3515, %v3516
      %v3518 = vrot.slane %v3517, 2
      %v3519 = vadd.f32 %v3517, %v3518
      %v3520 = vrot.slane %v3519, 1
      %v3521 = vadd.f32 %v3519, %v3520
      %v3522 = vsel %vm3164, %v3406, 0.0
      %v3523 = vsel %vm3164, %v3407, 0.0
      %v3524 = vadd.f32 %v3522, %v3523
      %v3525 = vrot.slane %v3524, 4
      %v3526 = vadd.f32 %v3524, %v3525
      %v3527 = vrot.slane %v3526, 2
      %v3528 = vadd.f32 %v3526, %v3527
      %v3529 = vrot.slane %v3528, 1
      %v3530 = vadd.f32 %v3528, %v3529
      %v3531 = vsel %vm3164, %v3408, 0.0
      %v3532 = vsel %vm3164, %v3409, 0.0
      %v3533 = vadd.f32 %v3531, %v3532
      %v3534 = vrot.slane %v3533, 4
      %v3535 = vadd.f32 %v3533, %v3534
      %v3536 = vrot.slane %v3535, 2
      %v3537 = vadd.f32 %v3535, %v3536
      %v3538 = vrot.slane %v3537, 1
      %v3539 = vadd.f32 %v3537, %v3538
      %v3540 = vsel %vm3164, %v3410, 0.0
      %v3541 = vsel %vm3164, %v3411, 0.0
      %v3542 = vadd.f32 %v3540, %v3541
      %v3543 = vrot.slane %v3542, 4
      %v3544 = vadd.f32 %v3542, %v3543
      %v3545 = vrot.slane %v3544, 2
      %v3546 = vadd.f32 %v3544, %v3545
      %v3547 = vrot.slane %v3546, 1
      %v3548 = vadd.f32 %v3546, %v3547
      %v3549 = vsel %vm3164, %v3412, 0.0
      %v3550 = vsel %vm3164, %v3413, 0.0
      %v3551 = vadd.f32 %v3549, %v3550
      %v3552 = vrot.slane %v3551, 4
      %v3553 = vadd.f32 %v3551, %v3552
      %v3554 = vrot.slane %v3553, 2
      %v3555 = vadd.f32 %v3553, %v3554
      %v3556 = vrot.slane %v3555, 1
      %v3557 = vadd.f32 %v3555, %v3556
      %v3574 = vsel %vm3325, %v3431, %v3422
      %v3575 = vsel %vm3327, %v3440, %v3574
      %v3576 = vsel %vm3329, %v3449, %v3575
      %v3577 = vsel %vm3331, %v3458, %v3576
      %v3578 = vsel %vm3333, %v3467, %v3577
      %v3579 = vsel %vm3335, %v3476, %v3578
      %v3580 = vsel %vm3337, %v3485, %v3579
      %v3581 = vsel %vm3325, %v3503, %v3494
      %v3582 = vsel %vm3327, %v3512, %v3581
      %v3583 = vsel %vm3329, %v3521, %v3582
      %v3584 = vsel %vm3331, %v3530, %v3583
      %v3585 = vsel %vm3333, %v3539, %v3584
      %v3586 = vsel %vm3335, %v3548, %v3585
      %v3587 = vsel %vm3337, %v3557, %v3586
      %v3590 = vadd.f32 %v3348, %v3580
      %v3591 = vadd.f32 %v3349, %v3587
      %3592 = vst.msk [vmem:[%s886] sm:$0xff] %vm3164, %v3590
      %3593 = vst.msk [vmem:[%s886 + $0x8] sm:$0xff] %vm3164, %v3591
      %p3594 = scmp.lt.s32.totalorder %s38, 1
      %s3595 = scalar_select %p3594, %s38, 1
      %s3596 = smul.addr %s3595, 2
      %s3597 = smul.addr %s3596, 8
      %s3598 = scalar_lea.vmem %s23, %s3597
      %p3599 = scmp.lt.s32.totalorder %s38, 1
      %s3600 = scalar_select %p3599, %s38, 1
      %s3601 = smul.addr %s3600, 2
      %s3602 = smul.addr %s3601, 8
      %s3603 = scalar_lea.vmem %s24, %s3602
      %p3604 = scmp.lt.s32.totalorder %s38, 1
      %s3605 = scalar_select %p3604, %s38, 1
      %s3606 = scalar_lea.vmem %s25, %s3605
      %p3607 = scmp.lt.s32.totalorder %s38, 1
      %s3608 = scalar_select %p3607, %s38, 1
      %s3609 = smul.addr %s3608, 8
      %s3610 = scalar_lea.vmem %s26, %s3609
      // Predicated region
      $region113: #{_lambda_.5} parent=111 // pred_check
        %p3611 = pneg %p564
      $region114: #{_lambda_.5} parent=111 // pred_check_branch
        %3613 = sbr.rel (%p3611) target = $region116
      $region115: #{_lambda_.5} parent=111 // pred_region
        _
      $region116: #{_lambda_.5} parent=111 // pred_fallthru
        _
      // Predicated region
      $region117: #{_lambda_.5} parent=111 // pred_check
        %p3614 = pneg %p590
      $region118: #{_lambda_.5} parent=111 // pred_check_branch
        %3616 = sbr.rel (%p3614) target = $region120
      $region119: #{_lambda_.5} parent=111 // pred_region
        _
      $region120: #{_lambda_.5} parent=111 // pred_fallthru
        _
      // Predicated region
      $region121: #{_lambda_.5} parent=111 // pred_check
        %p3617 = pneg %p616
      $region122: #{_lambda_.5} parent=111 // pred_check_branch
        %3619 = sbr.rel (%p3617) target = $region124
      $region123: #{_lambda_.5} parent=111 // pred_region
        _
      $region124: #{_lambda_.5} parent=111 // pred_fallthru
        _
      // Predicated region
      $region125: #{_lambda_.5} parent=111 // pred_check
        %p3620 = pneg %p642
      $region126: #{_lambda_.5} parent=111 // pred_check_branch
        %3622 = sbr.rel (%p3620) target = $region128
      $region127: #{_lambda_.5} parent=111 // pred_region
        _
      $region128: #{_lambda_.5} parent=111 // pred_fallthru
        _
    $region112: #{_lambda_.5} parent=5 // pred_fallthru
      _
    %p3623 = scmp.le.s32.totalorder 2, %s33
    // Predicated region
    $region129: #{_lambda_.5} parent=5 // pred_check
      %p3624 = pneg %p3623
    $region130: #{_lambda_.5} parent=5 // pred_check_branch
      %3626 = sbr.rel (%p3624) target = $region132
    $region131: #{_lambda_.5} parent=5 // pred_region
      %s3627 = ssub.s32 %s33, 2
      // Predicated region
      $region133: #{_lambda_.5} parent=131 // pred_check
        %p3628 = pneg %p570
      $region134: #{_lambda_.5} parent=131 // pred_check_branch
        %3630 = sbr.rel (%p3628) target = $region136
      $region135: #{_lambda_.5} parent=131 // pred_region
        %p3631 = scmp.lt.s32.totalorder %s39, 1
        %s3632 = scalar_select %p3631, %s39, 1
        %s3633 = smul.addr %s3632, 2
        %s3634 = smul.addr %s3633, 8
        %s3635 = scalar_lea.vmem %s23, %s3634
      $region136: #{_lambda_.5} parent=131 // pred_fallthru
        _
      // Predicated region
      $region137: #{_lambda_.5} parent=131 // pred_check
        %p3636 = pneg %p596
      $region138: #{_lambda_.5} parent=131 // pred_check_branch
        %3638 = sbr.rel (%p3636) target = $region140
      $region139: #{_lambda_.5} parent=131 // pred_region
        %p3639 = scmp.lt.s32.totalorder %s39, 1
        %s3640 = scalar_select %p3639, %s39, 1
        %s3641 = smul.addr %s3640, 2
        %s3642 = smul.addr %s3641, 8
        %s3643 = scalar_lea.vmem %s24, %s3642
      $region140: #{_lambda_.5} parent=131 // pred_fallthru
        _
      // Predicated region
      $region141: #{_lambda_.5} parent=131 // pred_check
        %p3644 = pneg %p622
      $region142: #{_lambda_.5} parent=131 // pred_check_branch
        %3646 = sbr.rel (%p3644) target = $region144
      $region143: #{_lambda_.5} parent=131 // pred_region
        %p3647 = scmp.lt.s32.totalorder %s39, 1
        %s3648 = scalar_select %p3647, %s39, 1
        %s3649 = scalar_lea.vmem %s25, %s3648
      $region144: #{_lambda_.5} parent=131 // pred_fallthru
        _
      // Predicated region
      $region145: #{_lambda_.5} parent=131 // pred_check
        %p3650 = pneg %p648
      $region146: #{_lambda_.5} parent=131 // pred_check_branch
        %3652 = sbr.rel (%p3650) target = $region148
      $region147: #{_lambda_.5} parent=131 // pred_region
        %p3653 = scmp.lt.s32.totalorder %s39, 1
        %s3654 = scalar_select %p3653, %s39, 1
        %s3655 = smul.addr %s3654, 8
        %s3656 = scalar_lea.vmem %s26, %s3655
      $region148: #{_lambda_.5} parent=131 // pred_fallthru
        _
    $region132: #{_lambda_.5} parent=5 // pred_fallthru
      _
  $region6: #{_lambda_.5} parent=0 // loop_footer
    %s37 = sadd.s32 1, %s33
  $region7: #{_lambda_.5} parent=0 // loop_footer_branch
    %32 = sbr.rel target = $region3
  $region8: #{_lambda_.5} parent=0 // loop_exit
    _

// kernel: _lambda_.7
$region0: #{_lambda_.7}
  #allocation0 [shape = 'u32[]', space=smem, size = 0x4, offset = 0x4, fixed_abs, tag = 'smem constant byte address 0x4 - core index']
  #allocation1 [shape = 'u32[144,128]{1,0:T(1,128)}', space=vmem, size = 0x12000, scoped, tag = 'internal scratch']
  %s0 = inlined_call_operand.vmem [shape: f32[16,32], index: 0, kind: input, shape index: {}]
  %s1 = inlined_call_operand.vmem [shape: bf16[32,4], index: 1, kind: input, shape index: {}]
  %s2 = inlined_call_operand.vmem [shape: f32[1,4], index: 2, kind: input, shape index: {}]
  %s3 = inlined_call_operand.vmem [shape: f32[16,4], index: 3, kind: output, shape index: {}]
  %s4 = sld [smem:[#allocation0]]
  $region22: #{_lambda_.7} parent=0
    _
  %s6 = ssub.s32 1, %s4
  %s7 = scalar_select 0, %s6, %s4
  // Predicated region
  $region2: #{_lambda_.7} parent=0 // pred_check
    _
  $region3: #{_lambda_.7} parent=0 // pred_check_branch
    %9 = sbr.rel (0) target = $region5
  $region4: #{_lambda_.7} parent=0 // pred_region
    _
  $region5: #{_lambda_.7} parent=0 // pred_fallthru
    _
  // Predicated region
  $region6: #{_lambda_.7} parent=0 // pred_check
    _
  $region7: #{_lambda_.7} parent=0 // pred_check_branch
    %11 = sbr.rel (0) target = $region9
  $region8: #{_lambda_.7} parent=0 // pred_region
    _
  $region9: #{_lambda_.7} parent=0 // pred_fallthru
    _
  // Predicated region
  $region10: #{_lambda_.7} parent=0 // pred_check
    _
  $region11: #{_lambda_.7} parent=0 // pred_check_branch
    %13 = sbr.rel (0) target = $region13
  $region12: #{_lambda_.7} parent=0 // pred_region
    _
  $region13: #{_lambda_.7} parent=0 // pred_fallthru
    _
  %v15 = vld [vmem:[%s0] sm:$0xff]
  %v16 = vld [vmem:[%s0 + $0x8] sm:$0xff]
  %v17 = vpack.c.bf16 %v16, %v15
  %v18 = vld [vmem:[%s1] sm:$0xf]
  %v19 = vld [vmem:[%s1 + $0x4] sm:$0xf]
  %v20 = vld [vmem:[%s1 + $0x8] sm:$0xf]
  %v21 = vld [vmem:[%s1 + $0xc] sm:$0xf]
  %v22 = vld [vmem:[%s2] sm:$0x1]
  %v24 = vlaneseq
  %v25 = vshrl.u32 %v24, 7
  %v26 = vsub.s32 0, %v25
  %v27 = vrot.slane %v22, %v26
  %v33 = vunpack.c.l.b16 %v18
  %v34 = vunpack.c.l.b16 %v19
  %v35 = vunpack.c.l.b16 %v20
  %v36 = vunpack.c.l.b16 %v21
  %v37 = vpack.c.b16 %v34, %v33
  %v38 = vpack.c.b16 %v36, %v35
  %vm41 = vcmask 261120
  %v43 = vsel %vm41, %v17, 0
  %45 = vmatprep.subr.bf16.mxu0 0
  %46 = vmatpush1.bf16.msra.mxu0 0
  %47 = vmatprep.subr.bf16.mxu0 0
  %48 = vmatpush1.bf16.msra.mxu0 0
  %49 = vmatprep.subr.bf16.mxu0 0
  %50 = vmatpush1.bf16.msra.mxu0 0
  %51 = vmatprep.subr.bf16.mxu0 0
  %52 = vmatpush1.bf16.msra.mxu0 0
  %53 = vmatprep.subr.bf16.mxu0 0
  %54 = vmatpush1.bf16.msra.mxu0 0
  %55 = vmatprep.subr.bf16.mxu0 0
  %56 = vmatpush1.bf16.msra.mxu0 0
  %57 = vmatprep.subr.bf16.mxu0 0
  %58 = vmatpush1.bf16.msra.mxu0 %v38
  %59 = vmatprep.subr.bf16.mxu0 0
  %60 = vmatpush1.bf16.msra.mxu0 %v37
  %61 = vmatprep.subr.bf16.mxu0 0
  %62 = vmatpush2.bf16.msra.mxu0 0
  %63 = vmatprep.subr.bf16.mxu0 0
  %64 = vmatpush2.bf16.msra.mxu0 0
  %65 = vmatprep.subr.bf16.mxu0 0
  %66 = vmatpush2.bf16.msra.mxu0 0
  %67 = vmatprep.subr.bf16.mxu0 0
  %68 = vmatpush2.bf16.msra.mxu0 0
  %69 = vmatprep.subr.bf16.mxu0 0
  %70 = vmatpush2.bf16.msra.mxu0 0
  %71 = vmatprep.subr.bf16.mxu0 0
  %72 = vmatpush2.bf16.msra.mxu0 0
  %73 = vmatprep.subr.bf16.mxu0 0
  %74 = vmatpush2.bf16.msra.mxu0 0
  %75 = vmatprep.subr.bf16.mxu0 0
  %76 = vmatpush2.bf16.msra.mxu0 0
  %77 = vmatprep.mubr.bf16.mxu0 0
  %78 = vmatmul.mubr.bf16.gmra.mxu0 %v43
  %v79 = vpop.f32.mrf.mxu0
  %v80 = vadd.f32 %v27, %v79
  %v81 = vpop.f32.mrf.mxu0
  %v82 = vpop.f32.mrf.mxu0
  %v83 = vadd.f32 %v27, %v82
  %v84 = vpop.f32.mrf.mxu0
  %85 = vdwg.mxu0
  %vm86 = vcmask 31744
  %87 = vst.msk [vmem:[%s3] sm:$0xff] %vm86, %v80
  %88 = vst.msk [vmem:[%s3 + $0x8] sm:$0xff] %vm86, %v83
  // Predicated region
  $region14: #{_lambda_.7} parent=0 // pred_check
    _
  $region15: #{_lambda_.7} parent=0 // pred_check_branch
    %90 = sbr.rel (0) target = $region17
  $region16: #{_lambda_.7} parent=0 // pred_region
    _
  $region17: #{_lambda_.7} parent=0 // pred_fallthru
    _
  // Predicated region
  $region18: #{_lambda_.7} parent=0 // pred_check
    _
  $region19: #{_lambda_.7} parent=0 // pred_check_branch
    %92 = sbr.rel (0) target = $region21
  $region20: #{_lambda_.7} parent=0 // pred_region
    _
  $region21: #{_lambda_.7} parent=0 // pred_fallthru
    _

// kernel: _lambda_.6
$region0: #{_lambda_.6}
  #allocation0 [shape = 'u32[]', space=smem, size = 0x4, offset = 0x4, fixed_abs, tag = 'smem constant byte address 0x4 - core index']
  #allocation1 [shape = 'u32[144,128]{1,0:T(1,128)}', space=vmem, size = 0x12000, scoped, tag = 'internal scratch']
  %s0 = inlined_call_operand.vmem [shape: f32[2,16,32], index: 0, kind: input, shape index: {}]
  %s1 = inlined_call_operand.vmem [shape: f32[2,3,32], index: 1, kind: input, shape index: {}]
  %s2 = inlined_call_operand.vmem [shape: f32[2,3,32], index: 2, kind: input, shape index: {}]
  %s3 = inlined_call_operand.vmem [shape: f32[2,3,32], index: 3, kind: input, shape index: {}]
  %s4 = inlined_call_operand.vmem [shape: f32[2,16,4], index: 4, kind: input, shape index: {}]
  %s5 = inlined_call_operand.vmem [shape: bf16[32,32], index: 5, kind: input, shape index: {}]
  %s6 = inlined_call_operand.vmem [shape: f32[1,32], index: 6, kind: input, shape index: {}]
  %s7 = inlined_call_operand.vmem [shape: bf16[4,8,32], index: 7, kind: input, shape index: {}]
  %s8 = inlined_call_operand.vmem [shape: f32[4,32,16], index: 8, kind: input, shape index: {}]
  %s9 = inlined_call_operand.vmem [shape: f32[32,32], index: 9, kind: input, shape index: {}]
  %s10 = inlined_call_operand.vmem [shape: f32[1,32], index: 10, kind: input, shape index: {}]
  %s11 = inlined_call_operand.vmem [shape: f32[1,32], index: 11, kind: input, shape index: {}]
  %s12 = inlined_call_operand.vmem [shape: bf16[32,64], index: 12, kind: input, shape index: {}]
  %s13 = inlined_call_operand.vmem [shape: bf16[64,32], index: 13, kind: input, shape index: {}]
  %s14 = inlined_call_operand.vmem [shape: f32[1,32], index: 14, kind: input, shape index: {}]
  %s15 = inlined_call_operand.vmem [shape: f32[1,32], index: 15, kind: input, shape index: {}]
  %s16 = inlined_call_operand.vmem [shape: bf16[32,4], index: 16, kind: input, shape index: {}]
  %s17 = inlined_call_operand.vmem [shape: f32[1,4], index: 17, kind: input, shape index: {}]
  %s18 = inlined_call_operand.vmem [shape: bf16[32,4], index: 18, kind: input, shape index: {}]
  %s19 = inlined_call_operand.vmem [shape: f32[1,4], index: 19, kind: input, shape index: {}]
  %s20 = inlined_call_operand.vmem [shape: f32[16,16,4], index: 20, kind: input, shape index: {}]
  %s21 = inlined_call_operand.vmem [shape: f32[16,16,4], index: 21, kind: input, shape index: {}]
  %s22 = inlined_call_operand.vmem [shape: f32[16,4], index: 22, kind: input, shape index: {}]
  %s23 = inlined_call_operand.hbm [shape: f32[2,16,32], index: 23, kind: output, shape index: {0}]
  %s24 = inlined_call_operand.vmem [shape: f32[2,16,4], index: 24, kind: output, shape index: {1}]
  %s25 = inlined_call_operand.vmem [shape: f32[2,1,32], index: 25, kind: output, shape index: {2}]
  %s26 = inlined_call_operand.vmem [shape: f32[2,8,32], index: 26, kind: output, shape index: {3}]
  %27 = xla_tuple %s23, %s24, %s25, %s26
  %s28 = sld [smem:[#allocation0]]
  $region149: #{_lambda_.6} parent=0
    _
  %s30 = ssub.s32 1, %s28
  %s31 = scalar_select 0, %s30, %s28
  $region1: #{_lambda_.6} parent=0
    #allocation2 [shape = 'u8[16384]{0}', space=vmem, size = 0x4000, scoped, tag = 'output window, operand 0']
    #allocation3 [shape = 's32[2]{0}', space=sflag, size = 0x8, scoped, tag = 'scoped memory for _lambda_.6']
    %32 = vsyncpa [#allocation3], 0
    %s33 = scalar_lea.sflag [#allocation3], 1
    %34 = vsyncpa %s33, 0
    loop: start=0, step=1, limit=4
    $region2: #{_lambda_.6} parent=1 // loop_pre_header
      _
    $region3: #{_lambda_.6} parent=1 // loop_header
      %s36 = sphi 0, %s40
      %p37 = scmp.ge.s32.totalorder %s36, 4
      %s46 = sphi 0, %s48
      %s49 = sphi 0, %s46
      %s50 = sphi 0, %s49
      %s66 = sphi 0, %s50
      %s72 = sphi 0, %s74
      %s75 = sphi 0, %s72
      %s76 = sphi 0, %s75
      %s92 = sphi 0, %s76
      %s98 = sphi 0, %s100
      %s101 = sphi 0, %s98
      %s102 = sphi 0, %s101
      %s118 = sphi 0, %s102
      %s124 = sphi 0, %s126
      %s127 = sphi 0, %s124
      %s128 = sphi 0, %s127
      %s144 = sphi 0, %s128
      %s150 = sphi 0, %s152
      %s153 = sphi 0, %s150
      %s154 = sphi 0, %s153
      %s170 = sphi 0, %s154
      %s174 = sphi 0, %s174
      %s176 = sphi 0, %s174
      %s177 = sphi 0, %s176
      %s191 = sphi 0, %s177
      %s195 = sphi 0, %s195
      %s197 = sphi 0, %s195
      %s198 = sphi 0, %s197
      %s212 = sphi 0, %s198
      %s216 = sphi 0, %s216
      %s218 = sphi 0, %s216
      %s219 = sphi 0, %s218
      %s233 = sphi 0, %s219
      %s237 = sphi 0, %s237
      %s239 = sphi 0, %s237
      %s240 = sphi 0, %s239
      %s254 = sphi 0, %s240
      %s258 = sphi 0, %s258
      %s260 = sphi 0, %s258
      %s261 = sphi 0, %s260
      %s275 = sphi 0, %s261
      %s279 = sphi 0, %s279
      %s281 = sphi 0, %s279
      %s282 = sphi 0, %s281
      %s296 = sphi 0, %s282
      %s300 = sphi 0, %s300
      %s302 = sphi 0, %s300
      %s303 = sphi 0, %s302
      %s317 = sphi 0, %s303
      %s321 = sphi 0, %s321
      %s323 = sphi 0, %s321
      %s324 = sphi 0, %s323
      %s338 = sphi 0, %s324
      %s342 = sphi 0, %s342
      %s344 = sphi 0, %s342
      %s345 = sphi 0, %s344
      %s359 = sphi 0, %s345
      %s363 = sphi 0, %s363
      %s365 = sphi 0, %s363
      %s366 = sphi 0, %s365
      %s380 = sphi 0, %s366
      %s384 = sphi 0, %s384
      %s386 = sphi 0, %s384
      %s387 = sphi 0, %s386
      %s401 = sphi 0, %s387
      %s405 = sphi 0, %s405
      %s407 = sphi 0, %s405
      %s408 = sphi 0, %s407
      %s422 = sphi 0, %s408
      %s426 = sphi 0, %s426
      %s428 = sphi 0, %s426
      %s429 = sphi 0, %s428
      %s443 = sphi 0, %s429
      %s447 = sphi 0, %s447
      %s449 = sphi 0, %s447
      %s450 = sphi 0, %s449
      %s464 = sphi 0, %s450
      %s468 = sphi 0, %s468
      %s470 = sphi 0, %s468
      %s471 = sphi 0, %s470
      %s485 = sphi 0, %s471
      %s489 = sphi 0, %s489
      %s491 = sphi 0, %s489
      %s492 = sphi 0, %s491
      %s506 = sphi 0, %s492
      %s510 = sphi 0, %s510
      %s512 = sphi 0, %s510
      %s513 = sphi 0, %s512
      %s527 = sphi 0, %s513
      %s531 = sphi 0, %s531
      %s533 = sphi 0, %s531
      %s534 = sphi 0, %s533
      %s548 = sphi 0, %s534
      %s554 = sphi 0, %s556
      %s557 = sphi 0, %s554
      %s558 = sphi 0, %s557
      %s574 = sphi 0, %s558
      %s580 = sphi 0, %s582
      %s583 = sphi 0, %s580
      %s584 = sphi 0, %s583
      %s600 = sphi 0, %s584
      %s606 = sphi 0, %s608
      %s609 = sphi 0, %s606
      %s610 = sphi 0, %s609
      %s626 = sphi 0, %s610
      %s632 = sphi 0, %s634
      %s635 = sphi 0, %s632
      %s636 = sphi 0, %s635
      %s652 = sphi 0, %s636
    $region4: #{_lambda_.6} parent=1 // loop_header_branch
      %39 = sbr.rel (%p37) target = $region8
    $region5: #{_lambda_.6} parent=1 // loop_body
      %s41 = ssub.s32 %s36, 1
      %s42 = ssub.s32 %s36, 2
      %s43 = sadd.s32 %s36, 1
      %s44 = ssub.s32 %s36, %s43
      %p45 = scmp.eq.s32.totalorder %s44, 0
      %s47 = sadd.s32 %s46, 1
      %s48 = scalar_select %p45, %s46, %s47
      %p51 = pneg %p45
      %p52 = scmp.eq.s32.totalorder %s36, 1
      %p53 = por %p51, %p52
      %p54 = scmp.ne.s32.totalorder %s46, %s49
      %p55 = scmp.eq.s32.totalorder %s36, 0
      %p56 = por %p54, %p55
      %p57 = scmp.ne.s32.totalorder %s46, %s49
      %p58 = scmp.eq.s32.totalorder %s41, 1
      %p59 = por %p57, %p58
      %p60 = scmp.ne.s32.totalorder %s49, %s50
      %p61 = scmp.eq.s32.totalorder %s41, 0
      %p62 = por %p60, %p61
      %p63 = scmp.ne.s32.totalorder %s49, %s50
      %p64 = scmp.eq.s32.totalorder %s42, 1
      %p65 = por %p63, %p64
      %p67 = scmp.ne.s32.totalorder %s50, %s66
      %p68 = scmp.eq.s32.totalorder %s42, 0
      %p69 = por %p67, %p68
      %s70 = ssub.s32 %s36, %s43
      %p71 = scmp.eq.s32.totalorder %s70, 0
      %s73 = sadd.s32 %s72, 1
      %s74 = scalar_select %p71, %s72, %s73
      %p77 = pneg %p71
      %p78 = scmp.eq.s32.totalorder %s36, 1
      %p79 = por %p77, %p78
      %p80 = scmp.ne.s32.totalorder %s72, %s75
      %p81 = scmp.eq.s32.totalorder %s36, 0
      %p82 = por %p80, %p81
      %p83 = scmp.ne.s32.totalorder %s72, %s75
      %p84 = scmp.eq.s32.totalorder %s41, 1
      %p85 = por %p83, %p84
      %p86 = scmp.ne.s32.totalorder %s75, %s76
      %p87 = scmp.eq.s32.totalorder %s41, 0
      %p88 = por %p86, %p87
      %p89 = scmp.ne.s32.totalorder %s75, %s76
      %p90 = scmp.eq.s32.totalorder %s42, 1
      %p91 = por %p89, %p90
      %p93 = scmp.ne.s32.totalorder %s76, %s92
      %p94 = scmp.eq.s32.totalorder %s42, 0
      %p95 = por %p93, %p94
      %s96 = ssub.s32 %s36, %s43
      %p97 = scmp.eq.s32.totalorder %s96, 0
      %s99 = sadd.s32 %s98, 1
      %s100 = scalar_select %p97, %s98, %s99
      %p103 = pneg %p97
      %p104 = scmp.eq.s32.totalorder %s36, 1
      %p105 = por %p103, %p104
      %p106 = scmp.ne.s32.totalorder %s98, %s101
      %p107 = scmp.eq.s32.totalorder %s36, 0
      %p108 = por %p106, %p107
      %p109 = scmp.ne.s32.totalorder %s98, %s101
      %p110 = scmp.eq.s32.totalorder %s41, 1
      %p111 = por %p109, %p110
      %p112 = scmp.ne.s32.totalorder %s101, %s102
      %p113 = scmp.eq.s32.totalorder %s41, 0
      %p114 = por %p112, %p113
      %p115 = scmp.ne.s32.totalorder %s101, %s102
      %p116 = scmp.eq.s32.totalorder %s42, 1
      %p117 = por %p115, %p116
      %p119 = scmp.ne.s32.totalorder %s102, %s118
      %p120 = scmp.eq.s32.totalorder %s42, 0
      %p121 = por %p119, %p120
      %s122 = ssub.s32 %s36, %s43
      %p123 = scmp.eq.s32.totalorder %s122, 0
      %s125 = sadd.s32 %s124, 1
      %s126 = scalar_select %p123, %s124, %s125
      %p129 = pneg %p123
      %p130 = scmp.eq.s32.totalorder %s36, 1
      %p131 = por %p129, %p130
      %p132 = scmp.ne.s32.totalorder %s124, %s127
      %p133 = scmp.eq.s32.totalorder %s36, 0
      %p134 = por %p132, %p133
      %p135 = scmp.ne.s32.totalorder %s124, %s127
      %p136 = scmp.eq.s32.totalorder %s41, 1
      %p137 = por %p135, %p136
      %p138 = scmp.ne.s32.totalorder %s127, %s128
      %p139 = scmp.eq.s32.totalorder %s41, 0
      %p140 = por %p138, %p139
      %p141 = scmp.ne.s32.totalorder %s127, %s128
      %p142 = scmp.eq.s32.totalorder %s42, 1
      %p143 = por %p141, %p142
      %p145 = scmp.ne.s32.totalorder %s128, %s144
      %p146 = scmp.eq.s32.totalorder %s42, 0
      %p147 = por %p145, %p146
      %s148 = ssub.s32 %s36, %s43
      %p149 = scmp.eq.s32.totalorder %s148, 0
      %s151 = sadd.s32 %s150, 1
      %s152 = scalar_select %p149, %s150, %s151
      %p155 = pneg %p149
      %p156 = scmp.eq.s32.totalorder %s36, 1
      %p157 = por %p155, %p156
      %p158 = scmp.ne.s32.totalorder %s150, %s153
      %p159 = scmp.eq.s32.totalorder %s36, 0
      %p160 = por %p158, %p159
      %p161 = scmp.ne.s32.totalorder %s150, %s153
      %p162 = scmp.eq.s32.totalorder %s41, 1
      %p163 = por %p161, %p162
      %p164 = scmp.ne.s32.totalorder %s153, %s154
      %p165 = scmp.eq.s32.totalorder %s41, 0
      %p166 = por %p164, %p165
      %p167 = scmp.ne.s32.totalorder %s153, %s154
      %p168 = scmp.eq.s32.totalorder %s42, 1
      %p169 = por %p167, %p168
      %p171 = scmp.ne.s32.totalorder %s154, %s170
      %p172 = scmp.eq.s32.totalorder %s42, 0
      %p173 = por %p171, %p172
      %s175 = sadd.s32 %s174, 1
      %p178 = scmp.eq.s32.totalorder %s36, 1
      %p179 = scmp.ne.s32.totalorder %s174, %s176
      %p180 = scmp.eq.s32.totalorder %s36, 0
      %p181 = por %p179, %p180
      %p182 = scmp.ne.s32.totalorder %s174, %s176
      %p183 = scmp.eq.s32.totalorder %s41, 1
      %p184 = por %p182, %p183
      %p185 = scmp.ne.s32.totalorder %s176, %s177
      %p186 = scmp.eq.s32.totalorder %s41, 0
      %p187 = por %p185, %p186
      %p188 = scmp.ne.s32.totalorder %s176, %s177
      %p189 = scmp.eq.s32.totalorder %s42, 1
      %p190 = por %p188, %p189
      %p192 = scmp.ne.s32.totalorder %s177, %s191
      %p193 = scmp.eq.s32.totalorder %s42, 0
      %p194 = por %p192, %p193
      %s196 = sadd.s32 %s195, 1
      %p199 = scmp.eq.s32.totalorder %s36, 1
      %p200 = scmp.ne.s32.totalorder %s195, %s197
      %p201 = scmp.eq.s32.totalorder %s36, 0
      %p202 = por %p200, %p201
      %p203 = scmp.ne.s32.totalorder %s195, %s197
      %p204 = scmp.eq.s32.totalorder %s41, 1
      %p205 = por %p203, %p204
      %p206 = scmp.ne.s32.totalorder %s197, %s198
      %p207 = scmp.eq.s32.totalorder %s41, 0
      %p208 = por %p206, %p207
      %p209 = scmp.ne.s32.totalorder %s197, %s198
      %p210 = scmp.eq.s32.totalorder %s42, 1
      %p211 = por %p209, %p210
      %p213 = scmp.ne.s32.totalorder %s198, %s212
      %p214 = scmp.eq.s32.totalorder %s42, 0
      %p215 = por %p213, %p214
      %s217 = sadd.s32 %s216, 1
      %p220 = scmp.eq.s32.totalorder %s36, 1
      %p221 = scmp.ne.s32.totalorder %s216, %s218
      %p222 = scmp.eq.s32.totalorder %s36, 0
      %p223 = por %p221, %p222
      %p224 = scmp.ne.s32.totalorder %s216, %s218
      %p225 = scmp.eq.s32.totalorder %s41, 1
      %p226 = por %p224, %p225
      %p227 = scmp.ne.s32.totalorder %s218, %s219
      %p228 = scmp.eq.s32.totalorder %s41, 0
      %p229 = por %p227, %p228
      %p230 = scmp.ne.s32.totalorder %s218, %s219
      %p231 = scmp.eq.s32.totalorder %s42, 1
      %p232 = por %p230, %p231
      %p234 = scmp.ne.s32.totalorder %s219, %s233
      %p235 = scmp.eq.s32.totalorder %s42, 0
      %p236 = por %p234, %p235
      %s238 = sadd.s32 %s237, 1
      %p241 = scmp.eq.s32.totalorder %s36, 1
      %p242 = scmp.ne.s32.totalorder %s237, %s239
      %p243 = scmp.eq.s32.totalorder %s36, 0
      %p244 = por %p242, %p243
      %p245 = scmp.ne.s32.totalorder %s237, %s239
      %p246 = scmp.eq.s32.totalorder %s41, 1
      %p247 = por %p245, %p246
      %p248 = scmp.ne.s32.totalorder %s239, %s240
      %p249 = scmp.eq.s32.totalorder %s41, 0
      %p250 = por %p248, %p249
      %p251 = scmp.ne.s32.totalorder %s239, %s240
      %p252 = scmp.eq.s32.totalorder %s42, 1
      %p253 = por %p251, %p252
      %p255 = scmp.ne.s32.totalorder %s240, %s254
      %p256 = scmp.eq.s32.totalorder %s42, 0
      %p257 = por %p255, %p256
      %s259 = sadd.s32 %s258, 1
      %p262 = scmp.eq.s32.totalorder %s36, 1
      %p263 = scmp.ne.s32.totalorder %s258, %s260
      %p264 = scmp.eq.s32.totalorder %s36, 0
      %p265 = por %p263, %p264
      %p266 = scmp.ne.s32.totalorder %s258, %s260
      %p267 = scmp.eq.s32.totalorder %s41, 1
      %p268 = por %p266, %p267
      %p269 = scmp.ne.s32.totalorder %s260, %s261
      %p270 = scmp.eq.s32.totalorder %s41, 0
      %p271 = por %p269, %p270
      %p272 = scmp.ne.s32.totalorder %s260, %s261
      %p273 = scmp.eq.s32.totalorder %s42, 1
      %p274 = por %p272, %p273
      %p276 = scmp.ne.s32.totalorder %s261, %s275
      %p277 = scmp.eq.s32.totalorder %s42, 0
      %p278 = por %p276, %p277
      %s280 = sadd.s32 %s279, 1
      %p283 = scmp.eq.s32.totalorder %s36, 1
      %p284 = scmp.ne.s32.totalorder %s279, %s281
      %p285 = scmp.eq.s32.totalorder %s36, 0
      %p286 = por %p284, %p285
      %p287 = scmp.ne.s32.totalorder %s279, %s281
      %p288 = scmp.eq.s32.totalorder %s41, 1
      %p289 = por %p287, %p288
      %p290 = scmp.ne.s32.totalorder %s281, %s282
      %p291 = scmp.eq.s32.totalorder %s41, 0
      %p292 = por %p290, %p291
      %p293 = scmp.ne.s32.totalorder %s281, %s282
      %p294 = scmp.eq.s32.totalorder %s42, 1
      %p295 = por %p293, %p294
      %p297 = scmp.ne.s32.totalorder %s282, %s296
      %p298 = scmp.eq.s32.totalorder %s42, 0
      %p299 = por %p297, %p298
      %s301 = sadd.s32 %s300, 1
      %p304 = scmp.eq.s32.totalorder %s36, 1
      %p305 = scmp.ne.s32.totalorder %s300, %s302
      %p306 = scmp.eq.s32.totalorder %s36, 0
      %p307 = por %p305, %p306
      %p308 = scmp.ne.s32.totalorder %s300, %s302
      %p309 = scmp.eq.s32.totalorder %s41, 1
      %p310 = por %p308, %p309
      %p311 = scmp.ne.s32.totalorder %s302, %s303
      %p312 = scmp.eq.s32.totalorder %s41, 0
      %p313 = por %p311, %p312
      %p314 = scmp.ne.s32.totalorder %s302, %s303
      %p315 = scmp.eq.s32.totalorder %s42, 1
      %p316 = por %p314, %p315
      %p318 = scmp.ne.s32.totalorder %s303, %s317
      %p319 = scmp.eq.s32.totalorder %s42, 0
      %p320 = por %p318, %p319
      %s322 = sadd.s32 %s321, 1
      %p325 = scmp.eq.s32.totalorder %s36, 1
      %p326 = scmp.ne.s32.totalorder %s321, %s323
      %p327 = scmp.eq.s32.totalorder %s36, 0
      %p328 = por %p326, %p327
      %p329 = scmp.ne.s32.totalorder %s321, %s323
      %p330 = scmp.eq.s32.totalorder %s41, 1
      %p331 = por %p329, %p330
      %p332 = scmp.ne.s32.totalorder %s323, %s324
      %p333 = scmp.eq.s32.totalorder %s41, 0
      %p334 = por %p332, %p333
      %p335 = scmp.ne.s32.totalorder %s323, %s324
      %p336 = scmp.eq.s32.totalorder %s42, 1
      %p337 = por %p335, %p336
      %p339 = scmp.ne.s32.totalorder %s324, %s338
      %p340 = scmp.eq.s32.totalorder %s42, 0
      %p341 = por %p339, %p340
      %s343 = sadd.s32 %s342, 1
      %p346 = scmp.eq.s32.totalorder %s36, 1
      %p347 = scmp.ne.s32.totalorder %s342, %s344
      %p348 = scmp.eq.s32.totalorder %s36, 0
      %p349 = por %p347, %p348
      %p350 = scmp.ne.s32.totalorder %s342, %s344
      %p351 = scmp.eq.s32.totalorder %s41, 1
      %p352 = por %p350, %p351
      %p353 = scmp.ne.s32.totalorder %s344, %s345
      %p354 = scmp.eq.s32.totalorder %s41, 0
      %p355 = por %p353, %p354
      %p356 = scmp.ne.s32.totalorder %s344, %s345
      %p357 = scmp.eq.s32.totalorder %s42, 1
      %p358 = por %p356, %p357
      %p360 = scmp.ne.s32.totalorder %s345, %s359
      %p361 = scmp.eq.s32.totalorder %s42, 0
      %p362 = por %p360, %p361
      %s364 = sadd.s32 %s363, 1
      %p367 = scmp.eq.s32.totalorder %s36, 1
      %p368 = scmp.ne.s32.totalorder %s363, %s365
      %p369 = scmp.eq.s32.totalorder %s36, 0
      %p370 = por %p368, %p369
      %p371 = scmp.ne.s32.totalorder %s363, %s365
      %p372 = scmp.eq.s32.totalorder %s41, 1
      %p373 = por %p371, %p372
      %p374 = scmp.ne.s32.totalorder %s365, %s366
      %p375 = scmp.eq.s32.totalorder %s41, 0
      %p376 = por %p374, %p375
      %p377 = scmp.ne.s32.totalorder %s365, %s366
      %p378 = scmp.eq.s32.totalorder %s42, 1
      %p379 = por %p377, %p378
      %p381 = scmp.ne.s32.totalorder %s366, %s380
      %p382 = scmp.eq.s32.totalorder %s42, 0
      %p383 = por %p381, %p382
      %s385 = sadd.s32 %s384, 1
      %p388 = scmp.eq.s32.totalorder %s36, 1
      %p389 = scmp.ne.s32.totalorder %s384, %s386
      %p390 = scmp.eq.s32.totalorder %s36, 0
      %p391 = por %p389, %p390
      %p392 = scmp.ne.s32.totalorder %s384, %s386
      %p393 = scmp.eq.s32.totalorder %s41, 1
      %p394 = por %p392, %p393
      %p395 = scmp.ne.s32.totalorder %s386, %s387
      %p396 = scmp.eq.s32.totalorder %s41, 0
      %p397 = por %p395, %p396
      %p398 = scmp.ne.s32.totalorder %s386, %s387
      %p399 = scmp.eq.s32.totalorder %s42, 1
      %p400 = por %p398, %p399
      %p402 = scmp.ne.s32.totalorder %s387, %s401
      %p403 = scmp.eq.s32.totalorder %s42, 0
      %p404 = por %p402, %p403
      %s406 = sadd.s32 %s405, 1
      %p409 = scmp.eq.s32.totalorder %s36, 1
      %p410 = scmp.ne.s32.totalorder %s405, %s407
      %p411 = scmp.eq.s32.totalorder %s36, 0
      %p412 = por %p410, %p411
      %p413 = scmp.ne.s32.totalorder %s405, %s407
      %p414 = scmp.eq.s32.totalorder %s41, 1
      %p415 = por %p413, %p414
      %p416 = scmp.ne.s32.totalorder %s407, %s408
      %p417 = scmp.eq.s32.totalorder %s41, 0
      %p418 = por %p416, %p417
      %p419 = scmp.ne.s32.totalorder %s407, %s408
      %p420 = scmp.eq.s32.totalorder %s42, 1
      %p421 = por %p419, %p420
      %p423 = scmp.ne.s32.totalorder %s408, %s422
      %p424 = scmp.eq.s32.totalorder %s42, 0
      %p425 = por %p423, %p424
      %s427 = sadd.s32 %s426, 1
      %p430 = scmp.eq.s32.totalorder %s36, 1
      %p431 = scmp.ne.s32.totalorder %s426, %s428
      %p432 = scmp.eq.s32.totalorder %s36, 0
      %p433 = por %p431, %p432
      %p434 = scmp.ne.s32.totalorder %s426, %s428
      %p435 = scmp.eq.s32.totalorder %s41, 1
      %p436 = por %p434, %p435
      %p437 = scmp.ne.s32.totalorder %s428, %s429
      %p438 = scmp.eq.s32.totalorder %s41, 0
      %p439 = por %p437, %p438
      %p440 = scmp.ne.s32.totalorder %s428, %s429
      %p441 = scmp.eq.s32.totalorder %s42, 1
      %p442 = por %p440, %p441
      %p444 = scmp.ne.s32.totalorder %s429, %s443
      %p445 = scmp.eq.s32.totalorder %s42, 0
      %p446 = por %p444, %p445
      %s448 = sadd.s32 %s447, 1
      %p451 = scmp.eq.s32.totalorder %s36, 1
      %p452 = scmp.ne.s32.totalorder %s447, %s449
      %p453 = scmp.eq.s32.totalorder %s36, 0
      %p454 = por %p452, %p453
      %p455 = scmp.ne.s32.totalorder %s447, %s449
      %p456 = scmp.eq.s32.totalorder %s41, 1
      %p457 = por %p455, %p456
      %p458 = scmp.ne.s32.totalorder %s449, %s450
      %p459 = scmp.eq.s32.totalorder %s41, 0
      %p460 = por %p458, %p459
      %p461 = scmp.ne.s32.totalorder %s449, %s450
      %p462 = scmp.eq.s32.totalorder %s42, 1
      %p463 = por %p461, %p462
      %p465 = scmp.ne.s32.totalorder %s450, %s464
      %p466 = scmp.eq.s32.totalorder %s42, 0
      %p467 = por %p465, %p466
      %s469 = sadd.s32 %s468, 1
      %p472 = scmp.eq.s32.totalorder %s36, 1
      %p473 = scmp.ne.s32.totalorder %s468, %s470
      %p474 = scmp.eq.s32.totalorder %s36, 0
      %p475 = por %p473, %p474
      %p476 = scmp.ne.s32.totalorder %s468, %s470
      %p477 = scmp.eq.s32.totalorder %s41, 1
      %p478 = por %p476, %p477
      %p479 = scmp.ne.s32.totalorder %s470, %s471
      %p480 = scmp.eq.s32.totalorder %s41, 0
      %p481 = por %p479, %p480
      %p482 = scmp.ne.s32.totalorder %s470, %s471
      %p483 = scmp.eq.s32.totalorder %s42, 1
      %p484 = por %p482, %p483
      %p486 = scmp.ne.s32.totalorder %s471, %s485
      %p487 = scmp.eq.s32.totalorder %s42, 0
      %p488 = por %p486, %p487
      %s490 = sadd.s32 %s489, 1
      %p493 = scmp.eq.s32.totalorder %s36, 1
      %p494 = scmp.ne.s32.totalorder %s489, %s491
      %p495 = scmp.eq.s32.totalorder %s36, 0
      %p496 = por %p494, %p495
      %p497 = scmp.ne.s32.totalorder %s489, %s491
      %p498 = scmp.eq.s32.totalorder %s41, 1
      %p499 = por %p497, %p498
      %p500 = scmp.ne.s32.totalorder %s491, %s492
      %p501 = scmp.eq.s32.totalorder %s41, 0
      %p502 = por %p500, %p501
      %p503 = scmp.ne.s32.totalorder %s491, %s492
      %p504 = scmp.eq.s32.totalorder %s42, 1
      %p505 = por %p503, %p504
      %p507 = scmp.ne.s32.totalorder %s492, %s506
      %p508 = scmp.eq.s32.totalorder %s42, 0
      %p509 = por %p507, %p508
      %s511 = sadd.s32 %s510, 1
      %p514 = scmp.eq.s32.totalorder %s36, 1
      %p515 = scmp.ne.s32.totalorder %s510, %s512
      %p516 = scmp.eq.s32.totalorder %s36, 0
      %p517 = por %p515, %p516
      %p518 = scmp.ne.s32.totalorder %s510, %s512
      %p519 = scmp.eq.s32.totalorder %s41, 1
      %p520 = por %p518, %p519
      %p521 = scmp.ne.s32.totalorder %s512, %s513
      %p522 = scmp.eq.s32.totalorder %s41, 0
      %p523 = por %p521, %p522
      %p524 = scmp.ne.s32.totalorder %s512, %s513
      %p525 = scmp.eq.s32.totalorder %s42, 1
      %p526 = por %p524, %p525
      %p528 = scmp.ne.s32.totalorder %s513, %s527
      %p529 = scmp.eq.s32.totalorder %s42, 0
      %p530 = por %p528, %p529
      %s532 = sadd.s32 %s531, 1
      %p535 = scmp.eq.s32.totalorder %s36, 1
      %p536 = scmp.ne.s32.totalorder %s531, %s533
      %p537 = scmp.eq.s32.totalorder %s36, 0
      %p538 = por %p536, %p537
      %p539 = scmp.ne.s32.totalorder %s531, %s533
      %p540 = scmp.eq.s32.totalorder %s41, 1
      %p541 = por %p539, %p540
      %p542 = scmp.ne.s32.totalorder %s533, %s534
      %p543 = scmp.eq.s32.totalorder %s41, 0
      %p544 = por %p542, %p543
      %p545 = scmp.ne.s32.totalorder %s533, %s534
      %p546 = scmp.eq.s32.totalorder %s42, 1
      %p547 = por %p545, %p546
      %p549 = scmp.ne.s32.totalorder %s534, %s548
      %p550 = scmp.eq.s32.totalorder %s42, 0
      %p551 = por %p549, %p550
      %s552 = ssub.s32 %s36, %s43
      %p553 = scmp.eq.s32.totalorder %s552, 0
      %s555 = sadd.s32 %s554, 1
      %s556 = scalar_select %p553, %s554, %s555
      %p559 = pneg %p553
      %p560 = scmp.eq.s32.totalorder %s36, 1
      %p561 = por %p559, %p560
      %p562 = scmp.ne.s32.totalorder %s554, %s557
      %p563 = scmp.eq.s32.totalorder %s36, 0
      %p564 = por %p562, %p563
      %p565 = scmp.ne.s32.totalorder %s554, %s557
      %p566 = scmp.eq.s32.totalorder %s41, 1
      %p567 = por %p565, %p566
      %p568 = scmp.ne.s32.totalorder %s557, %s558
      %p569 = scmp.eq.s32.totalorder %s41, 0
      %p570 = por %p568, %p569
      %p571 = scmp.ne.s32.totalorder %s557, %s558
      %p572 = scmp.eq.s32.totalorder %s42, 1
      %p573 = por %p571, %p572
      %p575 = scmp.ne.s32.totalorder %s558, %s574
      %p576 = scmp.eq.s32.totalorder %s42, 0
      %p577 = por %p575, %p576
      %s578 = ssub.s32 %s36, %s43
      %p579 = scmp.eq.s32.totalorder %s578, 0
      %s581 = sadd.s32 %s580, 1
      %s582 = scalar_select %p579, %s580, %s581
      %p585 = pneg %p579
      %p586 = scmp.eq.s32.totalorder %s36, 1
      %p587 = por %p585, %p586
      %p588 = scmp.ne.s32.totalorder %s580, %s583
      %p589 = scmp.eq.s32.totalorder %s36, 0
      %p590 = por %p588, %p589
      %p591 = scmp.ne.s32.totalorder %s580, %s583
      %p592 = scmp.eq.s32.totalorder %s41, 1
      %p593 = por %p591, %p592
      %p594 = scmp.ne.s32.totalorder %s583, %s584
      %p595 = scmp.eq.s32.totalorder %s41, 0
      %p596 = por %p594, %p595
      %p597 = scmp.ne.s32.totalorder %s583, %s584
      %p598 = scmp.eq.s32.totalorder %s42, 1
      %p599 = por %p597, %p598
      %p601 = scmp.ne.s32.totalorder %s584, %s600
      %p602 = scmp.eq.s32.totalorder %s42, 0
      %p603 = por %p601, %p602
      %s604 = ssub.s32 %s36, %s43
      %p605 = scmp.eq.s32.totalorder %s604, 0
      %s607 = sadd.s32 %s606, 1
      %s608 = scalar_select %p605, %s606, %s607
      %p611 = pneg %p605
      %p612 = scmp.eq.s32.totalorder %s36, 1
      %p613 = por %p611, %p612
      %p614 = scmp.ne.s32.totalorder %s606, %s609
      %p615 = scmp.eq.s32.totalorder %s36, 0
      %p616 = por %p614, %p615
      %p617 = scmp.ne.s32.totalorder %s606, %s609
      %p618 = scmp.eq.s32.totalorder %s41, 1
      %p619 = por %p617, %p618
      %p620 = scmp.ne.s32.totalorder %s609, %s610
      %p621 = scmp.eq.s32.totalorder %s41, 0
      %p622 = por %p620, %p621
      %p623 = scmp.ne.s32.totalorder %s609, %s610
      %p624 = scmp.eq.s32.totalorder %s42, 1
      %p625 = por %p623, %p624
      %p627 = scmp.ne.s32.totalorder %s610, %s626
      %p628 = scmp.eq.s32.totalorder %s42, 0
      %p629 = por %p627, %p628
      %s630 = ssub.s32 %s36, %s43
      %p631 = scmp.eq.s32.totalorder %s630, 0
      %s633 = sadd.s32 %s632, 1
      %s634 = scalar_select %p631, %s632, %s633
      %p637 = pneg %p631
      %p638 = scmp.eq.s32.totalorder %s36, 1
      %p639 = por %p637, %p638
      %p640 = scmp.ne.s32.totalorder %s632, %s635
      %p641 = scmp.eq.s32.totalorder %s36, 0
      %p642 = por %p640, %p641
      %p643 = scmp.ne.s32.totalorder %s632, %s635
      %p644 = scmp.eq.s32.totalorder %s41, 1
      %p645 = por %p643, %p644
      %p646 = scmp.ne.s32.totalorder %s635, %s636
      %p647 = scmp.eq.s32.totalorder %s41, 0
      %p648 = por %p646, %p647
      %p649 = scmp.ne.s32.totalorder %s635, %s636
      %p650 = scmp.eq.s32.totalorder %s42, 1
      %p651 = por %p649, %p650
      %p653 = scmp.ne.s32.totalorder %s636, %s652
      %p654 = scmp.eq.s32.totalorder %s42, 0
      %p655 = por %p653, %p654
      %p656 = scmp.le.s32.totalorder 1, %s36
      %p657 = scmp.lt.s32.totalorder %s36, 3
      %p658 = pnand %p656, %p657
      %p659 = pneg %p658
      // Predicated region
      $region9: #{_lambda_.6} parent=5 // pred_check
        _
      $region10: #{_lambda_.6} parent=5 // pred_check_branch
        %661 = sbr.rel (%p658) target = $region12
      $region11: #{_lambda_.6} parent=5 // pred_region
        %s662 = ssub.s32 %s36, 1
        // Predicated region
        $region13: #{_lambda_.6} parent=11 // pred_check
          %p663 = pneg %p187
        $region14: #{_lambda_.6} parent=11 // pred_check_branch
          %665 = sbr.rel (%p663) target = $region16
        $region15: #{_lambda_.6} parent=11 // pred_region
          _
        $region16: #{_lambda_.6} parent=11 // pred_fallthru
          _
        // Predicated region
        $region17: #{_lambda_.6} parent=11 // pred_check
          %p666 = pneg %p208
        $region18: #{_lambda_.6} parent=11 // pred_check_branch
          %668 = sbr.rel (%p666) target = $region20
        $region19: #{_lambda_.6} parent=11 // pred_region
          _
        $region20: #{_lambda_.6} parent=11 // pred_fallthru
          _
        // Predicated region
        $region21: #{_lambda_.6} parent=11 // pred_check
          %p669 = pneg %p229
        $region22: #{_lambda_.6} parent=11 // pred_check_branch
          %671 = sbr.rel (%p669) target = $region24
        $region23: #{_lambda_.6} parent=11 // pred_region
          _
        $region24: #{_lambda_.6} parent=11 // pred_fallthru
          _
        // Predicated region
        $region25: #{_lambda_.6} parent=11 // pred_check
          %p672 = pneg %p250
        $region26: #{_lambda_.6} parent=11 // pred_check_branch
          %674 = sbr.rel (%p672) target = $region28
        $region27: #{_lambda_.6} parent=11 // pred_region
          _
        $region28: #{_lambda_.6} parent=11 // pred_fallthru
          _
        // Predicated region
        $region29: #{_lambda_.6} parent=11 // pred_check
          %p675 = pneg %p271
        $region30: #{_lambda_.6} parent=11 // pred_check_branch
          %677 = sbr.rel (%p675) target = $region32
        $region31: #{_lambda_.6} parent=11 // pred_region
          _
        $region32: #{_lambda_.6} parent=11 // pred_fallthru
          _
        // Predicated region
        $region33: #{_lambda_.6} parent=11 // pred_check
          %p678 = pneg %p292
        $region34: #{_lambda_.6} parent=11 // pred_check_branch
          %680 = sbr.rel (%p678) target = $region36
        $region35: #{_lambda_.6} parent=11 // pred_region
          _
        $region36: #{_lambda_.6} parent=11 // pred_fallthru
          _
        // Predicated region
        $region37: #{_lambda_.6} parent=11 // pred_check
          %p681 = pneg %p313
        $region38: #{_lambda_.6} parent=11 // pred_check_branch
          %683 = sbr.rel (%p681) target = $region40
        $region39: #{_lambda_.6} parent=11 // pred_region
          _
        $region40: #{_lambda_.6} parent=11 // pred_fallthru
          _
        // Predicated region
        $region41: #{_lambda_.6} parent=11 // pred_check
          %p684 = pneg %p334
        $region42: #{_lambda_.6} parent=11 // pred_check_branch
          %686 = sbr.rel (%p684) target = $region44
        $region43: #{_lambda_.6} parent=11 // pred_region
          _
        $region44: #{_lambda_.6} parent=11 // pred_fallthru
          _
        // Predicated region
        $region45: #{_lambda_.6} parent=11 // pred_check
          %p687 = pneg %p355
        $region46: #{_lambda_.6} parent=11 // pred_check_branch
          %689 = sbr.rel (%p687) target = $region48
        $region47: #{_lambda_.6} parent=11 // pred_region
          _
        $region48: #{_lambda_.6} parent=11 // pred_fallthru
          _
        // Predicated region
        $region49: #{_lambda_.6} parent=11 // pred_check
          %p690 = pneg %p376
        $region50: #{_lambda_.6} parent=11 // pred_check_branch
          %692 = sbr.rel (%p690) target = $region52
        $region51: #{_lambda_.6} parent=11 // pred_region
          _
        $region52: #{_lambda_.6} parent=11 // pred_fallthru
          _
        // Predicated region
        $region53: #{_lambda_.6} parent=11 // pred_check
          %p693 = pneg %p397
        $region54: #{_lambda_.6} parent=11 // pred_check_branch
          %695 = sbr.rel (%p693) target = $region56
        $region55: #{_lambda_.6} parent=11 // pred_region
          _
        $region56: #{_lambda_.6} parent=11 // pred_fallthru
          _
        // Predicated region
        $region57: #{_lambda_.6} parent=11 // pred_check
          %p696 = pneg %p418
        $region58: #{_lambda_.6} parent=11 // pred_check_branch
          %698 = sbr.rel (%p696) target = $region60
        $region59: #{_lambda_.6} parent=11 // pred_region
          _
        $region60: #{_lambda_.6} parent=11 // pred_fallthru
          _
        // Predicated region
        $region61: #{_lambda_.6} parent=11 // pred_check
          %p699 = pneg %p439
        $region62: #{_lambda_.6} parent=11 // pred_check_branch
          %701 = sbr.rel (%p699) target = $region64
        $region63: #{_lambda_.6} parent=11 // pred_region
          _
        $region64: #{_lambda_.6} parent=11 // pred_fallthru
          _
        // Predicated region
        $region65: #{_lambda_.6} parent=11 // pred_check
          %p702 = pneg %p460
        $region66: #{_lambda_.6} parent=11 // pred_check_branch
          %704 = sbr.rel (%p702) target = $region68
        $region67: #{_lambda_.6} parent=11 // pred_region
          _
        $region68: #{_lambda_.6} parent=11 // pred_fallthru
          _
        // Predicated region
        $region69: #{_lambda_.6} parent=11 // pred_check
          %p705 = pneg %p481
        $region70: #{_lambda_.6} parent=11 // pred_check_branch
          %707 = sbr.rel (%p705) target = $region72
        $region71: #{_lambda_.6} parent=11 // pred_region
          _
        $region72: #{_lambda_.6} parent=11 // pred_fallthru
          _
        // Predicated region
        $region73: #{_lambda_.6} parent=11 // pred_check
          %p708 = pneg %p502
        $region74: #{_lambda_.6} parent=11 // pred_check_branch
          %710 = sbr.rel (%p708) target = $region76
        $region75: #{_lambda_.6} parent=11 // pred_region
          _
        $region76: #{_lambda_.6} parent=11 // pred_fallthru
          _
        // Predicated region
        $region77: #{_lambda_.6} parent=11 // pred_check
          %p711 = pneg %p523
        $region78: #{_lambda_.6} parent=11 // pred_check_branch
          %713 = sbr.rel (%p711) target = $region80
        $region79: #{_lambda_.6} parent=11 // pred_region
          _
        $region80: #{_lambda_.6} parent=11 // pred_fallthru
          _
        // Predicated region
        $region81: #{_lambda_.6} parent=11 // pred_check
          %p714 = pneg %p544
        $region82: #{_lambda_.6} parent=11 // pred_check_branch
          %716 = sbr.rel (%p714) target = $region84
        $region83: #{_lambda_.6} parent=11 // pred_region
          _
        $region84: #{_lambda_.6} parent=11 // pred_fallthru
          _
      $region12: #{_lambda_.6} parent=5 // pred_fallthru
        _
      %p717 = scmp.lt.s32.totalorder %s36, 2
      // Predicated region
      $region85: #{_lambda_.6} parent=5 // pred_check
        %p718 = pneg %p717
      $region86: #{_lambda_.6} parent=5 // pred_check_branch
        %720 = sbr.rel (%p718) target = $region88
      $region87: #{_lambda_.6} parent=5 // pred_region
        // Predicated region
        $region89: #{_lambda_.6} parent=87 // pred_check
          %p721 = pneg %p56
        $region90: #{_lambda_.6} parent=87 // pred_check_branch
          %723 = sbr.rel (%p721) target = $region92
        $region91: #{_lambda_.6} parent=87 // pred_region
          %p724 = scmp.lt.s32.totalorder %s36, 1
          %s725 = scalar_select %p724, %s36, 1
          %s726 = smul.addr %s725, 2
          %s727 = smul.addr %s726, 8
          %s728 = scalar_lea.vmem %s0, %s727
        $region92: #{_lambda_.6} parent=87 // pred_fallthru
          _
        // Predicated region
        $region93: #{_lambda_.6} parent=87 // pred_check
          %p729 = pneg %p82
        $region94: #{_lambda_.6} parent=87 // pred_check_branch
          %731 = sbr.rel (%p729) target = $region96
        $region95: #{_lambda_.6} parent=87 // pred_region
          %p732 = scmp.lt.s32.totalorder %s36, 1
          %s733 = scalar_select %p732, %s36, 1
          %s734 = smul.addr %s733, 4
          %s735 = scalar_lea.vmem %s1, %s734
        $region96: #{_lambda_.6} parent=87 // pred_fallthru
          _
        // Predicated region
        $region97: #{_lambda_.6} parent=87 // pred_check
          %p736 = pneg %p108
        $region98: #{_lambda_.6} parent=87 // pred_check_branch
          %738 = sbr.rel (%p736) target = $region100
        $region99: #{_lambda_.6} parent=87 // pred_region
          %p739 = scmp.lt.s32.totalorder %s36, 1
          %s740 = scalar_select %p739, %s36, 1
          %s741 = smul.addr %s740, 4
          %s742 = scalar_lea.vmem %s2, %s741
        $region100: #{_lambda_.6} parent=87 // pred_fallthru
          _
        // Predicated region
        $region101: #{_lambda_.6} parent=87 // pred_check
          %p743 = pneg %p134
        $region102: #{_lambda_.6} parent=87 // pred_check_branch
          %745 = sbr.rel (%p743) target = $region104
        $region103: #{_lambda_.6} parent=87 // pred_region
          %p746 = scmp.lt.s32.totalorder %s36, 1
          %s747 = scalar_select %p746, %s36, 1
          %s748 = smul.addr %s747, 4
          %s749 = scalar_lea.vmem %s3, %s748
        $region104: #{_lambda_.6} parent=87 // pred_fallthru
          _
        // Predicated region
        $region105: #{_lambda_.6} parent=87 // pred_check
          %p750 = pneg %p160
        $region106: #{_lambda_.6} parent=87 // pred_check_branch
          %752 = sbr.rel (%p750) target = $region108
        $region107: #{_lambda_.6} parent=87 // pred_region
          %p753 = scmp.lt.s32.totalorder %s36, 1
          %s754 = scalar_select %p753, %s36, 1
          %s755 = smul.addr %s754, 2
          %s756 = smul.addr %s755, 8
          %s757 = scalar_lea.vmem %s4, %s756
        $region108: #{_lambda_.6} parent=87 // pred_fallthru
          _
      $region88: #{_lambda_.6} parent=5 // pred_fallthru
        _
      %p758 = scmp.le.s32.totalorder 1, %s36
      %p759 = scmp.lt.s32.totalorder %s36, 3
      %p760 = pnand %p758, %p759
      %p761 = pneg %p760
      // Predicated region
      $region109: #{_lambda_.6} parent=5 // pred_check
        _
      $region110: #{_lambda_.6} parent=5 // pred_check_branch
        %763 = sbr.rel (%p760) target = $region112
      $region111: #{_lambda_.6} parent=5 // pred_region
        %s764 = ssub.s32 %s36, 1
        %p765 = scmp.lt.s32.totalorder %s41, 1
        %s766 = scalar_select %p765, %s41, 1
        %s767 = smul.addr %s766, 2
        %s768 = smul.addr %s767, 8
        %s769 = scalar_lea.vmem %s0, %s768
        %p770 = pneg %p62
        %p771 = pneg %p59
        %p772 = scmp.lt.s32.totalorder %s41, 1
        %s773 = scalar_select %p772, %s41, 1
        %s774 = smul.addr %s773, 4
        %s775 = scalar_lea.vmem %s1, %s774
        %p776 = pneg %p88
        %p777 = pneg %p85
        %p778 = scmp.lt.s32.totalorder %s41, 1
        %s779 = scalar_select %p778, %s41, 1
        %s780 = smul.addr %s779, 4
        %s781 = scalar_lea.vmem %s2, %s780
        %p782 = pneg %p114
        %p783 = pneg %p111
        %p784 = scmp.lt.s32.totalorder %s41, 1
        %s785 = scalar_select %p784, %s41, 1
        %s786 = smul.addr %s785, 4
        %s787 = scalar_lea.vmem %s3, %s786
        %p788 = pneg %p140
        %p789 = pneg %p137
        %p790 = scmp.lt.s32.totalorder %s41, 1
        %s791 = scalar_select %p790, %s41, 1
        %s792 = smul.addr %s791, 2
        %s793 = smul.addr %s792, 8
        %s794 = scalar_lea.vmem %s4, %s793
        %p795 = pneg %p166
        %p796 = pneg %p163
        %p797 = pneg %p187
        %p798 = pneg %p184
        %p799 = pneg %p208
        %p800 = pneg %p205
        %p801 = pneg %p229
        %p802 = pneg %p226
        %p803 = pneg %p250
        %p804 = pneg %p247
        %p805 = pneg %p271
        %p806 = pneg %p268
        %p807 = pneg %p292
        %p808 = pneg %p289
        %p809 = pneg %p313
        %p810 = pneg %p310
        %p811 = pneg %p334
        %p812 = pneg %p331
        %p813 = pneg %p355
        %p814 = pneg %p352
        %p815 = pneg %p376
        %p816 = pneg %p373
        %p817 = pneg %p397
        %p818 = pneg %p394
        %p819 = pneg %p418
        %p820 = pneg %p415
        %p821 = pneg %p439
        %p822 = pneg %p436
        %p823 = pneg %p460
        %p824 = pneg %p457
        %p825 = pneg %p481
        %p826 = pneg %p478
        %p827 = pneg %p502
        %p828 = pneg %p499
        %p829 = pneg %p523
        %p830 = pneg %p520
        %p831 = pneg %p544
        %p832 = pneg %p541
        %p833 = pneg %p570
        %p834 = pneg %p567
        %s835 = sand.u32 %s557, 1
        %s836 = scalar_lea.sflag [#allocation3], %s835
        %s837 = sand.u32 %s557, 1
        %s838 = smul.addr %s837, 16
        %s839 = scalar_lea.vmem [#allocation2], %s838
        %p840 = pneg %p596
        %p841 = pneg %p593
        %p842 = scmp.lt.s32.totalorder %s41, 1
        %s843 = scalar_select %p842, %s41, 1
        %s844 = smul.addr %s843, 2
        %s845 = smul.addr %s844, 8
        %s846 = scalar_lea.vmem %s24, %s845
        %p847 = pneg %p622
        %p848 = pneg %p619
        %p849 = scmp.lt.s32.totalorder %s41, 1
        %s850 = scalar_select %p849, %s41, 1
        %s851 = scalar_lea.vmem %s25, %s850
        %p852 = pneg %p648
        %p853 = pneg %p645
        %p854 = scmp.lt.s32.totalorder %s41, 1
        %s855 = scalar_select %p854, %s41, 1
        %s856 = smul.addr %s855, 8
        %s857 = scalar_lea.vmem %s26, %s856
        %p858 = scmp.lt.s32.totalorder %s41, 1
        %s859 = scalar_select %p858, %s41, 1
        %s860 = smul.addr %s859, 2
        %s861 = smul.addr %s860, 8
        %s862 = scalar_lea.vmem %s0, %s861
        %p863 = scmp.lt.s32.totalorder %s41, 1
        %s864 = scalar_select %p863, %s41, 1
        %s865 = smul.addr %s864, 4
        %s866 = scalar_lea.vmem %s1, %s865
        %p867 = scmp.lt.s32.totalorder %s41, 1
        %s868 = scalar_select %p867, %s41, 1
        %s869 = smul.addr %s868, 4
        %s870 = scalar_lea.vmem %s2, %s869
        %p871 = scmp.lt.s32.totalorder %s41, 1
        %s872 = scalar_select %p871, %s41, 1
        %s873 = smul.addr %s872, 4
        %s874 = scalar_lea.vmem %s3, %s873
        %p875 = scmp.lt.s32.totalorder %s41, 1
        %s876 = scalar_select %p875, %s41, 1
        %s877 = smul.addr %s876, 2
        %s878 = smul.addr %s877, 8
        %s879 = scalar_lea.vmem %s4, %s878
        %p880 = scmp.lt.s32.totalorder %s41, 1
        %s881 = scalar_select %p880, %s41, 1
        %s882 = smul.addr %s881, 2
        %s883 = smul.addr %s882, 8
        %s884 = scalar_lea.vmem %s24, %s883
        %p885 = scmp.lt.s32.totalorder %s41, 1
        %s886 = scalar_select %p885, %s41, 1
        %s887 = scalar_lea.vmem %s25, %s886
        %p888 = scmp.lt.s32.totalorder %s41, 1
        %s889 = scalar_select %p888, %s41, 1
        %s890 = smul.addr %s889, 8
        %s891 = scalar_lea.vmem %s26, %s890
        %v893 = vlaneseq
        %v894 = vshrl.u32 %v893, 7
        %v895 = vadd.s32 %v894, 8
        %v896 = vadd.s32 %v894, 16
        %v897 = vcvt.s32.f32 %v894
        %v898 = vcvt.s32.f32 %v895
        %v899 = vcvt.s32.f32 %v896
        %v900 = vld [vmem:[%s874] sm:$0x7]
        %v901 = vld [vmem:[%s870] sm:$0x7]
        %v902 = vld [vmem:[%s866] sm:$0x7]
        %v905 = vunpack.c.l.s4 1966171168
        %v906 = vunpack.c.0.s8 %v905
        %v907 = vlaneseq
        %v908 = vshrl.u32 %v907, 7
        %v909 = vsub.s32 %v906, %v908
        %v910 = vrot.slane %v900, %v909
        %v911 = vcombine.high %v910, %v910
        %v913 = vunpack.c.l.s4 1966171168
        %v914 = vunpack.c.0.s8 %v913
        %v915 = vlaneseq
        %v916 = vshrl.u32 %v915, 7
        %v917 = vsub.s32 %v914, %v916
        %v918 = vrot.slane %v910, %v917
        %v920 = vunpack.c.l.s4 1966171168
        %v921 = vunpack.c.0.s8 %v920
        %v922 = vlaneseq
        %v923 = vshrl.u32 %v922, 7
        %v924 = vsub.s32 %v921, %v923
        %v925 = vrot.slane %v911, %v924
        %v926 = vcombine.high %v918, %v918
        %v930 = vmul.f32 %v918, 6.2831855
        %v931 = vmul.f32 %v925, 6.2831855
        %v932 = vmul.f32 %v926, 6.2831855
        %v936 = vlaneseq
        %v937 = vshrl.u32 %v936, 7
        %v938 = vsub.s32 0, %v937
        %v939 = vrot.slane %v930, %v938
        %v940 = vlaneseq
        %v941 = vshrl.u32 %v940, 7
        %v942 = vsub.s32 0, %v941
        %v943 = vrot.slane %v931, %v942
        %v944 = vlaneseq
        %v945 = vshrl.u32 %v944, 7
        %v946 = vsub.s32 0, %v945
        %v947 = vrot.slane %v932, %v946
        %v951 = vmul.f32 %v939, %v897
        %v952 = vmul.f32 %v939, %v898
        %v953 = vmul.f32 %v939, %v899
        %v954 = vmul.f32 %v943, %v897
        %v955 = vmul.f32 %v943, %v898
        %v956 = vmul.f32 %v943, %v899
        %v957 = vmul.f32 %v947, %v897
        %v958 = vmul.f32 %v947, %v898
        %v959 = vmul.f32 %v947, %v899
        %v962 = vunpack.c.l.s4 1966171168
        %v963 = vunpack.c.0.s8 %v962
        %v964 = vlaneseq
        %v965 = vshrl.u32 %v964, 7
        %v966 = vsub.s32 %v963, %v965
        %v967 = vrot.slane %v901, %v966
        %v968 = vcombine.high %v967, %v967
        %v970 = vunpack.c.l.s4 1966171168
        %v971 = vunpack.c.0.s8 %v970
        %v972 = vlaneseq
        %v973 = vshrl.u32 %v972, 7
        %v974 = vsub.s32 %v971, %v973
        %v975 = vrot.slane %v967, %v974
        %v977 = vunpack.c.l.s4 1966171168
        %v978 = vunpack.c.0.s8 %v977
        %v979 = vlaneseq
        %v980 = vshrl.u32 %v979, 7
        %v981 = vsub.s32 %v978, %v980
        %v982 = vrot.slane %v968, %v981
        %v983 = vcombine.high %v975, %v975
        %v984 = vlaneseq
        %v985 = vshrl.u32 %v984, 7
        %v986 = vsub.s32 0, %v985
        %v987 = vrot.slane %v975, %v986
        %v988 = vlaneseq
        %v989 = vshrl.u32 %v988, 7
        %v990 = vsub.s32 0, %v989
        %v991 = vrot.slane %v982, %v990
        %v992 = vlaneseq
        %v993 = vshrl.u32 %v992, 7
        %v994 = vsub.s32 0, %v993
        %v995 = vrot.slane %v983, %v994
        %v999 = vadd.f32 %v951, %v987
        %v1000 = vadd.f32 %v952, %v987
        %v1001 = vadd.f32 %v953, %v987
        %v1002 = vadd.f32 %v954, %v991
        %v1003 = vadd.f32 %v955, %v991
        %v1004 = vadd.f32 %v956, %v991
        %v1005 = vadd.f32 %v957, %v995
        %v1006 = vadd.f32 %v958, %v995
        %v1007 = vadd.f32 %v959, %v995
        %v1010 = vunpack.c.l.s4 1966171168
        %v1011 = vunpack.c.0.s8 %v1010
        %v1012 = vlaneseq
        %v1013 = vshrl.u32 %v1012, 7
        %v1014 = vsub.s32 %v1011, %v1013
        %v1015 = vrot.slane %v902, %v1014
        %v1016 = vcombine.high %v1015, %v1015
        %v1018 = vunpack.c.l.s4 1966171168
        %v1019 = vunpack.c.0.s8 %v1018
        %v1020 = vlaneseq
        %v1021 = vshrl.u32 %v1020, 7
        %v1022 = vsub.s32 %v1019, %v1021
        %v1023 = vrot.slane %v1015, %v1022
        %v1025 = vunpack.c.l.s4 1966171168
        %v1026 = vunpack.c.0.s8 %v1025
        %v1027 = vlaneseq
        %v1028 = vshrl.u32 %v1027, 7
        %v1029 = vsub.s32 %v1026, %v1028
        %v1030 = vrot.slane %v1016, %v1029
        %v1031 = vcombine.high %v1023, %v1023
        %v1032 = vand.u32 2147483647, %v999
        %vm1033 = vcmp.le.f32.partialorder %v1032, 0.7853982
        %vm1034 = vcmp.lt.s32.totalorder %v999, 0
        %v1035 = vand.u32 %v999, 2139095040
        %v1036 = vshrl.u32 %v1035, 23
        %v1037 = vsub.s32 %v1036, 127
        %v1038 = vand.u32 2147483647, %v999
        %v1039 = vand.u32 %v1038, 8388607
        %v1040 = vor.u32 %v1039, 8388608
        %v1041 = vsub.s32 0, %v1040
        %v1042 = vadd.s32 %v1037, 1
        %vm1043 = vcmp.gt.s32.totalorder %v1042, 0
        %v1044 = vsel %vm1043, %v1042, 0
        %v1045 = vshrl.u32 %v1044, 5
        %v1046 = vand.u32 %v1044, 31
        %v1047 = vsub.s32 32, %v1046
        %v1048 = vshrl.u32 683565275, %v1047
        %v1049 = vshll.u32 683565275, %v1046
        %v1050 = vshrl.u32 2475754826, %v1047
        %v1051 = vor.u32 %v1049, %v1050
        %v1052 = vshll.u32 2475754826, %v1046
        %v1053 = vshrl.u32 2131351028, %v1047
        %v1054 = vor.u32 %v1052, %v1053
        %v1055 = vshll.u32 2131351028, %v1046
        %v1056 = vshrl.u32 2102212464, %v1047
        %v1057 = vor.u32 %v1055, %v1056
        %v1058 = vshll.u32 2102212464, %v1046
        %v1059 = vshrl.u32 920167782, %v1047
        %v1060 = vor.u32 %v1058, %v1059
        %v1061 = vshll.u32 920167782, %v1046
        %v1062 = vshrl.u32 1326507024, %v1047
        %v1063 = vor.u32 %v1061, %v1062
        %vm1064 = vcmp.lt.s32.totalorder %v1045, 1
        %vm1065 = vcmp.lt.s32.totalorder %v1045, 2
        %vm1066 = vcmp.lt.s32.totalorder %v1045, 3
        %vm1067 = vcmp.lt.s32.totalorder %v1045, 4
        %v1068 = vsel %vm1064, %v1048, %v1051
        %v1069 = vsel %vm1067, %v1057, 2102212464
        %v1070 = vsel %vm1066, %v1054, %v1069
        %v1071 = vsel %vm1065, %v1068, %v1070
        %v1072 = vsel %vm1064, %v1051, %v1054
        %v1073 = vsel %vm1067, %v1060, 920167782
        %v1074 = vsel %vm1066, %v1057, %v1073
        %v1075 = vsel %vm1065, %v1072, %v1074
        %v1076 = vsel %vm1064, %v1054, %v1057
        %v1077 = vsel %vm1067, %v1063, 1326507024
        %v1078 = vsel %vm1066, %v1060, %v1077
        %v1079 = vsel %vm1065, %v1076, %v1078
        %v1080 = vshll.u32 %v1040, 8
        %v1081 = vmul.u32.u64.compose %v1080, %v1079
        %v1082 = vextract.low.u32 %v1081
        %v1083 = vextract.high.u32 %v1081
        %v1084 = vmul.u32.u64.compose %v1080, %v1075
        %v1085 = vextract.low.u32 %v1084
        %v1086 = vextract.high.u32 %v1084
        %v1087 = vmul.u32 %v1080, %v1071
        %v1088 = vadd.s32 %v1083, %v1085
        %vm1089 = vc.u32 %v1083, %v1085
        %v1090 = vadd.s32 %v1086, 1
        %v1091 = vsel %vm1089, %v1090, %v1086
        %v1092 = vadd.s32 %v1087, %v1091
        %v1093 = vadd.s32 %v1092, 536870912
        %v1094 = vshrl.u32 %v1093, 30
        %v1095 = vshll.u32 %v1094, 30
        %v1096 = vsub.s32 %v1092, %v1095
        %vm1097 = vcmp.lt.s32.totalorder %v1096, 0
        %v1098 = vsub.s32 0, %v1096
        %v1099 = vsel %vm1097, %v1098, %v1096
        %v1100 = vclz %v1099
        %v1101 = vsub.s32 %v1100, 2
        %vm1102 = vcmp.gt.s32.totalorder 0, %v1101
        %v1103 = vsel %vm1102, 0, %v1101
        %v1104 = vsub.s32 32, %v1103
        %v1105 = vshll.u32 %v1096, %v1103
        %v1106 = vshrl.u32 %v1088, %v1104
        %v1107 = vor.u32 %v1105, %v1106
        %v1108 = vsub.s32 4294967266, %v1103
        %v1109 = vadd.s32 %v1108, 127
        %v1110 = vshll.u32 %v1109, 23
        %v1111 = vor.u32 4788187, %v1110
        %v1112 = vand.u32 2147483647, %v1111
        %v1114 = vcvt.s32.f32 %v1107
        %v1115 = vmul.f32 %v1114, %v1112
        %v1116 = vxor.u32 %v1115, 2147483648
        %v1117 = vsel %vm1034, %v1116, %v1115
        %v1118 = vsub.s32 4, %v1094
        %v1119 = vsel %vm1034, %v1118, %v1094
        %v1120 = vsel %vm1033, %v999, %v1117
        %v1121 = vsel %vm1033, 0, %v1119
        %v1122 = vcosq.f32.pop %v1120
        %v1123 = vsinq.f32.pop %v1120
        %vm1124 = vweird.f32 %v999
        %v1125 = vand.u32 %v1121, 3
        %vm1126 = vcmp.lt.s32.totalorder %v1125, 2
        %vm1127 = vcmp.eq.s32.totalorder %v1125, 0
        %v1128 = vxor.u32 %v1123, 2147483648
        %v1129 = vsel %vm1127, %v1122, %v1128
        %vm1130 = vcmp.eq.s32.totalorder %v1125, 2
        %v1131 = vxor.u32 %v1122, 2147483648
        %v1132 = vsel %vm1130, %v1131, %v1123
        %v1133 = vsel %vm1126, %v1129, %v1132
        %v1134 = vsel %vm1124, nan, %v1133
        %v1135 = vand.u32 2147483647, %v1000
        %vm1136 = vcmp.le.f32.partialorder %v1135, 0.7853982
        %vm1137 = vcmp.lt.s32.totalorder %v1000, 0
        %v1138 = vand.u32 %v1000, 2139095040
        %v1139 = vshrl.u32 %v1138, 23
        %v1140 = vsub.s32 %v1139, 127
        %v1141 = vand.u32 2147483647, %v1000
        %v1142 = vand.u32 %v1141, 8388607
        %v1143 = vor.u32 %v1142, 8388608
        %v1144 = vsub.s32 0, %v1143
        %v1145 = vadd.s32 %v1140, 1
        %vm1146 = vcmp.gt.s32.totalorder %v1145, 0
        %v1147 = vsel %vm1146, %v1145, 0
        %v1148 = vshrl.u32 %v1147, 5
        %v1149 = vand.u32 %v1147, 31
        %v1150 = vsub.s32 32, %v1149
        %v1151 = vshrl.u32 683565275, %v1150
        %v1152 = vshll.u32 683565275, %v1149
        %v1153 = vshrl.u32 2475754826, %v1150
        %v1154 = vor.u32 %v1152, %v1153
        %v1155 = vshll.u32 2475754826, %v1149
        %v1156 = vshrl.u32 2131351028, %v1150
        %v1157 = vor.u32 %v1155, %v1156
        %v1158 = vshll.u32 2131351028, %v1149
        %v1159 = vshrl.u32 2102212464, %v1150
        %v1160 = vor.u32 %v1158, %v1159
        %v1161 = vshll.u32 2102212464, %v1149
        %v1162 = vshrl.u32 920167782, %v1150
        %v1163 = vor.u32 %v1161, %v1162
        %v1164 = vshll.u32 920167782, %v1149
        %v1165 = vshrl.u32 1326507024, %v1150
        %v1166 = vor.u32 %v1164, %v1165
        %vm1167 = vcmp.lt.s32.totalorder %v1148, 1
        %vm1168 = vcmp.lt.s32.totalorder %v1148, 2
        %vm1169 = vcmp.lt.s32.totalorder %v1148, 3
        %vm1170 = vcmp.lt.s32.totalorder %v1148, 4
        %v1171 = vsel %vm1167, %v1151, %v1154
        %v1172 = vsel %vm1170, %v1160, 2102212464
        %v1173 = vsel %vm1169, %v1157, %v1172
        %v1174 = vsel %vm1168, %v1171, %v1173
        %v1175 = vsel %vm1167, %v1154, %v1157
        %v1176 = vsel %vm1170, %v1163, 920167782
        %v1177 = vsel %vm1169, %v1160, %v1176
        %v1178 = vsel %vm1168, %v1175, %v1177
        %v1179 = vsel %vm1167, %v1157, %v1160
        %v1180 = vsel %vm1170, %v1166, 1326507024
        %v1181 = vsel %vm1169, %v1163, %v1180
        %v1182 = vsel %vm1168, %v1179, %v1181
        %v1183 = vshll.u32 %v1143, 8
        %v1184 = vmul.u32.u64.compose %v1183, %v1182
        %v1185 = vextract.low.u32 %v1184
        %v1186 = vextract.high.u32 %v1184
        %v1187 = vmul.u32.u64.compose %v1183, %v1178
        %v1188 = vextract.low.u32 %v1187
        %v1189 = vextract.high.u32 %v1187
        %v1190 = vmul.u32 %v1183, %v1174
        %v1191 = vadd.s32 %v1186, %v1188
        %vm1192 = vc.u32 %v1186, %v1188
        %v1193 = vadd.s32 %v1189, 1
        %v1194 = vsel %vm1192, %v1193, %v1189
        %v1195 = vadd.s32 %v1190, %v1194
        %v1196 = vadd.s32 %v1195, 536870912
        %v1197 = vshrl.u32 %v1196, 30
        %v1198 = vshll.u32 %v1197, 30
        %v1199 = vsub.s32 %v1195, %v1198
        %vm1200 = vcmp.lt.s32.totalorder %v1199, 0
        %v1201 = vsub.s32 0, %v1199
        %v1202 = vsel %vm1200, %v1201, %v1199
        %v1203 = vclz %v1202
        %v1204 = vsub.s32 %v1203, 2
        %vm1205 = vcmp.gt.s32.totalorder 0, %v1204
        %v1206 = vsel %vm1205, 0, %v1204
        %v1207 = vsub.s32 32, %v1206
        %v1208 = vshll.u32 %v1199, %v1206
        %v1209 = vshrl.u32 %v1191, %v1207
        %v1210 = vor.u32 %v1208, %v1209
        %v1211 = vsub.s32 4294967266, %v1206
        %v1212 = vadd.s32 %v1211, 127
        %v1213 = vshll.u32 %v1212, 23
        %v1214 = vor.u32 4788187, %v1213
        %v1215 = vand.u32 2147483647, %v1214
        %v1217 = vcvt.s32.f32 %v1210
        %v1218 = vmul.f32 %v1217, %v1215
        %v1219 = vxor.u32 %v1218, 2147483648
        %v1220 = vsel %vm1137, %v1219, %v1218
        %v1221 = vsub.s32 4, %v1197
        %v1222 = vsel %vm1137, %v1221, %v1197
        %v1223 = vsel %vm1136, %v1000, %v1220
        %v1224 = vsel %vm1136, 0, %v1222
        %v1225 = vcosq.f32.pop %v1223
        %v1226 = vsinq.f32.pop %v1223
        %vm1227 = vweird.f32 %v1000
        %v1228 = vand.u32 %v1224, 3
        %vm1229 = vcmp.lt.s32.totalorder %v1228, 2
        %vm1230 = vcmp.eq.s32.totalorder %v1228, 0
        %v1231 = vxor.u32 %v1226, 2147483648
        %v1232 = vsel %vm1230, %v1225, %v1231
        %vm1233 = vcmp.eq.s32.totalorder %v1228, 2
        %v1234 = vxor.u32 %v1225, 2147483648
        %v1235 = vsel %vm1233, %v1234, %v1226
        %v1236 = vsel %vm1229, %v1232, %v1235
        %v1237 = vsel %vm1227, nan, %v1236
        %v1238 = vand.u32 2147483647, %v1001
        %vm1239 = vcmp.le.f32.partialorder %v1238, 0.7853982
        %vm1240 = vcmp.lt.s32.totalorder %v1001, 0
        %v1241 = vand.u32 %v1001, 2139095040
        %v1242 = vshrl.u32 %v1241, 23
        %v1243 = vsub.s32 %v1242, 127
        %v1244 = vand.u32 2147483647, %v1001
        %v1245 = vand.u32 %v1244, 8388607
        %v1246 = vor.u32 %v1245, 8388608
        %v1247 = vsub.s32 0, %v1246
        %v1248 = vadd.s32 %v1243, 1
        %vm1249 = vcmp.gt.s32.totalorder %v1248, 0
        %v1250 = vsel %vm1249, %v1248, 0
        %v1251 = vshrl.u32 %v1250, 5
        %v1252 = vand.u32 %v1250, 31
        %v1253 = vsub.s32 32, %v1252
        %v1254 = vshrl.u32 683565275, %v1253
        %v1255 = vshll.u32 683565275, %v1252
        %v1256 = vshrl.u32 2475754826, %v1253
        %v1257 = vor.u32 %v1255, %v1256
        %v1258 = vshll.u32 2475754826, %v1252
        %v1259 = vshrl.u32 2131351028, %v1253
        %v1260 = vor.u32 %v1258, %v1259
        %v1261 = vshll.u32 2131351028, %v1252
        %v1262 = vshrl.u32 2102212464, %v1253
        %v1263 = vor.u32 %v1261, %v1262
        %v1264 = vshll.u32 2102212464, %v1252
        %v1265 = vshrl.u32 920167782, %v1253
        %v1266 = vor.u32 %v1264, %v1265
        %v1267 = vshll.u32 920167782, %v1252
        %v1268 = vshrl.u32 1326507024, %v1253
        %v1269 = vor.u32 %v1267, %v1268
        %vm1270 = vcmp.lt.s32.totalorder %v1251, 1
        %vm1271 = vcmp.lt.s32.totalorder %v1251, 2
        %vm1272 = vcmp.lt.s32.totalorder %v1251, 3
        %vm1273 = vcmp.lt.s32.totalorder %v1251, 4
        %v1274 = vsel %vm1270, %v1254, %v1257
        %v1275 = vsel %vm1273, %v1263, 2102212464
        %v1276 = vsel %vm1272, %v1260, %v1275
        %v1277 = vsel %vm1271, %v1274, %v1276
        %v1278 = vsel %vm1270, %v1257, %v1260
        %v1279 = vsel %vm1273, %v1266, 920167782
        %v1280 = vsel %vm1272, %v1263, %v1279
        %v1281 = vsel %vm1271, %v1278, %v1280
        %v1282 = vsel %vm1270, %v1260, %v1263
        %v1283 = vsel %vm1273, %v1269, 1326507024
        %v1284 = vsel %vm1272, %v1266, %v1283
        %v1285 = vsel %vm1271, %v1282, %v1284
        %v1286 = vshll.u32 %v1246, 8
        %v1287 = vmul.u32.u64.compose %v1286, %v1285
        %v1288 = vextract.low.u32 %v1287
        %v1289 = vextract.high.u32 %v1287
        %v1290 = vmul.u32.u64.compose %v1286, %v1281
        %v1291 = vextract.low.u32 %v1290
        %v1292 = vextract.high.u32 %v1290
        %v1293 = vmul.u32 %v1286, %v1277
        %v1294 = vadd.s32 %v1289, %v1291
        %vm1295 = vc.u32 %v1289, %v1291
        %v1296 = vadd.s32 %v1292, 1
        %v1297 = vsel %vm1295, %v1296, %v1292
        %v1298 = vadd.s32 %v1293, %v1297
        %v1299 = vadd.s32 %v1298, 536870912
        %v1300 = vshrl.u32 %v1299, 30
        %v1301 = vshll.u32 %v1300, 30
        %v1302 = vsub.s32 %v1298, %v1301
        %vm1303 = vcmp.lt.s32.totalorder %v1302, 0
        %v1304 = vsub.s32 0, %v1302
        %v1305 = vsel %vm1303, %v1304, %v1302
        %v1306 = vclz %v1305
        %v1307 = vsub.s32 %v1306, 2
        %vm1308 = vcmp.gt.s32.totalorder 0, %v1307
        %v1309 = vsel %vm1308, 0, %v1307
        %v1310 = vsub.s32 32, %v1309
        %v1311 = vshll.u32 %v1302, %v1309
        %v1312 = vshrl.u32 %v1294, %v1310
        %v1313 = vor.u32 %v1311, %v1312
        %v1314 = vsub.s32 4294967266, %v1309
        %v1315 = vadd.s32 %v1314, 127
        %v1316 = vshll.u32 %v1315, 23
        %v1317 = vor.u32 4788187, %v1316
        %v1318 = vand.u32 2147483647, %v1317
        %v1320 = vcvt.s32.f32 %v1313
        %v1321 = vmul.f32 %v1320, %v1318
        %v1322 = vxor.u32 %v1321, 2147483648
        %v1323 = vsel %vm1240, %v1322, %v1321
        %v1324 = vsub.s32 4, %v1300
        %v1325 = vsel %vm1240, %v1324, %v1300
        %v1326 = vsel %vm1239, %v1001, %v1323
        %v1327 = vsel %vm1239, 0, %v1325
        %v1328 = vcosq.f32.pop %v1326
        %v1329 = vsinq.f32.pop %v1326
        %vm1330 = vweird.f32 %v1001
        %v1331 = vand.u32 %v1327, 3
        %vm1332 = vcmp.lt.s32.totalorder %v1331, 2
        %vm1333 = vcmp.eq.s32.totalorder %v1331, 0
        %v1334 = vxor.u32 %v1329, 2147483648
        %v1335 = vsel %vm1333, %v1328, %v1334
        %vm1336 = vcmp.eq.s32.totalorder %v1331, 2
        %v1337 = vxor.u32 %v1328, 2147483648
        %v1338 = vsel %vm1336, %v1337, %v1329
        %v1339 = vsel %vm1332, %v1335, %v1338
        %v1340 = vsel %vm1330, nan, %v1339
        %v1341 = vand.u32 2147483647, %v1002
        %vm1342 = vcmp.le.f32.partialorder %v1341, 0.7853982
        %vm1343 = vcmp.lt.s32.totalorder %v1002, 0
        %v1344 = vand.u32 %v1002, 2139095040
        %v1345 = vshrl.u32 %v1344, 23
        %v1346 = vsub.s32 %v1345, 127
        %v1347 = vand.u32 2147483647, %v1002
        %v1348 = vand.u32 %v1347, 8388607
        %v1349 = vor.u32 %v1348, 8388608
        %v1350 = vsub.s32 0, %v1349
        %v1351 = vadd.s32 %v1346, 1
        %vm1352 = vcmp.gt.s32.totalorder %v1351, 0
        %v1353 = vsel %vm1352, %v1351, 0
        %v1354 = vshrl.u32 %v1353, 5
        %v1355 = vand.u32 %v1353, 31
        %v1356 = vsub.s32 32, %v1355
        %v1357 = vshrl.u32 683565275, %v1356
        %v1358 = vshll.u32 683565275, %v1355
        %v1359 = vshrl.u32 2475754826, %v1356
        %v1360 = vor.u32 %v1358, %v1359
        %v1361 = vshll.u32 2475754826, %v1355
        %v1362 = vshrl.u32 2131351028, %v1356
        %v1363 = vor.u32 %v1361, %v1362
        %v1364 = vshll.u32 2131351028, %v1355
        %v1365 = vshrl.u32 2102212464, %v1356
        %v1366 = vor.u32 %v1364, %v1365
        %v1367 = vshll.u32 2102212464, %v1355
        %v1368 = vshrl.u32 920167782, %v1356
        %v1369 = vor.u32 %v1367, %v1368
        %v1370 = vshll.u32 920167782, %v1355
        %v1371 = vshrl.u32 1326507024, %v1356
        %v1372 = vor.u32 %v1370, %v1371
        %vm1373 = vcmp.lt.s32.totalorder %v1354, 1
        %vm1374 = vcmp.lt.s32.totalorder %v1354, 2
        %vm1375 = vcmp.lt.s32.totalorder %v1354, 3
        %vm1376 = vcmp.lt.s32.totalorder %v1354, 4
        %v1377 = vsel %vm1373, %v1357, %v1360
        %v1378 = vsel %vm1376, %v1366, 2102212464
        %v1379 = vsel %vm1375, %v1363, %v1378
        %v1380 = vsel %vm1374, %v1377, %v1379
        %v1381 = vsel %vm1373, %v1360, %v1363
        %v1382 = vsel %vm1376, %v1369, 920167782
        %v1383 = vsel %vm1375, %v1366, %v1382
        %v1384 = vsel %vm1374, %v1381, %v1383
        %v1385 = vsel %vm1373, %v1363, %v1366
        %v1386 = vsel %vm1376, %v1372, 1326507024
        %v1387 = vsel %vm1375, %v1369, %v1386
        %v1388 = vsel %vm1374, %v1385, %v1387
        %v1389 = vshll.u32 %v1349, 8
        %v1390 = vmul.u32.u64.compose %v1389, %v1388
        %v1391 = vextract.low.u32 %v1390
        %v1392 = vextract.high.u32 %v1390
        %v1393 = vmul.u32.u64.compose %v1389, %v1384
        %v1394 = vextract.low.u32 %v1393
        %v1395 = vextract.high.u32 %v1393
        %v1396 = vmul.u32 %v1389, %v1380
        %v1397 = vadd.s32 %v1392, %v1394
        %vm1398 = vc.u32 %v1392, %v1394
        %v1399 = vadd.s32 %v1395, 1
        %v1400 = vsel %vm1398, %v1399, %v1395
        %v1401 = vadd.s32 %v1396, %v1400
        %v1402 = vadd.s32 %v1401, 536870912
        %v1403 = vshrl.u32 %v1402, 30
        %v1404 = vshll.u32 %v1403, 30
        %v1405 = vsub.s32 %v1401, %v1404
        %vm1406 = vcmp.lt.s32.totalorder %v1405, 0
        %v1407 = vsub.s32 0, %v1405
        %v1408 = vsel %vm1406, %v1407, %v1405
        %v1409 = vclz %v1408
        %v1410 = vsub.s32 %v1409, 2
        %vm1411 = vcmp.gt.s32.totalorder 0, %v1410
        %v1412 = vsel %vm1411, 0, %v1410
        %v1413 = vsub.s32 32, %v1412
        %v1414 = vshll.u32 %v1405, %v1412
        %v1415 = vshrl.u32 %v1397, %v1413
        %v1416 = vor.u32 %v1414, %v1415
        %v1417 = vsub.s32 4294967266, %v1412
        %v1418 = vadd.s32 %v1417, 127
        %v1419 = vshll.u32 %v1418, 23
        %v1420 = vor.u32 4788187, %v1419
        %v1421 = vand.u32 2147483647, %v1420
        %v1423 = vcvt.s32.f32 %v1416
        %v1424 = vmul.f32 %v1423, %v1421
        %v1425 = vxor.u32 %v1424, 2147483648
        %v1426 = vsel %vm1343, %v1425, %v1424
        %v1427 = vsub.s32 4, %v1403
        %v1428 = vsel %vm1343, %v1427, %v1403
        %v1429 = vsel %vm1342, %v1002, %v1426
        %v1430 = vsel %vm1342, 0, %v1428
        %v1431 = vcosq.f32.pop %v1429
        %v1432 = vsinq.f32.pop %v1429
        %vm1433 = vweird.f32 %v1002
        %v1434 = vand.u32 %v1430, 3
        %vm1435 = vcmp.lt.s32.totalorder %v1434, 2
        %vm1436 = vcmp.eq.s32.totalorder %v1434, 0
        %v1437 = vxor.u32 %v1432, 2147483648
        %v1438 = vsel %vm1436, %v1431, %v1437
        %vm1439 = vcmp.eq.s32.totalorder %v1434, 2
        %v1440 = vxor.u32 %v1431, 2147483648
        %v1441 = vsel %vm1439, %v1440, %v1432
        %v1442 = vsel %vm1435, %v1438, %v1441
        %v1443 = vsel %vm1433, nan, %v1442
        %v1444 = vand.u32 2147483647, %v1003
        %vm1445 = vcmp.le.f32.partialorder %v1444, 0.7853982
        %vm1446 = vcmp.lt.s32.totalorder %v1003, 0
        %v1447 = vand.u32 %v1003, 2139095040
        %v1448 = vshrl.u32 %v1447, 23
        %v1449 = vsub.s32 %v1448, 127
        %v1450 = vand.u32 2147483647, %v1003
        %v1451 = vand.u32 %v1450, 8388607
        %v1452 = vor.u32 %v1451, 8388608
        %v1453 = vsub.s32 0, %v1452
        %v1454 = vadd.s32 %v1449, 1
        %vm1455 = vcmp.gt.s32.totalorder %v1454, 0
        %v1456 = vsel %vm1455, %v1454, 0
        %v1457 = vshrl.u32 %v1456, 5
        %v1458 = vand.u32 %v1456, 31
        %v1459 = vsub.s32 32, %v1458
        %v1460 = vshrl.u32 683565275, %v1459
        %v1461 = vshll.u32 683565275, %v1458
        %v1462 = vshrl.u32 2475754826, %v1459
        %v1463 = vor.u32 %v1461, %v1462
        %v1464 = vshll.u32 2475754826, %v1458
        %v1465 = vshrl.u32 2131351028, %v1459
        %v1466 = vor.u32 %v1464, %v1465
        %v1467 = vshll.u32 2131351028, %v1458
        %v1468 = vshrl.u32 2102212464, %v1459
        %v1469 = vor.u32 %v1467, %v1468
        %v1470 = vshll.u32 2102212464, %v1458
        %v1471 = vshrl.u32 920167782, %v1459
        %v1472 = vor.u32 %v1470, %v1471
        %v1473 = vshll.u32 920167782, %v1458
        %v1474 = vshrl.u32 1326507024, %v1459
        %v1475 = vor.u32 %v1473, %v1474
        %vm1476 = vcmp.lt.s32.totalorder %v1457, 1
        %vm1477 = vcmp.lt.s32.totalorder %v1457, 2
        %vm1478 = vcmp.lt.s32.totalorder %v1457, 3
        %vm1479 = vcmp.lt.s32.totalorder %v1457, 4
        %v1480 = vsel %vm1476, %v1460, %v1463
        %v1481 = vsel %vm1479, %v1469, 2102212464
        %v1482 = vsel %vm1478, %v1466, %v1481
        %v1483 = vsel %vm1477, %v1480, %v1482
        %v1484 = vsel %vm1476, %v1463, %v1466
        %v1485 = vsel %vm1479, %v1472, 920167782
        %v1486 = vsel %vm1478, %v1469, %v1485
        %v1487 = vsel %vm1477, %v1484, %v1486
        %v1488 = vsel %vm1476, %v1466, %v1469
        %v1489 = vsel %vm1479, %v1475, 1326507024
        %v1490 = vsel %vm1478, %v1472, %v1489
        %v1491 = vsel %vm1477, %v1488, %v1490
        %v1492 = vshll.u32 %v1452, 8
        %v1493 = vmul.u32.u64.compose %v1492, %v1491
        %v1494 = vextract.low.u32 %v1493
        %v1495 = vextract.high.u32 %v1493
        %v1496 = vmul.u32.u64.compose %v1492, %v1487
        %v1497 = vextract.low.u32 %v1496
        %v1498 = vextract.high.u32 %v1496
        %v1499 = vmul.u32 %v1492, %v1483
        %v1500 = vadd.s32 %v1495, %v1497
        %vm1501 = vc.u32 %v1495, %v1497
        %v1502 = vadd.s32 %v1498, 1
        %v1503 = vsel %vm1501, %v1502, %v1498
        %v1504 = vadd.s32 %v1499, %v1503
        %v1505 = vadd.s32 %v1504, 536870912
        %v1506 = vshrl.u32 %v1505, 30
        %v1507 = vshll.u32 %v1506, 30
        %v1508 = vsub.s32 %v1504, %v1507
        %vm1509 = vcmp.lt.s32.totalorder %v1508, 0
        %v1510 = vsub.s32 0, %v1508
        %v1511 = vsel %vm1509, %v1510, %v1508
        %v1512 = vclz %v1511
        %v1513 = vsub.s32 %v1512, 2
        %vm1514 = vcmp.gt.s32.totalorder 0, %v1513
        %v1515 = vsel %vm1514, 0, %v1513
        %v1516 = vsub.s32 32, %v1515
        %v1517 = vshll.u32 %v1508, %v1515
        %v1518 = vshrl.u32 %v1500, %v1516
        %v1519 = vor.u32 %v1517, %v1518
        %v1520 = vsub.s32 4294967266, %v1515
        %v1521 = vadd.s32 %v1520, 127
        %v1522 = vshll.u32 %v1521, 23
        %v1523 = vor.u32 4788187, %v1522
        %v1524 = vand.u32 2147483647, %v1523
        %v1526 = vcvt.s32.f32 %v1519
        %v1527 = vmul.f32 %v1526, %v1524
        %v1528 = vxor.u32 %v1527, 2147483648
        %v1529 = vsel %vm1446, %v1528, %v1527
        %v1530 = vsub.s32 4, %v1506
        %v1531 = vsel %vm1446, %v1530, %v1506
        %v1532 = vsel %vm1445, %v1003, %v1529
        %v1533 = vsel %vm1445, 0, %v1531
        %v1534 = vcosq.f32.pop %v1532
        %v1535 = vsinq.f32.pop %v1532
        %vm1536 = vweird.f32 %v1003
        %v1537 = vand.u32 %v1533, 3
        %vm1538 = vcmp.lt.s32.totalorder %v1537, 2
        %vm1539 = vcmp.eq.s32.totalorder %v1537, 0
        %v1540 = vxor.u32 %v1535, 2147483648
        %v1541 = vsel %vm1539, %v1534, %v1540
        %vm1542 = vcmp.eq.s32.totalorder %v1537, 2
        %v1543 = vxor.u32 %v1534, 2147483648
        %v1544 = vsel %vm1542, %v1543, %v1535
        %v1545 = vsel %vm1538, %v1541, %v1544
        %v1546 = vsel %vm1536, nan, %v1545
        %v1547 = vand.u32 2147483647, %v1004
        %vm1548 = vcmp.le.f32.partialorder %v1547, 0.7853982
        %vm1549 = vcmp.lt.s32.totalorder %v1004, 0
        %v1550 = vand.u32 %v1004, 2139095040
        %v1551 = vshrl.u32 %v1550, 23
        %v1552 = vsub.s32 %v1551, 127
        %v1553 = vand.u32 2147483647, %v1004
        %v1554 = vand.u32 %v1553, 8388607
        %v1555 = vor.u32 %v1554, 8388608
        %v1556 = vsub.s32 0, %v1555
        %v1557 = vadd.s32 %v1552, 1
        %vm1558 = vcmp.gt.s32.totalorder %v1557, 0
        %v1559 = vsel %vm1558, %v1557, 0
        %v1560 = vshrl.u32 %v1559, 5
        %v1561 = vand.u32 %v1559, 31
        %v1562 = vsub.s32 32, %v1561
        %v1563 = vshrl.u32 683565275, %v1562
        %v1564 = vshll.u32 683565275, %v1561
        %v1565 = vshrl.u32 2475754826, %v1562
        %v1566 = vor.u32 %v1564, %v1565
        %v1567 = vshll.u32 2475754826, %v1561
        %v1568 = vshrl.u32 2131351028, %v1562
        %v1569 = vor.u32 %v1567, %v1568
        %v1570 = vshll.u32 2131351028, %v1561
        %v1571 = vshrl.u32 2102212464, %v1562
        %v1572 = vor.u32 %v1570, %v1571
        %v1573 = vshll.u32 2102212464, %v1561
        %v1574 = vshrl.u32 920167782, %v1562
        %v1575 = vor.u32 %v1573, %v1574
        %v1576 = vshll.u32 920167782, %v1561
        %v1577 = vshrl.u32 1326507024, %v1562
        %v1578 = vor.u32 %v1576, %v1577
        %vm1579 = vcmp.lt.s32.totalorder %v1560, 1
        %vm1580 = vcmp.lt.s32.totalorder %v1560, 2
        %vm1581 = vcmp.lt.s32.totalorder %v1560, 3
        %vm1582 = vcmp.lt.s32.totalorder %v1560, 4
        %v1583 = vsel %vm1579, %v1563, %v1566
        %v1584 = vsel %vm1582, %v1572, 2102212464
        %v1585 = vsel %vm1581, %v1569, %v1584
        %v1586 = vsel %vm1580, %v1583, %v1585
        %v1587 = vsel %vm1579, %v1566, %v1569
        %v1588 = vsel %vm1582, %v1575, 920167782
        %v1589 = vsel %vm1581, %v1572, %v1588
        %v1590 = vsel %vm1580, %v1587, %v1589
        %v1591 = vsel %vm1579, %v1569, %v1572
        %v1592 = vsel %vm1582, %v1578, 1326507024
        %v1593 = vsel %vm1581, %v1575, %v1592
        %v1594 = vsel %vm1580, %v1591, %v1593
        %v1595 = vshll.u32 %v1555, 8
        %v1596 = vmul.u32.u64.compose %v1595, %v1594
        %v1597 = vextract.low.u32 %v1596
        %v1598 = vextract.high.u32 %v1596
        %v1599 = vmul.u32.u64.compose %v1595, %v1590
        %v1600 = vextract.low.u32 %v1599
        %v1601 = vextract.high.u32 %v1599
        %v1602 = vmul.u32 %v1595, %v1586
        %v1603 = vadd.s32 %v1598, %v1600
        %vm1604 = vc.u32 %v1598, %v1600
        %v1605 = vadd.s32 %v1601, 1
        %v1606 = vsel %vm1604, %v1605, %v1601
        %v1607 = vadd.s32 %v1602, %v1606
        %v1608 = vadd.s32 %v1607, 536870912
        %v1609 = vshrl.u32 %v1608, 30
        %v1610 = vshll.u32 %v1609, 30
        %v1611 = vsub.s32 %v1607, %v1610
        %vm1612 = vcmp.lt.s32.totalorder %v1611, 0
        %v1613 = vsub.s32 0, %v1611
        %v1614 = vsel %vm1612, %v1613, %v1611
        %v1615 = vclz %v1614
        %v1616 = vsub.s32 %v1615, 2
        %vm1617 = vcmp.gt.s32.totalorder 0, %v1616
        %v1618 = vsel %vm1617, 0, %v1616
        %v1619 = vsub.s32 32, %v1618
        %v1620 = vshll.u32 %v1611, %v1618
        %v1621 = vshrl.u32 %v1603, %v1619
        %v1622 = vor.u32 %v1620, %v1621
        %v1623 = vsub.s32 4294967266, %v1618
        %v1624 = vadd.s32 %v1623, 127
        %v1625 = vshll.u32 %v1624, 23
        %v1626 = vor.u32 4788187, %v1625
        %v1627 = vand.u32 2147483647, %v1626
        %v1629 = vcvt.s32.f32 %v1622
        %v1630 = vmul.f32 %v1629, %v1627
        %v1631 = vxor.u32 %v1630, 2147483648
        %v1632 = vsel %vm1549, %v1631, %v1630
        %v1633 = vsub.s32 4, %v1609
        %v1634 = vsel %vm1549, %v1633, %v1609
        %v1635 = vsel %vm1548, %v1004, %v1632
        %v1636 = vsel %vm1548, 0, %v1634
        %v1637 = vcosq.f32.pop %v1635
        %v1638 = vsinq.f32.pop %v1635
        %vm1639 = vweird.f32 %v1004
        %v1640 = vand.u32 %v1636, 3
        %vm1641 = vcmp.lt.s32.totalorder %v1640, 2
        %vm1642 = vcmp.eq.s32.totalorder %v1640, 0
        %v1643 = vxor.u32 %v1638, 2147483648
        %v1644 = vsel %vm1642, %v1637, %v1643
        %vm1645 = vcmp.eq.s32.totalorder %v1640, 2
        %v1646 = vxor.u32 %v1637, 2147483648
        %v1647 = vsel %vm1645, %v1646, %v1638
        %v1648 = vsel %vm1641, %v1644, %v1647
        %v1649 = vsel %vm1639, nan, %v1648
        %v1650 = vand.u32 2147483647, %v1005
        %vm1651 = vcmp.le.f32.partialorder %v1650, 0.7853982
        %vm1652 = vcmp.lt.s32.totalorder %v1005, 0
        %v1653 = vand.u32 %v1005, 2139095040
        %v1654 = vshrl.u32 %v1653, 23
        %v1655 = vsub.s32 %v1654, 127
        %v1656 = vand.u32 2147483647, %v1005
        %v1657 = vand.u32 %v1656, 8388607
        %v1658 = vor.u32 %v1657, 8388608
        %v1659 = vsub.s32 0, %v1658
        %v1660 = vadd.s32 %v1655, 1
        %vm1661 = vcmp.gt.s32.totalorder %v1660, 0
        %v1662 = vsel %vm1661, %v1660, 0
        %v1663 = vshrl.u32 %v1662, 5
        %v1664 = vand.u32 %v1662, 31
        %v1665 = vsub.s32 32, %v1664
        %v1666 = vshrl.u32 683565275, %v1665
        %v1667 = vshll.u32 683565275, %v1664
        %v1668 = vshrl.u32 2475754826, %v1665
        %v1669 = vor.u32 %v1667, %v1668
        %v1670 = vshll.u32 2475754826, %v1664
        %v1671 = vshrl.u32 2131351028, %v1665
        %v1672 = vor.u32 %v1670, %v1671
        %v1673 = vshll.u32 2131351028, %v1664
        %v1674 = vshrl.u32 2102212464, %v1665
        %v1675 = vor.u32 %v1673, %v1674
        %v1676 = vshll.u32 2102212464, %v1664
        %v1677 = vshrl.u32 920167782, %v1665
        %v1678 = vor.u32 %v1676, %v1677
        %v1679 = vshll.u32 920167782, %v1664
        %v1680 = vshrl.u32 1326507024, %v1665
        %v1681 = vor.u32 %v1679, %v1680
        %vm1682 = vcmp.lt.s32.totalorder %v1663, 1
        %vm1683 = vcmp.lt.s32.totalorder %v1663, 2
        %vm1684 = vcmp.lt.s32.totalorder %v1663, 3
        %vm1685 = vcmp.lt.s32.totalorder %v1663, 4
        %v1686 = vsel %vm1682, %v1666, %v1669
        %v1687 = vsel %vm1685, %v1675, 2102212464
        %v1688 = vsel %vm1684, %v1672, %v1687
        %v1689 = vsel %vm1683, %v1686, %v1688
        %v1690 = vsel %vm1682, %v1669, %v1672
        %v1691 = vsel %vm1685, %v1678, 920167782
        %v1692 = vsel %vm1684, %v1675, %v1691
        %v1693 = vsel %vm1683, %v1690, %v1692
        %v1694 = vsel %vm1682, %v1672, %v1675
        %v1695 = vsel %vm1685, %v1681, 1326507024
        %v1696 = vsel %vm1684, %v1678, %v1695
        %v1697 = vsel %vm1683, %v1694, %v1696
        %v1698 = vshll.u32 %v1658, 8
        %v1699 = vmul.u32.u64.compose %v1698, %v1697
        %v1700 = vextract.low.u32 %v1699
        %v1701 = vextract.high.u32 %v1699
        %v1702 = vmul.u32.u64.compose %v1698, %v1693
        %v1703 = vextract.low.u32 %v1702
        %v1704 = vextract.high.u32 %v1702
        %v1705 = vmul.u32 %v1698, %v1689
        %v1706 = vadd.s32 %v1701, %v1703
        %vm1707 = vc.u32 %v1701, %v1703
        %v1708 = vadd.s32 %v1704, 1
        %v1709 = vsel %vm1707, %v1708, %v1704
        %v1710 = vadd.s32 %v1705, %v1709
        %v1711 = vadd.s32 %v1710, 536870912
        %v1712 = vshrl.u32 %v1711, 30
        %v1713 = vshll.u32 %v1712, 30
        %v1714 = vsub.s32 %v1710, %v1713
        %vm1715 = vcmp.lt.s32.totalorder %v1714, 0
        %v1716 = vsub.s32 0, %v1714
        %v1717 = vsel %vm1715, %v1716, %v1714
        %v1718 = vclz %v1717
        %v1719 = vsub.s32 %v1718, 2
        %vm1720 = vcmp.gt.s32.totalorder 0, %v1719
        %v1721 = vsel %vm1720, 0, %v1719
        %v1722 = vsub.s32 32, %v1721
        %v1723 = vshll.u32 %v1714, %v1721
        %v1724 = vshrl.u32 %v1706, %v1722
        %v1725 = vor.u32 %v1723, %v1724
        %v1726 = vsub.s32 4294967266, %v1721
        %v1727 = vadd.s32 %v1726, 127
        %v1728 = vshll.u32 %v1727, 23
        %v1729 = vor.u32 4788187, %v1728
        %v1730 = vand.u32 2147483647, %v1729
        %v1732 = vcvt.s32.f32 %v1725
        %v1733 = vmul.f32 %v1732, %v1730
        %v1734 = vxor.u32 %v1733, 2147483648
        %v1735 = vsel %vm1652, %v1734, %v1733
        %v1736 = vsub.s32 4, %v1712
        %v1737 = vsel %vm1652, %v1736, %v1712
        %v1738 = vsel %vm1651, %v1005, %v1735
        %v1739 = vsel %vm1651, 0, %v1737
        %v1740 = vcosq.f32.pop %v1738
        %v1741 = vsinq.f32.pop %v1738
        %vm1742 = vweird.f32 %v1005
        %v1743 = vand.u32 %v1739, 3
        %vm1744 = vcmp.lt.s32.totalorder %v1743, 2
        %vm1745 = vcmp.eq.s32.totalorder %v1743, 0
        %v1746 = vxor.u32 %v1741, 2147483648
        %v1747 = vsel %vm1745, %v1740, %v1746
        %vm1748 = vcmp.eq.s32.totalorder %v1743, 2
        %v1749 = vxor.u32 %v1740, 2147483648
        %v1750 = vsel %vm1748, %v1749, %v1741
        %v1751 = vsel %vm1744, %v1747, %v1750
        %v1752 = vsel %vm1742, nan, %v1751
        %v1753 = vand.u32 2147483647, %v1006
        %vm1754 = vcmp.le.f32.partialorder %v1753, 0.7853982
        %vm1755 = vcmp.lt.s32.totalorder %v1006, 0
        %v1756 = vand.u32 %v1006, 2139095040
        %v1757 = vshrl.u32 %v1756, 23
        %v1758 = vsub.s32 %v1757, 127
        %v1759 = vand.u32 2147483647, %v1006
        %v1760 = vand.u32 %v1759, 8388607
        %v1761 = vor.u32 %v1760, 8388608
        %v1762 = vsub.s32 0, %v1761
        %v1763 = vadd.s32 %v1758, 1
        %vm1764 = vcmp.gt.s32.totalorder %v1763, 0
        %v1765 = vsel %vm1764, %v1763, 0
        %v1766 = vshrl.u32 %v1765, 5
        %v1767 = vand.u32 %v1765, 31
        %v1768 = vsub.s32 32, %v1767
        %v1769 = vshrl.u32 683565275, %v1768
        %v1770 = vshll.u32 683565275, %v1767
        %v1771 = vshrl.u32 2475754826, %v1768
        %v1772 = vor.u32 %v1770, %v1771
        %v1773 = vshll.u32 2475754826, %v1767
        %v1774 = vshrl.u32 2131351028, %v1768
        %v1775 = vor.u32 %v1773, %v1774
        %v1776 = vshll.u32 2131351028, %v1767
        %v1777 = vshrl.u32 2102212464, %v1768
        %v1778 = vor.u32 %v1776, %v1777
        %v1779 = vshll.u32 2102212464, %v1767
        %v1780 = vshrl.u32 920167782, %v1768
        %v1781 = vor.u32 %v1779, %v1780
        %v1782 = vshll.u32 920167782, %v1767
        %v1783 = vshrl.u32 1326507024, %v1768
        %v1784 = vor.u32 %v1782, %v1783
        %vm1785 = vcmp.lt.s32.totalorder %v1766, 1
        %vm1786 = vcmp.lt.s32.totalorder %v1766, 2
        %vm1787 = vcmp.lt.s32.totalorder %v1766, 3
        %vm1788 = vcmp.lt.s32.totalorder %v1766, 4
        %v1789 = vsel %vm1785, %v1769, %v1772
        %v1790 = vsel %vm1788, %v1778, 2102212464
        %v1791 = vsel %vm1787, %v1775, %v1790
        %v1792 = vsel %vm1786, %v1789, %v1791
        %v1793 = vsel %vm1785, %v1772, %v1775
        %v1794 = vsel %vm1788, %v1781, 920167782
        %v1795 = vsel %vm1787, %v1778, %v1794
        %v1796 = vsel %vm1786, %v1793, %v1795
        %v1797 = vsel %vm1785, %v1775, %v1778
        %v1798 = vsel %vm1788, %v1784, 1326507024
        %v1799 = vsel %vm1787, %v1781, %v1798
        %v1800 = vsel %vm1786, %v1797, %v1799
        %v1801 = vshll.u32 %v1761, 8
        %v1802 = vmul.u32.u64.compose %v1801, %v1800
        %v1803 = vextract.low.u32 %v1802
        %v1804 = vextract.high.u32 %v1802
        %v1805 = vmul.u32.u64.compose %v1801, %v1796
        %v1806 = vextract.low.u32 %v1805
        %v1807 = vextract.high.u32 %v1805
        %v1808 = vmul.u32 %v1801, %v1792
        %v1809 = vadd.s32 %v1804, %v1806
        %vm1810 = vc.u32 %v1804, %v1806
        %v1811 = vadd.s32 %v1807, 1
        %v1812 = vsel %vm1810, %v1811, %v1807
        %v1813 = vadd.s32 %v1808, %v1812
        %v1814 = vadd.s32 %v1813, 536870912
        %v1815 = vshrl.u32 %v1814, 30
        %v1816 = vshll.u32 %v1815, 30
        %v1817 = vsub.s32 %v1813, %v1816
        %vm1818 = vcmp.lt.s32.totalorder %v1817, 0
        %v1819 = vsub.s32 0, %v1817
        %v1820 = vsel %vm1818, %v1819, %v1817
        %v1821 = vclz %v1820
        %v1822 = vsub.s32 %v1821, 2
        %vm1823 = vcmp.gt.s32.totalorder 0, %v1822
        %v1824 = vsel %vm1823, 0, %v1822
        %v1825 = vsub.s32 32, %v1824
        %v1826 = vshll.u32 %v1817, %v1824
        %v1827 = vshrl.u32 %v1809, %v1825
        %v1828 = vor.u32 %v1826, %v1827
        %v1829 = vsub.s32 4294967266, %v1824
        %v1830 = vadd.s32 %v1829, 127
        %v1831 = vshll.u32 %v1830, 23
        %v1832 = vor.u32 4788187, %v1831
        %v1833 = vand.u32 2147483647, %v1832
        %v1835 = vcvt.s32.f32 %v1828
        %v1836 = vmul.f32 %v1835, %v1833
        %v1837 = vxor.u32 %v1836, 2147483648
        %v1838 = vsel %vm1755, %v1837, %v1836
        %v1839 = vsub.s32 4, %v1815
        %v1840 = vsel %vm1755, %v1839, %v1815
        %v1841 = vsel %vm1754, %v1006, %v1838
        %v1842 = vsel %vm1754, 0, %v1840
        %v1843 = vcosq.f32.pop %v1841
        %v1844 = vsinq.f32.pop %v1841
        %vm1845 = vweird.f32 %v1006
        %v1846 = vand.u32 %v1842, 3
        %vm1847 = vcmp.lt.s32.totalorder %v1846, 2
        %vm1848 = vcmp.eq.s32.totalorder %v1846, 0
        %v1849 = vxor.u32 %v1844, 2147483648
        %v1850 = vsel %vm1848, %v1843, %v1849
        %vm1851 = vcmp.eq.s32.totalorder %v1846, 2
        %v1852 = vxor.u32 %v1843, 2147483648
        %v1853 = vsel %vm1851, %v1852, %v1844
        %v1854 = vsel %vm1847, %v1850, %v1853
        %v1855 = vsel %vm1845, nan, %v1854
        %v1856 = vand.u32 2147483647, %v1007
        %vm1857 = vcmp.le.f32.partialorder %v1856, 0.7853982
        %vm1858 = vcmp.lt.s32.totalorder %v1007, 0
        %v1859 = vand.u32 %v1007, 2139095040
        %v1860 = vshrl.u32 %v1859, 23
        %v1861 = vsub.s32 %v1860, 127
        %v1862 = vand.u32 2147483647, %v1007
        %v1863 = vand.u32 %v1862, 8388607
        %v1864 = vor.u32 %v1863, 8388608
        %v1865 = vsub.s32 0, %v1864
        %v1866 = vadd.s32 %v1861, 1
        %vm1867 = vcmp.gt.s32.totalorder %v1866, 0
        %v1868 = vsel %vm1867, %v1866, 0
        %v1869 = vshrl.u32 %v1868, 5
        %v1870 = vand.u32 %v1868, 31
        %v1871 = vsub.s32 32, %v1870
        %v1872 = vshrl.u32 683565275, %v1871
        %v1873 = vshll.u32 683565275, %v1870
        %v1874 = vshrl.u32 2475754826, %v1871
        %v1875 = vor.u32 %v1873, %v1874
        %v1876 = vshll.u32 2475754826, %v1870
        %v1877 = vshrl.u32 2131351028, %v1871
        %v1878 = vor.u32 %v1876, %v1877
        %v1879 = vshll.u32 2131351028, %v1870
        %v1880 = vshrl.u32 2102212464, %v1871
        %v1881 = vor.u32 %v1879, %v1880
        %v1882 = vshll.u32 2102212464, %v1870
        %v1883 = vshrl.u32 920167782, %v1871
        %v1884 = vor.u32 %v1882, %v1883
        %v1885 = vshll.u32 920167782, %v1870
        %v1886 = vshrl.u32 1326507024, %v1871
        %v1887 = vor.u32 %v1885, %v1886
        %vm1888 = vcmp.lt.s32.totalorder %v1869, 1
        %vm1889 = vcmp.lt.s32.totalorder %v1869, 2
        %vm1890 = vcmp.lt.s32.totalorder %v1869, 3
        %vm1891 = vcmp.lt.s32.totalorder %v1869, 4
        %v1892 = vsel %vm1888, %v1872, %v1875
        %v1893 = vsel %vm1891, %v1881, 2102212464
        %v1894 = vsel %vm1890, %v1878, %v1893
        %v1895 = vsel %vm1889, %v1892, %v1894
        %v1896 = vsel %vm1888, %v1875, %v1878
        %v1897 = vsel %vm1891, %v1884, 920167782
        %v1898 = vsel %vm1890, %v1881, %v1897
        %v1899 = vsel %vm1889, %v1896, %v1898
        %v1900 = vsel %vm1888, %v1878, %v1881
        %v1901 = vsel %vm1891, %v1887, 1326507024
        %v1902 = vsel %vm1890, %v1884, %v1901
        %v1903 = vsel %vm1889, %v1900, %v1902
        %v1904 = vshll.u32 %v1864, 8
        %v1905 = vmul.u32.u64.compose %v1904, %v1903
        %v1906 = vextract.low.u32 %v1905
        %v1907 = vextract.high.u32 %v1905
        %v1908 = vmul.u32.u64.compose %v1904, %v1899
        %v1909 = vextract.low.u32 %v1908
        %v1910 = vextract.high.u32 %v1908
        %v1911 = vmul.u32 %v1904, %v1895
        %v1912 = vadd.s32 %v1907, %v1909
        %vm1913 = vc.u32 %v1907, %v1909
        %v1914 = vadd.s32 %v1910, 1
        %v1915 = vsel %vm1913, %v1914, %v1910
        %v1916 = vadd.s32 %v1911, %v1915
        %v1917 = vadd.s32 %v1916, 536870912
        %v1918 = vshrl.u32 %v1917, 30
        %v1919 = vshll.u32 %v1918, 30
        %v1920 = vsub.s32 %v1916, %v1919
        %vm1921 = vcmp.lt.s32.totalorder %v1920, 0
        %v1922 = vsub.s32 0, %v1920
        %v1923 = vsel %vm1921, %v1922, %v1920
        %v1924 = vclz %v1923
        %v1925 = vsub.s32 %v1924, 2
        %vm1926 = vcmp.gt.s32.totalorder 0, %v1925
        %v1927 = vsel %vm1926, 0, %v1925
        %v1928 = vsub.s32 32, %v1927
        %v1929 = vshll.u32 %v1920, %v1927
        %v1930 = vshrl.u32 %v1912, %v1928
        %v1931 = vor.u32 %v1929, %v1930
        %v1932 = vsub.s32 4294967266, %v1927
        %v1933 = vadd.s32 %v1932, 127
        %v1934 = vshll.u32 %v1933, 23
        %v1935 = vor.u32 4788187, %v1934
        %v1936 = vand.u32 2147483647, %v1935
        %v1938 = vcvt.s32.f32 %v1931
        %v1939 = vmul.f32 %v1938, %v1936
        %v1940 = vxor.u32 %v1939, 2147483648
        %v1941 = vsel %vm1858, %v1940, %v1939
        %v1942 = vsub.s32 4, %v1918
        %v1943 = vsel %vm1858, %v1942, %v1918
        %v1944 = vsel %vm1857, %v1007, %v1941
        %v1945 = vsel %vm1857, 0, %v1943
        %v1946 = vcosq.f32.pop %v1944
        %v1947 = vsinq.f32.pop %v1944
        %vm1948 = vweird.f32 %v1007
        %v1949 = vand.u32 %v1945, 3
        %vm1950 = vcmp.lt.s32.totalorder %v1949, 2
        %vm1951 = vcmp.eq.s32.totalorder %v1949, 0
        %v1952 = vxor.u32 %v1947, 2147483648
        %v1953 = vsel %vm1951, %v1946, %v1952
        %vm1954 = vcmp.eq.s32.totalorder %v1949, 2
        %v1955 = vxor.u32 %v1946, 2147483648
        %v1956 = vsel %vm1954, %v1955, %v1947
        %v1957 = vsel %vm1950, %v1953, %v1956
        %v1958 = vsel %vm1948, nan, %v1957
        %v1959 = vlaneseq
        %v1960 = vshrl.u32 %v1959, 7
        %v1961 = vsub.s32 0, %v1960
        %v1962 = vrot.slane %v1023, %v1961
        %v1963 = vlaneseq
        %v1964 = vshrl.u32 %v1963, 7
        %v1965 = vsub.s32 0, %v1964
        %v1966 = vrot.slane %v1030, %v1965
        %v1967 = vlaneseq
        %v1968 = vshrl.u32 %v1967, 7
        %v1969 = vsub.s32 0, %v1968
        %v1970 = vrot.slane %v1031, %v1969
        %v1974 = vmul.f32 %v1962, %v1134
        %v1975 = vmul.f32 %v1962, %v1237
        %v1976 = vmul.f32 %v1962, %v1340
        %v1977 = vmul.f32 %v1966, %v1443
        %v1978 = vmul.f32 %v1966, %v1546
        %v1979 = vmul.f32 %v1966, %v1649
        %v1980 = vmul.f32 %v1970, %v1752
        %v1981 = vmul.f32 %v1970, %v1855
        %v1982 = vmul.f32 %v1970, %v1958
        %vm1983 = vcmask 261120
        %v1984 = vsel %vm1983, %v1974, 0.0
        %v1985 = vsel %vm1983, %v1977, 0.0
        %v1986 = vadd.f32 %v1984, %v1985
        %v1987 = vsel %vm1983, %v1980, 0.0
        %v1988 = vadd.f32 %v1986, %v1987
        %v1989 = vsel %vm1983, %v1975, 0.0
        %v1990 = vsel %vm1983, %v1978, 0.0
        %v1991 = vadd.f32 %v1989, %v1990
        %v1992 = vsel %vm1983, %v1981, 0.0
        %v1993 = vadd.f32 %v1991, %v1992
        %v1994 = vsel %vm1983, %v1976, 0.0
        %v1995 = vsel %vm1983, %v1979, 0.0
        %v1996 = vadd.f32 %v1994, %v1995
        %v1997 = vsel %vm1983, %v1982, 0.0
        %v1998 = vadd.f32 %v1996, %v1997
        %v1999 = vmul.f32 %v1988, 2.0
        %v2000 = vmul.f32 %v1993, 2.0
        %v2001 = vmul.f32 %v1998, 2.0
        %2002 = vst.msk [vmem:[%s891] sm:$0xff] %vm1983, %v2001
        %v2003 = vld [vmem:[%s862] sm:$0xff]
        %v2004 = vld [vmem:[%s862 + $0x8] sm:$0xff]
        %v2005 = vsub.f32 %v2003, %v1999
        %v2006 = vsub.f32 %v2004, %v2000
        %v2007 = vpack.c.bf16 %v2006, %v2005
        %v2008 = vld [vmem:[%s5] sm:$0xf]
        %v2009 = vld [vmem:[%s5 + $0x4] sm:$0xf]
        %v2010 = vld [vmem:[%s5 + $0x8] sm:$0xf]
        %v2011 = vld [vmem:[%s5 + $0xc] sm:$0xf]
        %v2012 = vld [vmem:[%s6] sm:$0x1]
        %v2014 = vlaneseq
        %v2015 = vshrl.u32 %v2014, 7
        %v2016 = vsub.s32 0, %v2015
        %v2017 = vrot.slane %v2012, %v2016
        %v2023 = vunpack.c.l.b16 %v2008
        %v2024 = vunpack.c.l.b16 %v2009
        %v2025 = vunpack.c.l.b16 %v2010
        %v2026 = vunpack.c.l.b16 %v2011
        %v2027 = vpack.c.b16 %v2024, %v2023
        %v2028 = vpack.c.b16 %v2026, %v2025
        %v2032 = vsel %vm1983, %v2007, 0
        %2034 = vmatprep.subr.bf16.mxu0 0
        %2035 = vmatpush1.bf16.msra.mxu0 0
        %2036 = vmatprep.subr.bf16.mxu0 0
        %2037 = vmatpush1.bf16.msra.mxu0 0
        %2038 = vmatprep.subr.bf16.mxu0 0
        %2039 = vmatpush1.bf16.msra.mxu0 0
        %2040 = vmatprep.subr.bf16.mxu0 0
        %2041 = vmatpush1.bf16.msra.mxu0 0
        %2042 = vmatprep.subr.bf16.mxu0 0
        %2043 = vmatpush1.bf16.msra.mxu0 0
        %2044 = vmatprep.subr.bf16.mxu0 0
        %2045 = vmatpush1.bf16.msra.mxu0 0
        %2046 = vmatprep.subr.bf16.mxu0 0
        %2047 = vmatpush1.bf16.msra.mxu0 %v2028
        %2048 = vmatprep.subr.bf16.mxu0 0
        %2049 = vmatpush1.bf16.msra.mxu0 %v2027
        %2050 = vmatprep.subr.bf16.mxu0 0
        %2051 = vmatpush2.bf16.msra.mxu0 0
        %2052 = vmatprep.subr.bf16.mxu0 0
        %2053 = vmatpush2.bf16.msra.mxu0 0
        %2054 = vmatprep.subr.bf16.mxu0 0
        %2055 = vmatpush2.bf16.msra.mxu0 0
        %2056 = vmatprep.subr.bf16.mxu0 0
        %2057 = vmatpush2.bf16.msra.mxu0 0
        %2058 = vmatprep.subr.bf16.mxu0 0
        %2059 = vmatpush2.bf16.msra.mxu0 0
        %2060 = vmatprep.subr.bf16.mxu0 0
        %2061 = vmatpush2.bf16.msra.mxu0 0
        %2062 = vmatprep.subr.bf16.mxu0 0
        %2063 = vmatpush2.bf16.msra.mxu0 0
        %2064 = vmatprep.subr.bf16.mxu0 0
        %2065 = vmatpush2.bf16.msra.mxu0 0
        %2066 = vmatprep.mubr.bf16.mxu0 0
        %2067 = vmatmul.mubr.bf16.gmra.mxu0 %v2032
        %v2068 = vpop.f32.mrf.mxu0
        %v2069 = vadd.f32 %v2017, %v2068
        %v2070 = vpop.f32.mrf.mxu0
        %v2071 = vpop.f32.mrf.mxu0
        %v2072 = vadd.f32 %v2017, %v2071
        %v2073 = vpop.f32.mrf.mxu0
        %2074 = vdwg.mxu0
        %v2075 = vld [vmem:[%s9] sm:$0xff]
        %v2076 = vld [vmem:[%s9 + $0x8] sm:$0xff]
        %v2077 = vld [vmem:[%s9 + $0x10] sm:$0xff]
        %v2078 = vld [vmem:[%s9 + $0x18] sm:$0xff]
        %v2079 = vpack.c.bf16 %v2072, %v2069
        %v2080 = vld [vmem:[%s7] sm:$0xf]
        %vm2081 = vcmask 64512
        %v2083 = vsel %vm2081, %v2079, 0
        %vm2085 = vcmask 1043456
        %v2087 = vsel %vm2085, %v2080, 0
        %2089 = vmatprep.subr.bf16.mxu0 0
        %2090 = vmatpush1.bf16.msra.mxu0 0
        %2091 = vmatprep.subr.bf16.mxu0 0
        %2092 = vmatpush1.bf16.msra.mxu0 0
        %2093 = vmatprep.subr.bf16.mxu0 0
        %2094 = vmatpush1.bf16.msra.mxu0 0
        %2095 = vmatprep.subr.bf16.mxu0 0
        %2096 = vmatpush1.bf16.msra.mxu0 0
        %2097 = vmatprep.subr.bf16.mxu0 0
        %2098 = vmatpush1.bf16.msra.mxu0 0
        %2099 = vmatprep.subr.bf16.mxu0 0
        %2100 = vmatpush1.bf16.msra.mxu0 0
        %2101 = vmatprep.subr.bf16.mxu0 0
        %2102 = vmatpush1.bf16.msra.mxu0 0
        %2103 = vmatprep.subr.bf16.mxu0 0
        %2104 = vmatpush1.bf16.msra.mxu0 %v2087
        %2105 = vmatprep.subr.bf16.mxu0 0
        %2106 = vmatpush2.bf16.msra.mxu0 0
        %2107 = vmatprep.subr.bf16.mxu0 0
        %2108 = vmatpush2.bf16.msra.mxu0 0
        %2109 = vmatprep.subr.bf16.mxu0 0
        %2110 = vmatpush2.bf16.msra.mxu0 0
        %2111 = vmatprep.subr.bf16.mxu0 0
        %2112 = vmatpush2.bf16.msra.mxu0 0
        %2113 = vmatprep.subr.bf16.mxu0 0
        %2114 = vmatpush2.bf16.msra.mxu0 0
        %2115 = vmatprep.subr.bf16.mxu0 0
        %2116 = vmatpush2.bf16.msra.mxu0 0
        %2117 = vmatprep.subr.bf16.mxu0 0
        %2118 = vmatpush2.bf16.msra.mxu0 0
        %2119 = vmatprep.subr.bf16.mxu0 0
        %2120 = vmatpush2.bf16.msra.mxu0 0
        %2121 = vmatprep.mubr.bf16.mxu0 0
        %2122 = vmatmul.mubr.bf16.gmra.mxu0 %v2083
        %v2123 = vpop.f32.mrf.mxu0
        %v2124 = vadd.f32 0.0, %v2123
        %v2125 = vpop.f32.mrf.mxu0
        %v2126 = vpop.f32.mrf.mxu0
        %v2127 = vadd.f32 0.0, %v2126
        %v2128 = vpop.f32.mrf.mxu0
        %2129 = vdwg.mxu0
        %v2130 = vld [vmem:[%s8] sm:$0xff]
        %v2131 = vld [vmem:[%s8 + $0x8] sm:$0xff]
        %v2132 = vld [vmem:[%s8 + $0x10] sm:$0xff]
        %v2133 = vld [vmem:[%s8 + $0x18] sm:$0xff]
        %vm2134 = vcmask 130048
        %v2136 = vsel %vm2134, %v2130, 0
        %v2139 = vsel %vm2134, %v2131, 0
        %v2142 = vsel %vm2134, %v2132, 0
        %v2145 = vsel %vm2134, %v2133, 0
        %2147 = vmatprep.subr.mxu0 0.0
        %2148 = vmatpush1.msra.mxu0 0.0
        %2149 = vmatprep.subr.mxu0 0.0
        %2150 = vmatpush1.msra.mxu0 0.0
        %2151 = vmatprep.subr.mxu0 0.0
        %2152 = vmatpush1.msra.mxu0 0.0
        %2153 = vmatprep.subr.mxu0 0.0
        %2154 = vmatpush1.msra.mxu0 0.0
        %2155 = vmatprep.subr.mxu0 0.0
        %2156 = vmatpush1.msra.mxu0 0.0
        %2157 = vmatprep.subr.mxu0 0.0
        %2158 = vmatpush1.msra.mxu0 0.0
        %2159 = vmatprep.subr.mxu0 0.0
        %2160 = vmatpush1.msra.mxu0 0.0
        %2161 = vmatprep.subr.mxu0 0.0
        %2162 = vmatpush1.msra.mxu0 0.0
        %2163 = vmatprep.subr.mxu0 0.0
        %2164 = vmatpush1.msra.mxu0 0.0
        %2165 = vmatprep.subr.mxu0 0.0
        %2166 = vmatpush1.msra.mxu0 0.0
        %2167 = vmatprep.subr.mxu0 0.0
        %2168 = vmatpush1.msra.mxu0 0.0
        %2169 = vmatprep.subr.mxu0 0.0
        %2170 = vmatpush1.msra.mxu0 0.0
        %2171 = vmatprep.subr.mxu0 0.0
        %2172 = vmatpush1.msra.mxu0 0.0
        %2173 = vmatprep.subr.mxu0 0.0
        %2174 = vmatpush1.msra.mxu0 0.0
        %2175 = vmatprep.subr.mxu0 0.0
        %2176 = vmatpush1.msra.mxu0 %v2127
        %2177 = vmatprep.subr.mxu0 0.0
        %2178 = vmatpush1.msra.mxu0 %v2124
        %2179 = vmatprep.subr.mxu0 0.0
        %2180 = vmatpush2.msra.mxu0 0.0
        %2181 = vmatprep.subr.mxu0 0.0
        %2182 = vmatpush2.msra.mxu0 0.0
        %2183 = vmatprep.subr.mxu0 0.0
        %2184 = vmatpush2.msra.mxu0 0.0
        %2185 = vmatprep.subr.mxu0 0.0
        %2186 = vmatpush2.msra.mxu0 0.0
        %2187 = vmatprep.subr.mxu0 0.0
        %2188 = vmatpush2.msra.mxu0 0.0
        %2189 = vmatprep.subr.mxu0 0.0
        %2190 = vmatpush2.msra.mxu0 0.0
        %2191 = vmatprep.subr.mxu0 0.0
        %2192 = vmatpush2.msra.mxu0 0.0
        %2193 = vmatprep.subr.mxu0 0.0
        %2194 = vmatpush2.msra.mxu0 0.0
        %2195 = vmatprep.subr.mxu0 0.0
        %2196 = vmatpush2.msra.mxu0 0.0
        %2197 = vmatprep.subr.mxu0 0.0
        %2198 = vmatpush2.msra.mxu0 0.0
        %2199 = vmatprep.subr.mxu0 0.0
        %2200 = vmatpush2.msra.mxu0 0.0
        %2201 = vmatprep.subr.mxu0 0.0
        %2202 = vmatpush2.msra.mxu0 0.0
        %2203 = vmatprep.subr.mxu0 0.0
        %2204 = vmatpush2.msra.mxu0 0.0
        %2205 = vmatprep.subr.mxu0 0.0
        %2206 = vmatpush2.msra.mxu0 0.0
        %2207 = vmatprep.subr.mxu0 0.0
        %2208 = vmatpush2.msra.mxu0 0.0
        %2209 = vmatprep.subr.mxu0 0.0
        %2210 = vmatpush2.msra.mxu0 0.0
        %2211 = vmatprep.mubr.f32.mxu0 0.0
        %2212 = vmatmul.mubr.f32.gmra.mxu0 %v2136
        %v2213 = vpop.f32.mrf.mxu0
        %v2214 = vadd.f32 0.0, %v2213
        %v2215 = vpop.f32.mrf.mxu0
        %2216 = vmatprep.mubr.f32.mxu0 0.0
        %2217 = vmatmul.mubr.f32.gmra.mxu0 %v2139
        %v2218 = vpop.f32.mrf.mxu0
        %v2219 = vadd.f32 0.0, %v2218
        %v2220 = vpop.f32.mrf.mxu0
        %2221 = vmatprep.mubr.f32.mxu0 0.0
        %2222 = vmatmul.mubr.f32.gmra.mxu0 %v2142
        %v2223 = vpop.f32.mrf.mxu0
        %v2224 = vadd.f32 0.0, %v2223
        %v2225 = vpop.f32.mrf.mxu0
        %2226 = vmatprep.mubr.f32.mxu0 0.0
        %2227 = vmatmul.mubr.f32.gmra.mxu0 %v2145
        %v2228 = vpop.f32.mrf.mxu0
        %v2229 = vadd.f32 0.0, %v2228
        %v2230 = vpop.f32.mrf.mxu0
        %2231 = vdwg.mxu0
        %v2232 = vadd.f32 %v2075, %v2214
        %v2233 = vadd.f32 %v2076, %v2219
        %v2234 = vadd.f32 %v2077, %v2224
        %v2235 = vadd.f32 %v2078, %v2229
        %s2236 = scalar_lea.vmem %s7, 4
        %v2237 = vld [vmem:[%s2236] sm:$0xf]
        %2239 = vrot.lane.b32.xlu0 %v2079, 120
        %v2240 = vpop.permute.xlu0 %2239
        %v2242 = vsel %vm2081, %v2240, 0
        %v2245 = vsel %vm2085, %v2237, 0
        %2247 = vmatprep.subr.bf16.mxu0 0
        %2248 = vmatpush1.bf16.msra.mxu0 0
        %2249 = vmatprep.subr.bf16.mxu0 0
        %2250 = vmatpush1.bf16.msra.mxu0 0
        %2251 = vmatprep.subr.bf16.mxu0 0
        %2252 = vmatpush1.bf16.msra.mxu0 0
        %2253 = vmatprep.subr.bf16.mxu0 0
        %2254 = vmatpush1.bf16.msra.mxu0 0
        %2255 = vmatprep.subr.bf16.mxu0 0
        %2256 = vmatpush1.bf16.msra.mxu0 0
        %2257 = vmatprep.subr.bf16.mxu0 0
        %2258 = vmatpush1.bf16.msra.mxu0 0
        %2259 = vmatprep.subr.bf16.mxu0 0
        %2260 = vmatpush1.bf16.msra.mxu0 0
        %2261 = vmatprep.subr.bf16.mxu0 0
        %2262 = vmatpush1.bf16.msra.mxu0 %v2245
        %2263 = vmatprep.subr.bf16.mxu0 0
        %2264 = vmatpush2.bf16.msra.mxu0 0
        %2265 = vmatprep.subr.bf16.mxu0 0
        %2266 = vmatpush2.bf16.msra.mxu0 0
        %2267 = vmatprep.subr.bf16.mxu0 0
        %2268 = vmatpush2.bf16.msra.mxu0 0
        %2269 = vmatprep.subr.bf16.mxu0 0
        %2270 = vmatpush2.bf16.msra.mxu0 0
        %2271 = vmatprep.subr.bf16.mxu0 0
        %2272 = vmatpush2.bf16.msra.mxu0 0
        %2273 = vmatprep.subr.bf16.mxu0 0
        %2274 = vmatpush2.bf16.msra.mxu0 0
        %2275 = vmatprep.subr.bf16.mxu0 0
        %2276 = vmatpush2.bf16.msra.mxu0 0
        %2277 = vmatprep.subr.bf16.mxu0 0
        %2278 = vmatpush2.bf16.msra.mxu0 0
        %2279 = vmatprep.mubr.bf16.mxu0 0
        %2280 = vmatmul.mubr.bf16.gmra.mxu0 %v2242
        %v2281 = vpop.f32.mrf.mxu0
        %v2282 = vadd.f32 0.0, %v2281
        %v2283 = vpop.f32.mrf.mxu0
        %v2284 = vpop.f32.mrf.mxu0
        %v2285 = vadd.f32 0.0, %v2284
        %v2286 = vpop.f32.mrf.mxu0
        %2287 = vdwg.mxu0
        %s2288 = scalar_lea.vmem %s8, 32
        %v2289 = vld [vmem:[%s2288] sm:$0xff]
        %v2290 = vld [vmem:[%s2288 + $0x8] sm:$0xff]
        %v2291 = vld [vmem:[%s2288 + $0x10] sm:$0xff]
        %v2292 = vld [vmem:[%s2288 + $0x18] sm:$0xff]
        %v2294 = vsel %vm2134, %v2289, 0
        %v2297 = vsel %vm2134, %v2290, 0
        %v2300 = vsel %vm2134, %v2291, 0
        %v2303 = vsel %vm2134, %v2292, 0
        %2305 = vmatprep.subr.mxu0 0.0
        %2306 = vmatpush1.msra.mxu0 0.0
        %2307 = vmatprep.subr.mxu0 0.0
        %2308 = vmatpush1.msra.mxu0 0.0
        %2309 = vmatprep.subr.mxu0 0.0
        %2310 = vmatpush1.msra.mxu0 0.0
        %2311 = vmatprep.subr.mxu0 0.0
        %2312 = vmatpush1.msra.mxu0 0.0
        %2313 = vmatprep.subr.mxu0 0.0
        %2314 = vmatpush1.msra.mxu0 0.0
        %2315 = vmatprep.subr.mxu0 0.0
        %2316 = vmatpush1.msra.mxu0 0.0
        %2317 = vmatprep.subr.mxu0 0.0
        %2318 = vmatpush1.msra.mxu0 0.0
        %2319 = vmatprep.subr.mxu0 0.0
        %2320 = vmatpush1.msra.mxu0 0.0
        %2321 = vmatprep.subr.mxu0 0.0
        %2322 = vmatpush1.msra.mxu0 0.0
        %2323 = vmatprep.subr.mxu0 0.0
        %2324 = vmatpush1.msra.mxu0 0.0
        %2325 = vmatprep.subr.mxu0 0.0
        %2326 = vmatpush1.msra.mxu0 0.0
        %2327 = vmatprep.subr.mxu0 0.0
        %2328 = vmatpush1.msra.mxu0 0.0
        %2329 = vmatprep.subr.mxu0 0.0
        %2330 = vmatpush1.msra.mxu0 0.0
        %2331 = vmatprep.subr.mxu0 0.0
        %2332 = vmatpush1.msra.mxu0 0.0
        %2333 = vmatprep.subr.mxu0 0.0
        %2334 = vmatpush1.msra.mxu0 %v2285
        %2335 = vmatprep.subr.mxu0 0.0
        %2336 = vmatpush1.msra.mxu0 %v2282
        %2337 = vmatprep.subr.mxu0 0.0
        %2338 = vmatpush2.msra.mxu0 0.0
        %2339 = vmatprep.subr.mxu0 0.0
        %2340 = vmatpush2.msra.mxu0 0.0
        %2341 = vmatprep.subr.mxu0 0.0
        %2342 = vmatpush2.msra.mxu0 0.0
        %2343 = vmatprep.subr.mxu0 0.0
        %2344 = vmatpush2.msra.mxu0 0.0
        %2345 = vmatprep.subr.mxu0 0.0
        %2346 = vmatpush2.msra.mxu0 0.0
        %2347 = vmatprep.subr.mxu0 0.0
        %2348 = vmatpush2.msra.mxu0 0.0
        %2349 = vmatprep.subr.mxu0 0.0
        %2350 = vmatpush2.msra.mxu0 0.0
        %2351 = vmatprep.subr.mxu0 0.0
        %2352 = vmatpush2.msra.mxu0 0.0
        %2353 = vmatprep.subr.mxu0 0.0
        %2354 = vmatpush2.msra.mxu0 0.0
        %2355 = vmatprep.subr.mxu0 0.0
        %2356 = vmatpush2.msra.mxu0 0.0
        %2357 = vmatprep.subr.mxu0 0.0
        %2358 = vmatpush2.msra.mxu0 0.0
        %2359 = vmatprep.subr.mxu0 0.0
        %2360 = vmatpush2.msra.mxu0 0.0
        %2361 = vmatprep.subr.mxu0 0.0
        %2362 = vmatpush2.msra.mxu0 0.0
        %2363 = vmatprep.subr.mxu0 0.0
        %2364 = vmatpush2.msra.mxu0 0.0
        %2365 = vmatprep.subr.mxu0 0.0
        %2366 = vmatpush2.msra.mxu0 0.0
        %2367 = vmatprep.subr.mxu0 0.0
        %2368 = vmatpush2.msra.mxu0 0.0
        %2369 = vmatprep.mubr.f32.mxu0 0.0
        %2370 = vmatmul.mubr.f32.gmra.mxu0 %v2294
        %v2371 = vpop.f32.mrf.mxu0
        %v2372 = vadd.f32 0.0, %v2371
        %v2373 = vpop.f32.mrf.mxu0
        %2374 = vmatprep.mubr.f32.mxu0 0.0
        %2375 = vmatmul.mubr.f32.gmra.mxu0 %v2297
        %v2376 = vpop.f32.mrf.mxu0
        %v2377 = vadd.f32 0.0, %v2376
        %v2378 = vpop.f32.mrf.mxu0
        %2379 = vmatprep.mubr.f32.mxu0 0.0
        %2380 = vmatmul.mubr.f32.gmra.mxu0 %v2300
        %v2381 = vpop.f32.mrf.mxu0
        %v2382 = vadd.f32 0.0, %v2381
        %v2383 = vpop.f32.mrf.mxu0
        %2384 = vmatprep.mubr.f32.mxu0 0.0
        %2385 = vmatmul.mubr.f32.gmra.mxu0 %v2303
        %v2386 = vpop.f32.mrf.mxu0
        %v2387 = vadd.f32 0.0, %v2386
        %v2388 = vpop.f32.mrf.mxu0
        %2389 = vdwg.mxu0
        %v2390 = vadd.f32 %v2232, %v2372
        %v2391 = vadd.f32 %v2233, %v2377
        %v2392 = vadd.f32 %v2234, %v2382
        %v2393 = vadd.f32 %v2235, %v2387
        %s2394 = scalar_lea.vmem %s7, 8
        %v2395 = vld [vmem:[%s2394] sm:$0xf]
        %2396 = vrot.lane.b32.xlu0 %v2079, 112
        %v2397 = vpop.permute.xlu0 %2396
        %v2399 = vsel %vm2081, %v2397, 0
        %v2402 = vsel %vm2085, %v2395, 0
        %2404 = vmatprep.subr.bf16.mxu0 0
        %2405 = vmatpush1.bf16.msra.mxu0 0
        %2406 = vmatprep.subr.bf16.mxu0 0
        %2407 = vmatpush1.bf16.msra.mxu0 0
        %2408 = vmatprep.subr.bf16.mxu0 0
        %2409 = vmatpush1.bf16.msra.mxu0 0
        %2410 = vmatprep.subr.bf16.mxu0 0
        %2411 = vmatpush1.bf16.msra.mxu0 0
        %2412 = vmatprep.subr.bf16.mxu0 0
        %2413 = vmatpush1.bf16.msra.mxu0 0
        %2414 = vmatprep.subr.bf16.mxu0 0
        %2415 = vmatpush1.bf16.msra.mxu0 0
        %2416 = vmatprep.subr.bf16.mxu0 0
        %2417 = vmatpush1.bf16.msra.mxu0 0
        %2418 = vmatprep.subr.bf16.mxu0 0
        %2419 = vmatpush1.bf16.msra.mxu0 %v2402
        %2420 = vmatprep.subr.bf16.mxu0 0
        %2421 = vmatpush2.bf16.msra.mxu0 0
        %2422 = vmatprep.subr.bf16.mxu0 0
        %2423 = vmatpush2.bf16.msra.mxu0 0
        %2424 = vmatprep.subr.bf16.mxu0 0
        %2425 = vmatpush2.bf16.msra.mxu0 0
        %2426 = vmatprep.subr.bf16.mxu0 0
        %2427 = vmatpush2.bf16.msra.mxu0 0
        %2428 = vmatprep.subr.bf16.mxu0 0
        %2429 = vmatpush2.bf16.msra.mxu0 0
        %2430 = vmatprep.subr.bf16.mxu0 0
        %2431 = vmatpush2.bf16.msra.mxu0 0
        %2432 = vmatprep.subr.bf16.mxu0 0
        %2433 = vmatpush2.bf16.msra.mxu0 0
        %2434 = vmatprep.subr.bf16.mxu0 0
        %2435 = vmatpush2.bf16.msra.mxu0 0
        %2436 = vmatprep.mubr.bf16.mxu0 0
        %2437 = vmatmul.mubr.bf16.gmra.mxu0 %v2399
        %v2438 = vpop.f32.mrf.mxu0
        %v2439 = vadd.f32 0.0, %v2438
        %v2440 = vpop.f32.mrf.mxu0
        %v2441 = vpop.f32.mrf.mxu0
        %v2442 = vadd.f32 0.0, %v2441
        %v2443 = vpop.f32.mrf.mxu0
        %2444 = vdwg.mxu0
        %s2445 = scalar_lea.vmem %s8, 64
        %v2446 = vld [vmem:[%s2445] sm:$0xff]
        %v2447 = vld [vmem:[%s2445 + $0x8] sm:$0xff]
        %v2448 = vld [vmem:[%s2445 + $0x10] sm:$0xff]
        %v2449 = vld [vmem:[%s2445 + $0x18] sm:$0xff]
        %v2451 = vsel %vm2134, %v2446, 0
        %v2454 = vsel %vm2134, %v2447, 0
        %v2457 = vsel %vm2134, %v2448, 0
        %v2460 = vsel %vm2134, %v2449, 0
        %2462 = vmatprep.subr.mxu0 0.0
        %2463 = vmatpush1.msra.mxu0 0.0
        %2464 = vmatprep.subr.mxu0 0.0
        %2465 = vmatpush1.msra.mxu0 0.0
        %2466 = vmatprep.subr.mxu0 0.0
        %2467 = vmatpush1.msra.mxu0 0.0
        %2468 = vmatprep.subr.mxu0 0.0
        %2469 = vmatpush1.msra.mxu0 0.0
        %2470 = vmatprep.subr.mxu0 0.0
        %2471 = vmatpush1.msra.mxu0 0.0
        %2472 = vmatprep.subr.mxu0 0.0
        %2473 = vmatpush1.msra.mxu0 0.0
        %2474 = vmatprep.subr.mxu0 0.0
        %2475 = vmatpush1.msra.mxu0 0.0
        %2476 = vmatprep.subr.mxu0 0.0
        %2477 = vmatpush1.msra.mxu0 0.0
        %2478 = vmatprep.subr.mxu0 0.0
        %2479 = vmatpush1.msra.mxu0 0.0
        %2480 = vmatprep.subr.mxu0 0.0
        %2481 = vmatpush1.msra.mxu0 0.0
        %2482 = vmatprep.subr.mxu0 0.0
        %2483 = vmatpush1.msra.mxu0 0.0
        %2484 = vmatprep.subr.mxu0 0.0
        %2485 = vmatpush1.msra.mxu0 0.0
        %2486 = vmatprep.subr.mxu0 0.0
        %2487 = vmatpush1.msra.mxu0 0.0
        %2488 = vmatprep.subr.mxu0 0.0
        %2489 = vmatpush1.msra.mxu0 0.0
        %2490 = vmatprep.subr.mxu0 0.0
        %2491 = vmatpush1.msra.mxu0 %v2442
        %2492 = vmatprep.subr.mxu0 0.0
        %2493 = vmatpush1.msra.mxu0 %v2439
        %2494 = vmatprep.subr.mxu0 0.0
        %2495 = vmatpush2.msra.mxu0 0.0
        %2496 = vmatprep.subr.mxu0 0.0
        %2497 = vmatpush2.msra.mxu0 0.0
        %2498 = vmatprep.subr.mxu0 0.0
        %2499 = vmatpush2.msra.mxu0 0.0
        %2500 = vmatprep.subr.mxu0 0.0
        %2501 = vmatpush2.msra.mxu0 0.0
        %2502 = vmatprep.subr.mxu0 0.0
        %2503 = vmatpush2.msra.mxu0 0.0
        %2504 = vmatprep.subr.mxu0 0.0
        %2505 = vmatpush2.msra.mxu0 0.0
        %2506 = vmatprep.subr.mxu0 0.0
        %2507 = vmatpush2.msra.mxu0 0.0
        %2508 = vmatprep.subr.mxu0 0.0
        %2509 = vmatpush2.msra.mxu0 0.0
        %2510 = vmatprep.subr.mxu0 0.0
        %2511 = vmatpush2.msra.mxu0 0.0
        %2512 = vmatprep.subr.mxu0 0.0
        %2513 = vmatpush2.msra.mxu0 0.0
        %2514 = vmatprep.subr.mxu0 0.0
        %2515 = vmatpush2.msra.mxu0 0.0
        %2516 = vmatprep.subr.mxu0 0.0
        %2517 = vmatpush2.msra.mxu0 0.0
        %2518 = vmatprep.subr.mxu0 0.0
        %2519 = vmatpush2.msra.mxu0 0.0
        %2520 = vmatprep.subr.mxu0 0.0
        %2521 = vmatpush2.msra.mxu0 0.0
        %2522 = vmatprep.subr.mxu0 0.0
        %2523 = vmatpush2.msra.mxu0 0.0
        %2524 = vmatprep.subr.mxu0 0.0
        %2525 = vmatpush2.msra.mxu0 0.0
        %2526 = vmatprep.mubr.f32.mxu0 0.0
        %2527 = vmatmul.mubr.f32.gmra.mxu0 %v2451
        %v2528 = vpop.f32.mrf.mxu0
        %v2529 = vadd.f32 0.0, %v2528
        %v2530 = vpop.f32.mrf.mxu0
        %2531 = vmatprep.mubr.f32.mxu0 0.0
        %2532 = vmatmul.mubr.f32.gmra.mxu0 %v2454
        %v2533 = vpop.f32.mrf.mxu0
        %v2534 = vadd.f32 0.0, %v2533
        %v2535 = vpop.f32.mrf.mxu0
        %2536 = vmatprep.mubr.f32.mxu0 0.0
        %2537 = vmatmul.mubr.f32.gmra.mxu0 %v2457
        %v2538 = vpop.f32.mrf.mxu0
        %v2539 = vadd.f32 0.0, %v2538
        %v2540 = vpop.f32.mrf.mxu0
        %2541 = vmatprep.mubr.f32.mxu0 0.0
        %2542 = vmatmul.mubr.f32.gmra.mxu0 %v2460
        %v2543 = vpop.f32.mrf.mxu0
        %v2544 = vadd.f32 0.0, %v2543
        %v2545 = vpop.f32.mrf.mxu0
        %2546 = vdwg.mxu0
        %v2547 = vadd.f32 %v2390, %v2529
        %v2548 = vadd.f32 %v2391, %v2534
        %v2549 = vadd.f32 %v2392, %v2539
        %v2550 = vadd.f32 %v2393, %v2544
        %s2551 = scalar_lea.vmem %s7, 12
        %v2552 = vld [vmem:[%s2551] sm:$0xf]
        %2553 = vrot.lane.b32.xlu0 %v2079, 104
        %v2554 = vpop.permute.xlu0 %2553
        %v2556 = vsel %vm2081, %v2554, 0
        %v2559 = vsel %vm2085, %v2552, 0
        %2561 = vmatprep.subr.bf16.mxu0 0
        %2562 = vmatpush1.bf16.msra.mxu0 0
        %2563 = vmatprep.subr.bf16.mxu0 0
        %2564 = vmatpush1.bf16.msra.mxu0 0
        %2565 = vmatprep.subr.bf16.mxu0 0
        %2566 = vmatpush1.bf16.msra.mxu0 0
        %2567 = vmatprep.subr.bf16.mxu0 0
        %2568 = vmatpush1.bf16.msra.mxu0 0
        %2569 = vmatprep.subr.bf16.mxu0 0
        %2570 = vmatpush1.bf16.msra.mxu0 0
        %2571 = vmatprep.subr.bf16.mxu0 0
        %2572 = vmatpush1.bf16.msra.mxu0 0
        %2573 = vmatprep.subr.bf16.mxu0 0
        %2574 = vmatpush1.bf16.msra.mxu0 0
        %2575 = vmatprep.subr.bf16.mxu0 0
        %2576 = vmatpush1.bf16.msra.mxu0 %v2559
        %2577 = vmatprep.subr.bf16.mxu0 0
        %2578 = vmatpush2.bf16.msra.mxu0 0
        %2579 = vmatprep.subr.bf16.mxu0 0
        %2580 = vmatpush2.bf16.msra.mxu0 0
        %2581 = vmatprep.subr.bf16.mxu0 0
        %2582 = vmatpush2.bf16.msra.mxu0 0
        %2583 = vmatprep.subr.bf16.mxu0 0
        %2584 = vmatpush2.bf16.msra.mxu0 0
        %2585 = vmatprep.subr.bf16.mxu0 0
        %2586 = vmatpush2.bf16.msra.mxu0 0
        %2587 = vmatprep.subr.bf16.mxu0 0
        %2588 = vmatpush2.bf16.msra.mxu0 0
        %2589 = vmatprep.subr.bf16.mxu0 0
        %2590 = vmatpush2.bf16.msra.mxu0 0
        %2591 = vmatprep.subr.bf16.mxu0 0
        %2592 = vmatpush2.bf16.msra.mxu0 0
        %2593 = vmatprep.mubr.bf16.mxu0 0
        %2594 = vmatmul.mubr.bf16.gmra.mxu0 %v2556
        %v2595 = vpop.f32.mrf.mxu0
        %v2596 = vadd.f32 0.0, %v2595
        %v2597 = vpop.f32.mrf.mxu0
        %v2598 = vpop.f32.mrf.mxu0
        %v2599 = vadd.f32 0.0, %v2598
        %v2600 = vpop.f32.mrf.mxu0
        %2601 = vdwg.mxu0
        %s2602 = scalar_lea.vmem %s8, 96
        %v2603 = vld [vmem:[%s2602] sm:$0xff]
        %v2604 = vld [vmem:[%s2602 + $0x8] sm:$0xff]
        %v2605 = vld [vmem:[%s2602 + $0x10] sm:$0xff]
        %v2606 = vld [vmem:[%s2602 + $0x18] sm:$0xff]
        %v2608 = vsel %vm2134, %v2603, 0
        %v2611 = vsel %vm2134, %v2604, 0
        %v2614 = vsel %vm2134, %v2605, 0
        %v2617 = vsel %vm2134, %v2606, 0
        %2619 = vmatprep.subr.mxu0 0.0
        %2620 = vmatpush1.msra.mxu0 0.0
        %2621 = vmatprep.subr.mxu0 0.0
        %2622 = vmatpush1.msra.mxu0 0.0
        %2623 = vmatprep.subr.mxu0 0.0
        %2624 = vmatpush1.msra.mxu0 0.0
        %2625 = vmatprep.subr.mxu0 0.0
        %2626 = vmatpush1.msra.mxu0 0.0
        %2627 = vmatprep.subr.mxu0 0.0
        %2628 = vmatpush1.msra.mxu0 0.0
        %2629 = vmatprep.subr.mxu0 0.0
        %2630 = vmatpush1.msra.mxu0 0.0
        %2631 = vmatprep.subr.mxu0 0.0
        %2632 = vmatpush1.msra.mxu0 0.0
        %2633 = vmatprep.subr.mxu0 0.0
        %2634 = vmatpush1.msra.mxu0 0.0
        %2635 = vmatprep.subr.mxu0 0.0
        %2636 = vmatpush1.msra.mxu0 0.0
        %2637 = vmatprep.subr.mxu0 0.0
        %2638 = vmatpush1.msra.mxu0 0.0
        %2639 = vmatprep.subr.mxu0 0.0
        %2640 = vmatpush1.msra.mxu0 0.0
        %2641 = vmatprep.subr.mxu0 0.0
        %2642 = vmatpush1.msra.mxu0 0.0
        %2643 = vmatprep.subr.mxu0 0.0
        %2644 = vmatpush1.msra.mxu0 0.0
        %2645 = vmatprep.subr.mxu0 0.0
        %2646 = vmatpush1.msra.mxu0 0.0
        %2647 = vmatprep.subr.mxu0 0.0
        %2648 = vmatpush1.msra.mxu0 %v2599
        %2649 = vmatprep.subr.mxu0 0.0
        %2650 = vmatpush1.msra.mxu0 %v2596
        %2651 = vmatprep.subr.mxu0 0.0
        %2652 = vmatpush2.msra.mxu0 0.0
        %2653 = vmatprep.subr.mxu0 0.0
        %2654 = vmatpush2.msra.mxu0 0.0
        %2655 = vmatprep.subr.mxu0 0.0
        %2656 = vmatpush2.msra.mxu0 0.0
        %2657 = vmatprep.subr.mxu0 0.0
        %2658 = vmatpush2.msra.mxu0 0.0
        %2659 = vmatprep.subr.mxu0 0.0
        %2660 = vmatpush2.msra.mxu0 0.0
        %2661 = vmatprep.subr.mxu0 0.0
        %2662 = vmatpush2.msra.mxu0 0.0
        %2663 = vmatprep.subr.mxu0 0.0
        %2664 = vmatpush2.msra.mxu0 0.0
        %2665 = vmatprep.subr.mxu0 0.0
        %2666 = vmatpush2.msra.mxu0 0.0
        %2667 = vmatprep.subr.mxu0 0.0
        %2668 = vmatpush2.msra.mxu0 0.0
        %2669 = vmatprep.subr.mxu0 0.0
        %2670 = vmatpush2.msra.mxu0 0.0
        %2671 = vmatprep.subr.mxu0 0.0
        %2672 = vmatpush2.msra.mxu0 0.0
        %2673 = vmatprep.subr.mxu0 0.0
        %2674 = vmatpush2.msra.mxu0 0.0
        %2675 = vmatprep.subr.mxu0 0.0
        %2676 = vmatpush2.msra.mxu0 0.0
        %2677 = vmatprep.subr.mxu0 0.0
        %2678 = vmatpush2.msra.mxu0 0.0
        %2679 = vmatprep.subr.mxu0 0.0
        %2680 = vmatpush2.msra.mxu0 0.0
        %2681 = vmatprep.subr.mxu0 0.0
        %2682 = vmatpush2.msra.mxu0 0.0
        %2683 = vmatprep.mubr.f32.mxu0 0.0
        %2684 = vmatmul.mubr.f32.gmra.mxu0 %v2608
        %v2685 = vpop.f32.mrf.mxu0
        %v2686 = vadd.f32 0.0, %v2685
        %v2687 = vpop.f32.mrf.mxu0
        %2688 = vmatprep.mubr.f32.mxu0 0.0
        %2689 = vmatmul.mubr.f32.gmra.mxu0 %v2611
        %v2690 = vpop.f32.mrf.mxu0
        %v2691 = vadd.f32 0.0, %v2690
        %v2692 = vpop.f32.mrf.mxu0
        %2693 = vmatprep.mubr.f32.mxu0 0.0
        %2694 = vmatmul.mubr.f32.gmra.mxu0 %v2614
        %v2695 = vpop.f32.mrf.mxu0
        %v2696 = vadd.f32 0.0, %v2695
        %v2697 = vpop.f32.mrf.mxu0
        %2698 = vmatprep.mubr.f32.mxu0 0.0
        %2699 = vmatmul.mubr.f32.gmra.mxu0 %v2617
        %v2700 = vpop.f32.mrf.mxu0
        %v2701 = vadd.f32 0.0, %v2700
        %v2702 = vpop.f32.mrf.mxu0
        %2703 = vdwg.mxu0
        %v2704 = vadd.f32 %v2547, %v2686
        %v2705 = vadd.f32 %v2548, %v2691
        %v2706 = vadd.f32 %v2549, %v2696
        %v2707 = vadd.f32 %v2550, %v2701
        %vm2708 = vcmask 261127
        %2709 = vst.msk [vmem:[%s887 - $0x7] sm:$0x80] %vm2708, %v2705
        %v2710 = vsub.f32 %v2005, %v2704
        %v2711 = vsub.f32 %v2006, %v2705
        %v2712 = vld [vmem:[%s10] sm:$0x1]
        %v2713 = vld [vmem:[%s11] sm:$0x1]
        %v2714 = vsel %vm1983, %v2710, 0.0
        %2715 = vadd.xlane.f32.xlu0 %v2714
        %v2716 = vpop.xlane.xlu0 %2715
        %v2717 = vsel %vm1983, %v2711, 0.0
        %2718 = vadd.xlane.f32.xlu0 %v2717
        %v2719 = vpop.xlane.xlu0 %2718
        %v2720 = vrcp.pop 32.0
        %v2721 = vmul.f32 %v2716, %v2720
        %v2722 = vmul.f32 %v2719, %v2720
        %v2723 = vsub.f32 %v2710, %v2721
        %v2724 = vsub.f32 %v2711, %v2722
        %v2725 = vmul.f32 %v2723, %v2723
        %v2726 = vmul.f32 %v2724, %v2724
        %v2727 = vsel %vm1983, %v2725, 0.0
        %2728 = vadd.xlane.f32.xlu0 %v2727
        %v2729 = vpop.xlane.xlu0 %2728
        %v2730 = vsel %vm1983, %v2726, 0.0
        %2731 = vadd.xlane.f32.xlu0 %v2730
        %v2732 = vpop.xlane.xlu0 %2731
        %v2733 = vmul.f32 %v2729, %v2720
        %v2734 = vmul.f32 %v2732, %v2720
        %v2735 = vadd.f32 %v2733, 1e-05
        %v2736 = vadd.f32 %v2734, 1e-05
        %v2737 = vrsqrt.pop %v2735
        %v2738 = vrsqrt.pop %v2736
        %v2739 = vmul.f32 %v2723, %v2737
        %v2740 = vmul.f32 %v2724, %v2738
        %v2742 = vlaneseq
        %v2743 = vshrl.u32 %v2742, 7
        %v2744 = vsub.s32 0, %v2743
        %v2745 = vrot.slane %v2712, %v2744
        %v2747 = vmul.f32 %v2739, %v2745
        %v2748 = vmul.f32 %v2740, %v2745
        %v2750 = vlaneseq
        %v2751 = vshrl.u32 %v2750, 7
        %v2752 = vsub.s32 0, %v2751
        %v2753 = vrot.slane %v2713, %v2752
        %v2755 = vadd.f32 %v2747, %v2753
        %v2756 = vadd.f32 %v2748, %v2753
        %v2757 = vpack.c.bf16 %v2756, %v2755
        %v2758 = vld [vmem:[%s12] sm:$0xf]
        %v2759 = vld [vmem:[%s12 + $0x4] sm:$0xf]
        %v2760 = vld [vmem:[%s12 + $0x8] sm:$0xf]
        %v2761 = vld [vmem:[%s12 + $0xc] sm:$0xf]
        %v2766 = vunpack.c.l.b16 %v2758
        %v2767 = vunpack.c.l.b16 %v2759
        %v2768 = vunpack.c.l.b16 %v2760
        %v2769 = vunpack.c.l.b16 %v2761
        %v2770 = vpack.c.b16 %v2767, %v2766
        %v2771 = vpack.c.b16 %v2769, %v2768
        %v2775 = vsel %vm1983, %v2757, 0
        %2777 = vmatprep.subr.bf16.mxu0 0
        %2778 = vmatpush1.bf16.msra.mxu0 0
        %2779 = vmatprep.subr.bf16.mxu0 0
        %2780 = vmatpush1.bf16.msra.mxu0 0
        %2781 = vmatprep.subr.bf16.mxu0 0
        %2782 = vmatpush1.bf16.msra.mxu0 0
        %2783 = vmatprep.subr.bf16.mxu0 0
        %2784 = vmatpush1.bf16.msra.mxu0 0
        %2785 = vmatprep.subr.bf16.mxu0 0
        %2786 = vmatpush1.bf16.msra.mxu0 0
        %2787 = vmatprep.subr.bf16.mxu0 0
        %2788 = vmatpush1.bf16.msra.mxu0 0
        %2789 = vmatprep.subr.bf16.mxu0 0
        %2790 = vmatpush1.bf16.msra.mxu0 %v2771
        %2791 = vmatprep.subr.bf16.mxu0 0
        %2792 = vmatpush1.bf16.msra.mxu0 %v2770
        %2793 = vmatprep.subr.bf16.mxu0 0
        %2794 = vmatpush2.bf16.msra.mxu0 0
        %2795 = vmatprep.subr.bf16.mxu0 0
        %2796 = vmatpush2.bf16.msra.mxu0 0
        %2797 = vmatprep.subr.bf16.mxu0 0
        %2798 = vmatpush2.bf16.msra.mxu0 0
        %2799 = vmatprep.subr.bf16.mxu0 0
        %2800 = vmatpush2.bf16.msra.mxu0 0
        %2801 = vmatprep.subr.bf16.mxu0 0
        %2802 = vmatpush2.bf16.msra.mxu0 0
        %2803 = vmatprep.subr.bf16.mxu0 0
        %2804 = vmatpush2.bf16.msra.mxu0 0
        %2805 = vmatprep.subr.bf16.mxu0 0
        %2806 = vmatpush2.bf16.msra.mxu0 0
        %2807 = vmatprep.subr.bf16.mxu0 0
        %2808 = vmatpush2.bf16.msra.mxu0 0
        %2809 = vmatprep.mubr.bf16.mxu0 0
        %2810 = vmatmul.mubr.bf16.gmra.mxu0 %v2775
        %v2811 = vpop.f32.mrf.mxu0
        %v2812 = vadd.f32 0.0, %v2811
        %v2813 = vpop.f32.mrf.mxu0
        %v2814 = vpop.f32.mrf.mxu0
        %v2815 = vadd.f32 0.0, %v2814
        %v2816 = vpop.f32.mrf.mxu0
        %2817 = vdwg.mxu0
        %v2818 = vxor.u32 %v2812, 2147483648
        %v2819 = vxor.u32 %v2815, 2147483648
        %v2820 = vmul.f32 %v2818, 1.442695
        %v2821 = vpow.pop %v2820
        %v2822 = vmul.f32 %v2819, 1.442695
        %v2823 = vpow.pop %v2822
        %v2824 = vadd.f32 %v2821, 1.0
        %v2825 = vadd.f32 %v2823, 1.0
        %v2826 = vrcp.pop %v2824
        %v2827 = vmul.f32 1.0, %v2826
        %v2828 = vrcp.pop %v2825
        %v2829 = vmul.f32 1.0, %v2828
        %v2830 = vpack.c.bf16 %v2829, %v2827
        %v2831 = vld [vmem:[%s13] sm:$0xf]
        %v2832 = vld [vmem:[%s13 + $0x4] sm:$0xf]
        %v2833 = vld [vmem:[%s13 + $0x8] sm:$0xf]
        %v2834 = vld [vmem:[%s13 + $0xc] sm:$0xf]
        %v2835 = vld [vmem:[%s13 + $0x10] sm:$0xf]
        %v2836 = vld [vmem:[%s13 + $0x14] sm:$0xf]
        %v2837 = vld [vmem:[%s13 + $0x18] sm:$0xf]
        %v2838 = vld [vmem:[%s13 + $0x1c] sm:$0xf]
        %v2847 = vunpack.c.l.b16 %v2831
        %v2848 = vunpack.c.l.b16 %v2832
        %v2849 = vunpack.c.l.b16 %v2833
        %v2850 = vunpack.c.l.b16 %v2834
        %v2851 = vunpack.c.l.b16 %v2835
        %v2852 = vunpack.c.l.b16 %v2836
        %v2853 = vunpack.c.l.b16 %v2837
        %v2854 = vunpack.c.l.b16 %v2838
        %v2855 = vpack.c.b16 %v2848, %v2847
        %v2856 = vpack.c.b16 %v2850, %v2849
        %v2857 = vpack.c.b16 %v2852, %v2851
        %v2858 = vpack.c.b16 %v2854, %v2853
        %vm2863 = vcmask 523264
        %v2865 = vsel %vm2863, %v2830, 0
        %2867 = vmatprep.subr.bf16.mxu0 0
        %2868 = vmatpush1.bf16.msra.mxu0 0
        %2869 = vmatprep.subr.bf16.mxu0 0
        %2870 = vmatpush1.bf16.msra.mxu0 0
        %2871 = vmatprep.subr.bf16.mxu0 0
        %2872 = vmatpush1.bf16.msra.mxu0 0
        %2873 = vmatprep.subr.bf16.mxu0 0
        %2874 = vmatpush1.bf16.msra.mxu0 0
        %2875 = vmatprep.subr.bf16.mxu0 0
        %2876 = vmatpush1.bf16.msra.mxu0 %v2858
        %2877 = vmatprep.subr.bf16.mxu0 0
        %2878 = vmatpush1.bf16.msra.mxu0 %v2857
        %2879 = vmatprep.subr.bf16.mxu0 0
        %2880 = vmatpush1.bf16.msra.mxu0 %v2856
        %2881 = vmatprep.subr.bf16.mxu0 0
        %2882 = vmatpush1.bf16.msra.mxu0 %v2855
        %2883 = vmatprep.subr.bf16.mxu0 0
        %2884 = vmatpush2.bf16.msra.mxu0 0
        %2885 = vmatprep.subr.bf16.mxu0 0
        %2886 = vmatpush2.bf16.msra.mxu0 0
        %2887 = vmatprep.subr.bf16.mxu0 0
        %2888 = vmatpush2.bf16.msra.mxu0 0
        %2889 = vmatprep.subr.bf16.mxu0 0
        %2890 = vmatpush2.bf16.msra.mxu0 0
        %2891 = vmatprep.subr.bf16.mxu0 0
        %2892 = vmatpush2.bf16.msra.mxu0 0
        %2893 = vmatprep.subr.bf16.mxu0 0
        %2894 = vmatpush2.bf16.msra.mxu0 0
        %2895 = vmatprep.subr.bf16.mxu0 0
        %2896 = vmatpush2.bf16.msra.mxu0 0
        %2897 = vmatprep.subr.bf16.mxu0 0
        %2898 = vmatpush2.bf16.msra.mxu0 0
        %2899 = vmatprep.mubr.bf16.mxu0 0
        %2900 = vmatmul.mubr.bf16.gmra.mxu0 %v2865
        %v2901 = vpop.f32.mrf.mxu0
        %v2902 = vadd.f32 0.0, %v2901
        %v2903 = vpop.f32.mrf.mxu0
        %v2904 = vpop.f32.mrf.mxu0
        %v2905 = vadd.f32 0.0, %v2904
        %v2906 = vpop.f32.mrf.mxu0
        %2907 = vdwg.mxu0
        %v2908 = vadd.f32 %v2755, %v2902
        %v2909 = vadd.f32 %v2756, %v2905
        %v2910 = vld [vmem:[%s14] sm:$0x1]
        %v2911 = vld [vmem:[%s15] sm:$0x1]
        %v2912 = vsel %vm1983, %v2908, 0.0
        %2913 = vadd.xlane.f32.xlu0 %v2912
        %v2914 = vpop.xlane.xlu0 %2913
        %v2915 = vsel %vm1983, %v2909, 0.0
        %2916 = vadd.xlane.f32.xlu0 %v2915
        %v2917 = vpop.xlane.xlu0 %2916
        %v2918 = vmul.f32 %v2914, %v2720
        %v2919 = vmul.f32 %v2917, %v2720
        %v2920 = vsub.f32 %v2908, %v2918
        %v2921 = vsub.f32 %v2909, %v2919
        %v2922 = vmul.f32 %v2920, %v2920
        %v2923 = vmul.f32 %v2921, %v2921
        %v2924 = vsel %vm1983, %v2922, 0.0
        %2925 = vadd.xlane.f32.xlu0 %v2924
        %v2926 = vpop.xlane.xlu0 %2925
        %v2927 = vsel %vm1983, %v2923, 0.0
        %2928 = vadd.xlane.f32.xlu0 %v2927
        %v2929 = vpop.xlane.xlu0 %2928
        %v2930 = vmul.f32 %v2926, %v2720
        %v2931 = vmul.f32 %v2929, %v2720
        %v2932 = vadd.f32 %v2930, 1e-05
        %v2933 = vadd.f32 %v2931, 1e-05
        %v2934 = vrsqrt.pop %v2932
        %v2935 = vrsqrt.pop %v2933
        %v2936 = vmul.f32 %v2920, %v2934
        %v2937 = vmul.f32 %v2921, %v2935
        %v2939 = vlaneseq
        %v2940 = vshrl.u32 %v2939, 7
        %v2941 = vsub.s32 0, %v2940
        %v2942 = vrot.slane %v2910, %v2941
        %v2944 = vmul.f32 %v2936, %v2942
        %v2945 = vmul.f32 %v2937, %v2942
        %v2947 = vlaneseq
        %v2948 = vshrl.u32 %v2947, 7
        %v2949 = vsub.s32 0, %v2948
        %v2950 = vrot.slane %v2911, %v2949
        %v2952 = vadd.f32 %v2944, %v2950
        %v2953 = vadd.f32 %v2945, %v2950
        %2954 = vst.msk [vmem:[%s839] sm:$0xff] %vm1983, %v2952
        %2955 = vst.msk [vmem:[%s839 + $0x8] sm:$0xff] %vm1983, %v2953
        %v2956 = vpack.c.bf16 %v2707, %v2706
        %v2957 = vld [vmem:[%s16] sm:$0xf]
        %v2958 = vld [vmem:[%s16 + $0x4] sm:$0xf]
        %v2959 = vld [vmem:[%s16 + $0x8] sm:$0xf]
        %v2960 = vld [vmem:[%s16 + $0xc] sm:$0xf]
        %v2961 = vld [vmem:[%s17] sm:$0x1]
        %v2963 = vlaneseq
        %v2964 = vshrl.u32 %v2963, 7
        %v2965 = vsub.s32 0, %v2964
        %v2966 = vrot.slane %v2961, %v2965
        %v2972 = vunpack.c.l.b16 %v2957
        %v2973 = vunpack.c.l.b16 %v2958
        %v2974 = vunpack.c.l.b16 %v2959
        %v2975 = vunpack.c.l.b16 %v2960
        %v2976 = vpack.c.b16 %v2973, %v2972
        %v2977 = vpack.c.b16 %v2975, %v2974
        %v2981 = vsel %vm1983, %v2956, 0
        %2983 = vmatprep.subr.bf16.mxu0 0
        %2984 = vmatpush1.bf16.msra.mxu0 0
        %2985 = vmatprep.subr.bf16.mxu0 0
        %2986 = vmatpush1.bf16.msra.mxu0 0
        %2987 = vmatprep.subr.bf16.mxu0 0
        %2988 = vmatpush1.bf16.msra.mxu0 0
        %2989 = vmatprep.subr.bf16.mxu0 0
        %2990 = vmatpush1.bf16.msra.mxu0 0
        %2991 = vmatprep.subr.bf16.mxu0 0
        %2992 = vmatpush1.bf16.msra.mxu0 0
        %2993 = vmatprep.subr.bf16.mxu0 0
        %2994 = vmatpush1.bf16.msra.mxu0 0
        %2995 = vmatprep.subr.bf16.mxu0 0
        %2996 = vmatpush1.bf16.msra.mxu0 %v2977
        %2997 = vmatprep.subr.bf16.mxu0 0
        %2998 = vmatpush1.bf16.msra.mxu0 %v2976
        %2999 = vmatprep.subr.bf16.mxu0 0
        %3000 = vmatpush2.bf16.msra.mxu0 0
        %3001 = vmatprep.subr.bf16.mxu0 0
        %3002 = vmatpush2.bf16.msra.mxu0 0
        %3003 = vmatprep.subr.bf16.mxu0 0
        %3004 = vmatpush2.bf16.msra.mxu0 0
        %3005 = vmatprep.subr.bf16.mxu0 0
        %3006 = vmatpush2.bf16.msra.mxu0 0
        %3007 = vmatprep.subr.bf16.mxu0 0
        %3008 = vmatpush2.bf16.msra.mxu0 0
        %3009 = vmatprep.subr.bf16.mxu0 0
        %3010 = vmatpush2.bf16.msra.mxu0 0
        %3011 = vmatprep.subr.bf16.mxu0 0
        %3012 = vmatpush2.bf16.msra.mxu0 0
        %3013 = vmatprep.subr.bf16.mxu0 0
        %3014 = vmatpush2.bf16.msra.mxu0 0
        %3015 = vmatprep.mubr.bf16.mxu0 0
        %3016 = vmatmul.mubr.bf16.gmra.mxu0 %v2981
        %v3017 = vpop.f32.mrf.mxu0
        %v3018 = vadd.f32 %v2966, %v3017
        %v3019 = vpop.f32.mrf.mxu0
        %v3020 = vpop.f32.mrf.mxu0
        %v3021 = vadd.f32 %v2966, %v3020
        %v3022 = vpop.f32.mrf.mxu0
        %3023 = vdwg.mxu0
        %v3024 = vpack.c.bf16 %v2000, %v1999
        %v3025 = vld [vmem:[%s18] sm:$0xf]
        %v3026 = vld [vmem:[%s18 + $0x4] sm:$0xf]
        %v3027 = vld [vmem:[%s18 + $0x8] sm:$0xf]
        %v3028 = vld [vmem:[%s18 + $0xc] sm:$0xf]
        %v3029 = vld [vmem:[%s19] sm:$0x1]
        %v3031 = vlaneseq
        %v3032 = vshrl.u32 %v3031, 7
        %v3033 = vsub.s32 0, %v3032
        %v3034 = vrot.slane %v3029, %v3033
        %v3040 = vunpack.c.l.b16 %v3025
        %v3041 = vunpack.c.l.b16 %v3026
        %v3042 = vunpack.c.l.b16 %v3027
        %v3043 = vunpack.c.l.b16 %v3028
        %v3044 = vpack.c.b16 %v3041, %v3040
        %v3045 = vpack.c.b16 %v3043, %v3042
        %v3049 = vsel %vm1983, %v3024, 0
        %3051 = vmatprep.subr.bf16.mxu0 0
        %3052 = vmatpush1.bf16.msra.mxu0 0
        %3053 = vmatprep.subr.bf16.mxu0 0
        %3054 = vmatpush1.bf16.msra.mxu0 0
        %3055 = vmatprep.subr.bf16.mxu0 0
        %3056 = vmatpush1.bf16.msra.mxu0 0
        %3057 = vmatprep.subr.bf16.mxu0 0
        %3058 = vmatpush1.bf16.msra.mxu0 0
        %3059 = vmatprep.subr.bf16.mxu0 0
        %3060 = vmatpush1.bf16.msra.mxu0 0
        %3061 = vmatprep.subr.bf16.mxu0 0
        %3062 = vmatpush1.bf16.msra.mxu0 0
        %3063 = vmatprep.subr.bf16.mxu0 0
        %3064 = vmatpush1.bf16.msra.mxu0 %v3045
        %3065 = vmatprep.subr.bf16.mxu0 0
        %3066 = vmatpush1.bf16.msra.mxu0 %v3044
        %3067 = vmatprep.subr.bf16.mxu0 0
        %3068 = vmatpush2.bf16.msra.mxu0 0
        %3069 = vmatprep.subr.bf16.mxu0 0
        %3070 = vmatpush2.bf16.msra.mxu0 0
        %3071 = vmatprep.subr.bf16.mxu0 0
        %3072 = vmatpush2.bf16.msra.mxu0 0
        %3073 = vmatprep.subr.bf16.mxu0 0
        %3074 = vmatpush2.bf16.msra.mxu0 0
        %3075 = vmatprep.subr.bf16.mxu0 0
        %3076 = vmatpush2.bf16.msra.mxu0 0
        %3077 = vmatprep.subr.bf16.mxu0 0
        %3078 = vmatpush2.bf16.msra.mxu0 0
        %3079 = vmatprep.subr.bf16.mxu0 0
        %3080 = vmatpush2.bf16.msra.mxu0 0
        %3081 = vmatprep.subr.bf16.mxu0 0
        %3082 = vmatpush2.bf16.msra.mxu0 0
        %3083 = vmatprep.mubr.bf16.mxu0 0
        %3084 = vmatmul.mubr.bf16.gmra.mxu0 %v3049
        %v3085 = vpop.f32.mrf.mxu0
        %v3086 = vadd.f32 %v3034, %v3085
        %v3087 = vpop.f32.mrf.mxu0
        %v3088 = vpop.f32.mrf.mxu0
        %v3089 = vadd.f32 %v3034, %v3088
        %v3090 = vpop.f32.mrf.mxu0
        %3091 = vdwg.mxu0
        %v3092 = vld [vmem:[%s879] sm:$0xff]
        %v3093 = vld [vmem:[%s879 + $0x8] sm:$0xff]
        %v3094 = vsub.f32 %v3092, %v3086
        %v3095 = vsub.f32 %v3093, %v3089
        %v3096 = vld [vmem:[%s22] sm:$0xff]
        %v3097 = vld [vmem:[%s22 + $0x8] sm:$0xff]
        %v3098 = vld [vmem:[%s20] sm:$0xff]
        %v3099 = vld [vmem:[%s20 + $0x8] sm:$0xff]
        %v3100 = vld [vmem:[%s20 + $0x10] sm:$0xff]
        %v3101 = vld [vmem:[%s20 + $0x18] sm:$0xff]
        %v3102 = vld [vmem:[%s20 + $0x20] sm:$0xff]
        %v3103 = vld [vmem:[%s20 + $0x28] sm:$0xff]
        %v3104 = vld [vmem:[%s20 + $0x30] sm:$0xff]
        %v3105 = vld [vmem:[%s20 + $0x38] sm:$0xff]
        %v3106 = vld [vmem:[%s20 + $0x40] sm:$0xff]
        %v3107 = vld [vmem:[%s20 + $0x48] sm:$0xff]
        %v3108 = vld [vmem:[%s20 + $0x50] sm:$0xff]
        %v3109 = vld [vmem:[%s20 + $0x58] sm:$0xff]
        %v3110 = vld [vmem:[%s20 + $0x60] sm:$0xff]
        %v3111 = vld [vmem:[%s20 + $0x68] sm:$0xff]
        %v3112 = vld [vmem:[%s20 + $0x70] sm:$0xff]
        %v3113 = vld [vmem:[%s20 + $0x78] sm:$0xff]
        %v3114 = vld [vmem:[%s20 + $0x80] sm:$0xff]
        %v3115 = vld [vmem:[%s20 + $0x88] sm:$0xff]
        %v3116 = vld [vmem:[%s20 + $0x90] sm:$0xff]
        %v3117 = vld [vmem:[%s20 + $0x98] sm:$0xff]
        %v3118 = vld [vmem:[%s20 + $0xa0] sm:$0xff]
        %v3119 = vld [vmem:[%s20 + $0xa8] sm:$0xff]
        %v3120 = vld [vmem:[%s20 + $0xb0] sm:$0xff]
        %v3121 = vld [vmem:[%s20 + $0xb8] sm:$0xff]
        %v3122 = vld [vmem:[%s20 + $0xc0] sm:$0xff]
        %v3123 = vld [vmem:[%s20 + $0xc8] sm:$0xff]
        %v3124 = vld [vmem:[%s20 + $0xd0] sm:$0xff]
        %v3125 = vld [vmem:[%s20 + $0xd8] sm:$0xff]
        %v3126 = vld [vmem:[%s20 + $0xe0] sm:$0xff]
        %v3127 = vld [vmem:[%s20 + $0xe8] sm:$0xff]
        %v3128 = vld [vmem:[%s20 + $0xf0] sm:$0xff]
        %v3129 = vld [vmem:[%s20 + $0xf8] sm:$0xff]
        %v3130 = vmul.f32 %v3098, %v3094
        %v3131 = vmul.f32 %v3099, %v3095
        %v3132 = vmul.f32 %v3100, %v3094
        %v3133 = vmul.f32 %v3101, %v3095
        %v3134 = vmul.f32 %v3102, %v3094
        %v3135 = vmul.f32 %v3103, %v3095
        %v3136 = vmul.f32 %v3104, %v3094
        %v3137 = vmul.f32 %v3105, %v3095
        %v3138 = vmul.f32 %v3106, %v3094
        %v3139 = vmul.f32 %v3107, %v3095
        %v3140 = vmul.f32 %v3108, %v3094
        %v3141 = vmul.f32 %v3109, %v3095
        %v3142 = vmul.f32 %v3110, %v3094
        %v3143 = vmul.f32 %v3111, %v3095
        %v3144 = vmul.f32 %v3112, %v3094
        %v3145 = vmul.f32 %v3113, %v3095
        %v3146 = vmul.f32 %v3114, %v3094
        %v3147 = vmul.f32 %v3115, %v3095
        %v3148 = vmul.f32 %v3116, %v3094
        %v3149 = vmul.f32 %v3117, %v3095
        %v3150 = vmul.f32 %v3118, %v3094
        %v3151 = vmul.f32 %v3119, %v3095
        %v3152 = vmul.f32 %v3120, %v3094
        %v3153 = vmul.f32 %v3121, %v3095
        %v3154 = vmul.f32 %v3122, %v3094
        %v3155 = vmul.f32 %v3123, %v3095
        %v3156 = vmul.f32 %v3124, %v3094
        %v3157 = vmul.f32 %v3125, %v3095
        %v3158 = vmul.f32 %v3126, %v3094
        %v3159 = vmul.f32 %v3127, %v3095
        %v3160 = vmul.f32 %v3128, %v3094
        %v3161 = vmul.f32 %v3129, %v3095
        %vm3162 = vcmask 31744
        %v3163 = vsel %vm3162, %v3130, 0.0
        %v3164 = vsel %vm3162, %v3131, 0.0
        %v3165 = vadd.f32 %v3163, %v3164
        %v3166 = vrot.slane %v3165, 4
        %v3167 = vadd.f32 %v3165, %v3166
        %v3168 = vrot.slane %v3167, 2
        %v3169 = vadd.f32 %v3167, %v3168
        %v3170 = vrot.slane %v3169, 1
        %v3171 = vadd.f32 %v3169, %v3170
        %v3172 = vsel %vm3162, %v3132, 0.0
        %v3173 = vsel %vm3162, %v3133, 0.0
        %v3174 = vadd.f32 %v3172, %v3173
        %v3175 = vrot.slane %v3174, 4
        %v3176 = vadd.f32 %v3174, %v3175
        %v3177 = vrot.slane %v3176, 2
        %v3178 = vadd.f32 %v3176, %v3177
        %v3179 = vrot.slane %v3178, 1
        %v3180 = vadd.f32 %v3178, %v3179
        %v3181 = vsel %vm3162, %v3134, 0.0
        %v3182 = vsel %vm3162, %v3135, 0.0
        %v3183 = vadd.f32 %v3181, %v3182
        %v3184 = vrot.slane %v3183, 4
        %v3185 = vadd.f32 %v3183, %v3184
        %v3186 = vrot.slane %v3185, 2
        %v3187 = vadd.f32 %v3185, %v3186
        %v3188 = vrot.slane %v3187, 1
        %v3189 = vadd.f32 %v3187, %v3188
        %v3190 = vsel %vm3162, %v3136, 0.0
        %v3191 = vsel %vm3162, %v3137, 0.0
        %v3192 = vadd.f32 %v3190, %v3191
        %v3193 = vrot.slane %v3192, 4
        %v3194 = vadd.f32 %v3192, %v3193
        %v3195 = vrot.slane %v3194, 2
        %v3196 = vadd.f32 %v3194, %v3195
        %v3197 = vrot.slane %v3196, 1
        %v3198 = vadd.f32 %v3196, %v3197
        %v3199 = vsel %vm3162, %v3138, 0.0
        %v3200 = vsel %vm3162, %v3139, 0.0
        %v3201 = vadd.f32 %v3199, %v3200
        %v3202 = vrot.slane %v3201, 4
        %v3203 = vadd.f32 %v3201, %v3202
        %v3204 = vrot.slane %v3203, 2
        %v3205 = vadd.f32 %v3203, %v3204
        %v3206 = vrot.slane %v3205, 1
        %v3207 = vadd.f32 %v3205, %v3206
        %v3208 = vsel %vm3162, %v3140, 0.0
        %v3209 = vsel %vm3162, %v3141, 0.0
        %v3210 = vadd.f32 %v3208, %v3209
        %v3211 = vrot.slane %v3210, 4
        %v3212 = vadd.f32 %v3210, %v3211
        %v3213 = vrot.slane %v3212, 2
        %v3214 = vadd.f32 %v3212, %v3213
        %v3215 = vrot.slane %v3214, 1
        %v3216 = vadd.f32 %v3214, %v3215
        %v3217 = vsel %vm3162, %v3142, 0.0
        %v3218 = vsel %vm3162, %v3143, 0.0
        %v3219 = vadd.f32 %v3217, %v3218
        %v3220 = vrot.slane %v3219, 4
        %v3221 = vadd.f32 %v3219, %v3220
        %v3222 = vrot.slane %v3221, 2
        %v3223 = vadd.f32 %v3221, %v3222
        %v3224 = vrot.slane %v3223, 1
        %v3225 = vadd.f32 %v3223, %v3224
        %v3226 = vsel %vm3162, %v3144, 0.0
        %v3227 = vsel %vm3162, %v3145, 0.0
        %v3228 = vadd.f32 %v3226, %v3227
        %v3229 = vrot.slane %v3228, 4
        %v3230 = vadd.f32 %v3228, %v3229
        %v3231 = vrot.slane %v3230, 2
        %v3232 = vadd.f32 %v3230, %v3231
        %v3233 = vrot.slane %v3232, 1
        %v3234 = vadd.f32 %v3232, %v3233
        %v3235 = vsel %vm3162, %v3146, 0.0
        %v3236 = vsel %vm3162, %v3147, 0.0
        %v3237 = vadd.f32 %v3235, %v3236
        %v3238 = vrot.slane %v3237, 4
        %v3239 = vadd.f32 %v3237, %v3238
        %v3240 = vrot.slane %v3239, 2
        %v3241 = vadd.f32 %v3239, %v3240
        %v3242 = vrot.slane %v3241, 1
        %v3243 = vadd.f32 %v3241, %v3242
        %v3244 = vsel %vm3162, %v3148, 0.0
        %v3245 = vsel %vm3162, %v3149, 0.0
        %v3246 = vadd.f32 %v3244, %v3245
        %v3247 = vrot.slane %v3246, 4
        %v3248 = vadd.f32 %v3246, %v3247
        %v3249 = vrot.slane %v3248, 2
        %v3250 = vadd.f32 %v3248, %v3249
        %v3251 = vrot.slane %v3250, 1
        %v3252 = vadd.f32 %v3250, %v3251
        %v3253 = vsel %vm3162, %v3150, 0.0
        %v3254 = vsel %vm3162, %v3151, 0.0
        %v3255 = vadd.f32 %v3253, %v3254
        %v3256 = vrot.slane %v3255, 4
        %v3257 = vadd.f32 %v3255, %v3256
        %v3258 = vrot.slane %v3257, 2
        %v3259 = vadd.f32 %v3257, %v3258
        %v3260 = vrot.slane %v3259, 1
        %v3261 = vadd.f32 %v3259, %v3260
        %v3262 = vsel %vm3162, %v3152, 0.0
        %v3263 = vsel %vm3162, %v3153, 0.0
        %v3264 = vadd.f32 %v3262, %v3263
        %v3265 = vrot.slane %v3264, 4
        %v3266 = vadd.f32 %v3264, %v3265
        %v3267 = vrot.slane %v3266, 2
        %v3268 = vadd.f32 %v3266, %v3267
        %v3269 = vrot.slane %v3268, 1
        %v3270 = vadd.f32 %v3268, %v3269
        %v3271 = vsel %vm3162, %v3154, 0.0
        %v3272 = vsel %vm3162, %v3155, 0.0
        %v3273 = vadd.f32 %v3271, %v3272
        %v3274 = vrot.slane %v3273, 4
        %v3275 = vadd.f32 %v3273, %v3274
        %v3276 = vrot.slane %v3275, 2
        %v3277 = vadd.f32 %v3275, %v3276
        %v3278 = vrot.slane %v3277, 1
        %v3279 = vadd.f32 %v3277, %v3278
        %v3280 = vsel %vm3162, %v3156, 0.0
        %v3281 = vsel %vm3162, %v3157, 0.0
        %v3282 = vadd.f32 %v3280, %v3281
        %v3283 = vrot.slane %v3282, 4
        %v3284 = vadd.f32 %v3282, %v3283
        %v3285 = vrot.slane %v3284, 2
        %v3286 = vadd.f32 %v3284, %v3285
        %v3287 = vrot.slane %v3286, 1
        %v3288 = vadd.f32 %v3286, %v3287
        %v3289 = vsel %vm3162, %v3158, 0.0
        %v3290 = vsel %vm3162, %v3159, 0.0
        %v3291 = vadd.f32 %v3289, %v3290
        %v3292 = vrot.slane %v3291, 4
        %v3293 = vadd.f32 %v3291, %v3292
        %v3294 = vrot.slane %v3293, 2
        %v3295 = vadd.f32 %v3293, %v3294
        %v3296 = vrot.slane %v3295, 1
        %v3297 = vadd.f32 %v3295, %v3296
        %v3298 = vsel %vm3162, %v3160, 0.0
        %v3299 = vsel %vm3162, %v3161, 0.0
        %v3300 = vadd.f32 %v3298, %v3299
        %v3301 = vrot.slane %v3300, 4
        %v3302 = vadd.f32 %v3300, %v3301
        %v3303 = vrot.slane %v3302, 2
        %v3304 = vadd.f32 %v3302, %v3303
        %v3305 = vrot.slane %v3304, 1
        %v3306 = vadd.f32 %v3304, %v3305
        %vm3323 = vcmask 1041409
        %v3324 = vsel %vm3323, %v3180, %v3171
        %vm3325 = vcmask 1042434
        %v3326 = vsel %vm3325, %v3189, %v3324
        %vm3327 = vcmask 1043459
        %v3328 = vsel %vm3327, %v3198, %v3326
        %vm3329 = vcmask 1044484
        %v3330 = vsel %vm3329, %v3207, %v3328
        %vm3331 = vcmask 1045509
        %v3332 = vsel %vm3331, %v3216, %v3330
        %vm3333 = vcmask 1046534
        %v3334 = vsel %vm3333, %v3225, %v3332
        %vm3335 = vcmask 1047559
        %v3336 = vsel %vm3335, %v3234, %v3334
        %v3337 = vsel %vm3323, %v3252, %v3243
        %v3338 = vsel %vm3325, %v3261, %v3337
        %v3339 = vsel %vm3327, %v3270, %v3338
        %v3340 = vsel %vm3329, %v3279, %v3339
        %v3341 = vsel %vm3331, %v3288, %v3340
        %v3342 = vsel %vm3333, %v3297, %v3341
        %v3343 = vsel %vm3335, %v3306, %v3342
        %v3346 = vadd.f32 %v3096, %v3336
        %v3347 = vadd.f32 %v3097, %v3343
        %v3348 = vld [vmem:[%s21] sm:$0xff]
        %v3349 = vld [vmem:[%s21 + $0x8] sm:$0xff]
        %v3350 = vld [vmem:[%s21 + $0x10] sm:$0xff]
        %v3351 = vld [vmem:[%s21 + $0x18] sm:$0xff]
        %v3352 = vld [vmem:[%s21 + $0x20] sm:$0xff]
        %v3353 = vld [vmem:[%s21 + $0x28] sm:$0xff]
        %v3354 = vld [vmem:[%s21 + $0x30] sm:$0xff]
        %v3355 = vld [vmem:[%s21 + $0x38] sm:$0xff]
        %v3356 = vld [vmem:[%s21 + $0x40] sm:$0xff]
        %v3357 = vld [vmem:[%s21 + $0x48] sm:$0xff]
        %v3358 = vld [vmem:[%s21 + $0x50] sm:$0xff]
        %v3359 = vld [vmem:[%s21 + $0x58] sm:$0xff]
        %v3360 = vld [vmem:[%s21 + $0x60] sm:$0xff]
        %v3361 = vld [vmem:[%s21 + $0x68] sm:$0xff]
        %v3362 = vld [vmem:[%s21 + $0x70] sm:$0xff]
        %v3363 = vld [vmem:[%s21 + $0x78] sm:$0xff]
        %v3364 = vld [vmem:[%s21 + $0x80] sm:$0xff]
        %v3365 = vld [vmem:[%s21 + $0x88] sm:$0xff]
        %v3366 = vld [vmem:[%s21 + $0x90] sm:$0xff]
        %v3367 = vld [vmem:[%s21 + $0x98] sm:$0xff]
        %v3368 = vld [vmem:[%s21 + $0xa0] sm:$0xff]
        %v3369 = vld [vmem:[%s21 + $0xa8] sm:$0xff]
        %v3370 = vld [vmem:[%s21 + $0xb0] sm:$0xff]
        %v3371 = vld [vmem:[%s21 + $0xb8] sm:$0xff]
        %v3372 = vld [vmem:[%s21 + $0xc0] sm:$0xff]
        %v3373 = vld [vmem:[%s21 + $0xc8] sm:$0xff]
        %v3374 = vld [vmem:[%s21 + $0xd0] sm:$0xff]
        %v3375 = vld [vmem:[%s21 + $0xd8] sm:$0xff]
        %v3376 = vld [vmem:[%s21 + $0xe0] sm:$0xff]
        %v3377 = vld [vmem:[%s21 + $0xe8] sm:$0xff]
        %v3378 = vld [vmem:[%s21 + $0xf0] sm:$0xff]
        %v3379 = vld [vmem:[%s21 + $0xf8] sm:$0xff]
        %v3380 = vmul.f32 %v3348, %v3018
        %v3381 = vmul.f32 %v3349, %v3021
        %v3382 = vmul.f32 %v3350, %v3018
        %v3383 = vmul.f32 %v3351, %v3021
        %v3384 = vmul.f32 %v3352, %v3018
        %v3385 = vmul.f32 %v3353, %v3021
        %v3386 = vmul.f32 %v3354, %v3018
        %v3387 = vmul.f32 %v3355, %v3021
        %v3388 = vmul.f32 %v3356, %v3018
        %v3389 = vmul.f32 %v3357, %v3021
        %v3390 = vmul.f32 %v3358, %v3018
        %v3391 = vmul.f32 %v3359, %v3021
        %v3392 = vmul.f32 %v3360, %v3018
        %v3393 = vmul.f32 %v3361, %v3021
        %v3394 = vmul.f32 %v3362, %v3018
        %v3395 = vmul.f32 %v3363, %v3021
        %v3396 = vmul.f32 %v3364, %v3018
        %v3397 = vmul.f32 %v3365, %v3021
        %v3398 = vmul.f32 %v3366, %v3018
        %v3399 = vmul.f32 %v3367, %v3021
        %v3400 = vmul.f32 %v3368, %v3018
        %v3401 = vmul.f32 %v3369, %v3021
        %v3402 = vmul.f32 %v3370, %v3018
        %v3403 = vmul.f32 %v3371, %v3021
        %v3404 = vmul.f32 %v3372, %v3018
        %v3405 = vmul.f32 %v3373, %v3021
        %v3406 = vmul.f32 %v3374, %v3018
        %v3407 = vmul.f32 %v3375, %v3021
        %v3408 = vmul.f32 %v3376, %v3018
        %v3409 = vmul.f32 %v3377, %v3021
        %v3410 = vmul.f32 %v3378, %v3018
        %v3411 = vmul.f32 %v3379, %v3021
        %v3412 = vsel %vm3162, %v3380, 0.0
        %v3413 = vsel %vm3162, %v3381, 0.0
        %v3414 = vadd.f32 %v3412, %v3413
        %v3415 = vrot.slane %v3414, 4
        %v3416 = vadd.f32 %v3414, %v3415
        %v3417 = vrot.slane %v3416, 2
        %v3418 = vadd.f32 %v3416, %v3417
        %v3419 = vrot.slane %v3418, 1
        %v3420 = vadd.f32 %v3418, %v3419
        %v3421 = vsel %vm3162, %v3382, 0.0
        %v3422 = vsel %vm3162, %v3383, 0.0
        %v3423 = vadd.f32 %v3421, %v3422
        %v3424 = vrot.slane %v3423, 4
        %v3425 = vadd.f32 %v3423, %v3424
        %v3426 = vrot.slane %v3425, 2
        %v3427 = vadd.f32 %v3425, %v3426
        %v3428 = vrot.slane %v3427, 1
        %v3429 = vadd.f32 %v3427, %v3428
        %v3430 = vsel %vm3162, %v3384, 0.0
        %v3431 = vsel %vm3162, %v3385, 0.0
        %v3432 = vadd.f32 %v3430, %v3431
        %v3433 = vrot.slane %v3432, 4
        %v3434 = vadd.f32 %v3432, %v3433
        %v3435 = vrot.slane %v3434, 2
        %v3436 = vadd.f32 %v3434, %v3435
        %v3437 = vrot.slane %v3436, 1
        %v3438 = vadd.f32 %v3436, %v3437
        %v3439 = vsel %vm3162, %v3386, 0.0
        %v3440 = vsel %vm3162, %v3387, 0.0
        %v3441 = vadd.f32 %v3439, %v3440
        %v3442 = vrot.slane %v3441, 4
        %v3443 = vadd.f32 %v3441, %v3442
        %v3444 = vrot.slane %v3443, 2
        %v3445 = vadd.f32 %v3443, %v3444
        %v3446 = vrot.slane %v3445, 1
        %v3447 = vadd.f32 %v3445, %v3446
        %v3448 = vsel %vm3162, %v3388, 0.0
        %v3449 = vsel %vm3162, %v3389, 0.0
        %v3450 = vadd.f32 %v3448, %v3449
        %v3451 = vrot.slane %v3450, 4
        %v3452 = vadd.f32 %v3450, %v3451
        %v3453 = vrot.slane %v3452, 2
        %v3454 = vadd.f32 %v3452, %v3453
        %v3455 = vrot.slane %v3454, 1
        %v3456 = vadd.f32 %v3454, %v3455
        %v3457 = vsel %vm3162, %v3390, 0.0
        %v3458 = vsel %vm3162, %v3391, 0.0
        %v3459 = vadd.f32 %v3457, %v3458
        %v3460 = vrot.slane %v3459, 4
        %v3461 = vadd.f32 %v3459, %v3460
        %v3462 = vrot.slane %v3461, 2
        %v3463 = vadd.f32 %v3461, %v3462
        %v3464 = vrot.slane %v3463, 1
        %v3465 = vadd.f32 %v3463, %v3464
        %v3466 = vsel %vm3162, %v3392, 0.0
        %v3467 = vsel %vm3162, %v3393, 0.0
        %v3468 = vadd.f32 %v3466, %v3467
        %v3469 = vrot.slane %v3468, 4
        %v3470 = vadd.f32 %v3468, %v3469
        %v3471 = vrot.slane %v3470, 2
        %v3472 = vadd.f32 %v3470, %v3471
        %v3473 = vrot.slane %v3472, 1
        %v3474 = vadd.f32 %v3472, %v3473
        %v3475 = vsel %vm3162, %v3394, 0.0
        %v3476 = vsel %vm3162, %v3395, 0.0
        %v3477 = vadd.f32 %v3475, %v3476
        %v3478 = vrot.slane %v3477, 4
        %v3479 = vadd.f32 %v3477, %v3478
        %v3480 = vrot.slane %v3479, 2
        %v3481 = vadd.f32 %v3479, %v3480
        %v3482 = vrot.slane %v3481, 1
        %v3483 = vadd.f32 %v3481, %v3482
        %v3484 = vsel %vm3162, %v3396, 0.0
        %v3485 = vsel %vm3162, %v3397, 0.0
        %v3486 = vadd.f32 %v3484, %v3485
        %v3487 = vrot.slane %v3486, 4
        %v3488 = vadd.f32 %v3486, %v3487
        %v3489 = vrot.slane %v3488, 2
        %v3490 = vadd.f32 %v3488, %v3489
        %v3491 = vrot.slane %v3490, 1
        %v3492 = vadd.f32 %v3490, %v3491
        %v3493 = vsel %vm3162, %v3398, 0.0
        %v3494 = vsel %vm3162, %v3399, 0.0
        %v3495 = vadd.f32 %v3493, %v3494
        %v3496 = vrot.slane %v3495, 4
        %v3497 = vadd.f32 %v3495, %v3496
        %v3498 = vrot.slane %v3497, 2
        %v3499 = vadd.f32 %v3497, %v3498
        %v3500 = vrot.slane %v3499, 1
        %v3501 = vadd.f32 %v3499, %v3500
        %v3502 = vsel %vm3162, %v3400, 0.0
        %v3503 = vsel %vm3162, %v3401, 0.0
        %v3504 = vadd.f32 %v3502, %v3503
        %v3505 = vrot.slane %v3504, 4
        %v3506 = vadd.f32 %v3504, %v3505
        %v3507 = vrot.slane %v3506, 2
        %v3508 = vadd.f32 %v3506, %v3507
        %v3509 = vrot.slane %v3508, 1
        %v3510 = vadd.f32 %v3508, %v3509
        %v3511 = vsel %vm3162, %v3402, 0.0
        %v3512 = vsel %vm3162, %v3403, 0.0
        %v3513 = vadd.f32 %v3511, %v3512
        %v3514 = vrot.slane %v3513, 4
        %v3515 = vadd.f32 %v3513, %v3514
        %v3516 = vrot.slane %v3515, 2
        %v3517 = vadd.f32 %v3515, %v3516
        %v3518 = vrot.slane %v3517, 1
        %v3519 = vadd.f32 %v3517, %v3518
        %v3520 = vsel %vm3162, %v3404, 0.0
        %v3521 = vsel %vm3162, %v3405, 0.0
        %v3522 = vadd.f32 %v3520, %v3521
        %v3523 = vrot.slane %v3522, 4
        %v3524 = vadd.f32 %v3522, %v3523
        %v3525 = vrot.slane %v3524, 2
        %v3526 = vadd.f32 %v3524, %v3525
        %v3527 = vrot.slane %v3526, 1
        %v3528 = vadd.f32 %v3526, %v3527
        %v3529 = vsel %vm3162, %v3406, 0.0
        %v3530 = vsel %vm3162, %v3407, 0.0
        %v3531 = vadd.f32 %v3529, %v3530
        %v3532 = vrot.slane %v3531, 4
        %v3533 = vadd.f32 %v3531, %v3532
        %v3534 = vrot.slane %v3533, 2
        %v3535 = vadd.f32 %v3533, %v3534
        %v3536 = vrot.slane %v3535, 1
        %v3537 = vadd.f32 %v3535, %v3536
        %v3538 = vsel %vm3162, %v3408, 0.0
        %v3539 = vsel %vm3162, %v3409, 0.0
        %v3540 = vadd.f32 %v3538, %v3539
        %v3541 = vrot.slane %v3540, 4
        %v3542 = vadd.f32 %v3540, %v3541
        %v3543 = vrot.slane %v3542, 2
        %v3544 = vadd.f32 %v3542, %v3543
        %v3545 = vrot.slane %v3544, 1
        %v3546 = vadd.f32 %v3544, %v3545
        %v3547 = vsel %vm3162, %v3410, 0.0
        %v3548 = vsel %vm3162, %v3411, 0.0
        %v3549 = vadd.f32 %v3547, %v3548
        %v3550 = vrot.slane %v3549, 4
        %v3551 = vadd.f32 %v3549, %v3550
        %v3552 = vrot.slane %v3551, 2
        %v3553 = vadd.f32 %v3551, %v3552
        %v3554 = vrot.slane %v3553, 1
        %v3555 = vadd.f32 %v3553, %v3554
        %v3572 = vsel %vm3323, %v3429, %v3420
        %v3573 = vsel %vm3325, %v3438, %v3572
        %v3574 = vsel %vm3327, %v3447, %v3573
        %v3575 = vsel %vm3329, %v3456, %v3574
        %v3576 = vsel %vm3331, %v3465, %v3575
        %v3577 = vsel %vm3333, %v3474, %v3576
        %v3578 = vsel %vm3335, %v3483, %v3577
        %v3579 = vsel %vm3323, %v3501, %v3492
        %v3580 = vsel %vm3325, %v3510, %v3579
        %v3581 = vsel %vm3327, %v3519, %v3580
        %v3582 = vsel %vm3329, %v3528, %v3581
        %v3583 = vsel %vm3331, %v3537, %v3582
        %v3584 = vsel %vm3333, %v3546, %v3583
        %v3585 = vsel %vm3335, %v3555, %v3584
        %v3588 = vadd.f32 %v3346, %v3578
        %v3589 = vadd.f32 %v3347, %v3585
        %3590 = vst.msk [vmem:[%s884] sm:$0xff] %vm3162, %v3588
        %3591 = vst.msk [vmem:[%s884 + $0x8] sm:$0xff] %vm3162, %v3589
        %s3592 = sand.u32 %s557, 1
        %s3593 = scalar_lea.sflag [#allocation3], %s3592
        %s3594 = sand.u32 %s557, 1
        %s3595 = smul.addr %s3594, 16
        %s3596 = scalar_lea.vmem [#allocation2], %s3595
        %p3597 = scmp.lt.s32.totalorder %s41, 1
        %s3598 = scalar_select %p3597, %s41, 1
        %s3599 = smul.addr %s3598, 2
        %s3600 = smul.addr %s3599, 8
        %s3601 = scalar_lea.vmem %s24, %s3600
        %p3602 = scmp.lt.s32.totalorder %s41, 1
        %s3603 = scalar_select %p3602, %s41, 1
        %s3604 = scalar_lea.vmem %s25, %s3603
        %p3605 = scmp.lt.s32.totalorder %s41, 1
        %s3606 = scalar_select %p3605, %s41, 1
        %s3607 = smul.addr %s3606, 8
        %s3608 = scalar_lea.vmem %s26, %s3607
        // Predicated region
        $region113: #{_lambda_.6} parent=111 // pred_check
          %p3609 = pneg %p567
        $region114: #{_lambda_.6} parent=111 // pred_check_branch
          %3611 = sbr.rel (%p3609) target = $region116
        $region115: #{_lambda_.6} parent=111 // pred_region
          %s3613 = ssub.s32 256, 256
          %3614 = vsyncadd %s3593, %s3613
          %s3615 = smul.addr %s41, 2
          %s3616 = smul.addr %s3615, 128
          %s3617 = scalar_lea.hbm %s23, %s3616
          %s3618 = sshll.u32 %s3596, 4
          %s3619 = int_to_ptr.vmem [resolvable:$true] %s3618
          %3624 = dma.vmem_to_hbm [thread:$0]  %s3619, 256, %s3617, %s3593, 128, 128, 8
        $region116: #{_lambda_.6} parent=111 // pred_fallthru
          _
        // Predicated region
        $region117: #{_lambda_.6} parent=111 // pred_check
          %p3625 = pneg %p593
        $region118: #{_lambda_.6} parent=111 // pred_check_branch
          %3627 = sbr.rel (%p3625) target = $region120
        $region119: #{_lambda_.6} parent=111 // pred_region
          _
        $region120: #{_lambda_.6} parent=111 // pred_fallthru
          _
        // Predicated region
        $region121: #{_lambda_.6} parent=111 // pred_check
          %p3628 = pneg %p619
        $region122: #{_lambda_.6} parent=111 // pred_check_branch
          %3630 = sbr.rel (%p3628) target = $region124
        $region123: #{_lambda_.6} parent=111 // pred_region
          _
        $region124: #{_lambda_.6} parent=111 // pred_fallthru
          _
        // Predicated region
        $region125: #{_lambda_.6} parent=111 // pred_check
          %p3631 = pneg %p645
        $region126: #{_lambda_.6} parent=111 // pred_check_branch
          %3633 = sbr.rel (%p3631) target = $region128
        $region127: #{_lambda_.6} parent=111 // pred_region
          _
        $region128: #{_lambda_.6} parent=111 // pred_fallthru
          _
      $region112: #{_lambda_.6} parent=5 // pred_fallthru
        _
      %p3634 = scmp.le.s32.totalorder 2, %s36
      // Predicated region
      $region129: #{_lambda_.6} parent=5 // pred_check
        %p3635 = pneg %p3634
      $region130: #{_lambda_.6} parent=5 // pred_check_branch
        %3637 = sbr.rel (%p3635) target = $region132
      $region131: #{_lambda_.6} parent=5 // pred_region
        %s3638 = ssub.s32 %s36, 2
        // Predicated region
        $region133: #{_lambda_.6} parent=131 // pred_check
          %p3639 = pneg %p573
        $region134: #{_lambda_.6} parent=131 // pred_check_branch
          %3641 = sbr.rel (%p3639) target = $region136
        $region135: #{_lambda_.6} parent=131 // pred_region
          %s3642 = sand.u32 %s558, 1
          %s3643 = scalar_lea.sflag [#allocation3], %s3642
          %s3644 = sand.u32 %s558, 1
          %s3645 = smul.addr %s3644, 16
          %s3646 = scalar_lea.vmem [#allocation2], %s3645
          %3647 = dma.done %s3643, 256
        $region136: #{_lambda_.6} parent=131 // pred_fallthru
          _
        // Predicated region
        $region137: #{_lambda_.6} parent=131 // pred_check
          %p3648 = pneg %p599
        $region138: #{_lambda_.6} parent=131 // pred_check_branch
          %3650 = sbr.rel (%p3648) target = $region140
        $region139: #{_lambda_.6} parent=131 // pred_region
          %p3651 = scmp.lt.s32.totalorder %s42, 1
          %s3652 = scalar_select %p3651, %s42, 1
          %s3653 = smul.addr %s3652, 2
          %s3654 = smul.addr %s3653, 8
          %s3655 = scalar_lea.vmem %s24, %s3654
        $region140: #{_lambda_.6} parent=131 // pred_fallthru
          _
        // Predicated region
        $region141: #{_lambda_.6} parent=131 // pred_check
          %p3656 = pneg %p625
        $region142: #{_lambda_.6} parent=131 // pred_check_branch
          %3658 = sbr.rel (%p3656) target = $region144
        $region143: #{_lambda_.6} parent=131 // pred_region
          %p3659 = scmp.lt.s32.totalorder %s42, 1
          %s3660 = scalar_select %p3659, %s42, 1
          %s3661 = scalar_lea.vmem %s25, %s3660
        $region144: #{_lambda_.6} parent=131 // pred_fallthru
          _
        // Predicated region
        $region145: #{_lambda_.6} parent=131 // pred_check
          %p3662 = pneg %p651
        $region146: #{_lambda_.6} parent=131 // pred_check_branch
          %3664 = sbr.rel (%p3662) target = $region148
        $region147: #{_lambda_.6} parent=131 // pred_region
          %p3665 = scmp.lt.s32.totalorder %s42, 1
          %s3666 = scalar_select %p3665, %s42, 1
          %s3667 = smul.addr %s3666, 8
          %s3668 = scalar_lea.vmem %s26, %s3667
        $region148: #{_lambda_.6} parent=131 // pred_fallthru
          _
      $region132: #{_lambda_.6} parent=5 // pred_fallthru
        _
    $region6: #{_lambda_.6} parent=1 // loop_footer
      %s40 = sadd.s32 1, %s36
    $region7: #{_lambda_.6} parent=1 // loop_footer_branch
      %35 = sbr.rel target = $region3
    $region8: #{_lambda_.6} parent=1 // loop_exit
      _
    %3669 = vsyncpa [#allocation3], 1
    %s3670 = scalar_lea.sflag [#allocation3], 1
    %3671 = vsyncpa %s3670, 1

</llo_original>
